<compile_context>
chip_gen: v7x
topology: tpu7x:2x2x1
jax: 0.10.0
libtpu: 0.0.40
codegen_flags: <defaults>
</compile_context>

<pallas_src>
import jax
import jax.numpy as jnp
from jax.experimental import pallas as pl
from jax.experimental.pallas import tpu as pltpu

# ----------------------------- model config ---------------------------------
IMG = 56
PATCH = 4
IN_CH = 3
EMBED_DIM = 16
DEPTHS = [1, 1]
FOCAL_LEVELS = [2, 2]
FOCAL_WINDOWS = [3, 3]
FOCAL_FACTOR = 2
MLP_RATIO = 4.0
LN_EPS = 1e-5
BATCH = 2

# Derived static geometry (stage 1: 14x14, stage 2: 7x7).
H1 = W1 = IMG // PATCH
H2 = W2 = H1 // 2
N1 = H1 * W1
N2 = H2 * W2
C1 = EMBED_DIM
C2 = EMBED_DIM * 2
# Both stages use focal_window=3, focal_level=2 -> depthwise kernel sizes (3, 5).
KS = tuple(FOCAL_FACTOR * k + FOCAL_WINDOWS[0] for k in range(FOCAL_LEVELS[0]))
PMAX = max(k // 2 for k in KS)            # = 2
# Zero-halo width: >= PMAX*(W+1) for both stages AND lane-aligned (multiple of
# 128) so the per-level staging store starts on a lane-tile boundary.
HALO = 128


def _gelu(x):
    # TODO(synk): PyTorch nn.GELU() is erf-based; erf has no reliable Mosaic
    # lowering, so the tanh approximation is used in-kernel (~1e-3 deviation).
    return jax.nn.gelu(x, approximate=True)


def _ln_core(x):
    """Mean/var normalization over the channel axis (axis 0) of a (C, N) tile."""
    mu = jnp.mean(x, axis=0, keepdims=True)
    xc = x - mu
    var = jnp.mean(xc * xc, axis=0, keepdims=True)
    return xc * jax.lax.rsqrt(var + LN_EPS)


def _ln_affine(x, g, b):
    return _ln_core(x) * g + b


# ----------------------------- in-kernel block -------------------------------
def _focal_block(x, W, mask_ref, dw_refs, f_w, f_b, h_w, h_b, p_w, p_b,
                 w1, b1, w2, b2, pad_ref):
    """FocalNetBlock (use_postln=False, no layerscale, drop/droppath=0) on a
    channels-first (C, N) tile.  norm1/norm2 affines are pre-folded into
    f_w/f_b and w1/b1, so only mean/rsqrt normalization happens here."""
    C, N = x.shape
    L = len(dw_refs)

    y = _ln_core(x)                                         # norm1 (affine folded)
    # f: (2C+L+1, C) @ (C, N); split rows into q / ctx / gates (sublane-aligned).
    f = jnp.dot(f_w[...], y, preferred_element_type=jnp.float32) + f_b[...]
    q = f[0:C, :]
    ctx = f[C:2 * C, :]
    gates = f[2 * C:2 * C + L + 1, :]

    masks = mask_ref[...]                                   # (2*PMAX+1, N)
    pad_ref[...] = jnp.zeros(pad_ref.shape, jnp.float32)    # zero halo once per block

    ctx_all = None
    cur = ctx
    for l in range(L):
        k = KS[l]
        p = k // 2
        # Stage level input inside the zero halo: vertical out-of-image taps
        # land in the zero halo (true zero padding); horizontal row-wrap is
        # removed by the per-dx masks, factored OUT of the dy loop.
        pad_ref[:, pl.ds(HALO, N)] = cur
        wts = dw_refs[l][...]                               # (C, k*k), hoisted load
        acc = None
        for dx in range(-p, p + 1):
            part = None
            for dy in range(-p, p + 1):
                t = (dy + p) * k + (dx + p)
                shifted = pad_ref[:, pl.ds(HALO + dy * W + dx, N)]      # (C, N)
                term = shifted * wts[:, t:t + 1]
                part = term if part is None else part + term
            part = part * masks[PMAX + dx:PMAX + dx + 1, :]
            acc = part if acc is None else acc + part
        cur = _gelu(acc)                                    # focal level output
        lvl = cur * gates[l:l + 1, :]
        ctx_all = lvl if ctx_all is None else ctx_all + lvl

    # Global context (spatial mean of the last level), then gated add.
    ctx_global = _gelu(jnp.mean(cur, axis=1, keepdims=True))            # (C, 1)
    ctx_all = ctx_all + ctx_global * gates[L:L + 1, :]
    # normalize_modulator=False -> no division

    # modulator = h(ctx_all) (1x1 conv + bias), x_out = q * modulator, proj.
    mod = jnp.dot(h_w[...], ctx_all, preferred_element_type=jnp.float32) + h_b[...]
    xm = q * mod
    xm = jnp.dot(p_w[...], xm, preferred_element_type=jnp.float32) + p_b[...]
    x1 = x + xm                                             # residual 1 (gamma_1 = 1)

    # MLP branch: norm2 (affine folded) -> fc1 -> GELU -> fc2.
    y2 = _ln_core(x1)
    hid = _gelu(jnp.dot(w1[...], y2, preferred_element_type=jnp.float32) + b1[...])
    out = jnp.dot(w2[...], hid, preferred_element_type=jnp.float32) + b2[...]
    return x1 + out                                         # residual 2 (gamma_2 = 1)


# --------------------------- fused whole-network kernel ----------------------
def _focalnet_kernel(patches_ref,
                     stem_w, stem_b, stem_g, stem_bt,
                     mask1, dw1_0, dw1_1, f1_w, f1_b, h1_w, h1_b, p1_w, p1_b,
                     m1w1, m1b1, m1w2, m1b2,
                     sel, ds_w, ds_b, ds_g, ds_bt,
                     mask2, dw2_0, dw2_1, f2_w, f2_b, h2_w, h2_b, p2_w, p2_b,
                     m2w1, m2b1, m2w2, m2b2,
                     nf_g, nf_b,
                     out_l0, out_l1, out_fin,
                     pad1, pad2):
    """Whole FocalNet forward for one batch element per grid step, VMEM-resident."""
    # Stem: patch conv (as matmul over unfolded patches) + bias + LayerNorm.
    x = jnp.dot(stem_w[...], patches_ref[0], preferred_element_type=jnp.float32) + stem_b[...]
    x = _ln_affine(x, stem_g[...], stem_bt[...])                         # (C1, N1)

    # Stage-1 FocalNetBlock.
    x = _focal_block(x, W1, mask1, [dw1_0, dw1_1],
                     f1_w, f1_b, h1_w, h1_b, p1_w, p1_b,
                     m1w1, m1b1, m1w2, m1b2, pad1)                       # (C1, N1)

    # Downsample PatchEmbed (2x2 conv, stride 2, + LayerNorm).  The stride-2
    # token gather is expressed as 4 selection matmuls (sel[t]: N1 -> N2),
    # keeping the data path on the otherwise-idle MXU.
    ds = None
    for t in range(4):
        xt = jnp.dot(x, sel[t], preferred_element_type=jnp.float32)      # (C1, N2)
        term = jnp.dot(ds_w[t], xt, preferred_element_type=jnp.float32)  # (C2, N2)
        ds = term if ds is None else ds + term
    x = _ln_affine(ds + ds_b[...], ds_g[...], ds_bt[...])                # (C2, N2)
    out_l0[0] = x            # layers_list[0] (stage-1 output incl. downsample)

    # Stage-2 FocalNetBlock.
    x = _focal_block(x, W2, mask2, [dw2_0, dw2_1],
                     f2_w, f2_b, h2_w, h2_b, p2_w, p2_b,
                     m2w1, m2b1, m2w2, m2b2, pad2)                       # (C2, N2)
    out_l1[0] = x            # layers_list[1]

    # Final LayerNorm.
    out_fin[0] = _ln_affine(x, nf_g[...], nf_b[...])


# ------------------------------- module glue ---------------------------------
def _w_spec(a):
    nd = a.ndim
    return pl.BlockSpec(a.shape, lambda b, _nd=nd: (0,) * _nd)


@jax.jit
def focalnet_forward(x_img, kernel_params):
    """FocalNet.forward -> (layers_list, x) with x shaped (B, 7, 7, num_features).

    kernel_params is the flat, LN-affine-folded list from pack_params()."""
    B = x_img.shape[0]
    # Unfold stem patches (one small XLA transpose of the raw image); per-patch
    # row order is (c, ky, kx), matching Conv2d weight flattening.
    xr = x_img.reshape(B, IN_CH, H1, PATCH, W1, PATCH)
    patches = xr.transpose(0, 1, 3, 5, 2, 4).reshape(B, IN_CH * PATCH * PATCH, N1)

    inputs = [patches] + list(kernel_params)
    in_specs = [pl.BlockSpec((1, IN_CH * PATCH * PATCH, N1), lambda b: (b, 0, 0))]
    in_specs += [_w_spec(a) for a in kernel_params]
    out_shape = tuple(jax.ShapeDtypeStruct((B, C2, N2), jnp.float32) for _ in range(3))
    out_specs = tuple(pl.BlockSpec((1, C2, N2), lambda b: (b, 0, 0)) for _ in range(3))

    out_l0, out_l1, out_fin = pl.pallas_call(
        _focalnet_kernel,
        out_shape=out_shape,
        grid=(B,),
        in_specs=in_specs,
        out_specs=out_specs,
        scratch_shapes=[pltpu.VMEM((C1, N1 + 2 * HALO), jnp.float32),
                        pltpu.VMEM((C2, N2 + 2 * HALO), jnp.float32)],
        compiler_params=pltpu.CompilerParams(dimension_semantics=("parallel",)),
    )(*inputs)

    # Reference API: layers_list entries are (B, N, C); final x is (B, 7, 7, C).
    layers_list = [jnp.transpose(out_l0, (0, 2, 1)), jnp.transpose(out_l1, (0, 2, 1))]
    out = jnp.transpose(out_fin, (0, 2, 1)).reshape(B, H2, W2, C2)
    return layers_list, out


# ------------------------------ parameter init -------------------------------
def _nrm(key, shape):
    return jax.random.normal(key, shape, jnp.float32) * 0.02


def _dx_masks(H, W, pmax):
    """(2*pmax+1, H*W) masks: row (dx+pmax)[n] = 1 iff 0 <= (n % W) + dx < W."""
    w = jnp.arange(H * W, dtype=jnp.int32) % W
    rows = [((w + dx >= 0) & (w + dx < W)).astype(jnp.float32)
            for dx in range(-pmax, pmax + 1)]
    return jnp.stack(rows)


def _downsample_selectors():
    """sel[t = ky*2+kx]: (N1, N2) one-hot with sel[t][n1, n2] = 1 iff
    n1 == (2*ho+ky)*W1 + (2*wo+kx) for n2 = ho*W2 + wo (2x2 stride-2 gather)."""
    n2 = jnp.arange(N2)
    ho, wo = n2 // W2, n2 % W2
    sels = []
    for ky in range(2):
        for kx in range(2):
            src = (2 * ho + ky) * W1 + (2 * wo + kx)                       # (N2,)
            sels.append((jnp.arange(N1)[:, None] == src[None, :]).astype(jnp.float32))
    return jnp.stack(sels)                                                 # (4, N1, N2)


def init_block_params(key, dim, focal_level, mlp_ratio):
    hidden = int(dim * mlp_ratio)
    keys = jax.random.split(key, 5 + focal_level)
    return dict(
        norm1_g=jnp.ones((dim, 1)), norm1_b=jnp.zeros((dim, 1)),
        # nn.Linear / 1x1-conv weights kept in PyTorch (out, in) layout.
        f_w=_nrm(keys[0], (2 * dim + focal_level + 1, dim)),
        f_b=jnp.zeros((2 * dim + focal_level + 1, 1)),
        # Depthwise Conv2d weight (dim, 1, k, k) flattened to (dim, k*k),
        # tap order (dy, dx) row-major -- matches the in-kernel tap loop.
        dw=[_nrm(keys[1 + l], (dim, KS[l] * KS[l])) for l in range(focal_level)],
        h_w=_nrm(keys[1 + focal_level], (dim, dim)), h_b=jnp.zeros((dim, 1)),
        proj_w=_nrm(keys[2 + focal_level], (dim, dim)), proj_b=jnp.zeros((dim, 1)),
        norm2_g=jnp.ones((dim, 1)), norm2_b=jnp.zeros((dim, 1)),
        fc1_w=_nrm(keys[3 + focal_level], (hidden, dim)), fc1_b=jnp.zeros((hidden, 1)),
        fc2_w=_nrm(keys[4 + focal_level], (dim, hidden)), fc2_b=jnp.zeros((dim, 1)),
    )


def init_params(key):
    k_stem, k_b1, k_ds, k_b2 = jax.random.split(key, 4)
    return dict(
        stem=dict(w=_nrm(k_stem, (C1, IN_CH * PATCH * PATCH)), b=jnp.zeros((C1, 1)),
                  ln_g=jnp.ones((C1, 1)), ln_b=jnp.zeros((C1, 1))),
        block1=init_block_params(k_b1, C1, FOCAL_LEVELS[0], MLP_RATIO),
        # Downsample Conv2d(C1, C2, k=2, s=2) weight stored per-tap (4, C2, C1):
        # slot [ky*2+kx] == W[:, :, ky, kx] of the PyTorch (C2, C1, 2, 2) tensor.
        downsample=dict(w=_nrm(k_ds, (4, C2, C1)), b=jnp.zeros((C2, 1)),
                        ln_g=jnp.ones((C2, 1)), ln_b=jnp.zeros((C2, 1))),
        block2=init_block_params(k_b2, C2, FOCAL_LEVELS[1], MLP_RATIO),
        norm_g=jnp.ones((C2, 1)), norm_b=jnp.zeros((C2, 1)),
    )


def _fold_ln_into_matmul(w, b, ln_g, ln_b):
    """W @ (core(x)*g + ln_b) + b  ==  (W * g^T) @ core(x) + (W @ ln_b + b)."""
    return w * ln_g.reshape(1, -1), b + w @ ln_b


def pack_params(p):
    """Flatten params into the fused-kernel input order, folding the norm1/norm2
    affine parameters into the f / fc1 matmuls (one-time constant transform)."""
    def block_inputs(bp, H, W):
        f_w, f_b = _fold_ln_into_matmul(bp["f_w"], bp["f_b"], bp["norm1_g"], bp["norm1_b"])
        fc1_w, fc1_b = _fold_ln_into_matmul(bp["fc1_w"], bp["fc1_b"],
                                            bp["norm2_g"], bp["norm2_b"])
        return [_dx_masks(H, W, PMAX), bp["dw"][0], bp["dw"][1],
                f_w, f_b, bp["h_w"], bp["h_b"], bp["proj_w"], bp["proj_b"],
                fc1_w, fc1_b, bp["fc2_w"], bp["fc2_b"]]

    flat = [p["stem"]["w"], p["stem"]["b"], p["stem"]["ln_g"], p["stem"]["ln_b"]]
    flat += block_inputs(p["block1"], H1, W1)
    flat += [_downsample_selectors(), p["downsample"]["w"], p["downsample"]["b"],
             p["downsample"]["ln_g"], p["downsample"]["ln_b"]]
    flat += block_inputs(p["block2"], H2, W2)
    flat += [p["norm_g"], p["norm_b"]]
    return flat


# ----------------------------------- main -------------------------------------
if __name__ == "__main__":
    x_img = jax.random.normal(jax.random.PRNGKey(0), (BATCH, IN_CH, IMG, IMG), jnp.float32)
    params = init_params(jax.random.PRNGKey(1))
    kernel_params = pack_params(params)          # one-time folding / flattening

    layers_list, out = focalnet_forward(x_img, kernel_params)

    out = jax.block_until_ready(out)
    for y in layers_list:
        jax.block_until_ready(y)

    assert out.shape == (BATCH, H2, W2, C2)
    assert layers_list[0].shape == (BATCH, N2, C2)
    assert layers_list[1].shape == (BATCH, N2, C2)
    assert bool(jnp.all(jnp.isfinite(out)))
    print("KERNEL_OK")
</pallas_src>

<mosaic_0001>
module attributes {stable_mosaic.version = 11 : i64} {
  func.func @_focalnet_kernel(%arg0: i32, %arg1: memref<1x48x196xf32, #tpu.memory_space<vmem>>, %arg2: memref<16x48xf32, #tpu.memory_space<vmem>>, %arg3: memref<16x1xf32, #tpu.memory_space<vmem>>, %arg4: memref<16x1xf32, #tpu.memory_space<vmem>>, %arg5: memref<16x1xf32, #tpu.memory_space<vmem>>, %arg6: memref<5x196xf32, #tpu.memory_space<vmem>>, %arg7: memref<16x9xf32, #tpu.memory_space<vmem>>, %arg8: memref<16x25xf32, #tpu.memory_space<vmem>>, %arg9: memref<35x16xf32, #tpu.memory_space<vmem>>, %arg10: memref<35x1xf32, #tpu.memory_space<vmem>>, %arg11: memref<16x16xf32, #tpu.memory_space<vmem>>, %arg12: memref<16x1xf32, #tpu.memory_space<vmem>>, %arg13: memref<16x16xf32, #tpu.memory_space<vmem>>, %arg14: memref<16x1xf32, #tpu.memory_space<vmem>>, %arg15: memref<64x16xf32, #tpu.memory_space<vmem>>, %arg16: memref<64x1xf32, #tpu.memory_space<vmem>>, %arg17: memref<16x64xf32, #tpu.memory_space<vmem>>, %arg18: memref<16x1xf32, #tpu.memory_space<vmem>>, %arg19: memref<4x196x49xf32, #tpu.memory_space<vmem>>, %arg20: memref<4x32x16xf32, #tpu.memory_space<vmem>>, %arg21: memref<32x1xf32, #tpu.memory_space<vmem>>, %arg22: memref<32x1xf32, #tpu.memory_space<vmem>>, %arg23: memref<32x1xf32, #tpu.memory_space<vmem>>, %arg24: memref<5x49xf32, #tpu.memory_space<vmem>>, %arg25: memref<32x9xf32, #tpu.memory_space<vmem>>, %arg26: memref<32x25xf32, #tpu.memory_space<vmem>>, %arg27: memref<67x32xf32, #tpu.memory_space<vmem>>, %arg28: memref<67x1xf32, #tpu.memory_space<vmem>>, %arg29: memref<32x32xf32, #tpu.memory_space<vmem>>, %arg30: memref<32x1xf32, #tpu.memory_space<vmem>>, %arg31: memref<32x32xf32, #tpu.memory_space<vmem>>, %arg32: memref<32x1xf32, #tpu.memory_space<vmem>>, %arg33: memref<128x32xf32, #tpu.memory_space<vmem>>, %arg34: memref<128x1xf32, #tpu.memory_space<vmem>>, %arg35: memref<32x128xf32, #tpu.memory_space<vmem>>, %arg36: memref<32x1xf32, #tpu.memory_space<vmem>>, %arg37: memref<32x1xf32, #tpu.memory_space<vmem>>, %arg38: memref<32x1xf32, #tpu.memory_space<vmem>>, %arg39: memref<1x32x49xf32, #tpu.memory_space<vmem>>, %arg40: memref<1x32x49xf32, #tpu.memory_space<vmem>>, %arg41: memref<1x32x49xf32, #tpu.memory_space<vmem>>, %arg42: memref<16x452xf32, #tpu.memory_space<vmem>>, %arg43: memref<32x305xf32, #tpu.memory_space<vmem>>) attributes {dimension_semantics = [#tpu.dimension_semantics<parallel>], iteration_bounds = array<i64: 2>, scalar_prefetch = 0 : i64, scratch_operands = 2 : i64, tpu.core_type = #tpu.core_type<tc>, window_params = [{transform_indices = @transform_0, window_bounds = array<i64: 1, 48, 196>}, {pipeline_mode = #tpu.pipeline_mode<synchronous>, transform_indices = @transform_1, window_bounds = array<i64: 16, 48>}, {pipeline_mode = #tpu.pipeline_mode<synchronous>, transform_indices = @transform_2, window_bounds = array<i64: 16, 1>}, {pipeline_mode = #tpu.pipeline_mode<synchronous>, transform_indices = @transform_3, window_bounds = array<i64: 16, 1>}, {pipeline_mode = #tpu.pipeline_mode<synchronous>, transform_indices = @transform_4, window_bounds = array<i64: 16, 1>}, {pipeline_mode = #tpu.pipeline_mode<synchronous>, transform_indices = @transform_5, window_bounds = array<i64: 5, 196>}, {pipeline_mode = #tpu.pipeline_mode<synchronous>, transform_indices = @transform_6, window_bounds = array<i64: 16, 9>}, {pipeline_mode = #tpu.pipeline_mode<synchronous>, transform_indices = @transform_7, window_bounds = array<i64: 16, 25>}, {pipeline_mode = #tpu.pipeline_mode<synchronous>, transform_indices = @transform_8, window_bounds = array<i64: 35, 16>}, {pipeline_mode = #tpu.pipeline_mode<synchronous>, transform_indices = @transform_9, window_bounds = array<i64: 35, 1>}, {pipeline_mode = #tpu.pipeline_mode<synchronous>, transform_indices = @transform_10, window_bounds = array<i64: 16, 16>}, {pipeline_mode = #tpu.pipeline_mode<synchronous>, transform_indices = @transform_11, window_bounds = array<i64: 16, 1>}, {pipeline_mode = #tpu.pipeline_mode<synchronous>, transform_indices = @transform_12, window_bounds = array<i64: 16, 16>}, {pipeline_mode = #tpu.pipeline_mode<synchronous>, transform_indices = @transform_13, window_bounds = array<i64: 16, 1>}, {pipeline_mode = #tpu.pipeline_mode<synchronous>, transform_indices = @transform_14, window_bounds = array<i64: 64, 16>}, {pipeline_mode = #tpu.pipeline_mode<synchronous>, transform_indices = @transform_15, window_bounds = array<i64: 64, 1>}, {pipeline_mode = #tpu.pipeline_mode<synchronous>, transform_indices = @transform_16, window_bounds = array<i64: 16, 64>}, {pipeline_mode = #tpu.pipeline_mode<synchronous>, transform_indices = @transform_17, window_bounds = array<i64: 16, 1>}, {pipeline_mode = #tpu.pipeline_mode<synchronous>, transform_indices = @transform_18, window_bounds = array<i64: 4, 196, 49>}, {pipeline_mode = #tpu.pipeline_mode<synchronous>, transform_indices = @transform_19, window_bounds = array<i64: 4, 32, 16>}, {pipeline_mode = #tpu.pipeline_mode<synchronous>, transform_indices = @transform_20, window_bounds = array<i64: 32, 1>}, {pipeline_mode = #tpu.pipeline_mode<synchronous>, transform_indices = @transform_21, window_bounds = array<i64: 32, 1>}, {pipeline_mode = #tpu.pipeline_mode<synchronous>, transform_indices = @transform_22, window_bounds = array<i64: 32, 1>}, {pipeline_mode = #tpu.pipeline_mode<synchronous>, transform_indices = @transform_23, window_bounds = array<i64: 5, 49>}, {pipeline_mode = #tpu.pipeline_mode<synchronous>, transform_indices = @transform_24, window_bounds = array<i64: 32, 9>}, {pipeline_mode = #tpu.pipeline_mode<synchronous>, transform_indices = @transform_25, window_bounds = array<i64: 32, 25>}, {pipeline_mode = #tpu.pipeline_mode<synchronous>, transform_indices = @transform_26, window_bounds = array<i64: 67, 32>}, {pipeline_mode = #tpu.pipeline_mode<synchronous>, transform_indices = @transform_27, window_bounds = array<i64: 67, 1>}, {pipeline_mode = #tpu.pipeline_mode<synchronous>, transform_indices = @transform_28, window_bounds = array<i64: 32, 32>}, {pipeline_mode = #tpu.pipeline_mode<synchronous>, transform_indices = @transform_29, window_bounds = array<i64: 32, 1>}, {pipeline_mode = #tpu.pipeline_mode<synchronous>, transform_indices = @transform_30, window_bounds = array<i64: 32, 32>}, {pipeline_mode = #tpu.pipeline_mode<synchronous>, transform_indices = @transform_31, window_bounds = array<i64: 32, 1>}, {pipeline_mode = #tpu.pipeline_mode<synchronous>, transform_indices = @transform_32, window_bounds = array<i64: 128, 32>}, {pipeline_mode = #tpu.pipeline_mode<synchronous>, transform_indices = @transform_33, window_bounds = array<i64: 128, 1>}, {pipeline_mode = #tpu.pipeline_mode<synchronous>, transform_indices = @transform_34, window_bounds = array<i64: 32, 128>}, {pipeline_mode = #tpu.pipeline_mode<synchronous>, transform_indices = @transform_35, window_bounds = array<i64: 32, 1>}, {pipeline_mode = #tpu.pipeline_mode<synchronous>, transform_indices = @transform_36, window_bounds = array<i64: 32, 1>}, {pipeline_mode = #tpu.pipeline_mode<synchronous>, transform_indices = @transform_37, window_bounds = array<i64: 32, 1>}, {transform_indices = @transform_38, window_bounds = array<i64: 1, 32, 49>}, {transform_indices = @transform_39, window_bounds = array<i64: 1, 32, 49>}, {transform_indices = @transform_40, window_bounds = array<i64: 1, 32, 49>}]} {
    %c0 = arith.constant 0 : index
    %c0_0 = arith.constant 0 : index
    %0 = vector.load %arg2[%c0, %c0_0] : memref<16x48xf32, #tpu.memory_space<vmem>>, vector<16x48xf32>
    %c0_1 = arith.constant 0 : index
    %c0_2 = arith.constant 0 : index
    %c0_3 = arith.constant 0 : index
    %1 = vector.load %arg1[%c0_1, %c0_2, %c0_3] : memref<1x48x196xf32, #tpu.memory_space<vmem>>, vector<1x48x196xf32>
    %2 = vector.shape_cast %1 : vector<1x48x196xf32> to vector<48x196xf32>
    %cst = arith.constant dense<0.000000e+00> : vector<16x196xf32>
    %3 = tpu.matmul %0, %2, %cst {dimension_numbers = #tpu.dot_dimension_numbers<[1], [0], [0], [1], [0, 0, 1, 1], [], []>} : vector<16x48xf32>, vector<48x196xf32>, vector<16x196xf32> -> vector<16x196xf32>
    %c0_4 = arith.constant 0 : index
    %c0_5 = arith.constant 0 : index
    %4 = vector.load %arg3[%c0_4, %c0_5] : memref<16x1xf32, #tpu.memory_space<vmem>>, vector<16x1xf32>
    %5 = vector.broadcast %4 : vector<16x1xf32> to vector<16x196xf32>
    %6 = arith.addf %3, %5 : vector<16x196xf32>
    %c0_6 = arith.constant 0 : index
    %c0_7 = arith.constant 0 : index
    %7 = vector.load %arg4[%c0_6, %c0_7] : memref<16x1xf32, #tpu.memory_space<vmem>>, vector<16x1xf32>
    %c0_8 = arith.constant 0 : index
    %c0_9 = arith.constant 0 : index
    %8 = vector.load %arg5[%c0_8, %c0_9] : memref<16x1xf32, #tpu.memory_space<vmem>>, vector<16x1xf32>
    %cst_10 = arith.constant dense<0.000000e+00> : vector<196xf32>
    %9 = vector.multi_reduction <add>, %6, %cst_10 [0] : vector<16x196xf32> to vector<196xf32>
    %10 = vector.shape_cast %9 : vector<196xf32> to vector<1x196xf32>
    %cst_11 = arith.constant 1.600000e+01 : f32
    %11 = vector.broadcast %cst_11 : f32 to vector<1x196xf32>
    %12 = arith.divf %10, %11 : vector<1x196xf32>
    %13 = vector.broadcast %12 : vector<1x196xf32> to vector<16x196xf32>
    %14 = arith.subf %6, %13 : vector<16x196xf32>
    %15 = arith.mulf %14, %14 : vector<16x196xf32>
    %cst_12 = arith.constant dense<0.000000e+00> : vector<196xf32>
    %16 = vector.multi_reduction <add>, %15, %cst_12 [0] : vector<16x196xf32> to vector<196xf32>
    %17 = vector.shape_cast %16 : vector<196xf32> to vector<1x196xf32>
    %cst_13 = arith.constant 1.600000e+01 : f32
    %18 = vector.broadcast %cst_13 : f32 to vector<1x196xf32>
    %19 = arith.divf %17, %18 : vector<1x196xf32>
    %cst_14 = arith.constant 9.99999974E-6 : f32
    %20 = vector.broadcast %cst_14 : f32 to vector<1x196xf32>
    %21 = arith.addf %19, %20 : vector<1x196xf32>
    %22 = math.rsqrt %21 : vector<1x196xf32>
    %23 = vector.broadcast %22 : vector<1x196xf32> to vector<16x196xf32>
    %24 = arith.mulf %14, %23 : vector<16x196xf32>
    %25 = vector.broadcast %7 : vector<16x1xf32> to vector<16x196xf32>
    %26 = arith.mulf %24, %25 : vector<16x196xf32>
    %27 = vector.broadcast %8 : vector<16x1xf32> to vector<16x196xf32>
    %28 = arith.addf %26, %27 : vector<16x196xf32>
    %cst_15 = arith.constant dense<0.000000e+00> : vector<196xf32>
    %29 = vector.multi_reduction <add>, %28, %cst_15 [0] : vector<16x196xf32> to vector<196xf32>
    %30 = vector.shape_cast %29 : vector<196xf32> to vector<1x196xf32>
    %cst_16 = arith.constant 1.600000e+01 : f32
    %31 = vector.broadcast %cst_16 : f32 to vector<1x196xf32>
    %32 = arith.divf %30, %31 : vector<1x196xf32>
    %33 = vector.broadcast %32 : vector<1x196xf32> to vector<16x196xf32>
    %34 = arith.subf %28, %33 : vector<16x196xf32>
    %35 = arith.mulf %34, %34 : vector<16x196xf32>
    %cst_17 = arith.constant dense<0.000000e+00> : vector<196xf32>
    %36 = vector.multi_reduction <add>, %35, %cst_17 [0] : vector<16x196xf32> to vector<196xf32>
    %37 = vector.shape_cast %36 : vector<196xf32> to vector<1x196xf32>
    %cst_18 = arith.constant 1.600000e+01 : f32
    %38 = vector.broadcast %cst_18 : f32 to vector<1x196xf32>
    %39 = arith.divf %37, %38 : vector<1x196xf32>
    %cst_19 = arith.constant 9.99999974E-6 : f32
    %40 = vector.broadcast %cst_19 : f32 to vector<1x196xf32>
    %41 = arith.addf %39, %40 : vector<1x196xf32>
    %42 = math.rsqrt %41 : vector<1x196xf32>
    %43 = vector.broadcast %42 : vector<1x196xf32> to vector<16x196xf32>
    %44 = arith.mulf %34, %43 : vector<16x196xf32>
    %c0_20 = arith.constant 0 : index
    %c0_21 = arith.constant 0 : index
    %45 = vector.load %arg9[%c0_20, %c0_21] : memref<35x16xf32, #tpu.memory_space<vmem>>, vector<35x16xf32>
    %cst_22 = arith.constant dense<0.000000e+00> : vector<35x196xf32>
    %46 = tpu.matmul %45, %44, %cst_22 {dimension_numbers = #tpu.dot_dimension_numbers<[1], [0], [0], [1], [0, 0, 1, 1], [], []>} : vector<35x16xf32>, vector<16x196xf32>, vector<35x196xf32> -> vector<35x196xf32>
    %c0_23 = arith.constant 0 : index
    %c0_24 = arith.constant 0 : index
    %47 = vector.load %arg10[%c0_23, %c0_24] : memref<35x1xf32, #tpu.memory_space<vmem>>, vector<35x1xf32>
    %48 = vector.broadcast %47 : vector<35x1xf32> to vector<35x196xf32>
    %49 = arith.addf %46, %48 : vector<35x196xf32>
    %50 = vector.extract_strided_slice %49 {offsets = [0, 0], sizes = [16, 196], strides = [1, 1]} : vector<35x196xf32> to vector<16x196xf32>
    %51 = vector.extract_strided_slice %49 {offsets = [16, 0], sizes = [16, 196], strides = [1, 1]} : vector<35x196xf32> to vector<16x196xf32>
    %52 = vector.extract_strided_slice %49 {offsets = [32, 0], sizes = [3, 196], strides = [1, 1]} : vector<35x196xf32> to vector<3x196xf32>
    %c0_25 = arith.constant 0 : index
    %c0_26 = arith.constant 0 : index
    %53 = vector.load %arg6[%c0_25, %c0_26] : memref<5x196xf32, #tpu.memory_space<vmem>>, vector<5x196xf32>
    %cst_27 = arith.constant 0.000000e+00 : f32
    %54 = vector.broadcast %cst_27 : f32 to vector<16x452xf32>
    %c0_28 = arith.constant 0 : index
    %c0_29 = arith.constant 0 : index
    %55 = vector.load %arg42[%c0_28, %c0_29] : memref<16x452xf32, #tpu.memory_space<vmem>>, vector<16x452xf32>
    tpu.vector_store %arg42[%c0_28, %c0_29], %54 {strides = array<i32>} : memref<16x452xf32, #tpu.memory_space<vmem>>, vector<16x452xf32>,
    %c0_30 = arith.constant 0 : index
    %c128 = arith.constant 128 : index
    %56 = vector.load %arg42[%c0_30, %c128] : memref<16x452xf32, #tpu.memory_space<vmem>>, vector<16x196xf32>
    tpu.vector_store %arg42[%c0_30, %c128], %51 {strides = array<i32>} : memref<16x452xf32, #tpu.memory_space<vmem>>, vector<16x196xf32>,
    %c0_31 = arith.constant 0 : index
    %c0_32 = arith.constant 0 : index
    %57 = vector.load %arg7[%c0_31, %c0_32] : memref<16x9xf32, #tpu.memory_space<vmem>>, vector<16x9xf32>
    %c0_33 = arith.constant 0 : index
    %c113 = arith.constant 113 : index
    %58 = vector.load %arg42[%c0_33, %c113] : memref<16x452xf32, #tpu.memory_space<vmem>>, vector<16x196xf32>
    %59 = vector.extract_strided_slice %57 {offsets = [0, 0], sizes = [16, 1], strides = [1, 1]} : vector<16x9xf32> to vector<16x1xf32>
    %60 = vector.broadcast %59 : vector<16x1xf32> to vector<16x196xf32>
    %61 = arith.mulf %58, %60 : vector<16x196xf32>
    %c0_34 = arith.constant 0 : index
    %c127 = arith.constant 127 : index
    %62 = vector.load %arg42[%c0_34, %c127] : memref<16x452xf32, #tpu.memory_space<vmem>>, vector<16x196xf32>
    %63 = vector.extract_strided_slice %57 {offsets = [0, 3], sizes = [16, 1], strides = [1, 1]} : vector<16x9xf32> to vector<16x1xf32>
    %64 = vector.broadcast %63 : vector<16x1xf32> to vector<16x196xf32>
    %65 = arith.mulf %62, %64 : vector<16x196xf32>
    %66 = arith.addf %61, %65 : vector<16x196xf32>
    %c0_35 = arith.constant 0 : index
    %c141 = arith.constant 141 : index
    %67 = vector.load %arg42[%c0_35, %c141] : memref<16x452xf32, #tpu.memory_space<vmem>>, vector<16x196xf32>
    %68 = vector.extract_strided_slice %57 {offsets = [0, 6], sizes = [16, 1], strides = [1, 1]} : vector<16x9xf32> to vector<16x1xf32>
    %69 = vector.broadcast %68 : vector<16x1xf32> to vector<16x196xf32>
    %70 = arith.mulf %67, %69 : vector<16x196xf32>
    %71 = arith.addf %66, %70 : vector<16x196xf32>
    %72 = vector.extract_strided_slice %53 {offsets = [1, 0], sizes = [1, 196], strides = [1, 1]} : vector<5x196xf32> to vector<1x196xf32>
    %73 = vector.broadcast %72 : vector<1x196xf32> to vector<16x196xf32>
    %74 = arith.mulf %71, %73 : vector<16x196xf32>
    %c0_36 = arith.constant 0 : index
    %c114 = arith.constant 114 : index
    %75 = vector.load %arg42[%c0_36, %c114] : memref<16x452xf32, #tpu.memory_space<vmem>>, vector<16x196xf32>
    %76 = vector.extract_strided_slice %57 {offsets = [0, 1], sizes = [16, 1], strides = [1, 1]} : vector<16x9xf32> to vector<16x1xf32>
    %77 = vector.broadcast %76 : vector<16x1xf32> to vector<16x196xf32>
    %78 = arith.mulf %75, %77 : vector<16x196xf32>
    %c0_37 = arith.constant 0 : index
    %c128_38 = arith.constant 128 : index
    %79 = vector.load %arg42[%c0_37, %c128_38] : memref<16x452xf32, #tpu.memory_space<vmem>>, vector<16x196xf32>
    %80 = vector.extract_strided_slice %57 {offsets = [0, 4], sizes = [16, 1], strides = [1, 1]} : vector<16x9xf32> to vector<16x1xf32>
    %81 = vector.broadcast %80 : vector<16x1xf32> to vector<16x196xf32>
    %82 = arith.mulf %79, %81 : vector<16x196xf32>
    %83 = arith.addf %78, %82 : vector<16x196xf32>
    %c0_39 = arith.constant 0 : index
    %c142 = arith.constant 142 : index
    %84 = vector.load %arg42[%c0_39, %c142] : memref<16x452xf32, #tpu.memory_space<vmem>>, vector<16x196xf32>
    %85 = vector.extract_strided_slice %57 {offsets = [0, 7], sizes = [16, 1], strides = [1, 1]} : vector<16x9xf32> to vector<16x1xf32>
    %86 = vector.broadcast %85 : vector<16x1xf32> to vector<16x196xf32>
    %87 = arith.mulf %84, %86 : vector<16x196xf32>
    %88 = arith.addf %83, %87 : vector<16x196xf32>
    %89 = vector.extract_strided_slice %53 {offsets = [2, 0], sizes = [1, 196], strides = [1, 1]} : vector<5x196xf32> to vector<1x196xf32>
    %90 = vector.broadcast %89 : vector<1x196xf32> to vector<16x196xf32>
    %91 = arith.mulf %88, %90 : vector<16x196xf32>
    %92 = arith.addf %74, %91 : vector<16x196xf32>
    %c0_40 = arith.constant 0 : index
    %c115 = arith.constant 115 : index
    %93 = vector.load %arg42[%c0_40, %c115] : memref<16x452xf32, #tpu.memory_space<vmem>>, vector<16x196xf32>
    %94 = vector.extract_strided_slice %57 {offsets = [0, 2], sizes = [16, 1], strides = [1, 1]} : vector<16x9xf32> to vector<16x1xf32>
    %95 = vector.broadcast %94 : vector<16x1xf32> to vector<16x196xf32>
    %96 = arith.mulf %93, %95 : vector<16x196xf32>
    %c0_41 = arith.constant 0 : index
    %c129 = arith.constant 129 : index
    %97 = vector.load %arg42[%c0_41, %c129] : memref<16x452xf32, #tpu.memory_space<vmem>>, vector<16x196xf32>
    %98 = vector.extract_strided_slice %57 {offsets = [0, 5], sizes = [16, 1], strides = [1, 1]} : vector<16x9xf32> to vector<16x1xf32>
    %99 = vector.broadcast %98 : vector<16x1xf32> to vector<16x196xf32>
    %100 = arith.mulf %97, %99 : vector<16x196xf32>
    %101 = arith.addf %96, %100 : vector<16x196xf32>
    %c0_42 = arith.constant 0 : index
    %c143 = arith.constant 143 : index
    %102 = vector.load %arg42[%c0_42, %c143] : memref<16x452xf32, #tpu.memory_space<vmem>>, vector<16x196xf32>
    %103 = vector.extract_strided_slice %57 {offsets = [0, 8], sizes = [16, 1], strides = [1, 1]} : vector<16x9xf32> to vector<16x1xf32>
    %104 = vector.broadcast %103 : vector<16x1xf32> to vector<16x196xf32>
    %105 = arith.mulf %102, %104 : vector<16x196xf32>
    %106 = arith.addf %101, %105 : vector<16x196xf32>
    %107 = vector.extract_strided_slice %53 {offsets = [3, 0], sizes = [1, 196], strides = [1, 1]} : vector<5x196xf32> to vector<1x196xf32>
    %108 = vector.broadcast %107 : vector<1x196xf32> to vector<16x196xf32>
    %109 = arith.mulf %106, %108 : vector<16x196xf32>
    %110 = arith.addf %92, %109 : vector<16x196xf32>
    %111 = arith.mulf %110, %110 : vector<16x196xf32>
    %112 = arith.mulf %110, %111 : vector<16x196xf32>
    %cst_43 = arith.constant 4.471500e-02 : f32
    %113 = vector.broadcast %cst_43 : f32 to vector<16x196xf32>
    %114 = arith.mulf %113, %112 : vector<16x196xf32>
    %115 = arith.addf %110, %114 : vector<16x196xf32>
    %cst_44 = arith.constant 0.797884583 : f32
    %116 = vector.broadcast %cst_44 : f32 to vector<16x196xf32>
    %117 = arith.mulf %116, %115 : vector<16x196xf32>
    %118 = math.tanh %117 : vector<16x196xf32>
    %cst_45 = arith.constant 1.000000e+00 : f32
    %119 = vector.broadcast %cst_45 : f32 to vector<16x196xf32>
    %120 = arith.addf %119, %118 : vector<16x196xf32>
    %cst_46 = arith.constant 5.000000e-01 : f32
    %121 = vector.broadcast %cst_46 : f32 to vector<16x196xf32>
    %122 = arith.mulf %121, %120 : vector<16x196xf32>
    %123 = arith.mulf %110, %122 : vector<16x196xf32>
    %124 = vector.extract_strided_slice %52 {offsets = [0, 0], sizes = [1, 196], strides = [1, 1]} : vector<3x196xf32> to vector<1x196xf32>
    %125 = vector.broadcast %124 : vector<1x196xf32> to vector<16x196xf32>
    %126 = arith.mulf %123, %125 : vector<16x196xf32>
    %c0_47 = arith.constant 0 : index
    %c128_48 = arith.constant 128 : index
    %127 = vector.load %arg42[%c0_47, %c128_48] : memref<16x452xf32, #tpu.memory_space<vmem>>, vector<16x196xf32>
    tpu.vector_store %arg42[%c0_47, %c128_48], %123 {strides = array<i32>} : memref<16x452xf32, #tpu.memory_space<vmem>>, vector<16x196xf32>,
    %c0_49 = arith.constant 0 : index
    %c0_50 = arith.constant 0 : index
    %128 = vector.load %arg8[%c0_49, %c0_50] : memref<16x25xf32, #tpu.memory_space<vmem>>, vector<16x25xf32>
    %c0_51 = arith.constant 0 : index
    %c98 = arith.constant 98 : index
    %129 = vector.load %arg42[%c0_51, %c98] : memref<16x452xf32, #tpu.memory_space<vmem>>, vector<16x196xf32>
    %130 = vector.extract_strided_slice %128 {offsets = [0, 0], sizes = [16, 1], strides = [1, 1]} : vector<16x25xf32> to vector<16x1xf32>
    %131 = vector.broadcast %130 : vector<16x1xf32> to vector<16x196xf32>
    %132 = arith.mulf %129, %131 : vector<16x196xf32>
    %c0_52 = arith.constant 0 : index
    %c112 = arith.constant 112 : index
    %133 = vector.load %arg42[%c0_52, %c112] : memref<16x452xf32, #tpu.memory_space<vmem>>, vector<16x196xf32>
    %134 = vector.extract_strided_slice %128 {offsets = [0, 5], sizes = [16, 1], strides = [1, 1]} : vector<16x25xf32> to vector<16x1xf32>
    %135 = vector.broadcast %134 : vector<16x1xf32> to vector<16x196xf32>
    %136 = arith.mulf %133, %135 : vector<16x196xf32>
    %137 = arith.addf %132, %136 : vector<16x196xf32>
    %c0_53 = arith.constant 0 : index
    %c126 = arith.constant 126 : index
    %138 = vector.load %arg42[%c0_53, %c126] : memref<16x452xf32, #tpu.memory_space<vmem>>, vector<16x196xf32>
    %139 = vector.extract_strided_slice %128 {offsets = [0, 10], sizes = [16, 1], strides = [1, 1]} : vector<16x25xf32> to vector<16x1xf32>
    %140 = vector.broadcast %139 : vector<16x1xf32> to vector<16x196xf32>
    %141 = arith.mulf %138, %140 : vector<16x196xf32>
    %142 = arith.addf %137, %141 : vector<16x196xf32>
    %c0_54 = arith.constant 0 : index
    %c140 = arith.constant 140 : index
    %143 = vector.load %arg42[%c0_54, %c140] : memref<16x452xf32, #tpu.memory_space<vmem>>, vector<16x196xf32>
    %144 = vector.extract_strided_slice %128 {offsets = [0, 15], sizes = [16, 1], strides = [1, 1]} : vector<16x25xf32> to vector<16x1xf32>
    %145 = vector.broadcast %144 : vector<16x1xf32> to vector<16x196xf32>
    %146 = arith.mulf %143, %145 : vector<16x196xf32>
    %147 = arith.addf %142, %146 : vector<16x196xf32>
    %c0_55 = arith.constant 0 : index
    %c154 = arith.constant 154 : index
    %148 = vector.load %arg42[%c0_55, %c154] : memref<16x452xf32, #tpu.memory_space<vmem>>, vector<16x196xf32>
    %149 = vector.extract_strided_slice %128 {offsets = [0, 20], sizes = [16, 1], strides = [1, 1]} : vector<16x25xf32> to vector<16x1xf32>
    %150 = vector.broadcast %149 : vector<16x1xf32> to vector<16x196xf32>
    %151 = arith.mulf %148, %150 : vector<16x196xf32>
    %152 = arith.addf %147, %151 : vector<16x196xf32>
    %153 = vector.extract_strided_slice %53 {offsets = [0, 0], sizes = [1, 196], strides = [1, 1]} : vector<5x196xf32> to vector<1x196xf32>
    %154 = vector.broadcast %153 : vector<1x196xf32> to vector<16x196xf32>
    %155 = arith.mulf %152, %154 : vector<16x196xf32>
    %c0_56 = arith.constant 0 : index
    %c99 = arith.constant 99 : index
    %156 = vector.load %arg42[%c0_56, %c99] : memref<16x452xf32, #tpu.memory_space<vmem>>, vector<16x196xf32>
    %157 = vector.extract_strided_slice %128 {offsets = [0, 1], sizes = [16, 1], strides = [1, 1]} : vector<16x25xf32> to vector<16x1xf32>
    %158 = vector.broadcast %157 : vector<16x1xf32> to vector<16x196xf32>
    %159 = arith.mulf %156, %158 : vector<16x196xf32>
    %c0_57 = arith.constant 0 : index
    %c113_58 = arith.constant 113 : index
    %160 = vector.load %arg42[%c0_57, %c113_58] : memref<16x452xf32, #tpu.memory_space<vmem>>, vector<16x196xf32>
    %161 = vector.extract_strided_slice %128 {offsets = [0, 6], sizes = [16, 1], strides = [1, 1]} : vector<16x25xf32> to vector<16x1xf32>
    %162 = vector.broadcast %161 : vector<16x1xf32> to vector<16x196xf32>
    %163 = arith.mulf %160, %162 : vector<16x196xf32>
    %164 = arith.addf %159, %163 : vector<16x196xf32>
    %c0_59 = arith.constant 0 : index
    %c127_60 = arith.constant 127 : index
    %165 = vector.load %arg42[%c0_59, %c127_60] : memref<16x452xf32, #tpu.memory_space<vmem>>, vector<16x196xf32>
    %166 = vector.extract_strided_slice %128 {offsets = [0, 11], sizes = [16, 1], strides = [1, 1]} : vector<16x25xf32> to vector<16x1xf32>
    %167 = vector.broadcast %166 : vector<16x1xf32> to vector<16x196xf32>
    %168 = arith.mulf %165, %167 : vector<16x196xf32>
    %169 = arith.addf %164, %168 : vector<16x196xf32>
    %c0_61 = arith.constant 0 : index
    %c141_62 = arith.constant 141 : index
    %170 = vector.load %arg42[%c0_61, %c141_62] : memref<16x452xf32, #tpu.memory_space<vmem>>, vector<16x196xf32>
    %171 = vector.extract_strided_slice %128 {offsets = [0, 16], sizes = [16, 1], strides = [1, 1]} : vector<16x25xf32> to vector<16x1xf32>
    %172 = vector.broadcast %171 : vector<16x1xf32> to vector<16x196xf32>
    %173 = arith.mulf %170, %172 : vector<16x196xf32>
    %174 = arith.addf %169, %173 : vector<16x196xf32>
    %c0_63 = arith.constant 0 : index
    %c155 = arith.constant 155 : index
    %175 = vector.load %arg42[%c0_63, %c155] : memref<16x452xf32, #tpu.memory_space<vmem>>, vector<16x196xf32>
    %176 = vector.extract_strided_slice %128 {offsets = [0, 21], sizes = [16, 1], strides = [1, 1]} : vector<16x25xf32> to vector<16x1xf32>
    %177 = vector.broadcast %176 : vector<16x1xf32> to vector<16x196xf32>
    %178 = arith.mulf %175, %177 : vector<16x196xf32>
    %179 = arith.addf %174, %178 : vector<16x196xf32>
    %180 = vector.extract_strided_slice %53 {offsets = [1, 0], sizes = [1, 196], strides = [1, 1]} : vector<5x196xf32> to vector<1x196xf32>
    %181 = vector.broadcast %180 : vector<1x196xf32> to vector<16x196xf32>
    %182 = arith.mulf %179, %181 : vector<16x196xf32>
    %183 = arith.addf %155, %182 : vector<16x196xf32>
    %c0_64 = arith.constant 0 : index
    %c100 = arith.constant 100 : index
    %184 = vector.load %arg42[%c0_64, %c100] : memref<16x452xf32, #tpu.memory_space<vmem>>, vector<16x196xf32>
    %185 = vector.extract_strided_slice %128 {offsets = [0, 2], sizes = [16, 1], strides = [1, 1]} : vector<16x25xf32> to vector<16x1xf32>
    %186 = vector.broadcast %185 : vector<16x1xf32> to vector<16x196xf32>
    %187 = arith.mulf %184, %186 : vector<16x196xf32>
    %c0_65 = arith.constant 0 : index
    %c114_66 = arith.constant 114 : index
    %188 = vector.load %arg42[%c0_65, %c114_66] : memref<16x452xf32, #tpu.memory_space<vmem>>, vector<16x196xf32>
    %189 = vector.extract_strided_slice %128 {offsets = [0, 7], sizes = [16, 1], strides = [1, 1]} : vector<16x25xf32> to vector<16x1xf32>
    %190 = vector.broadcast %189 : vector<16x1xf32> to vector<16x196xf32>
    %191 = arith.mulf %188, %190 : vector<16x196xf32>
    %192 = arith.addf %187, %191 : vector<16x196xf32>
    %c0_67 = arith.constant 0 : index
    %c128_68 = arith.constant 128 : index
    %193 = vector.load %arg42[%c0_67, %c128_68] : memref<16x452xf32, #tpu.memory_space<vmem>>, vector<16x196xf32>
    %194 = vector.extract_strided_slice %128 {offsets = [0, 12], sizes = [16, 1], strides = [1, 1]} : vector<16x25xf32> to vector<16x1xf32>
    %195 = vector.broadcast %194 : vector<16x1xf32> to vector<16x196xf32>
    %196 = arith.mulf %193, %195 : vector<16x196xf32>
    %197 = arith.addf %192, %196 : vector<16x196xf32>
    %c0_69 = arith.constant 0 : index
    %c142_70 = arith.constant 142 : index
    %198 = vector.load %arg42[%c0_69, %c142_70] : memref<16x452xf32, #tpu.memory_space<vmem>>, vector<16x196xf32>
    %199 = vector.extract_strided_slice %128 {offsets = [0, 17], sizes = [16, 1], strides = [1, 1]} : vector<16x25xf32> to vector<16x1xf32>
    %200 = vector.broadcast %199 : vector<16x1xf32> to vector<16x196xf32>
    %201 = arith.mulf %198, %200 : vector<16x196xf32>
    %202 = arith.addf %197, %201 : vector<16x196xf32>
    %c0_71 = arith.constant 0 : index
    %c156 = arith.constant 156 : index
    %203 = vector.load %arg42[%c0_71, %c156] : memref<16x452xf32, #tpu.memory_space<vmem>>, vector<16x196xf32>
    %204 = vector.extract_strided_slice %128 {offsets = [0, 22], sizes = [16, 1], strides = [1, 1]} : vector<16x25xf32> to vector<16x1xf32>
    %205 = vector.broadcast %204 : vector<16x1xf32> to vector<16x196xf32>
    %206 = arith.mulf %203, %205 : vector<16x196xf32>
    %207 = arith.addf %202, %206 : vector<16x196xf32>
    %208 = vector.extract_strided_slice %53 {offsets = [2, 0], sizes = [1, 196], strides = [1, 1]} : vector<5x196xf32> to vector<1x196xf32>
    %209 = vector.broadcast %208 : vector<1x196xf32> to vector<16x196xf32>
    %210 = arith.mulf %207, %209 : vector<16x196xf32>
    %211 = arith.addf %183, %210 : vector<16x196xf32>
    %c0_72 = arith.constant 0 : index
    %c101 = arith.constant 101 : index
    %212 = vector.load %arg42[%c0_72, %c101] : memref<16x452xf32, #tpu.memory_space<vmem>>, vector<16x196xf32>
    %213 = vector.extract_strided_slice %128 {offsets = [0, 3], sizes = [16, 1], strides = [1, 1]} : vector<16x25xf32> to vector<16x1xf32>
    %214 = vector.broadcast %213 : vector<16x1xf32> to vector<16x196xf32>
    %215 = arith.mulf %212, %214 : vector<16x196xf32>
    %c0_73 = arith.constant 0 : index
    %c115_74 = arith.constant 115 : index
    %216 = vector.load %arg42[%c0_73, %c115_74] : memref<16x452xf32, #tpu.memory_space<vmem>>, vector<16x196xf32>
    %217 = vector.extract_strided_slice %128 {offsets = [0, 8], sizes = [16, 1], strides = [1, 1]} : vector<16x25xf32> to vector<16x1xf32>
    %218 = vector.broadcast %217 : vector<16x1xf32> to vector<16x196xf32>
    %219 = arith.mulf %216, %218 : vector<16x196xf32>
    %220 = arith.addf %215, %219 : vector<16x196xf32>
    %c0_75 = arith.constant 0 : index
    %c129_76 = arith.constant 129 : index
    %221 = vector.load %arg42[%c0_75, %c129_76] : memref<16x452xf32, #tpu.memory_space<vmem>>, vector<16x196xf32>
    %222 = vector.extract_strided_slice %128 {offsets = [0, 13], sizes = [16, 1], strides = [1, 1]} : vector<16x25xf32> to vector<16x1xf32>
    %223 = vector.broadcast %222 : vector<16x1xf32> to vector<16x196xf32>
    %224 = arith.mulf %221, %223 : vector<16x196xf32>
    %225 = arith.addf %220, %224 : vector<16x196xf32>
    %c0_77 = arith.constant 0 : index
    %c143_78 = arith.constant 143 : index
    %226 = vector.load %arg42[%c0_77, %c143_78] : memref<16x452xf32, #tpu.memory_space<vmem>>, vector<16x196xf32>
    %227 = vector.extract_strided_slice %128 {offsets = [0, 18], sizes = [16, 1], strides = [1, 1]} : vector<16x25xf32> to vector<16x1xf32>
    %228 = vector.broadcast %227 : vector<16x1xf32> to vector<16x196xf32>
    %229 = arith.mulf %226, %228 : vector<16x196xf32>
    %230 = arith.addf %225, %229 : vector<16x196xf32>
    %c0_79 = arith.constant 0 : index
    %c157 = arith.constant 157 : index
    %231 = vector.load %arg42[%c0_79, %c157] : memref<16x452xf32, #tpu.memory_space<vmem>>, vector<16x196xf32>
    %232 = vector.extract_strided_slice %128 {offsets = [0, 23], sizes = [16, 1], strides = [1, 1]} : vector<16x25xf32> to vector<16x1xf32>
    %233 = vector.broadcast %232 : vector<16x1xf32> to vector<16x196xf32>
    %234 = arith.mulf %231, %233 : vector<16x196xf32>
    %235 = arith.addf %230, %234 : vector<16x196xf32>
    %236 = vector.extract_strided_slice %53 {offsets = [3, 0], sizes = [1, 196], strides = [1, 1]} : vector<5x196xf32> to vector<1x196xf32>
    %237 = vector.broadcast %236 : vector<1x196xf32> to vector<16x196xf32>
    %238 = arith.mulf %235, %237 : vector<16x196xf32>
    %239 = arith.addf %211, %238 : vector<16x196xf32>
    %c0_80 = arith.constant 0 : index
    %c102 = arith.constant 102 : index
    %240 = vector.load %arg42[%c0_80, %c102] : memref<16x452xf32, #tpu.memory_space<vmem>>, vector<16x196xf32>
    %241 = vector.extract_strided_slice %128 {offsets = [0, 4], sizes = [16, 1], strides = [1, 1]} : vector<16x25xf32> to vector<16x1xf32>
    %242 = vector.broadcast %241 : vector<16x1xf32> to vector<16x196xf32>
    %243 = arith.mulf %240, %242 : vector<16x196xf32>
    %c0_81 = arith.constant 0 : index
    %c116 = arith.constant 116 : index
    %244 = vector.load %arg42[%c0_81, %c116] : memref<16x452xf32, #tpu.memory_space<vmem>>, vector<16x196xf32>
    %245 = vector.extract_strided_slice %128 {offsets = [0, 9], sizes = [16, 1], strides = [1, 1]} : vector<16x25xf32> to vector<16x1xf32>
    %246 = vector.broadcast %245 : vector<16x1xf32> to vector<16x196xf32>
    %247 = arith.mulf %244, %246 : vector<16x196xf32>
    %248 = arith.addf %243, %247 : vector<16x196xf32>
    %c0_82 = arith.constant 0 : index
    %c130 = arith.constant 130 : index
    %249 = vector.load %arg42[%c0_82, %c130] : memref<16x452xf32, #tpu.memory_space<vmem>>, vector<16x196xf32>
    %250 = vector.extract_strided_slice %128 {offsets = [0, 14], sizes = [16, 1], strides = [1, 1]} : vector<16x25xf32> to vector<16x1xf32>
    %251 = vector.broadcast %250 : vector<16x1xf32> to vector<16x196xf32>
    %252 = arith.mulf %249, %251 : vector<16x196xf32>
    %253 = arith.addf %248, %252 : vector<16x196xf32>
    %c0_83 = arith.constant 0 : index
    %c144 = arith.constant 144 : index
    %254 = vector.load %arg42[%c0_83, %c144] : memref<16x452xf32, #tpu.memory_space<vmem>>, vector<16x196xf32>
    %255 = vector.extract_strided_slice %128 {offsets = [0, 19], sizes = [16, 1], strides = [1, 1]} : vector<16x25xf32> to vector<16x1xf32>
    %256 = vector.broadcast %255 : vector<16x1xf32> to vector<16x196xf32>
    %257 = arith.mulf %254, %256 : vector<16x196xf32>
    %258 = arith.addf %253, %257 : vector<16x196xf32>
    %c0_84 = arith.constant 0 : index
    %c158 = arith.constant 158 : index
    %259 = vector.load %arg42[%c0_84, %c158] : memref<16x452xf32, #tpu.memory_space<vmem>>, vector<16x196xf32>
    %260 = vector.extract_strided_slice %128 {offsets = [0, 24], sizes = [16, 1], strides = [1, 1]} : vector<16x25xf32> to vector<16x1xf32>
    %261 = vector.broadcast %260 : vector<16x1xf32> to vector<16x196xf32>
    %262 = arith.mulf %259, %261 : vector<16x196xf32>
    %263 = arith.addf %258, %262 : vector<16x196xf32>
    %264 = vector.extract_strided_slice %53 {offsets = [4, 0], sizes = [1, 196], strides = [1, 1]} : vector<5x196xf32> to vector<1x196xf32>
    %265 = vector.broadcast %264 : vector<1x196xf32> to vector<16x196xf32>
    %266 = arith.mulf %263, %265 : vector<16x196xf32>
    %267 = arith.addf %239, %266 : vector<16x196xf32>
    %268 = arith.mulf %267, %267 : vector<16x196xf32>
    %269 = arith.mulf %267, %268 : vector<16x196xf32>
    %cst_85 = arith.constant 4.471500e-02 : f32
    %270 = vector.broadcast %cst_85 : f32 to vector<16x196xf32>
    %271 = arith.mulf %270, %269 : vector<16x196xf32>
    %272 = arith.addf %267, %271 : vector<16x196xf32>
    %cst_86 = arith.constant 0.797884583 : f32
    %273 = vector.broadcast %cst_86 : f32 to vector<16x196xf32>
    %274 = arith.mulf %273, %272 : vector<16x196xf32>
    %275 = math.tanh %274 : vector<16x196xf32>
    %cst_87 = arith.constant 1.000000e+00 : f32
    %276 = vector.broadcast %cst_87 : f32 to vector<16x196xf32>
    %277 = arith.addf %276, %275 : vector<16x196xf32>
    %cst_88 = arith.constant 5.000000e-01 : f32
    %278 = vector.broadcast %cst_88 : f32 to vector<16x196xf32>
    %279 = arith.mulf %278, %277 : vector<16x196xf32>
    %280 = arith.mulf %267, %279 : vector<16x196xf32>
    %281 = vector.extract_strided_slice %52 {offsets = [1, 0], sizes = [1, 196], strides = [1, 1]} : vector<3x196xf32> to vector<1x196xf32>
    %282 = vector.broadcast %281 : vector<1x196xf32> to vector<16x196xf32>
    %283 = arith.mulf %280, %282 : vector<16x196xf32>
    %284 = arith.addf %126, %283 : vector<16x196xf32>
    %cst_89 = arith.constant dense<0.000000e+00> : vector<16xf32>
    %285 = vector.multi_reduction <add>, %280, %cst_89 [1] : vector<16x196xf32> to vector<16xf32>
    %286 = vector.shape_cast %285 : vector<16xf32> to vector<16x1xf32>
    %cst_90 = arith.constant 1.960000e+02 : f32
    %287 = vector.broadcast %cst_90 : f32 to vector<16x1xf32>
    %288 = arith.divf %286, %287 : vector<16x1xf32>
    %289 = arith.mulf %288, %288 : vector<16x1xf32>
    %290 = arith.mulf %288, %289 : vector<16x1xf32>
    %cst_91 = arith.constant 4.471500e-02 : f32
    %291 = vector.broadcast %cst_91 : f32 to vector<16x1xf32>
    %292 = arith.mulf %291, %290 : vector<16x1xf32>
    %293 = arith.addf %288, %292 : vector<16x1xf32>
    %cst_92 = arith.constant 0.797884583 : f32
    %294 = vector.broadcast %cst_92 : f32 to vector<16x1xf32>
    %295 = arith.mulf %294, %293 : vector<16x1xf32>
    %296 = math.tanh %295 : vector<16x1xf32>
    %cst_93 = arith.constant 1.000000e+00 : f32
    %297 = vector.broadcast %cst_93 : f32 to vector<16x1xf32>
    %298 = arith.addf %297, %296 : vector<16x1xf32>
    %cst_94 = arith.constant 5.000000e-01 : f32
    %299 = vector.broadcast %cst_94 : f32 to vector<16x1xf32>
    %300 = arith.mulf %299, %298 : vector<16x1xf32>
    %301 = arith.mulf %288, %300 : vector<16x1xf32>
    %302 = vector.extract_strided_slice %52 {offsets = [2, 0], sizes = [1, 196], strides = [1, 1]} : vector<3x196xf32> to vector<1x196xf32>
    %303 = vector.broadcast %301 : vector<16x1xf32> to vector<16x196xf32>
    %304 = vector.broadcast %302 : vector<1x196xf32> to vector<16x196xf32>
    %305 = arith.mulf %303, %304 : vector<16x196xf32>
    %306 = arith.addf %284, %305 : vector<16x196xf32>
    %c0_95 = arith.constant 0 : index
    %c0_96 = arith.constant 0 : index
    %307 = vector.load %arg11[%c0_95, %c0_96] : memref<16x16xf32, #tpu.memory_space<vmem>>, vector<16x16xf32>
    %cst_97 = arith.constant dense<0.000000e+00> : vector<16x196xf32>
    %308 = tpu.matmul %307, %306, %cst_97 {dimension_numbers = #tpu.dot_dimension_numbers<[1], [0], [0], [1], [0, 0, 1, 1], [], []>} : vector<16x16xf32>, vector<16x196xf32>, vector<16x196xf32> -> vector<16x196xf32>
    %c0_98 = arith.constant 0 : index
    %c0_99 = arith.constant 0 : index
    %309 = vector.load %arg12[%c0_98, %c0_99] : memref<16x1xf32, #tpu.memory_space<vmem>>, vector<16x1xf32>
    %310 = vector.broadcast %309 : vector<16x1xf32> to vector<16x196xf32>
    %311 = arith.addf %308, %310 : vector<16x196xf32>
    %312 = arith.mulf %50, %311 : vector<16x196xf32>
    %c0_100 = arith.constant 0 : index
    %c0_101 = arith.constant 0 : index
    %313 = vector.load %arg13[%c0_100, %c0_101] : memref<16x16xf32, #tpu.memory_space<vmem>>, vector<16x16xf32>
    %cst_102 = arith.constant dense<0.000000e+00> : vector<16x196xf32>
    %314 = tpu.matmul %313, %312, %cst_102 {dimension_numbers = #tpu.dot_dimension_numbers<[1], [0], [0], [1], [0, 0, 1, 1], [], []>} : vector<16x16xf32>, vector<16x196xf32>, vector<16x196xf32> -> vector<16x196xf32>
    %c0_103 = arith.constant 0 : index
    %c0_104 = arith.constant 0 : index
    %315 = vector.load %arg14[%c0_103, %c0_104] : memref<16x1xf32, #tpu.memory_space<vmem>>, vector<16x1xf32>
    %316 = vector.broadcast %315 : vector<16x1xf32> to vector<16x196xf32>
    %317 = arith.addf %314, %316 : vector<16x196xf32>
    %318 = arith.addf %28, %317 : vector<16x196xf32>
    %cst_105 = arith.constant dense<0.000000e+00> : vector<196xf32>
    %319 = vector.multi_reduction <add>, %318, %cst_105 [0] : vector<16x196xf32> to vector<196xf32>
    %320 = vector.shape_cast %319 : vector<196xf32> to vector<1x196xf32>
    %cst_106 = arith.constant 1.600000e+01 : f32
    %321 = vector.broadcast %cst_106 : f32 to vector<1x196xf32>
    %322 = arith.divf %320, %321 : vector<1x196xf32>
    %323 = vector.broadcast %322 : vector<1x196xf32> to vector<16x196xf32>
    %324 = arith.subf %318, %323 : vector<16x196xf32>
    %325 = arith.mulf %324, %324 : vector<16x196xf32>
    %cst_107 = arith.constant dense<0.000000e+00> : vector<196xf32>
    %326 = vector.multi_reduction <add>, %325, %cst_107 [0] : vector<16x196xf32> to vector<196xf32>
    %327 = vector.shape_cast %326 : vector<196xf32> to vector<1x196xf32>
    %cst_108 = arith.constant 1.600000e+01 : f32
    %328 = vector.broadcast %cst_108 : f32 to vector<1x196xf32>
    %329 = arith.divf %327, %328 : vector<1x196xf32>
    %cst_109 = arith.constant 9.99999974E-6 : f32
    %330 = vector.broadcast %cst_109 : f32 to vector<1x196xf32>
    %331 = arith.addf %329, %330 : vector<1x196xf32>
    %332 = math.rsqrt %331 : vector<1x196xf32>
    %333 = vector.broadcast %332 : vector<1x196xf32> to vector<16x196xf32>
    %334 = arith.mulf %324, %333 : vector<16x196xf32>
    %c0_110 = arith.constant 0 : index
    %c0_111 = arith.constant 0 : index
    %335 = vector.load %arg15[%c0_110, %c0_111] : memref<64x16xf32, #tpu.memory_space<vmem>>, vector<64x16xf32>
    %cst_112 = arith.constant dense<0.000000e+00> : vector<64x196xf32>
    %336 = tpu.matmul %335, %334, %cst_112 {dimension_numbers = #tpu.dot_dimension_numbers<[1], [0], [0], [1], [0, 0, 1, 1], [], []>} : vector<64x16xf32>, vector<16x196xf32>, vector<64x196xf32> -> vector<64x196xf32>
    %c0_113 = arith.constant 0 : index
    %c0_114 = arith.constant 0 : index
    %337 = vector.load %arg16[%c0_113, %c0_114] : memref<64x1xf32, #tpu.memory_space<vmem>>, vector<64x1xf32>
    %338 = vector.broadcast %337 : vector<64x1xf32> to vector<64x196xf32>
    %339 = arith.addf %336, %338 : vector<64x196xf32>
    %340 = arith.mulf %339, %339 : vector<64x196xf32>
    %341 = arith.mulf %339, %340 : vector<64x196xf32>
    %cst_115 = arith.constant 4.471500e-02 : f32
    %342 = vector.broadcast %cst_115 : f32 to vector<64x196xf32>
    %343 = arith.mulf %342, %341 : vector<64x196xf32>
    %344 = arith.addf %339, %343 : vector<64x196xf32>
    %cst_116 = arith.constant 0.797884583 : f32
    %345 = vector.broadcast %cst_116 : f32 to vector<64x196xf32>
    %346 = arith.mulf %345, %344 : vector<64x196xf32>
    %347 = math.tanh %346 : vector<64x196xf32>
    %cst_117 = arith.constant 1.000000e+00 : f32
    %348 = vector.broadcast %cst_117 : f32 to vector<64x196xf32>
    %349 = arith.addf %348, %347 : vector<64x196xf32>
    %cst_118 = arith.constant 5.000000e-01 : f32
    %350 = vector.broadcast %cst_118 : f32 to vector<64x196xf32>
    %351 = arith.mulf %350, %349 : vector<64x196xf32>
    %352 = arith.mulf %339, %351 : vector<64x196xf32>
    %c0_119 = arith.constant 0 : index
    %c0_120 = arith.constant 0 : index
    %353 = vector.load %arg17[%c0_119, %c0_120] : memref<16x64xf32, #tpu.memory_space<vmem>>, vector<16x64xf32>
    %cst_121 = arith.constant dense<0.000000e+00> : vector<16x196xf32>
    %354 = tpu.matmul %353, %352, %cst_121 {dimension_numbers = #tpu.dot_dimension_numbers<[1], [0], [0], [1], [0, 0, 1, 1], [], []>} : vector<16x64xf32>, vector<64x196xf32>, vector<16x196xf32> -> vector<16x196xf32>
    %c0_122 = arith.constant 0 : index
    %c0_123 = arith.constant 0 : index
    %355 = vector.load %arg18[%c0_122, %c0_123] : memref<16x1xf32, #tpu.memory_space<vmem>>, vector<16x1xf32>
    %356 = vector.broadcast %355 : vector<16x1xf32> to vector<16x196xf32>
    %357 = arith.addf %354, %356 : vector<16x196xf32>
    %358 = arith.addf %318, %357 : vector<16x196xf32>
    %c0_124 = arith.constant 0 : index
    %c0_125 = arith.constant 0 : index
    %c0_126 = arith.constant 0 : index
    %359 = vector.load %arg19[%c0_124, %c0_125, %c0_126] : memref<4x196x49xf32, #tpu.memory_space<vmem>>, vector<1x196x49xf32>
    %360 = vector.shape_cast %359 : vector<1x196x49xf32> to vector<196x49xf32>
    %cst_127 = arith.constant dense<0.000000e+00> : vector<16x49xf32>
    %361 = tpu.matmul %358, %360, %cst_127 {dimension_numbers = #tpu.dot_dimension_numbers<[1], [0], [0], [1], [0, 0, 1, 1], [], []>} : vector<16x196xf32>, vector<196x49xf32>, vector<16x49xf32> -> vector<16x49xf32>
    %c0_128 = arith.constant 0 : index
    %c0_129 = arith.constant 0 : index
    %c0_130 = arith.constant 0 : index
    %362 = vector.load %arg20[%c0_128, %c0_129, %c0_130] : memref<4x32x16xf32, #tpu.memory_space<vmem>>, vector<1x32x16xf32>
    %363 = vector.shape_cast %362 : vector<1x32x16xf32> to vector<32x16xf32>
    %cst_131 = arith.constant dense<0.000000e+00> : vector<32x49xf32>
    %364 = tpu.matmul %363, %361, %cst_131 {dimension_numbers = #tpu.dot_dimension_numbers<[1], [0], [0], [1], [0, 0, 1, 1], [], []>} : vector<32x16xf32>, vector<16x49xf32>, vector<32x49xf32> -> vector<32x49xf32>
    %c1 = arith.constant 1 : index
    %c0_132 = arith.constant 0 : index
    %c0_133 = arith.constant 0 : index
    %365 = vector.load %arg19[%c1, %c0_132, %c0_133] : memref<4x196x49xf32, #tpu.memory_space<vmem>>, vector<1x196x49xf32>
    %366 = vector.shape_cast %365 : vector<1x196x49xf32> to vector<196x49xf32>
    %cst_134 = arith.constant dense<0.000000e+00> : vector<16x49xf32>
    %367 = tpu.matmul %358, %366, %cst_134 {dimension_numbers = #tpu.dot_dimension_numbers<[1], [0], [0], [1], [0, 0, 1, 1], [], []>} : vector<16x196xf32>, vector<196x49xf32>, vector<16x49xf32> -> vector<16x49xf32>
    %c1_135 = arith.constant 1 : index
    %c0_136 = arith.constant 0 : index
    %c0_137 = arith.constant 0 : index
    %368 = vector.load %arg20[%c1_135, %c0_136, %c0_137] : memref<4x32x16xf32, #tpu.memory_space<vmem>>, vector<1x32x16xf32>
    %369 = vector.shape_cast %368 : vector<1x32x16xf32> to vector<32x16xf32>
    %cst_138 = arith.constant dense<0.000000e+00> : vector<32x49xf32>
    %370 = tpu.matmul %369, %367, %cst_138 {dimension_numbers = #tpu.dot_dimension_numbers<[1], [0], [0], [1], [0, 0, 1, 1], [], []>} : vector<32x16xf32>, vector<16x49xf32>, vector<32x49xf32> -> vector<32x49xf32>
    %371 = arith.addf %364, %370 : vector<32x49xf32>
    %c2 = arith.constant 2 : index
    %c0_139 = arith.constant 0 : index
    %c0_140 = arith.constant 0 : index
    %372 = vector.load %arg19[%c2, %c0_139, %c0_140] : memref<4x196x49xf32, #tpu.memory_space<vmem>>, vector<1x196x49xf32>
    %373 = vector.shape_cast %372 : vector<1x196x49xf32> to vector<196x49xf32>
    %cst_141 = arith.constant dense<0.000000e+00> : vector<16x49xf32>
    %374 = tpu.matmul %358, %373, %cst_141 {dimension_numbers = #tpu.dot_dimension_numbers<[1], [0], [0], [1], [0, 0, 1, 1], [], []>} : vector<16x196xf32>, vector<196x49xf32>, vector<16x49xf32> -> vector<16x49xf32>
    %c2_142 = arith.constant 2 : index
    %c0_143 = arith.constant 0 : index
    %c0_144 = arith.constant 0 : index
    %375 = vector.load %arg20[%c2_142, %c0_143, %c0_144] : memref<4x32x16xf32, #tpu.memory_space<vmem>>, vector<1x32x16xf32>
    %376 = vector.shape_cast %375 : vector<1x32x16xf32> to vector<32x16xf32>
    %cst_145 = arith.constant dense<0.000000e+00> : vector<32x49xf32>
    %377 = tpu.matmul %376, %374, %cst_145 {dimension_numbers = #tpu.dot_dimension_numbers<[1], [0], [0], [1], [0, 0, 1, 1], [], []>} : vector<32x16xf32>, vector<16x49xf32>, vector<32x49xf32> -> vector<32x49xf32>
    %378 = arith.addf %371, %377 : vector<32x49xf32>
    %c3 = arith.constant 3 : index
    %c0_146 = arith.constant 0 : index
    %c0_147 = arith.constant 0 : index
    %379 = vector.load %arg19[%c3, %c0_146, %c0_147] : memref<4x196x49xf32, #tpu.memory_space<vmem>>, vector<1x196x49xf32>
    %380 = vector.shape_cast %379 : vector<1x196x49xf32> to vector<196x49xf32>
    %cst_148 = arith.constant dense<0.000000e+00> : vector<16x49xf32>
    %381 = tpu.matmul %358, %380, %cst_148 {dimension_numbers = #tpu.dot_dimension_numbers<[1], [0], [0], [1], [0, 0, 1, 1], [], []>} : vector<16x196xf32>, vector<196x49xf32>, vector<16x49xf32> -> vector<16x49xf32>
    %c3_149 = arith.constant 3 : index
    %c0_150 = arith.constant 0 : index
    %c0_151 = arith.constant 0 : index
    %382 = vector.load %arg20[%c3_149, %c0_150, %c0_151] : memref<4x32x16xf32, #tpu.memory_space<vmem>>, vector<1x32x16xf32>
    %383 = vector.shape_cast %382 : vector<1x32x16xf32> to vector<32x16xf32>
    %cst_152 = arith.constant dense<0.000000e+00> : vector<32x49xf32>
    %384 = tpu.matmul %383, %381, %cst_152 {dimension_numbers = #tpu.dot_dimension_numbers<[1], [0], [0], [1], [0, 0, 1, 1], [], []>} : vector<32x16xf32>, vector<16x49xf32>, vector<32x49xf32> -> vector<32x49xf32>
    %385 = arith.addf %378, %384 : vector<32x49xf32>
    %c0_153 = arith.constant 0 : index
    %c0_154 = arith.constant 0 : index
    %386 = vector.load %arg21[%c0_153, %c0_154] : memref<32x1xf32, #tpu.memory_space<vmem>>, vector<32x1xf32>
    %387 = vector.broadcast %386 : vector<32x1xf32> to vector<32x49xf32>
    %388 = arith.addf %385, %387 : vector<32x49xf32>
    %c0_155 = arith.constant 0 : index
    %c0_156 = arith.constant 0 : index
    %389 = vector.load %arg22[%c0_155, %c0_156] : memref<32x1xf32, #tpu.memory_space<vmem>>, vector<32x1xf32>
    %c0_157 = arith.constant 0 : index
    %c0_158 = arith.constant 0 : index
    %390 = vector.load %arg23[%c0_157, %c0_158] : memref<32x1xf32, #tpu.memory_space<vmem>>, vector<32x1xf32>
    %cst_159 = arith.constant dense<0.000000e+00> : vector<49xf32>
    %391 = vector.multi_reduction <add>, %388, %cst_159 [0] : vector<32x49xf32> to vector<49xf32>
    %392 = vector.shape_cast %391 : vector<49xf32> to vector<1x49xf32>
    %cst_160 = arith.constant 3.200000e+01 : f32
    %393 = vector.broadcast %cst_160 : f32 to vector<1x49xf32>
    %394 = arith.divf %392, %393 : vector<1x49xf32>
    %395 = vector.broadcast %394 : vector<1x49xf32> to vector<32x49xf32>
    %396 = arith.subf %388, %395 : vector<32x49xf32>
    %397 = arith.mulf %396, %396 : vector<32x49xf32>
    %cst_161 = arith.constant dense<0.000000e+00> : vector<49xf32>
    %398 = vector.multi_reduction <add>, %397, %cst_161 [0] : vector<32x49xf32> to vector<49xf32>
    %399 = vector.shape_cast %398 : vector<49xf32> to vector<1x49xf32>
    %cst_162 = arith.constant 3.200000e+01 : f32
    %400 = vector.broadcast %cst_162 : f32 to vector<1x49xf32>
    %401 = arith.divf %399, %400 : vector<1x49xf32>
    %cst_163 = arith.constant 9.99999974E-6 : f32
    %402 = vector.broadcast %cst_163 : f32 to vector<1x49xf32>
    %403 = arith.addf %401, %402 : vector<1x49xf32>
    %404 = math.rsqrt %403 : vector<1x49xf32>
    %405 = vector.broadcast %404 : vector<1x49xf32> to vector<32x49xf32>
    %406 = arith.mulf %396, %405 : vector<32x49xf32>
    %407 = vector.broadcast %389 : vector<32x1xf32> to vector<32x49xf32>
    %408 = arith.mulf %406, %407 : vector<32x49xf32>
    %409 = vector.broadcast %390 : vector<32x1xf32> to vector<32x49xf32>
    %410 = arith.addf %408, %409 : vector<32x49xf32>
    %c0_164 = arith.constant 0 : index
    %c0_165 = arith.constant 0 : index
    %c0_166 = arith.constant 0 : index
    %411 = vector.load %arg39[%c0_164, %c0_165, %c0_166] : memref<1x32x49xf32, #tpu.memory_space<vmem>>, vector<1x32x49xf32>
    %412 = vector.shape_cast %411 : vector<1x32x49xf32> to vector<32x49xf32>
    %413 = vector.shape_cast %410 : vector<32x49xf32> to vector<1x32x49xf32>
    tpu.vector_store %arg39[%c0_164, %c0_165, %c0_166], %413 {strides = array<i32>} : memref<1x32x49xf32, #tpu.memory_space<vmem>>, vector<1x32x49xf32>,
    %cst_167 = arith.constant dense<0.000000e+00> : vector<49xf32>
    %414 = vector.multi_reduction <add>, %410, %cst_167 [0] : vector<32x49xf32> to vector<49xf32>
    %415 = vector.shape_cast %414 : vector<49xf32> to vector<1x49xf32>
    %cst_168 = arith.constant 3.200000e+01 : f32
    %416 = vector.broadcast %cst_168 : f32 to vector<1x49xf32>
    %417 = arith.divf %415, %416 : vector<1x49xf32>
    %418 = vector.broadcast %417 : vector<1x49xf32> to vector<32x49xf32>
    %419 = arith.subf %410, %418 : vector<32x49xf32>
    %420 = arith.mulf %419, %419 : vector<32x49xf32>
    %cst_169 = arith.constant dense<0.000000e+00> : vector<49xf32>
    %421 = vector.multi_reduction <add>, %420, %cst_169 [0] : vector<32x49xf32> to vector<49xf32>
    %422 = vector.shape_cast %421 : vector<49xf32> to vector<1x49xf32>
    %cst_170 = arith.constant 3.200000e+01 : f32
    %423 = vector.broadcast %cst_170 : f32 to vector<1x49xf32>
    %424 = arith.divf %422, %423 : vector<1x49xf32>
    %cst_171 = arith.constant 9.99999974E-6 : f32
    %425 = vector.broadcast %cst_171 : f32 to vector<1x49xf32>
    %426 = arith.addf %424, %425 : vector<1x49xf32>
    %427 = math.rsqrt %426 : vector<1x49xf32>
    %428 = vector.broadcast %427 : vector<1x49xf32> to vector<32x49xf32>
    %429 = arith.mulf %419, %428 : vector<32x49xf32>
    %c0_172 = arith.constant 0 : index
    %c0_173 = arith.constant 0 : index
    %430 = vector.load %arg27[%c0_172, %c0_173] : memref<67x32xf32, #tpu.memory_space<vmem>>, vector<67x32xf32>
    %cst_174 = arith.constant dense<0.000000e+00> : vector<67x49xf32>
    %431 = tpu.matmul %430, %429, %cst_174 {dimension_numbers = #tpu.dot_dimension_numbers<[1], [0], [0], [1], [0, 0, 1, 1], [], []>} : vector<67x32xf32>, vector<32x49xf32>, vector<67x49xf32> -> vector<67x49xf32>
    %c0_175 = arith.constant 0 : index
    %c0_176 = arith.constant 0 : index
    %432 = vector.load %arg28[%c0_175, %c0_176] : memref<67x1xf32, #tpu.memory_space<vmem>>, vector<67x1xf32>
    %433 = vector.broadcast %432 : vector<67x1xf32> to vector<67x49xf32>
    %434 = arith.addf %431, %433 : vector<67x49xf32>
    %435 = vector.extract_strided_slice %434 {offsets = [0, 0], sizes = [32, 49], strides = [1, 1]} : vector<67x49xf32> to vector<32x49xf32>
    %436 = vector.extract_strided_slice %434 {offsets = [32, 0], sizes = [32, 49], strides = [1, 1]} : vector<67x49xf32> to vector<32x49xf32>
    %437 = vector.extract_strided_slice %434 {offsets = [64, 0], sizes = [3, 49], strides = [1, 1]} : vector<67x49xf32> to vector<3x49xf32>
    %c0_177 = arith.constant 0 : index
    %c0_178 = arith.constant 0 : index
    %438 = vector.load %arg24[%c0_177, %c0_178] : memref<5x49xf32, #tpu.memory_space<vmem>>, vector<5x49xf32>
    %cst_179 = arith.constant 0.000000e+00 : f32
    %439 = vector.broadcast %cst_179 : f32 to vector<32x305xf32>
    %c0_180 = arith.constant 0 : index
    %c0_181 = arith.constant 0 : index
    %440 = vector.load %arg43[%c0_180, %c0_181] : memref<32x305xf32, #tpu.memory_space<vmem>>, vector<32x305xf32>
    tpu.vector_store %arg43[%c0_180, %c0_181], %439 {strides = array<i32>} : memref<32x305xf32, #tpu.memory_space<vmem>>, vector<32x305xf32>,
    %c0_182 = arith.constant 0 : index
    %c128_183 = arith.constant 128 : index
    %441 = vector.load %arg43[%c0_182, %c128_183] : memref<32x305xf32, #tpu.memory_space<vmem>>, vector<32x49xf32>
    tpu.vector_store %arg43[%c0_182, %c128_183], %436 {strides = array<i32>} : memref<32x305xf32, #tpu.memory_space<vmem>>, vector<32x49xf32>,
    %c0_184 = arith.constant 0 : index
    %c0_185 = arith.constant 0 : index
    %442 = vector.load %arg25[%c0_184, %c0_185] : memref<32x9xf32, #tpu.memory_space<vmem>>, vector<32x9xf32>
    %c0_186 = arith.constant 0 : index
    %c120 = arith.constant 120 : index
    %443 = vector.load %arg43[%c0_186, %c120] : memref<32x305xf32, #tpu.memory_space<vmem>>, vector<32x49xf32>
    %444 = vector.extract_strided_slice %442 {offsets = [0, 0], sizes = [32, 1], strides = [1, 1]} : vector<32x9xf32> to vector<32x1xf32>
    %445 = vector.broadcast %444 : vector<32x1xf32> to vector<32x49xf32>
    %446 = arith.mulf %443, %445 : vector<32x49xf32>
    %c0_187 = arith.constant 0 : index
    %c127_188 = arith.constant 127 : index
    %447 = vector.load %arg43[%c0_187, %c127_188] : memref<32x305xf32, #tpu.memory_space<vmem>>, vector<32x49xf32>
    %448 = vector.extract_strided_slice %442 {offsets = [0, 3], sizes = [32, 1], strides = [1, 1]} : vector<32x9xf32> to vector<32x1xf32>
    %449 = vector.broadcast %448 : vector<32x1xf32> to vector<32x49xf32>
    %450 = arith.mulf %447, %449 : vector<32x49xf32>
    %451 = arith.addf %446, %450 : vector<32x49xf32>
    %c0_189 = arith.constant 0 : index
    %c134 = arith.constant 134 : index
    %452 = vector.load %arg43[%c0_189, %c134] : memref<32x305xf32, #tpu.memory_space<vmem>>, vector<32x49xf32>
    %453 = vector.extract_strided_slice %442 {offsets = [0, 6], sizes = [32, 1], strides = [1, 1]} : vector<32x9xf32> to vector<32x1xf32>
    %454 = vector.broadcast %453 : vector<32x1xf32> to vector<32x49xf32>
    %455 = arith.mulf %452, %454 : vector<32x49xf32>
    %456 = arith.addf %451, %455 : vector<32x49xf32>
    %457 = vector.extract_strided_slice %438 {offsets = [1, 0], sizes = [1, 49], strides = [1, 1]} : vector<5x49xf32> to vector<1x49xf32>
    %458 = vector.broadcast %457 : vector<1x49xf32> to vector<32x49xf32>
    %459 = arith.mulf %456, %458 : vector<32x49xf32>
    %c0_190 = arith.constant 0 : index
    %c121 = arith.constant 121 : index
    %460 = vector.load %arg43[%c0_190, %c121] : memref<32x305xf32, #tpu.memory_space<vmem>>, vector<32x49xf32>
    %461 = vector.extract_strided_slice %442 {offsets = [0, 1], sizes = [32, 1], strides = [1, 1]} : vector<32x9xf32> to vector<32x1xf32>
    %462 = vector.broadcast %461 : vector<32x1xf32> to vector<32x49xf32>
    %463 = arith.mulf %460, %462 : vector<32x49xf32>
    %c0_191 = arith.constant 0 : index
    %c128_192 = arith.constant 128 : index
    %464 = vector.load %arg43[%c0_191, %c128_192] : memref<32x305xf32, #tpu.memory_space<vmem>>, vector<32x49xf32>
    %465 = vector.extract_strided_slice %442 {offsets = [0, 4], sizes = [32, 1], strides = [1, 1]} : vector<32x9xf32> to vector<32x1xf32>
    %466 = vector.broadcast %465 : vector<32x1xf32> to vector<32x49xf32>
    %467 = arith.mulf %464, %466 : vector<32x49xf32>
    %468 = arith.addf %463, %467 : vector<32x49xf32>
    %c0_193 = arith.constant 0 : index
    %c135 = arith.constant 135 : index
    %469 = vector.load %arg43[%c0_193, %c135] : memref<32x305xf32, #tpu.memory_space<vmem>>, vector<32x49xf32>
    %470 = vector.extract_strided_slice %442 {offsets = [0, 7], sizes = [32, 1], strides = [1, 1]} : vector<32x9xf32> to vector<32x1xf32>
    %471 = vector.broadcast %470 : vector<32x1xf32> to vector<32x49xf32>
    %472 = arith.mulf %469, %471 : vector<32x49xf32>
    %473 = arith.addf %468, %472 : vector<32x49xf32>
    %474 = vector.extract_strided_slice %438 {offsets = [2, 0], sizes = [1, 49], strides = [1, 1]} : vector<5x49xf32> to vector<1x49xf32>
    %475 = vector.broadcast %474 : vector<1x49xf32> to vector<32x49xf32>
    %476 = arith.mulf %473, %475 : vector<32x49xf32>
    %477 = arith.addf %459, %476 : vector<32x49xf32>
    %c0_194 = arith.constant 0 : index
    %c122 = arith.constant 122 : index
    %478 = vector.load %arg43[%c0_194, %c122] : memref<32x305xf32, #tpu.memory_space<vmem>>, vector<32x49xf32>
    %479 = vector.extract_strided_slice %442 {offsets = [0, 2], sizes = [32, 1], strides = [1, 1]} : vector<32x9xf32> to vector<32x1xf32>
    %480 = vector.broadcast %479 : vector<32x1xf32> to vector<32x49xf32>
    %481 = arith.mulf %478, %480 : vector<32x49xf32>
    %c0_195 = arith.constant 0 : index
    %c129_196 = arith.constant 129 : index
    %482 = vector.load %arg43[%c0_195, %c129_196] : memref<32x305xf32, #tpu.memory_space<vmem>>, vector<32x49xf32>
    %483 = vector.extract_strided_slice %442 {offsets = [0, 5], sizes = [32, 1], strides = [1, 1]} : vector<32x9xf32> to vector<32x1xf32>
    %484 = vector.broadcast %483 : vector<32x1xf32> to vector<32x49xf32>
    %485 = arith.mulf %482, %484 : vector<32x49xf32>
    %486 = arith.addf %481, %485 : vector<32x49xf32>
    %c0_197 = arith.constant 0 : index
    %c136 = arith.constant 136 : index
    %487 = vector.load %arg43[%c0_197, %c136] : memref<32x305xf32, #tpu.memory_space<vmem>>, vector<32x49xf32>
    %488 = vector.extract_strided_slice %442 {offsets = [0, 8], sizes = [32, 1], strides = [1, 1]} : vector<32x9xf32> to vector<32x1xf32>
    %489 = vector.broadcast %488 : vector<32x1xf32> to vector<32x49xf32>
    %490 = arith.mulf %487, %489 : vector<32x49xf32>
    %491 = arith.addf %486, %490 : vector<32x49xf32>
    %492 = vector.extract_strided_slice %438 {offsets = [3, 0], sizes = [1, 49], strides = [1, 1]} : vector<5x49xf32> to vector<1x49xf32>
    %493 = vector.broadcast %492 : vector<1x49xf32> to vector<32x49xf32>
    %494 = arith.mulf %491, %493 : vector<32x49xf32>
    %495 = arith.addf %477, %494 : vector<32x49xf32>
    %496 = arith.mulf %495, %495 : vector<32x49xf32>
    %497 = arith.mulf %495, %496 : vector<32x49xf32>
    %cst_198 = arith.constant 4.471500e-02 : f32
    %498 = vector.broadcast %cst_198 : f32 to vector<32x49xf32>
    %499 = arith.mulf %498, %497 : vector<32x49xf32>
    %500 = arith.addf %495, %499 : vector<32x49xf32>
    %cst_199 = arith.constant 0.797884583 : f32
    %501 = vector.broadcast %cst_199 : f32 to vector<32x49xf32>
    %502 = arith.mulf %501, %500 : vector<32x49xf32>
    %503 = math.tanh %502 : vector<32x49xf32>
    %cst_200 = arith.constant 1.000000e+00 : f32
    %504 = vector.broadcast %cst_200 : f32 to vector<32x49xf32>
    %505 = arith.addf %504, %503 : vector<32x49xf32>
    %cst_201 = arith.constant 5.000000e-01 : f32
    %506 = vector.broadcast %cst_201 : f32 to vector<32x49xf32>
    %507 = arith.mulf %506, %505 : vector<32x49xf32>
    %508 = arith.mulf %495, %507 : vector<32x49xf32>
    %509 = vector.extract_strided_slice %437 {offsets = [0, 0], sizes = [1, 49], strides = [1, 1]} : vector<3x49xf32> to vector<1x49xf32>
    %510 = vector.broadcast %509 : vector<1x49xf32> to vector<32x49xf32>
    %511 = arith.mulf %508, %510 : vector<32x49xf32>
    %c0_202 = arith.constant 0 : index
    %c128_203 = arith.constant 128 : index
    %512 = vector.load %arg43[%c0_202, %c128_203] : memref<32x305xf32, #tpu.memory_space<vmem>>, vector<32x49xf32>
    tpu.vector_store %arg43[%c0_202, %c128_203], %508 {strides = array<i32>} : memref<32x305xf32, #tpu.memory_space<vmem>>, vector<32x49xf32>,
    %c0_204 = arith.constant 0 : index
    %c0_205 = arith.constant 0 : index
    %513 = vector.load %arg26[%c0_204, %c0_205] : memref<32x25xf32, #tpu.memory_space<vmem>>, vector<32x25xf32>
    %c0_206 = arith.constant 0 : index
    %c112_207 = arith.constant 112 : index
    %514 = vector.load %arg43[%c0_206, %c112_207] : memref<32x305xf32, #tpu.memory_space<vmem>>, vector<32x49xf32>
    %515 = vector.extract_strided_slice %513 {offsets = [0, 0], sizes = [32, 1], strides = [1, 1]} : vector<32x25xf32> to vector<32x1xf32>
    %516 = vector.broadcast %515 : vector<32x1xf32> to vector<32x49xf32>
    %517 = arith.mulf %514, %516 : vector<32x49xf32>
    %c0_208 = arith.constant 0 : index
    %c119 = arith.constant 119 : index
    %518 = vector.load %arg43[%c0_208, %c119] : memref<32x305xf32, #tpu.memory_space<vmem>>, vector<32x49xf32>
    %519 = vector.extract_strided_slice %513 {offsets = [0, 5], sizes = [32, 1], strides = [1, 1]} : vector<32x25xf32> to vector<32x1xf32>
    %520 = vector.broadcast %519 : vector<32x1xf32> to vector<32x49xf32>
    %521 = arith.mulf %518, %520 : vector<32x49xf32>
    %522 = arith.addf %517, %521 : vector<32x49xf32>
    %c0_209 = arith.constant 0 : index
    %c126_210 = arith.constant 126 : index
    %523 = vector.load %arg43[%c0_209, %c126_210] : memref<32x305xf32, #tpu.memory_space<vmem>>, vector<32x49xf32>
    %524 = vector.extract_strided_slice %513 {offsets = [0, 10], sizes = [32, 1], strides = [1, 1]} : vector<32x25xf32> to vector<32x1xf32>
    %525 = vector.broadcast %524 : vector<32x1xf32> to vector<32x49xf32>
    %526 = arith.mulf %523, %525 : vector<32x49xf32>
    %527 = arith.addf %522, %526 : vector<32x49xf32>
    %c0_211 = arith.constant 0 : index
    %c133 = arith.constant 133 : index
    %528 = vector.load %arg43[%c0_211, %c133] : memref<32x305xf32, #tpu.memory_space<vmem>>, vector<32x49xf32>
    %529 = vector.extract_strided_slice %513 {offsets = [0, 15], sizes = [32, 1], strides = [1, 1]} : vector<32x25xf32> to vector<32x1xf32>
    %530 = vector.broadcast %529 : vector<32x1xf32> to vector<32x49xf32>
    %531 = arith.mulf %528, %530 : vector<32x49xf32>
    %532 = arith.addf %527, %531 : vector<32x49xf32>
    %c0_212 = arith.constant 0 : index
    %c140_213 = arith.constant 140 : index
    %533 = vector.load %arg43[%c0_212, %c140_213] : memref<32x305xf32, #tpu.memory_space<vmem>>, vector<32x49xf32>
    %534 = vector.extract_strided_slice %513 {offsets = [0, 20], sizes = [32, 1], strides = [1, 1]} : vector<32x25xf32> to vector<32x1xf32>
    %535 = vector.broadcast %534 : vector<32x1xf32> to vector<32x49xf32>
    %536 = arith.mulf %533, %535 : vector<32x49xf32>
    %537 = arith.addf %532, %536 : vector<32x49xf32>
    %538 = vector.extract_strided_slice %438 {offsets = [0, 0], sizes = [1, 49], strides = [1, 1]} : vector<5x49xf32> to vector<1x49xf32>
    %539 = vector.broadcast %538 : vector<1x49xf32> to vector<32x49xf32>
    %540 = arith.mulf %537, %539 : vector<32x49xf32>
    %c0_214 = arith.constant 0 : index
    %c113_215 = arith.constant 113 : index
    %541 = vector.load %arg43[%c0_214, %c113_215] : memref<32x305xf32, #tpu.memory_space<vmem>>, vector<32x49xf32>
    %542 = vector.extract_strided_slice %513 {offsets = [0, 1], sizes = [32, 1], strides = [1, 1]} : vector<32x25xf32> to vector<32x1xf32>
    %543 = vector.broadcast %542 : vector<32x1xf32> to vector<32x49xf32>
    %544 = arith.mulf %541, %543 : vector<32x49xf32>
    %c0_216 = arith.constant 0 : index
    %c120_217 = arith.constant 120 : index
    %545 = vector.load %arg43[%c0_216, %c120_217] : memref<32x305xf32, #tpu.memory_space<vmem>>, vector<32x49xf32>
    %546 = vector.extract_strided_slice %513 {offsets = [0, 6], sizes = [32, 1], strides = [1, 1]} : vector<32x25xf32> to vector<32x1xf32>
    %547 = vector.broadcast %546 : vector<32x1xf32> to vector<32x49xf32>
    %548 = arith.mulf %545, %547 : vector<32x49xf32>
    %549 = arith.addf %544, %548 : vector<32x49xf32>
    %c0_218 = arith.constant 0 : index
    %c127_219 = arith.constant 127 : index
    %550 = vector.load %arg43[%c0_218, %c127_219] : memref<32x305xf32, #tpu.memory_space<vmem>>, vector<32x49xf32>
    %551 = vector.extract_strided_slice %513 {offsets = [0, 11], sizes = [32, 1], strides = [1, 1]} : vector<32x25xf32> to vector<32x1xf32>
    %552 = vector.broadcast %551 : vector<32x1xf32> to vector<32x49xf32>
    %553 = arith.mulf %550, %552 : vector<32x49xf32>
    %554 = arith.addf %549, %553 : vector<32x49xf32>
    %c0_220 = arith.constant 0 : index
    %c134_221 = arith.constant 134 : index
    %555 = vector.load %arg43[%c0_220, %c134_221] : memref<32x305xf32, #tpu.memory_space<vmem>>, vector<32x49xf32>
    %556 = vector.extract_strided_slice %513 {offsets = [0, 16], sizes = [32, 1], strides = [1, 1]} : vector<32x25xf32> to vector<32x1xf32>
    %557 = vector.broadcast %556 : vector<32x1xf32> to vector<32x49xf32>
    %558 = arith.mulf %555, %557 : vector<32x49xf32>
    %559 = arith.addf %554, %558 : vector<32x49xf32>
    %c0_222 = arith.constant 0 : index
    %c141_223 = arith.constant 141 : index
    %560 = vector.load %arg43[%c0_222, %c141_223] : memref<32x305xf32, #tpu.memory_space<vmem>>, vector<32x49xf32>
    %561 = vector.extract_strided_slice %513 {offsets = [0, 21], sizes = [32, 1], strides = [1, 1]} : vector<32x25xf32> to vector<32x1xf32>
    %562 = vector.broadcast %561 : vector<32x1xf32> to vector<32x49xf32>
    %563 = arith.mulf %560, %562 : vector<32x49xf32>
    %564 = arith.addf %559, %563 : vector<32x49xf32>
    %565 = vector.extract_strided_slice %438 {offsets = [1, 0], sizes = [1, 49], strides = [1, 1]} : vector<5x49xf32> to vector<1x49xf32>
    %566 = vector.broadcast %565 : vector<1x49xf32> to vector<32x49xf32>
    %567 = arith.mulf %564, %566 : vector<32x49xf32>
    %568 = arith.addf %540, %567 : vector<32x49xf32>
    %c0_224 = arith.constant 0 : index
    %c114_225 = arith.constant 114 : index
    %569 = vector.load %arg43[%c0_224, %c114_225] : memref<32x305xf32, #tpu.memory_space<vmem>>, vector<32x49xf32>
    %570 = vector.extract_strided_slice %513 {offsets = [0, 2], sizes = [32, 1], strides = [1, 1]} : vector<32x25xf32> to vector<32x1xf32>
    %571 = vector.broadcast %570 : vector<32x1xf32> to vector<32x49xf32>
    %572 = arith.mulf %569, %571 : vector<32x49xf32>
    %c0_226 = arith.constant 0 : index
    %c121_227 = arith.constant 121 : index
    %573 = vector.load %arg43[%c0_226, %c121_227] : memref<32x305xf32, #tpu.memory_space<vmem>>, vector<32x49xf32>
    %574 = vector.extract_strided_slice %513 {offsets = [0, 7], sizes = [32, 1], strides = [1, 1]} : vector<32x25xf32> to vector<32x1xf32>
    %575 = vector.broadcast %574 : vector<32x1xf32> to vector<32x49xf32>
    %576 = arith.mulf %573, %575 : vector<32x49xf32>
    %577 = arith.addf %572, %576 : vector<32x49xf32>
    %c0_228 = arith.constant 0 : index
    %c128_229 = arith.constant 128 : index
    %578 = vector.load %arg43[%c0_228, %c128_229] : memref<32x305xf32, #tpu.memory_space<vmem>>, vector<32x49xf32>
    %579 = vector.extract_strided_slice %513 {offsets = [0, 12], sizes = [32, 1], strides = [1, 1]} : vector<32x25xf32> to vector<32x1xf32>
    %580 = vector.broadcast %579 : vector<32x1xf32> to vector<32x49xf32>
    %581 = arith.mulf %578, %580 : vector<32x49xf32>
    %582 = arith.addf %577, %581 : vector<32x49xf32>
    %c0_230 = arith.constant 0 : index
    %c135_231 = arith.constant 135 : index
    %583 = vector.load %arg43[%c0_230, %c135_231] : memref<32x305xf32, #tpu.memory_space<vmem>>, vector<32x49xf32>
    %584 = vector.extract_strided_slice %513 {offsets = [0, 17], sizes = [32, 1], strides = [1, 1]} : vector<32x25xf32> to vector<32x1xf32>
    %585 = vector.broadcast %584 : vector<32x1xf32> to vector<32x49xf32>
    %586 = arith.mulf %583, %585 : vector<32x49xf32>
    %587 = arith.addf %582, %586 : vector<32x49xf32>
    %c0_232 = arith.constant 0 : index
    %c142_233 = arith.constant 142 : index
    %588 = vector.load %arg43[%c0_232, %c142_233] : memref<32x305xf32, #tpu.memory_space<vmem>>, vector<32x49xf32>
    %589 = vector.extract_strided_slice %513 {offsets = [0, 22], sizes = [32, 1], strides = [1, 1]} : vector<32x25xf32> to vector<32x1xf32>
    %590 = vector.broadcast %589 : vector<32x1xf32> to vector<32x49xf32>
    %591 = arith.mulf %588, %590 : vector<32x49xf32>
    %592 = arith.addf %587, %591 : vector<32x49xf32>
    %593 = vector.extract_strided_slice %438 {offsets = [2, 0], sizes = [1, 49], strides = [1, 1]} : vector<5x49xf32> to vector<1x49xf32>
    %594 = vector.broadcast %593 : vector<1x49xf32> to vector<32x49xf32>
    %595 = arith.mulf %592, %594 : vector<32x49xf32>
    %596 = arith.addf %568, %595 : vector<32x49xf32>
    %c0_234 = arith.constant 0 : index
    %c115_235 = arith.constant 115 : index
    %597 = vector.load %arg43[%c0_234, %c115_235] : memref<32x305xf32, #tpu.memory_space<vmem>>, vector<32x49xf32>
    %598 = vector.extract_strided_slice %513 {offsets = [0, 3], sizes = [32, 1], strides = [1, 1]} : vector<32x25xf32> to vector<32x1xf32>
    %599 = vector.broadcast %598 : vector<32x1xf32> to vector<32x49xf32>
    %600 = arith.mulf %597, %599 : vector<32x49xf32>
    %c0_236 = arith.constant 0 : index
    %c122_237 = arith.constant 122 : index
    %601 = vector.load %arg43[%c0_236, %c122_237] : memref<32x305xf32, #tpu.memory_space<vmem>>, vector<32x49xf32>
    %602 = vector.extract_strided_slice %513 {offsets = [0, 8], sizes = [32, 1], strides = [1, 1]} : vector<32x25xf32> to vector<32x1xf32>
    %603 = vector.broadcast %602 : vector<32x1xf32> to vector<32x49xf32>
    %604 = arith.mulf %601, %603 : vector<32x49xf32>
    %605 = arith.addf %600, %604 : vector<32x49xf32>
    %c0_238 = arith.constant 0 : index
    %c129_239 = arith.constant 129 : index
    %606 = vector.load %arg43[%c0_238, %c129_239] : memref<32x305xf32, #tpu.memory_space<vmem>>, vector<32x49xf32>
    %607 = vector.extract_strided_slice %513 {offsets = [0, 13], sizes = [32, 1], strides = [1, 1]} : vector<32x25xf32> to vector<32x1xf32>
    %608 = vector.broadcast %607 : vector<32x1xf32> to vector<32x49xf32>
    %609 = arith.mulf %606, %608 : vector<32x49xf32>
    %610 = arith.addf %605, %609 : vector<32x49xf32>
    %c0_240 = arith.constant 0 : index
    %c136_241 = arith.constant 136 : index
    %611 = vector.load %arg43[%c0_240, %c136_241] : memref<32x305xf32, #tpu.memory_space<vmem>>, vector<32x49xf32>
    %612 = vector.extract_strided_slice %513 {offsets = [0, 18], sizes = [32, 1], strides = [1, 1]} : vector<32x25xf32> to vector<32x1xf32>
    %613 = vector.broadcast %612 : vector<32x1xf32> to vector<32x49xf32>
    %614 = arith.mulf %611, %613 : vector<32x49xf32>
    %615 = arith.addf %610, %614 : vector<32x49xf32>
    %c0_242 = arith.constant 0 : index
    %c143_243 = arith.constant 143 : index
    %616 = vector.load %arg43[%c0_242, %c143_243] : memref<32x305xf32, #tpu.memory_space<vmem>>, vector<32x49xf32>
    %617 = vector.extract_strided_slice %513 {offsets = [0, 23], sizes = [32, 1], strides = [1, 1]} : vector<32x25xf32> to vector<32x1xf32>
    %618 = vector.broadcast %617 : vector<32x1xf32> to vector<32x49xf32>
    %619 = arith.mulf %616, %618 : vector<32x49xf32>
    %620 = arith.addf %615, %619 : vector<32x49xf32>
    %621 = vector.extract_strided_slice %438 {offsets = [3, 0], sizes = [1, 49], strides = [1, 1]} : vector<5x49xf32> to vector<1x49xf32>
    %622 = vector.broadcast %621 : vector<1x49xf32> to vector<32x49xf32>
    %623 = arith.mulf %620, %622 : vector<32x49xf32>
    %624 = arith.addf %596, %623 : vector<32x49xf32>
    %c0_244 = arith.constant 0 : index
    %c116_245 = arith.constant 116 : index
    %625 = vector.load %arg43[%c0_244, %c116_245] : memref<32x305xf32, #tpu.memory_space<vmem>>, vector<32x49xf32>
    %626 = vector.extract_strided_slice %513 {offsets = [0, 4], sizes = [32, 1], strides = [1, 1]} : vector<32x25xf32> to vector<32x1xf32>
    %627 = vector.broadcast %626 : vector<32x1xf32> to vector<32x49xf32>
    %628 = arith.mulf %625, %627 : vector<32x49xf32>
    %c0_246 = arith.constant 0 : index
    %c123 = arith.constant 123 : index
    %629 = vector.load %arg43[%c0_246, %c123] : memref<32x305xf32, #tpu.memory_space<vmem>>, vector<32x49xf32>
    %630 = vector.extract_strided_slice %513 {offsets = [0, 9], sizes = [32, 1], strides = [1, 1]} : vector<32x25xf32> to vector<32x1xf32>
    %631 = vector.broadcast %630 : vector<32x1xf32> to vector<32x49xf32>
    %632 = arith.mulf %629, %631 : vector<32x49xf32>
    %633 = arith.addf %628, %632 : vector<32x49xf32>
    %c0_247 = arith.constant 0 : index
    %c130_248 = arith.constant 130 : index
    %634 = vector.load %arg43[%c0_247, %c130_248] : memref<32x305xf32, #tpu.memory_space<vmem>>, vector<32x49xf32>
    %635 = vector.extract_strided_slice %513 {offsets = [0, 14], sizes = [32, 1], strides = [1, 1]} : vector<32x25xf32> to vector<32x1xf32>
    %636 = vector.broadcast %635 : vector<32x1xf32> to vector<32x49xf32>
    %637 = arith.mulf %634, %636 : vector<32x49xf32>
    %638 = arith.addf %633, %637 : vector<32x49xf32>
    %c0_249 = arith.constant 0 : index
    %c137 = arith.constant 137 : index
    %639 = vector.load %arg43[%c0_249, %c137] : memref<32x305xf32, #tpu.memory_space<vmem>>, vector<32x49xf32>
    %640 = vector.extract_strided_slice %513 {offsets = [0, 19], sizes = [32, 1], strides = [1, 1]} : vector<32x25xf32> to vector<32x1xf32>
    %641 = vector.broadcast %640 : vector<32x1xf32> to vector<32x49xf32>
    %642 = arith.mulf %639, %641 : vector<32x49xf32>
    %643 = arith.addf %638, %642 : vector<32x49xf32>
    %c0_250 = arith.constant 0 : index
    %c144_251 = arith.constant 144 : index
    %644 = vector.load %arg43[%c0_250, %c144_251] : memref<32x305xf32, #tpu.memory_space<vmem>>, vector<32x49xf32>
    %645 = vector.extract_strided_slice %513 {offsets = [0, 24], sizes = [32, 1], strides = [1, 1]} : vector<32x25xf32> to vector<32x1xf32>
    %646 = vector.broadcast %645 : vector<32x1xf32> to vector<32x49xf32>
    %647 = arith.mulf %644, %646 : vector<32x49xf32>
    %648 = arith.addf %643, %647 : vector<32x49xf32>
    %649 = vector.extract_strided_slice %438 {offsets = [4, 0], sizes = [1, 49], strides = [1, 1]} : vector<5x49xf32> to vector<1x49xf32>
    %650 = vector.broadcast %649 : vector<1x49xf32> to vector<32x49xf32>
    %651 = arith.mulf %648, %650 : vector<32x49xf32>
    %652 = arith.addf %624, %651 : vector<32x49xf32>
    %653 = arith.mulf %652, %652 : vector<32x49xf32>
    %654 = arith.mulf %652, %653 : vector<32x49xf32>
    %cst_252 = arith.constant 4.471500e-02 : f32
    %655 = vector.broadcast %cst_252 : f32 to vector<32x49xf32>
    %656 = arith.mulf %655, %654 : vector<32x49xf32>
    %657 = arith.addf %652, %656 : vector<32x49xf32>
    %cst_253 = arith.constant 0.797884583 : f32
    %658 = vector.broadcast %cst_253 : f32 to vector<32x49xf32>
    %659 = arith.mulf %658, %657 : vector<32x49xf32>
    %660 = math.tanh %659 : vector<32x49xf32>
    %cst_254 = arith.constant 1.000000e+00 : f32
    %661 = vector.broadcast %cst_254 : f32 to vector<32x49xf32>
    %662 = arith.addf %661, %660 : vector<32x49xf32>
    %cst_255 = arith.constant 5.000000e-01 : f32
    %663 = vector.broadcast %cst_255 : f32 to vector<32x49xf32>
    %664 = arith.mulf %663, %662 : vector<32x49xf32>
    %665 = arith.mulf %652, %664 : vector<32x49xf32>
    %666 = vector.extract_strided_slice %437 {offsets = [1, 0], sizes = [1, 49], strides = [1, 1]} : vector<3x49xf32> to vector<1x49xf32>
    %667 = vector.broadcast %666 : vector<1x49xf32> to vector<32x49xf32>
    %668 = arith.mulf %665, %667 : vector<32x49xf32>
    %669 = arith.addf %511, %668 : vector<32x49xf32>
    %cst_256 = arith.constant dense<0.000000e+00> : vector<32xf32>
    %670 = vector.multi_reduction <add>, %665, %cst_256 [1] : vector<32x49xf32> to vector<32xf32>
    %671 = vector.shape_cast %670 : vector<32xf32> to vector<32x1xf32>
    %cst_257 = arith.constant 4.900000e+01 : f32
    %672 = vector.broadcast %cst_257 : f32 to vector<32x1xf32>
    %673 = arith.divf %671, %672 : vector<32x1xf32>
    %674 = arith.mulf %673, %673 : vector<32x1xf32>
    %675 = arith.mulf %673, %674 : vector<32x1xf32>
    %cst_258 = arith.constant 4.471500e-02 : f32
    %676 = vector.broadcast %cst_258 : f32 to vector<32x1xf32>
    %677 = arith.mulf %676, %675 : vector<32x1xf32>
    %678 = arith.addf %673, %677 : vector<32x1xf32>
    %cst_259 = arith.constant 0.797884583 : f32
    %679 = vector.broadcast %cst_259 : f32 to vector<32x1xf32>
    %680 = arith.mulf %679, %678 : vector<32x1xf32>
    %681 = math.tanh %680 : vector<32x1xf32>
    %cst_260 = arith.constant 1.000000e+00 : f32
    %682 = vector.broadcast %cst_260 : f32 to vector<32x1xf32>
    %683 = arith.addf %682, %681 : vector<32x1xf32>
    %cst_261 = arith.constant 5.000000e-01 : f32
    %684 = vector.broadcast %cst_261 : f32 to vector<32x1xf32>
    %685 = arith.mulf %684, %683 : vector<32x1xf32>
    %686 = arith.mulf %673, %685 : vector<32x1xf32>
    %687 = vector.extract_strided_slice %437 {offsets = [2, 0], sizes = [1, 49], strides = [1, 1]} : vector<3x49xf32> to vector<1x49xf32>
    %688 = vector.broadcast %686 : vector<32x1xf32> to vector<32x49xf32>
    %689 = vector.broadcast %687 : vector<1x49xf32> to vector<32x49xf32>
    %690 = arith.mulf %688, %689 : vector<32x49xf32>
    %691 = arith.addf %669, %690 : vector<32x49xf32>
    %c0_262 = arith.constant 0 : index
    %c0_263 = arith.constant 0 : index
    %692 = vector.load %arg29[%c0_262, %c0_263] : memref<32x32xf32, #tpu.memory_space<vmem>>, vector<32x32xf32>
    %cst_264 = arith.constant dense<0.000000e+00> : vector<32x49xf32>
    %693 = tpu.matmul %692, %691, %cst_264 {dimension_numbers = #tpu.dot_dimension_numbers<[1], [0], [0], [1], [0, 0, 1, 1], [], []>} : vector<32x32xf32>, vector<32x49xf32>, vector<32x49xf32> -> vector<32x49xf32>
    %c0_265 = arith.constant 0 : index
    %c0_266 = arith.constant 0 : index
    %694 = vector.load %arg30[%c0_265, %c0_266] : memref<32x1xf32, #tpu.memory_space<vmem>>, vector<32x1xf32>
    %695 = vector.broadcast %694 : vector<32x1xf32> to vector<32x49xf32>
    %696 = arith.addf %693, %695 : vector<32x49xf32>
    %697 = arith.mulf %435, %696 : vector<32x49xf32>
    %c0_267 = arith.constant 0 : index
    %c0_268 = arith.constant 0 : index
    %698 = vector.load %arg31[%c0_267, %c0_268] : memref<32x32xf32, #tpu.memory_space<vmem>>, vector<32x32xf32>
    %cst_269 = arith.constant dense<0.000000e+00> : vector<32x49xf32>
    %699 = tpu.matmul %698, %697, %cst_269 {dimension_numbers = #tpu.dot_dimension_numbers<[1], [0], [0], [1], [0, 0, 1, 1], [], []>} : vector<32x32xf32>, vector<32x49xf32>, vector<32x49xf32> -> vector<32x49xf32>
    %c0_270 = arith.constant 0 : index
    %c0_271 = arith.constant 0 : index
    %700 = vector.load %arg32[%c0_270, %c0_271] : memref<32x1xf32, #tpu.memory_space<vmem>>, vector<32x1xf32>
    %701 = vector.broadcast %700 : vector<32x1xf32> to vector<32x49xf32>
    %702 = arith.addf %699, %701 : vector<32x49xf32>
    %703 = arith.addf %410, %702 : vector<32x49xf32>
    %cst_272 = arith.constant dense<0.000000e+00> : vector<49xf32>
    %704 = vector.multi_reduction <add>, %703, %cst_272 [0] : vector<32x49xf32> to vector<49xf32>
    %705 = vector.shape_cast %704 : vector<49xf32> to vector<1x49xf32>
    %cst_273 = arith.constant 3.200000e+01 : f32
    %706 = vector.broadcast %cst_273 : f32 to vector<1x49xf32>
    %707 = arith.divf %705, %706 : vector<1x49xf32>
    %708 = vector.broadcast %707 : vector<1x49xf32> to vector<32x49xf32>
    %709 = arith.subf %703, %708 : vector<32x49xf32>
    %710 = arith.mulf %709, %709 : vector<32x49xf32>
    %cst_274 = arith.constant dense<0.000000e+00> : vector<49xf32>
    %711 = vector.multi_reduction <add>, %710, %cst_274 [0] : vector<32x49xf32> to vector<49xf32>
    %712 = vector.shape_cast %711 : vector<49xf32> to vector<1x49xf32>
    %cst_275 = arith.constant 3.200000e+01 : f32
    %713 = vector.broadcast %cst_275 : f32 to vector<1x49xf32>
    %714 = arith.divf %712, %713 : vector<1x49xf32>
    %cst_276 = arith.constant 9.99999974E-6 : f32
    %715 = vector.broadcast %cst_276 : f32 to vector<1x49xf32>
    %716 = arith.addf %714, %715 : vector<1x49xf32>
    %717 = math.rsqrt %716 : vector<1x49xf32>
    %718 = vector.broadcast %717 : vector<1x49xf32> to vector<32x49xf32>
    %719 = arith.mulf %709, %718 : vector<32x49xf32>
    %c0_277 = arith.constant 0 : index
    %c0_278 = arith.constant 0 : index
    %720 = vector.load %arg33[%c0_277, %c0_278] : memref<128x32xf32, #tpu.memory_space<vmem>>, vector<128x32xf32>
    %cst_279 = arith.constant dense<0.000000e+00> : vector<128x49xf32>
    %721 = tpu.matmul %720, %719, %cst_279 {dimension_numbers = #tpu.dot_dimension_numbers<[1], [0], [0], [1], [0, 0, 1, 1], [], []>} : vector<128x32xf32>, vector<32x49xf32>, vector<128x49xf32> -> vector<128x49xf32>
    %c0_280 = arith.constant 0 : index
    %c0_281 = arith.constant 0 : index
    %722 = vector.load %arg34[%c0_280, %c0_281] : memref<128x1xf32, #tpu.memory_space<vmem>>, vector<128x1xf32>
    %723 = vector.broadcast %722 : vector<128x1xf32> to vector<128x49xf32>
    %724 = arith.addf %721, %723 : vector<128x49xf32>
    %725 = arith.mulf %724, %724 : vector<128x49xf32>
    %726 = arith.mulf %724, %725 : vector<128x49xf32>
    %cst_282 = arith.constant 4.471500e-02 : f32
    %727 = vector.broadcast %cst_282 : f32 to vector<128x49xf32>
    %728 = arith.mulf %727, %726 : vector<128x49xf32>
    %729 = arith.addf %724, %728 : vector<128x49xf32>
    %cst_283 = arith.constant 0.797884583 : f32
    %730 = vector.broadcast %cst_283 : f32 to vector<128x49xf32>
    %731 = arith.mulf %730, %729 : vector<128x49xf32>
    %732 = math.tanh %731 : vector<128x49xf32>
    %cst_284 = arith.constant 1.000000e+00 : f32
    %733 = vector.broadcast %cst_284 : f32 to vector<128x49xf32>
    %734 = arith.addf %733, %732 : vector<128x49xf32>
    %cst_285 = arith.constant 5.000000e-01 : f32
    %735 = vector.broadcast %cst_285 : f32 to vector<128x49xf32>
    %736 = arith.mulf %735, %734 : vector<128x49xf32>
    %737 = arith.mulf %724, %736 : vector<128x49xf32>
    %c0_286 = arith.constant 0 : index
    %c0_287 = arith.constant 0 : index
    %738 = vector.load %arg35[%c0_286, %c0_287] : memref<32x128xf32, #tpu.memory_space<vmem>>, vector<32x128xf32>
    %cst_288 = arith.constant dense<0.000000e+00> : vector<32x49xf32>
    %739 = tpu.matmul %738, %737, %cst_288 {dimension_numbers = #tpu.dot_dimension_numbers<[1], [0], [0], [1], [0, 0, 1, 1], [], []>} : vector<32x128xf32>, vector<128x49xf32>, vector<32x49xf32> -> vector<32x49xf32>
    %c0_289 = arith.constant 0 : index
    %c0_290 = arith.constant 0 : index
    %740 = vector.load %arg36[%c0_289, %c0_290] : memref<32x1xf32, #tpu.memory_space<vmem>>, vector<32x1xf32>
    %741 = vector.broadcast %740 : vector<32x1xf32> to vector<32x49xf32>
    %742 = arith.addf %739, %741 : vector<32x49xf32>
    %743 = arith.addf %703, %742 : vector<32x49xf32>
    %c0_291 = arith.constant 0 : index
    %c0_292 = arith.constant 0 : index
    %c0_293 = arith.constant 0 : index
    %744 = vector.load %arg40[%c0_291, %c0_292, %c0_293] : memref<1x32x49xf32, #tpu.memory_space<vmem>>, vector<1x32x49xf32>
    %745 = vector.shape_cast %744 : vector<1x32x49xf32> to vector<32x49xf32>
    %746 = vector.shape_cast %743 : vector<32x49xf32> to vector<1x32x49xf32>
    tpu.vector_store %arg40[%c0_291, %c0_292, %c0_293], %746 {strides = array<i32>} : memref<1x32x49xf32, #tpu.memory_space<vmem>>, vector<1x32x49xf32>,
    %c0_294 = arith.constant 0 : index
    %c0_295 = arith.constant 0 : index
    %747 = vector.load %arg37[%c0_294, %c0_295] : memref<32x1xf32, #tpu.memory_space<vmem>>, vector<32x1xf32>
    %c0_296 = arith.constant 0 : index
    %c0_297 = arith.constant 0 : index
    %748 = vector.load %arg38[%c0_296, %c0_297] : memref<32x1xf32, #tpu.memory_space<vmem>>, vector<32x1xf32>
    %cst_298 = arith.constant dense<0.000000e+00> : vector<49xf32>
    %749 = vector.multi_reduction <add>, %743, %cst_298 [0] : vector<32x49xf32> to vector<49xf32>
    %750 = vector.shape_cast %749 : vector<49xf32> to vector<1x49xf32>
    %cst_299 = arith.constant 3.200000e+01 : f32
    %751 = vector.broadcast %cst_299 : f32 to vector<1x49xf32>
    %752 = arith.divf %750, %751 : vector<1x49xf32>
    %753 = vector.broadcast %752 : vector<1x49xf32> to vector<32x49xf32>
    %754 = arith.subf %743, %753 : vector<32x49xf32>
    %755 = arith.mulf %754, %754 : vector<32x49xf32>
    %cst_300 = arith.constant dense<0.000000e+00> : vector<49xf32>
    %756 = vector.multi_reduction <add>, %755, %cst_300 [0] : vector<32x49xf32> to vector<49xf32>
    %757 = vector.shape_cast %756 : vector<49xf32> to vector<1x49xf32>
    %cst_301 = arith.constant 3.200000e+01 : f32
    %758 = vector.broadcast %cst_301 : f32 to vector<1x49xf32>
    %759 = arith.divf %757, %758 : vector<1x49xf32>
    %cst_302 = arith.constant 9.99999974E-6 : f32
    %760 = vector.broadcast %cst_302 : f32 to vector<1x49xf32>
    %761 = arith.addf %759, %760 : vector<1x49xf32>
    %762 = math.rsqrt %761 : vector<1x49xf32>
    %763 = vector.broadcast %762 : vector<1x49xf32> to vector<32x49xf32>
    %764 = arith.mulf %754, %763 : vector<32x49xf32>
    %765 = vector.broadcast %747 : vector<32x1xf32> to vector<32x49xf32>
    %766 = arith.mulf %764, %765 : vector<32x49xf32>
    %767 = vector.broadcast %748 : vector<32x1xf32> to vector<32x49xf32>
    %768 = arith.addf %766, %767 : vector<32x49xf32>
    %c0_303 = arith.constant 0 : index
    %c0_304 = arith.constant 0 : index
    %c0_305 = arith.constant 0 : index
    %769 = vector.load %arg41[%c0_303, %c0_304, %c0_305] : memref<1x32x49xf32, #tpu.memory_space<vmem>>, vector<1x32x49xf32>
    %770 = vector.shape_cast %769 : vector<1x32x49xf32> to vector<32x49xf32>
    %771 = vector.shape_cast %768 : vector<32x49xf32> to vector<1x32x49xf32>
    tpu.vector_store %arg41[%c0_303, %c0_304, %c0_305], %771 {strides = array<i32>} : memref<1x32x49xf32, #tpu.memory_space<vmem>>, vector<1x32x49xf32>,
    return
  }
  func.func @transform_0(%arg0: i32) -> (i32, i32, i32) {
    %c0_i32 = arith.constant 0 : i32
    %c0_i32_0 = arith.constant 0 : i32
    %c0_i32_1 = arith.constant 0 : i32
    return %arg0, %c0_i32, %c0_i32_0 : i32, i32, i32
  }
  func.func @transform_1(%arg0: i32) -> (i32, i32) {
    %c0_i32 = arith.constant 0 : i32
    %c0_i32_0 = arith.constant 0 : i32
    %c0_i32_1 = arith.constant 0 : i32
    return %c0_i32, %c0_i32_0 : i32, i32
  }
  func.func @transform_2(%arg0: i32) -> (i32, i32) {
    %c0_i32 = arith.constant 0 : i32
    %c0_i32_0 = arith.constant 0 : i32
    %c0_i32_1 = arith.constant 0 : i32
    return %c0_i32, %c0_i32_0 : i32, i32
  }
  func.func @transform_3(%arg0: i32) -> (i32, i32) {
    %c0_i32 = arith.constant 0 : i32
    %c0_i32_0 = arith.constant 0 : i32
    %c0_i32_1 = arith.constant 0 : i32
    return %c0_i32, %c0_i32_0 : i32, i32
  }
  func.func @transform_4(%arg0: i32) -> (i32, i32) {
    %c0_i32 = arith.constant 0 : i32
    %c0_i32_0 = arith.constant 0 : i32
    %c0_i32_1 = arith.constant 0 : i32
    return %c0_i32, %c0_i32_0 : i32, i32
  }
  func.func @transform_5(%arg0: i32) -> (i32, i32) {
    %c0_i32 = arith.constant 0 : i32
    %c0_i32_0 = arith.constant 0 : i32
    %c0_i32_1 = arith.constant 0 : i32
    return %c0_i32, %c0_i32_0 : i32, i32
  }
  func.func @transform_6(%arg0: i32) -> (i32, i32) {
    %c0_i32 = arith.constant 0 : i32
    %c0_i32_0 = arith.constant 0 : i32
    %c0_i32_1 = arith.constant 0 : i32
    return %c0_i32, %c0_i32_0 : i32, i32
  }
  func.func @transform_7(%arg0: i32) -> (i32, i32) {
    %c0_i32 = arith.constant 0 : i32
    %c0_i32_0 = arith.constant 0 : i32
    %c0_i32_1 = arith.constant 0 : i32
    return %c0_i32, %c0_i32_0 : i32, i32
  }
  func.func @transform_8(%arg0: i32) -> (i32, i32) {
    %c0_i32 = arith.constant 0 : i32
    %c0_i32_0 = arith.constant 0 : i32
    %c0_i32_1 = arith.constant 0 : i32
    return %c0_i32, %c0_i32_0 : i32, i32
  }
  func.func @transform_9(%arg0: i32) -> (i32, i32) {
    %c0_i32 = arith.constant 0 : i32
    %c0_i32_0 = arith.constant 0 : i32
    %c0_i32_1 = arith.constant 0 : i32
    return %c0_i32, %c0_i32_0 : i32, i32
  }
  func.func @transform_10(%arg0: i32) -> (i32, i32) {
    %c0_i32 = arith.constant 0 : i32
    %c0_i32_0 = arith.constant 0 : i32
    %c0_i32_1 = arith.constant 0 : i32
    return %c0_i32, %c0_i32_0 : i32, i32
  }
  func.func @transform_11(%arg0: i32) -> (i32, i32) {
    %c0_i32 = arith.constant 0 : i32
    %c0_i32_0 = arith.constant 0 : i32
    %c0_i32_1 = arith.constant 0 : i32
    return %c0_i32, %c0_i32_0 : i32, i32
  }
  func.func @transform_12(%arg0: i32) -> (i32, i32) {
    %c0_i32 = arith.constant 0 : i32
    %c0_i32_0 = arith.constant 0 : i32
    %c0_i32_1 = arith.constant 0 : i32
    return %c0_i32, %c0_i32_0 : i32, i32
  }
  func.func @transform_13(%arg0: i32) -> (i32, i32) {
    %c0_i32 = arith.constant 0 : i32
    %c0_i32_0 = arith.constant 0 : i32
    %c0_i32_1 = arith.constant 0 : i32
    return %c0_i32, %c0_i32_0 : i32, i32
  }
  func.func @transform_14(%arg0: i32) -> (i32, i32) {
    %c0_i32 = arith.constant 0 : i32
    %c0_i32_0 = arith.constant 0 : i32
    %c0_i32_1 = arith.constant 0 : i32
    return %c0_i32, %c0_i32_0 : i32, i32
  }
  func.func @transform_15(%arg0: i32) -> (i32, i32) {
    %c0_i32 = arith.constant 0 : i32
    %c0_i32_0 = arith.constant 0 : i32
    %c0_i32_1 = arith.constant 0 : i32
    return %c0_i32, %c0_i32_0 : i32, i32
  }
  func.func @transform_16(%arg0: i32) -> (i32, i32) {
    %c0_i32 = arith.constant 0 : i32
    %c0_i32_0 = arith.constant 0 : i32
    %c0_i32_1 = arith.constant 0 : i32
    return %c0_i32, %c0_i32_0 : i32, i32
  }
  func.func @transform_17(%arg0: i32) -> (i32, i32) {
    %c0_i32 = arith.constant 0 : i32
    %c0_i32_0 = arith.constant 0 : i32
    %c0_i32_1 = arith.constant 0 : i32
    return %c0_i32, %c0_i32_0 : i32, i32
  }
  func.func @transform_18(%arg0: i32) -> (i32, i32, i32) {
    %c0_i32 = arith.constant 0 : i32
    %c0_i32_0 = arith.constant 0 : i32
    %c0_i32_1 = arith.constant 0 : i32
    %c0_i32_2 = arith.constant 0 : i32
    return %c0_i32, %c0_i32_0, %c0_i32_1 : i32, i32, i32
  }
  func.func @transform_19(%arg0: i32) -> (i32, i32, i32) {
    %c0_i32 = arith.constant 0 : i32
    %c0_i32_0 = arith.constant 0 : i32
    %c0_i32_1 = arith.constant 0 : i32
    %c0_i32_2 = arith.constant 0 : i32
    return %c0_i32, %c0_i32_0, %c0_i32_1 : i32, i32, i32
  }
  func.func @transform_20(%arg0: i32) -> (i32, i32) {
    %c0_i32 = arith.constant 0 : i32
    %c0_i32_0 = arith.constant 0 : i32
    %c0_i32_1 = arith.constant 0 : i32
    return %c0_i32, %c0_i32_0 : i32, i32
  }
  func.func @transform_21(%arg0: i32) -> (i32, i32) {
    %c0_i32 = arith.constant 0 : i32
    %c0_i32_0 = arith.constant 0 : i32
    %c0_i32_1 = arith.constant 0 : i32
    return %c0_i32, %c0_i32_0 : i32, i32
  }
  func.func @transform_22(%arg0: i32) -> (i32, i32) {
    %c0_i32 = arith.constant 0 : i32
    %c0_i32_0 = arith.constant 0 : i32
    %c0_i32_1 = arith.constant 0 : i32
    return %c0_i32, %c0_i32_0 : i32, i32
  }
  func.func @transform_23(%arg0: i32) -> (i32, i32) {
    %c0_i32 = arith.constant 0 : i32
    %c0_i32_0 = arith.constant 0 : i32
    %c0_i32_1 = arith.constant 0 : i32
    return %c0_i32, %c0_i32_0 : i32, i32
  }
  func.func @transform_24(%arg0: i32) -> (i32, i32) {
    %c0_i32 = arith.constant 0 : i32
    %c0_i32_0 = arith.constant 0 : i32
    %c0_i32_1 = arith.constant 0 : i32
    return %c0_i32, %c0_i32_0 : i32, i32
  }
  func.func @transform_25(%arg0: i32) -> (i32, i32) {
    %c0_i32 = arith.constant 0 : i32
    %c0_i32_0 = arith.constant 0 : i32
    %c0_i32_1 = arith.constant 0 : i32
    return %c0_i32, %c0_i32_0 : i32, i32
  }
  func.func @transform_26(%arg0: i32) -> (i32, i32) {
    %c0_i32 = arith.constant 0 : i32
    %c0_i32_0 = arith.constant 0 : i32
    %c0_i32_1 = arith.constant 0 : i32
    return %c0_i32, %c0_i32_0 : i32, i32
  }
  func.func @transform_27(%arg0: i32) -> (i32, i32) {
    %c0_i32 = arith.constant 0 : i32
    %c0_i32_0 = arith.constant 0 : i32
    %c0_i32_1 = arith.constant 0 : i32
    return %c0_i32, %c0_i32_0 : i32, i32
  }
  func.func @transform_28(%arg0: i32) -> (i32, i32) {
    %c0_i32 = arith.constant 0 : i32
    %c0_i32_0 = arith.constant 0 : i32
    %c0_i32_1 = arith.constant 0 : i32
    return %c0_i32, %c0_i32_0 : i32, i32
  }
  func.func @transform_29(%arg0: i32) -> (i32, i32) {
    %c0_i32 = arith.constant 0 : i32
    %c0_i32_0 = arith.constant 0 : i32
    %c0_i32_1 = arith.constant 0 : i32
    return %c0_i32, %c0_i32_0 : i32, i32
  }
  func.func @transform_30(%arg0: i32) -> (i32, i32) {
    %c0_i32 = arith.constant 0 : i32
    %c0_i32_0 = arith.constant 0 : i32
    %c0_i32_1 = arith.constant 0 : i32
    return %c0_i32, %c0_i32_0 : i32, i32
  }
  func.func @transform_31(%arg0: i32) -> (i32, i32) {
    %c0_i32 = arith.constant 0 : i32
    %c0_i32_0 = arith.constant 0 : i32
    %c0_i32_1 = arith.constant 0 : i32
    return %c0_i32, %c0_i32_0 : i32, i32
  }
  func.func @transform_32(%arg0: i32) -> (i32, i32) {
    %c0_i32 = arith.constant 0 : i32
    %c0_i32_0 = arith.constant 0 : i32
    %c0_i32_1 = arith.constant 0 : i32
    return %c0_i32, %c0_i32_0 : i32, i32
  }
  func.func @transform_33(%arg0: i32) -> (i32, i32) {
    %c0_i32 = arith.constant 0 : i32
    %c0_i32_0 = arith.constant 0 : i32
    %c0_i32_1 = arith.constant 0 : i32
    return %c0_i32, %c0_i32_0 : i32, i32
  }
  func.func @transform_34(%arg0: i32) -> (i32, i32) {
    %c0_i32 = arith.constant 0 : i32
    %c0_i32_0 = arith.constant 0 : i32
    %c0_i32_1 = arith.constant 0 : i32
    return %c0_i32, %c0_i32_0 : i32, i32
  }
  func.func @transform_35(%arg0: i32) -> (i32, i32) {
    %c0_i32 = arith.constant 0 : i32
    %c0_i32_0 = arith.constant 0 : i32
    %c0_i32_1 = arith.constant 0 : i32
    return %c0_i32, %c0_i32_0 : i32, i32
  }
  func.func @transform_36(%arg0: i32) -> (i32, i32) {
    %c0_i32 = arith.constant 0 : i32
    %c0_i32_0 = arith.constant 0 : i32
    %c0_i32_1 = arith.constant 0 : i32
    return %c0_i32, %c0_i32_0 : i32, i32
  }
  func.func @transform_37(%arg0: i32) -> (i32, i32) {
    %c0_i32 = arith.constant 0 : i32
    %c0_i32_0 = arith.constant 0 : i32
    %c0_i32_1 = arith.constant 0 : i32
    return %c0_i32, %c0_i32_0 : i32, i32
  }
  func.func @transform_38(%arg0: i32) -> (i32, i32, i32) {
    %c0_i32 = arith.constant 0 : i32
    %c0_i32_0 = arith.constant 0 : i32
    %c0_i32_1 = arith.constant 0 : i32
    return %arg0, %c0_i32, %c0_i32_0 : i32, i32, i32
  }
  func.func @transform_39(%arg0: i32) -> (i32, i32, i32) {
    %c0_i32 = arith.constant 0 : i32
    %c0_i32_0 = arith.constant 0 : i32
    %c0_i32_1 = arith.constant 0 : i32
    return %arg0, %c0_i32, %c0_i32_0 : i32, i32, i32
  }
  func.func @transform_40(%arg0: i32) -> (i32, i32, i32) {
    %c0_i32 = arith.constant 0 : i32
    %c0_i32_0 = arith.constant 0 : i32
    %c0_i32_1 = arith.constant 0 : i32
    return %arg0, %c0_i32, %c0_i32_0 : i32, i32, i32
  }
}

</mosaic_0001>

<llo_original>
// kernel: focalnet_forward.1
$region0: #{focalnet_forward.1}
  #allocation0 [shape = 'u32[]', space=smem, size = 0x4, offset = 0x4, fixed_abs, tag = 'smem constant byte address 0x4 - core index']
  #allocation1 [shape = 'u32[144,128]{1,0:T(1,128)}', space=vmem, size = 0x12000, scoped, tag = 'internal scratch']
  #allocation2 [shape = 'f32[16,452]{1,0:T(8,128)}', space=vmem, size = 0x8000, scoped, tag = 'scratch operand']
  #allocation3 [shape = 'f32[32,305]{1,0:T(8,128)}', space=vmem, size = 0xc000, scoped, tag = 'scratch operand']
  %s0 = inlined_call_operand.smem [shape: u32[41], index: -1, kind: input, shape index: {}]
  %s1 = sld [smem:[%s0]]
  %s2 = scalar_lea.smem %s0, 1
  %s3 = sld [smem:[%s2]]
  %s4 = scalar_lea.smem %s0, 2
  %s5 = sld [smem:[%s4]]
  %s6 = scalar_lea.smem %s0, 3
  %s7 = sld [smem:[%s6]]
  %s8 = scalar_lea.smem %s0, 4
  %s9 = sld [smem:[%s8]]
  %s10 = scalar_lea.smem %s0, 5
  %s11 = sld [smem:[%s10]]
  %s12 = scalar_lea.smem %s0, 6
  %s13 = sld [smem:[%s12]]
  %s14 = scalar_lea.smem %s0, 7
  %s15 = sld [smem:[%s14]]
  %s16 = scalar_lea.smem %s0, 8
  %s17 = sld [smem:[%s16]]
  %s18 = scalar_lea.smem %s0, 9
  %s19 = sld [smem:[%s18]]
  %s20 = scalar_lea.smem %s0, 10
  %s21 = sld [smem:[%s20]]
  %s22 = scalar_lea.smem %s0, 11
  %s23 = sld [smem:[%s22]]
  %s24 = scalar_lea.smem %s0, 12
  %s25 = sld [smem:[%s24]]
  %s26 = scalar_lea.smem %s0, 13
  %s27 = sld [smem:[%s26]]
  %s28 = scalar_lea.smem %s0, 14
  %s29 = sld [smem:[%s28]]
  %s30 = scalar_lea.smem %s0, 15
  %s31 = sld [smem:[%s30]]
  %s32 = scalar_lea.smem %s0, 16
  %s33 = sld [smem:[%s32]]
  %s34 = scalar_lea.smem %s0, 17
  %s35 = sld [smem:[%s34]]
  %s36 = scalar_lea.smem %s0, 18
  %s37 = sld [smem:[%s36]]
  %s38 = scalar_lea.smem %s0, 19
  %s39 = sld [smem:[%s38]]
  %s40 = scalar_lea.smem %s0, 20
  %s41 = sld [smem:[%s40]]
  %s42 = scalar_lea.smem %s0, 21
  %s43 = sld [smem:[%s42]]
  %s44 = scalar_lea.smem %s0, 22
  %s45 = sld [smem:[%s44]]
  %s46 = scalar_lea.smem %s0, 23
  %s47 = sld [smem:[%s46]]
  %s48 = scalar_lea.smem %s0, 24
  %s49 = sld [smem:[%s48]]
  %s50 = scalar_lea.smem %s0, 25
  %s51 = sld [smem:[%s50]]
  %s52 = scalar_lea.smem %s0, 26
  %s53 = sld [smem:[%s52]]
  %s54 = scalar_lea.smem %s0, 27
  %s55 = sld [smem:[%s54]]
  %s56 = scalar_lea.smem %s0, 28
  %s57 = sld [smem:[%s56]]
  %s58 = scalar_lea.smem %s0, 29
  %s59 = sld [smem:[%s58]]
  %s60 = scalar_lea.smem %s0, 30
  %s61 = sld [smem:[%s60]]
  %s62 = scalar_lea.smem %s0, 31
  %s63 = sld [smem:[%s62]]
  %s64 = scalar_lea.smem %s0, 32
  %s65 = sld [smem:[%s64]]
  %s66 = scalar_lea.smem %s0, 33
  %s67 = sld [smem:[%s66]]
  %s68 = scalar_lea.smem %s0, 34
  %s69 = sld [smem:[%s68]]
  %s70 = scalar_lea.smem %s0, 35
  %s71 = sld [smem:[%s70]]
  %s72 = scalar_lea.smem %s0, 36
  %s73 = sld [smem:[%s72]]
  %s74 = scalar_lea.smem %s0, 37
  %s75 = sld [smem:[%s74]]
  %s76 = scalar_lea.smem %s0, 38
  %s77 = sld [smem:[%s76]]
  %s78 = scalar_lea.smem %s0, 39
  %s79 = sld [smem:[%s78]]
  %s80 = scalar_lea.smem %s0, 40
  %s81 = sld [smem:[%s80]]
  %82 = xla_tuple %s77, %s79, %s81
  %s83 = sld [smem:[#allocation0]]
  $region201: #{focalnet_forward.1} parent=0
    _
  %s85 = ssub.s32 1, %s83
  %s86 = scalar_select 0, %s85, %s83
  $region1: #{focalnet_forward.1} parent=0
    #allocation4 [shape = 'u8[32768]{0}', space=vmem, size = 0x8000, scoped, tag = 'output window, operand 0']
    #allocation5 [shape = 's32[2]{0}', space=sflag, size = 0x8, scoped, tag = 'scoped memory for focalnet_forward.1']
    #allocation6 [shape = 'u8[32768]{0}', space=vmem, size = 0x8000, scoped, tag = 'output window, operand 1']
    #allocation7 [shape = 's32[2]{0}', space=sflag, size = 0x8, scoped, tag = 'scoped memory for focalnet_forward.1']
    %87 = vsyncpa [#allocation5], 0
    %s88 = scalar_lea.sflag [#allocation5], 1
    %89 = vsyncpa %s88, 0
    %90 = vsyncpa [#allocation7], 0
    %s91 = scalar_lea.sflag [#allocation7], 1
    %92 = vsyncpa %s91, 0
    loop: start=0, step=1, limit=4
    $region2: #{focalnet_forward.1} parent=1 // loop_pre_header
      _
    $region3: #{focalnet_forward.1} parent=1 // loop_header
      %s94 = sphi 0, %s98
      %p95 = scmp.ge.s32.totalorder %s94, 4
      %s104 = sphi 0, %s106
      %s107 = sphi 0, %s104
      %s108 = sphi 0, %s107
      %s124 = sphi 0, %s108
      %s128 = sphi 0, %s128
      %s130 = sphi 0, %s128
      %s131 = sphi 0, %s130
      %s145 = sphi 0, %s131
      %s149 = sphi 0, %s149
      %s151 = sphi 0, %s149
      %s152 = sphi 0, %s151
      %s166 = sphi 0, %s152
      %s170 = sphi 0, %s170
      %s172 = sphi 0, %s170
      %s173 = sphi 0, %s172
      %s187 = sphi 0, %s173
      %s191 = sphi 0, %s191
      %s193 = sphi 0, %s191
      %s194 = sphi 0, %s193
      %s208 = sphi 0, %s194
      %s212 = sphi 0, %s212
      %s214 = sphi 0, %s212
      %s215 = sphi 0, %s214
      %s229 = sphi 0, %s215
      %s233 = sphi 0, %s233
      %s235 = sphi 0, %s233
      %s236 = sphi 0, %s235
      %s250 = sphi 0, %s236
      %s254 = sphi 0, %s254
      %s256 = sphi 0, %s254
      %s257 = sphi 0, %s256
      %s271 = sphi 0, %s257
      %s275 = sphi 0, %s275
      %s277 = sphi 0, %s275
      %s278 = sphi 0, %s277
      %s292 = sphi 0, %s278
      %s296 = sphi 0, %s296
      %s298 = sphi 0, %s296
      %s299 = sphi 0, %s298
      %s313 = sphi 0, %s299
      %s317 = sphi 0, %s317
      %s319 = sphi 0, %s317
      %s320 = sphi 0, %s319
      %s334 = sphi 0, %s320
      %s338 = sphi 0, %s338
      %s340 = sphi 0, %s338
      %s341 = sphi 0, %s340
      %s355 = sphi 0, %s341
      %s359 = sphi 0, %s359
      %s361 = sphi 0, %s359
      %s362 = sphi 0, %s361
      %s376 = sphi 0, %s362
      %s380 = sphi 0, %s380
      %s382 = sphi 0, %s380
      %s383 = sphi 0, %s382
      %s397 = sphi 0, %s383
      %s401 = sphi 0, %s401
      %s403 = sphi 0, %s401
      %s404 = sphi 0, %s403
      %s418 = sphi 0, %s404
      %s422 = sphi 0, %s422
      %s424 = sphi 0, %s422
      %s425 = sphi 0, %s424
      %s439 = sphi 0, %s425
      %s443 = sphi 0, %s443
      %s445 = sphi 0, %s443
      %s446 = sphi 0, %s445
      %s460 = sphi 0, %s446
      %s464 = sphi 0, %s464
      %s466 = sphi 0, %s464
      %s467 = sphi 0, %s466
      %s481 = sphi 0, %s467
      %s485 = sphi 0, %s485
      %s487 = sphi 0, %s485
      %s488 = sphi 0, %s487
      %s502 = sphi 0, %s488
      %s506 = sphi 0, %s506
      %s508 = sphi 0, %s506
      %s509 = sphi 0, %s508
      %s523 = sphi 0, %s509
      %s527 = sphi 0, %s527
      %s529 = sphi 0, %s527
      %s530 = sphi 0, %s529
      %s544 = sphi 0, %s530
      %s548 = sphi 0, %s548
      %s550 = sphi 0, %s548
      %s551 = sphi 0, %s550
      %s565 = sphi 0, %s551
      %s569 = sphi 0, %s569
      %s571 = sphi 0, %s569
      %s572 = sphi 0, %s571
      %s586 = sphi 0, %s572
      %s590 = sphi 0, %s590
      %s592 = sphi 0, %s590
      %s593 = sphi 0, %s592
      %s607 = sphi 0, %s593
      %s611 = sphi 0, %s611
      %s613 = sphi 0, %s611
      %s614 = sphi 0, %s613
      %s628 = sphi 0, %s614
      %s632 = sphi 0, %s632
      %s634 = sphi 0, %s632
      %s635 = sphi 0, %s634
      %s649 = sphi 0, %s635
      %s653 = sphi 0, %s653
      %s655 = sphi 0, %s653
      %s656 = sphi 0, %s655
      %s670 = sphi 0, %s656
      %s674 = sphi 0, %s674
      %s676 = sphi 0, %s674
      %s677 = sphi 0, %s676
      %s691 = sphi 0, %s677
      %s695 = sphi 0, %s695
      %s697 = sphi 0, %s695
      %s698 = sphi 0, %s697
      %s712 = sphi 0, %s698
      %s716 = sphi 0, %s716
      %s718 = sphi 0, %s716
      %s719 = sphi 0, %s718
      %s733 = sphi 0, %s719
      %s737 = sphi 0, %s737
      %s739 = sphi 0, %s737
      %s740 = sphi 0, %s739
      %s754 = sphi 0, %s740
      %s758 = sphi 0, %s758
      %s760 = sphi 0, %s758
      %s761 = sphi 0, %s760
      %s775 = sphi 0, %s761
      %s779 = sphi 0, %s779
      %s781 = sphi 0, %s779
      %s782 = sphi 0, %s781
      %s796 = sphi 0, %s782
      %s800 = sphi 0, %s800
      %s802 = sphi 0, %s800
      %s803 = sphi 0, %s802
      %s817 = sphi 0, %s803
      %s821 = sphi 0, %s821
      %s823 = sphi 0, %s821
      %s824 = sphi 0, %s823
      %s838 = sphi 0, %s824
      %s842 = sphi 0, %s842
      %s844 = sphi 0, %s842
      %s845 = sphi 0, %s844
      %s859 = sphi 0, %s845
      %s863 = sphi 0, %s863
      %s865 = sphi 0, %s863
      %s866 = sphi 0, %s865
      %s880 = sphi 0, %s866
      %s884 = sphi 0, %s884
      %s886 = sphi 0, %s884
      %s887 = sphi 0, %s886
      %s901 = sphi 0, %s887
      %s907 = sphi 0, %s909
      %s910 = sphi 0, %s907
      %s911 = sphi 0, %s910
      %s927 = sphi 0, %s911
      %s933 = sphi 0, %s935
      %s936 = sphi 0, %s933
      %s937 = sphi 0, %s936
      %s953 = sphi 0, %s937
      %s959 = sphi 0, %s961
      %s962 = sphi 0, %s959
      %s963 = sphi 0, %s962
      %s979 = sphi 0, %s963
    $region4: #{focalnet_forward.1} parent=1 // loop_header_branch
      %97 = sbr.rel (%p95) target = $region8
    $region5: #{focalnet_forward.1} parent=1 // loop_body
      %s99 = ssub.s32 %s94, 1
      %s100 = ssub.s32 %s94, 2
      %s101 = sadd.s32 %s94, 1
      %s102 = ssub.s32 %s94, %s101
      %p103 = scmp.eq.s32.totalorder %s102, 0
      %s105 = sadd.s32 %s104, 1
      %s106 = scalar_select %p103, %s104, %s105
      %p109 = pneg %p103
      %p110 = scmp.eq.s32.totalorder %s94, 1
      %p111 = por %p109, %p110
      %p112 = scmp.ne.s32.totalorder %s104, %s107
      %p113 = scmp.eq.s32.totalorder %s94, 0
      %p114 = por %p112, %p113
      %p115 = scmp.ne.s32.totalorder %s104, %s107
      %p116 = scmp.eq.s32.totalorder %s99, 1
      %p117 = por %p115, %p116
      %p118 = scmp.ne.s32.totalorder %s107, %s108
      %p119 = scmp.eq.s32.totalorder %s99, 0
      %p120 = por %p118, %p119
      %p121 = scmp.ne.s32.totalorder %s107, %s108
      %p122 = scmp.eq.s32.totalorder %s100, 1
      %p123 = por %p121, %p122
      %p125 = scmp.ne.s32.totalorder %s108, %s124
      %p126 = scmp.eq.s32.totalorder %s100, 0
      %p127 = por %p125, %p126
      %s129 = sadd.s32 %s128, 1
      %p132 = scmp.eq.s32.totalorder %s94, 1
      %p133 = scmp.ne.s32.totalorder %s128, %s130
      %p134 = scmp.eq.s32.totalorder %s94, 0
      %p135 = por %p133, %p134
      %p136 = scmp.ne.s32.totalorder %s128, %s130
      %p137 = scmp.eq.s32.totalorder %s99, 1
      %p138 = por %p136, %p137
      %p139 = scmp.ne.s32.totalorder %s130, %s131
      %p140 = scmp.eq.s32.totalorder %s99, 0
      %p141 = por %p139, %p140
      %p142 = scmp.ne.s32.totalorder %s130, %s131
      %p143 = scmp.eq.s32.totalorder %s100, 1
      %p144 = por %p142, %p143
      %p146 = scmp.ne.s32.totalorder %s131, %s145
      %p147 = scmp.eq.s32.totalorder %s100, 0
      %p148 = por %p146, %p147
      %s150 = sadd.s32 %s149, 1
      %p153 = scmp.eq.s32.totalorder %s94, 1
      %p154 = scmp.ne.s32.totalorder %s149, %s151
      %p155 = scmp.eq.s32.totalorder %s94, 0
      %p156 = por %p154, %p155
      %p157 = scmp.ne.s32.totalorder %s149, %s151
      %p158 = scmp.eq.s32.totalorder %s99, 1
      %p159 = por %p157, %p158
      %p160 = scmp.ne.s32.totalorder %s151, %s152
      %p161 = scmp.eq.s32.totalorder %s99, 0
      %p162 = por %p160, %p161
      %p163 = scmp.ne.s32.totalorder %s151, %s152
      %p164 = scmp.eq.s32.totalorder %s100, 1
      %p165 = por %p163, %p164
      %p167 = scmp.ne.s32.totalorder %s152, %s166
      %p168 = scmp.eq.s32.totalorder %s100, 0
      %p169 = por %p167, %p168
      %s171 = sadd.s32 %s170, 1
      %p174 = scmp.eq.s32.totalorder %s94, 1
      %p175 = scmp.ne.s32.totalorder %s170, %s172
      %p176 = scmp.eq.s32.totalorder %s94, 0
      %p177 = por %p175, %p176
      %p178 = scmp.ne.s32.totalorder %s170, %s172
      %p179 = scmp.eq.s32.totalorder %s99, 1
      %p180 = por %p178, %p179
      %p181 = scmp.ne.s32.totalorder %s172, %s173
      %p182 = scmp.eq.s32.totalorder %s99, 0
      %p183 = por %p181, %p182
      %p184 = scmp.ne.s32.totalorder %s172, %s173
      %p185 = scmp.eq.s32.totalorder %s100, 1
      %p186 = por %p184, %p185
      %p188 = scmp.ne.s32.totalorder %s173, %s187
      %p189 = scmp.eq.s32.totalorder %s100, 0
      %p190 = por %p188, %p189
      %s192 = sadd.s32 %s191, 1
      %p195 = scmp.eq.s32.totalorder %s94, 1
      %p196 = scmp.ne.s32.totalorder %s191, %s193
      %p197 = scmp.eq.s32.totalorder %s94, 0
      %p198 = por %p196, %p197
      %p199 = scmp.ne.s32.totalorder %s191, %s193
      %p200 = scmp.eq.s32.totalorder %s99, 1
      %p201 = por %p199, %p200
      %p202 = scmp.ne.s32.totalorder %s193, %s194
      %p203 = scmp.eq.s32.totalorder %s99, 0
      %p204 = por %p202, %p203
      %p205 = scmp.ne.s32.totalorder %s193, %s194
      %p206 = scmp.eq.s32.totalorder %s100, 1
      %p207 = por %p205, %p206
      %p209 = scmp.ne.s32.totalorder %s194, %s208
      %p210 = scmp.eq.s32.totalorder %s100, 0
      %p211 = por %p209, %p210
      %s213 = sadd.s32 %s212, 1
      %p216 = scmp.eq.s32.totalorder %s94, 1
      %p217 = scmp.ne.s32.totalorder %s212, %s214
      %p218 = scmp.eq.s32.totalorder %s94, 0
      %p219 = por %p217, %p218
      %p220 = scmp.ne.s32.totalorder %s212, %s214
      %p221 = scmp.eq.s32.totalorder %s99, 1
      %p222 = por %p220, %p221
      %p223 = scmp.ne.s32.totalorder %s214, %s215
      %p224 = scmp.eq.s32.totalorder %s99, 0
      %p225 = por %p223, %p224
      %p226 = scmp.ne.s32.totalorder %s214, %s215
      %p227 = scmp.eq.s32.totalorder %s100, 1
      %p228 = por %p226, %p227
      %p230 = scmp.ne.s32.totalorder %s215, %s229
      %p231 = scmp.eq.s32.totalorder %s100, 0
      %p232 = por %p230, %p231
      %s234 = sadd.s32 %s233, 1
      %p237 = scmp.eq.s32.totalorder %s94, 1
      %p238 = scmp.ne.s32.totalorder %s233, %s235
      %p239 = scmp.eq.s32.totalorder %s94, 0
      %p240 = por %p238, %p239
      %p241 = scmp.ne.s32.totalorder %s233, %s235
      %p242 = scmp.eq.s32.totalorder %s99, 1
      %p243 = por %p241, %p242
      %p244 = scmp.ne.s32.totalorder %s235, %s236
      %p245 = scmp.eq.s32.totalorder %s99, 0
      %p246 = por %p244, %p245
      %p247 = scmp.ne.s32.totalorder %s235, %s236
      %p248 = scmp.eq.s32.totalorder %s100, 1
      %p249 = por %p247, %p248
      %p251 = scmp.ne.s32.totalorder %s236, %s250
      %p252 = scmp.eq.s32.totalorder %s100, 0
      %p253 = por %p251, %p252
      %s255 = sadd.s32 %s254, 1
      %p258 = scmp.eq.s32.totalorder %s94, 1
      %p259 = scmp.ne.s32.totalorder %s254, %s256
      %p260 = scmp.eq.s32.totalorder %s94, 0
      %p261 = por %p259, %p260
      %p262 = scmp.ne.s32.totalorder %s254, %s256
      %p263 = scmp.eq.s32.totalorder %s99, 1
      %p264 = por %p262, %p263
      %p265 = scmp.ne.s32.totalorder %s256, %s257
      %p266 = scmp.eq.s32.totalorder %s99, 0
      %p267 = por %p265, %p266
      %p268 = scmp.ne.s32.totalorder %s256, %s257
      %p269 = scmp.eq.s32.totalorder %s100, 1
      %p270 = por %p268, %p269
      %p272 = scmp.ne.s32.totalorder %s257, %s271
      %p273 = scmp.eq.s32.totalorder %s100, 0
      %p274 = por %p272, %p273
      %s276 = sadd.s32 %s275, 1
      %p279 = scmp.eq.s32.totalorder %s94, 1
      %p280 = scmp.ne.s32.totalorder %s275, %s277
      %p281 = scmp.eq.s32.totalorder %s94, 0
      %p282 = por %p280, %p281
      %p283 = scmp.ne.s32.totalorder %s275, %s277
      %p284 = scmp.eq.s32.totalorder %s99, 1
      %p285 = por %p283, %p284
      %p286 = scmp.ne.s32.totalorder %s277, %s278
      %p287 = scmp.eq.s32.totalorder %s99, 0
      %p288 = por %p286, %p287
      %p289 = scmp.ne.s32.totalorder %s277, %s278
      %p290 = scmp.eq.s32.totalorder %s100, 1
      %p291 = por %p289, %p290
      %p293 = scmp.ne.s32.totalorder %s278, %s292
      %p294 = scmp.eq.s32.totalorder %s100, 0
      %p295 = por %p293, %p294
      %s297 = sadd.s32 %s296, 1
      %p300 = scmp.eq.s32.totalorder %s94, 1
      %p301 = scmp.ne.s32.totalorder %s296, %s298
      %p302 = scmp.eq.s32.totalorder %s94, 0
      %p303 = por %p301, %p302
      %p304 = scmp.ne.s32.totalorder %s296, %s298
      %p305 = scmp.eq.s32.totalorder %s99, 1
      %p306 = por %p304, %p305
      %p307 = scmp.ne.s32.totalorder %s298, %s299
      %p308 = scmp.eq.s32.totalorder %s99, 0
      %p309 = por %p307, %p308
      %p310 = scmp.ne.s32.totalorder %s298, %s299
      %p311 = scmp.eq.s32.totalorder %s100, 1
      %p312 = por %p310, %p311
      %p314 = scmp.ne.s32.totalorder %s299, %s313
      %p315 = scmp.eq.s32.totalorder %s100, 0
      %p316 = por %p314, %p315
      %s318 = sadd.s32 %s317, 1
      %p321 = scmp.eq.s32.totalorder %s94, 1
      %p322 = scmp.ne.s32.totalorder %s317, %s319
      %p323 = scmp.eq.s32.totalorder %s94, 0
      %p324 = por %p322, %p323
      %p325 = scmp.ne.s32.totalorder %s317, %s319
      %p326 = scmp.eq.s32.totalorder %s99, 1
      %p327 = por %p325, %p326
      %p328 = scmp.ne.s32.totalorder %s319, %s320
      %p329 = scmp.eq.s32.totalorder %s99, 0
      %p330 = por %p328, %p329
      %p331 = scmp.ne.s32.totalorder %s319, %s320
      %p332 = scmp.eq.s32.totalorder %s100, 1
      %p333 = por %p331, %p332
      %p335 = scmp.ne.s32.totalorder %s320, %s334
      %p336 = scmp.eq.s32.totalorder %s100, 0
      %p337 = por %p335, %p336
      %s339 = sadd.s32 %s338, 1
      %p342 = scmp.eq.s32.totalorder %s94, 1
      %p343 = scmp.ne.s32.totalorder %s338, %s340
      %p344 = scmp.eq.s32.totalorder %s94, 0
      %p345 = por %p343, %p344
      %p346 = scmp.ne.s32.totalorder %s338, %s340
      %p347 = scmp.eq.s32.totalorder %s99, 1
      %p348 = por %p346, %p347
      %p349 = scmp.ne.s32.totalorder %s340, %s341
      %p350 = scmp.eq.s32.totalorder %s99, 0
      %p351 = por %p349, %p350
      %p352 = scmp.ne.s32.totalorder %s340, %s341
      %p353 = scmp.eq.s32.totalorder %s100, 1
      %p354 = por %p352, %p353
      %p356 = scmp.ne.s32.totalorder %s341, %s355
      %p357 = scmp.eq.s32.totalorder %s100, 0
      %p358 = por %p356, %p357
      %s360 = sadd.s32 %s359, 1
      %p363 = scmp.eq.s32.totalorder %s94, 1
      %p364 = scmp.ne.s32.totalorder %s359, %s361
      %p365 = scmp.eq.s32.totalorder %s94, 0
      %p366 = por %p364, %p365
      %p367 = scmp.ne.s32.totalorder %s359, %s361
      %p368 = scmp.eq.s32.totalorder %s99, 1
      %p369 = por %p367, %p368
      %p370 = scmp.ne.s32.totalorder %s361, %s362
      %p371 = scmp.eq.s32.totalorder %s99, 0
      %p372 = por %p370, %p371
      %p373 = scmp.ne.s32.totalorder %s361, %s362
      %p374 = scmp.eq.s32.totalorder %s100, 1
      %p375 = por %p373, %p374
      %p377 = scmp.ne.s32.totalorder %s362, %s376
      %p378 = scmp.eq.s32.totalorder %s100, 0
      %p379 = por %p377, %p378
      %s381 = sadd.s32 %s380, 1
      %p384 = scmp.eq.s32.totalorder %s94, 1
      %p385 = scmp.ne.s32.totalorder %s380, %s382
      %p386 = scmp.eq.s32.totalorder %s94, 0
      %p387 = por %p385, %p386
      %p388 = scmp.ne.s32.totalorder %s380, %s382
      %p389 = scmp.eq.s32.totalorder %s99, 1
      %p390 = por %p388, %p389
      %p391 = scmp.ne.s32.totalorder %s382, %s383
      %p392 = scmp.eq.s32.totalorder %s99, 0
      %p393 = por %p391, %p392
      %p394 = scmp.ne.s32.totalorder %s382, %s383
      %p395 = scmp.eq.s32.totalorder %s100, 1
      %p396 = por %p394, %p395
      %p398 = scmp.ne.s32.totalorder %s383, %s397
      %p399 = scmp.eq.s32.totalorder %s100, 0
      %p400 = por %p398, %p399
      %s402 = sadd.s32 %s401, 1
      %p405 = scmp.eq.s32.totalorder %s94, 1
      %p406 = scmp.ne.s32.totalorder %s401, %s403
      %p407 = scmp.eq.s32.totalorder %s94, 0
      %p408 = por %p406, %p407
      %p409 = scmp.ne.s32.totalorder %s401, %s403
      %p410 = scmp.eq.s32.totalorder %s99, 1
      %p411 = por %p409, %p410
      %p412 = scmp.ne.s32.totalorder %s403, %s404
      %p413 = scmp.eq.s32.totalorder %s99, 0
      %p414 = por %p412, %p413
      %p415 = scmp.ne.s32.totalorder %s403, %s404
      %p416 = scmp.eq.s32.totalorder %s100, 1
      %p417 = por %p415, %p416
      %p419 = scmp.ne.s32.totalorder %s404, %s418
      %p420 = scmp.eq.s32.totalorder %s100, 0
      %p421 = por %p419, %p420
      %s423 = sadd.s32 %s422, 1
      %p426 = scmp.eq.s32.totalorder %s94, 1
      %p427 = scmp.ne.s32.totalorder %s422, %s424
      %p428 = scmp.eq.s32.totalorder %s94, 0
      %p429 = por %p427, %p428
      %p430 = scmp.ne.s32.totalorder %s422, %s424
      %p431 = scmp.eq.s32.totalorder %s99, 1
      %p432 = por %p430, %p431
      %p433 = scmp.ne.s32.totalorder %s424, %s425
      %p434 = scmp.eq.s32.totalorder %s99, 0
      %p435 = por %p433, %p434
      %p436 = scmp.ne.s32.totalorder %s424, %s425
      %p437 = scmp.eq.s32.totalorder %s100, 1
      %p438 = por %p436, %p437
      %p440 = scmp.ne.s32.totalorder %s425, %s439
      %p441 = scmp.eq.s32.totalorder %s100, 0
      %p442 = por %p440, %p441
      %s444 = sadd.s32 %s443, 1
      %p447 = scmp.eq.s32.totalorder %s94, 1
      %p448 = scmp.ne.s32.totalorder %s443, %s445
      %p449 = scmp.eq.s32.totalorder %s94, 0
      %p450 = por %p448, %p449
      %p451 = scmp.ne.s32.totalorder %s443, %s445
      %p452 = scmp.eq.s32.totalorder %s99, 1
      %p453 = por %p451, %p452
      %p454 = scmp.ne.s32.totalorder %s445, %s446
      %p455 = scmp.eq.s32.totalorder %s99, 0
      %p456 = por %p454, %p455
      %p457 = scmp.ne.s32.totalorder %s445, %s446
      %p458 = scmp.eq.s32.totalorder %s100, 1
      %p459 = por %p457, %p458
      %p461 = scmp.ne.s32.totalorder %s446, %s460
      %p462 = scmp.eq.s32.totalorder %s100, 0
      %p463 = por %p461, %p462
      %s465 = sadd.s32 %s464, 1
      %p468 = scmp.eq.s32.totalorder %s94, 1
      %p469 = scmp.ne.s32.totalorder %s464, %s466
      %p470 = scmp.eq.s32.totalorder %s94, 0
      %p471 = por %p469, %p470
      %p472 = scmp.ne.s32.totalorder %s464, %s466
      %p473 = scmp.eq.s32.totalorder %s99, 1
      %p474 = por %p472, %p473
      %p475 = scmp.ne.s32.totalorder %s466, %s467
      %p476 = scmp.eq.s32.totalorder %s99, 0
      %p477 = por %p475, %p476
      %p478 = scmp.ne.s32.totalorder %s466, %s467
      %p479 = scmp.eq.s32.totalorder %s100, 1
      %p480 = por %p478, %p479
      %p482 = scmp.ne.s32.totalorder %s467, %s481
      %p483 = scmp.eq.s32.totalorder %s100, 0
      %p484 = por %p482, %p483
      %s486 = sadd.s32 %s485, 1
      %p489 = scmp.eq.s32.totalorder %s94, 1
      %p490 = scmp.ne.s32.totalorder %s485, %s487
      %p491 = scmp.eq.s32.totalorder %s94, 0
      %p492 = por %p490, %p491
      %p493 = scmp.ne.s32.totalorder %s485, %s487
      %p494 = scmp.eq.s32.totalorder %s99, 1
      %p495 = por %p493, %p494
      %p496 = scmp.ne.s32.totalorder %s487, %s488
      %p497 = scmp.eq.s32.totalorder %s99, 0
      %p498 = por %p496, %p497
      %p499 = scmp.ne.s32.totalorder %s487, %s488
      %p500 = scmp.eq.s32.totalorder %s100, 1
      %p501 = por %p499, %p500
      %p503 = scmp.ne.s32.totalorder %s488, %s502
      %p504 = scmp.eq.s32.totalorder %s100, 0
      %p505 = por %p503, %p504
      %s507 = sadd.s32 %s506, 1
      %p510 = scmp.eq.s32.totalorder %s94, 1
      %p511 = scmp.ne.s32.totalorder %s506, %s508
      %p512 = scmp.eq.s32.totalorder %s94, 0
      %p513 = por %p511, %p512
      %p514 = scmp.ne.s32.totalorder %s506, %s508
      %p515 = scmp.eq.s32.totalorder %s99, 1
      %p516 = por %p514, %p515
      %p517 = scmp.ne.s32.totalorder %s508, %s509
      %p518 = scmp.eq.s32.totalorder %s99, 0
      %p519 = por %p517, %p518
      %p520 = scmp.ne.s32.totalorder %s508, %s509
      %p521 = scmp.eq.s32.totalorder %s100, 1
      %p522 = por %p520, %p521
      %p524 = scmp.ne.s32.totalorder %s509, %s523
      %p525 = scmp.eq.s32.totalorder %s100, 0
      %p526 = por %p524, %p525
      %s528 = sadd.s32 %s527, 1
      %p531 = scmp.eq.s32.totalorder %s94, 1
      %p532 = scmp.ne.s32.totalorder %s527, %s529
      %p533 = scmp.eq.s32.totalorder %s94, 0
      %p534 = por %p532, %p533
      %p535 = scmp.ne.s32.totalorder %s527, %s529
      %p536 = scmp.eq.s32.totalorder %s99, 1
      %p537 = por %p535, %p536
      %p538 = scmp.ne.s32.totalorder %s529, %s530
      %p539 = scmp.eq.s32.totalorder %s99, 0
      %p540 = por %p538, %p539
      %p541 = scmp.ne.s32.totalorder %s529, %s530
      %p542 = scmp.eq.s32.totalorder %s100, 1
      %p543 = por %p541, %p542
      %p545 = scmp.ne.s32.totalorder %s530, %s544
      %p546 = scmp.eq.s32.totalorder %s100, 0
      %p547 = por %p545, %p546
      %s549 = sadd.s32 %s548, 1
      %p552 = scmp.eq.s32.totalorder %s94, 1
      %p553 = scmp.ne.s32.totalorder %s548, %s550
      %p554 = scmp.eq.s32.totalorder %s94, 0
      %p555 = por %p553, %p554
      %p556 = scmp.ne.s32.totalorder %s548, %s550
      %p557 = scmp.eq.s32.totalorder %s99, 1
      %p558 = por %p556, %p557
      %p559 = scmp.ne.s32.totalorder %s550, %s551
      %p560 = scmp.eq.s32.totalorder %s99, 0
      %p561 = por %p559, %p560
      %p562 = scmp.ne.s32.totalorder %s550, %s551
      %p563 = scmp.eq.s32.totalorder %s100, 1
      %p564 = por %p562, %p563
      %p566 = scmp.ne.s32.totalorder %s551, %s565
      %p567 = scmp.eq.s32.totalorder %s100, 0
      %p568 = por %p566, %p567
      %s570 = sadd.s32 %s569, 1
      %p573 = scmp.eq.s32.totalorder %s94, 1
      %p574 = scmp.ne.s32.totalorder %s569, %s571
      %p575 = scmp.eq.s32.totalorder %s94, 0
      %p576 = por %p574, %p575
      %p577 = scmp.ne.s32.totalorder %s569, %s571
      %p578 = scmp.eq.s32.totalorder %s99, 1
      %p579 = por %p577, %p578
      %p580 = scmp.ne.s32.totalorder %s571, %s572
      %p581 = scmp.eq.s32.totalorder %s99, 0
      %p582 = por %p580, %p581
      %p583 = scmp.ne.s32.totalorder %s571, %s572
      %p584 = scmp.eq.s32.totalorder %s100, 1
      %p585 = por %p583, %p584
      %p587 = scmp.ne.s32.totalorder %s572, %s586
      %p588 = scmp.eq.s32.totalorder %s100, 0
      %p589 = por %p587, %p588
      %s591 = sadd.s32 %s590, 1
      %p594 = scmp.eq.s32.totalorder %s94, 1
      %p595 = scmp.ne.s32.totalorder %s590, %s592
      %p596 = scmp.eq.s32.totalorder %s94, 0
      %p597 = por %p595, %p596
      %p598 = scmp.ne.s32.totalorder %s590, %s592
      %p599 = scmp.eq.s32.totalorder %s99, 1
      %p600 = por %p598, %p599
      %p601 = scmp.ne.s32.totalorder %s592, %s593
      %p602 = scmp.eq.s32.totalorder %s99, 0
      %p603 = por %p601, %p602
      %p604 = scmp.ne.s32.totalorder %s592, %s593
      %p605 = scmp.eq.s32.totalorder %s100, 1
      %p606 = por %p604, %p605
      %p608 = scmp.ne.s32.totalorder %s593, %s607
      %p609 = scmp.eq.s32.totalorder %s100, 0
      %p610 = por %p608, %p609
      %s612 = sadd.s32 %s611, 1
      %p615 = scmp.eq.s32.totalorder %s94, 1
      %p616 = scmp.ne.s32.totalorder %s611, %s613
      %p617 = scmp.eq.s32.totalorder %s94, 0
      %p618 = por %p616, %p617
      %p619 = scmp.ne.s32.totalorder %s611, %s613
      %p620 = scmp.eq.s32.totalorder %s99, 1
      %p621 = por %p619, %p620
      %p622 = scmp.ne.s32.totalorder %s613, %s614
      %p623 = scmp.eq.s32.totalorder %s99, 0
      %p624 = por %p622, %p623
      %p625 = scmp.ne.s32.totalorder %s613, %s614
      %p626 = scmp.eq.s32.totalorder %s100, 1
      %p627 = por %p625, %p626
      %p629 = scmp.ne.s32.totalorder %s614, %s628
      %p630 = scmp.eq.s32.totalorder %s100, 0
      %p631 = por %p629, %p630
      %s633 = sadd.s32 %s632, 1
      %p636 = scmp.eq.s32.totalorder %s94, 1
      %p637 = scmp.ne.s32.totalorder %s632, %s634
      %p638 = scmp.eq.s32.totalorder %s94, 0
      %p639 = por %p637, %p638
      %p640 = scmp.ne.s32.totalorder %s632, %s634
      %p641 = scmp.eq.s32.totalorder %s99, 1
      %p642 = por %p640, %p641
      %p643 = scmp.ne.s32.totalorder %s634, %s635
      %p644 = scmp.eq.s32.totalorder %s99, 0
      %p645 = por %p643, %p644
      %p646 = scmp.ne.s32.totalorder %s634, %s635
      %p647 = scmp.eq.s32.totalorder %s100, 1
      %p648 = por %p646, %p647
      %p650 = scmp.ne.s32.totalorder %s635, %s649
      %p651 = scmp.eq.s32.totalorder %s100, 0
      %p652 = por %p650, %p651
      %s654 = sadd.s32 %s653, 1
      %p657 = scmp.eq.s32.totalorder %s94, 1
      %p658 = scmp.ne.s32.totalorder %s653, %s655
      %p659 = scmp.eq.s32.totalorder %s94, 0
      %p660 = por %p658, %p659
      %p661 = scmp.ne.s32.totalorder %s653, %s655
      %p662 = scmp.eq.s32.totalorder %s99, 1
      %p663 = por %p661, %p662
      %p664 = scmp.ne.s32.totalorder %s655, %s656
      %p665 = scmp.eq.s32.totalorder %s99, 0
      %p666 = por %p664, %p665
      %p667 = scmp.ne.s32.totalorder %s655, %s656
      %p668 = scmp.eq.s32.totalorder %s100, 1
      %p669 = por %p667, %p668
      %p671 = scmp.ne.s32.totalorder %s656, %s670
      %p672 = scmp.eq.s32.totalorder %s100, 0
      %p673 = por %p671, %p672
      %s675 = sadd.s32 %s674, 1
      %p678 = scmp.eq.s32.totalorder %s94, 1
      %p679 = scmp.ne.s32.totalorder %s674, %s676
      %p680 = scmp.eq.s32.totalorder %s94, 0
      %p681 = por %p679, %p680
      %p682 = scmp.ne.s32.totalorder %s674, %s676
      %p683 = scmp.eq.s32.totalorder %s99, 1
      %p684 = por %p682, %p683
      %p685 = scmp.ne.s32.totalorder %s676, %s677
      %p686 = scmp.eq.s32.totalorder %s99, 0
      %p687 = por %p685, %p686
      %p688 = scmp.ne.s32.totalorder %s676, %s677
      %p689 = scmp.eq.s32.totalorder %s100, 1
      %p690 = por %p688, %p689
      %p692 = scmp.ne.s32.totalorder %s677, %s691
      %p693 = scmp.eq.s32.totalorder %s100, 0
      %p694 = por %p692, %p693
      %s696 = sadd.s32 %s695, 1
      %p699 = scmp.eq.s32.totalorder %s94, 1
      %p700 = scmp.ne.s32.totalorder %s695, %s697
      %p701 = scmp.eq.s32.totalorder %s94, 0
      %p702 = por %p700, %p701
      %p703 = scmp.ne.s32.totalorder %s695, %s697
      %p704 = scmp.eq.s32.totalorder %s99, 1
      %p705 = por %p703, %p704
      %p706 = scmp.ne.s32.totalorder %s697, %s698
      %p707 = scmp.eq.s32.totalorder %s99, 0
      %p708 = por %p706, %p707
      %p709 = scmp.ne.s32.totalorder %s697, %s698
      %p710 = scmp.eq.s32.totalorder %s100, 1
      %p711 = por %p709, %p710
      %p713 = scmp.ne.s32.totalorder %s698, %s712
      %p714 = scmp.eq.s32.totalorder %s100, 0
      %p715 = por %p713, %p714
      %s717 = sadd.s32 %s716, 1
      %p720 = scmp.eq.s32.totalorder %s94, 1
      %p721 = scmp.ne.s32.totalorder %s716, %s718
      %p722 = scmp.eq.s32.totalorder %s94, 0
      %p723 = por %p721, %p722
      %p724 = scmp.ne.s32.totalorder %s716, %s718
      %p725 = scmp.eq.s32.totalorder %s99, 1
      %p726 = por %p724, %p725
      %p727 = scmp.ne.s32.totalorder %s718, %s719
      %p728 = scmp.eq.s32.totalorder %s99, 0
      %p729 = por %p727, %p728
      %p730 = scmp.ne.s32.totalorder %s718, %s719
      %p731 = scmp.eq.s32.totalorder %s100, 1
      %p732 = por %p730, %p731
      %p734 = scmp.ne.s32.totalorder %s719, %s733
      %p735 = scmp.eq.s32.totalorder %s100, 0
      %p736 = por %p734, %p735
      %s738 = sadd.s32 %s737, 1
      %p741 = scmp.eq.s32.totalorder %s94, 1
      %p742 = scmp.ne.s32.totalorder %s737, %s739
      %p743 = scmp.eq.s32.totalorder %s94, 0
      %p744 = por %p742, %p743
      %p745 = scmp.ne.s32.totalorder %s737, %s739
      %p746 = scmp.eq.s32.totalorder %s99, 1
      %p747 = por %p745, %p746
      %p748 = scmp.ne.s32.totalorder %s739, %s740
      %p749 = scmp.eq.s32.totalorder %s99, 0
      %p750 = por %p748, %p749
      %p751 = scmp.ne.s32.totalorder %s739, %s740
      %p752 = scmp.eq.s32.totalorder %s100, 1
      %p753 = por %p751, %p752
      %p755 = scmp.ne.s32.totalorder %s740, %s754
      %p756 = scmp.eq.s32.totalorder %s100, 0
      %p757 = por %p755, %p756
      %s759 = sadd.s32 %s758, 1
      %p762 = scmp.eq.s32.totalorder %s94, 1
      %p763 = scmp.ne.s32.totalorder %s758, %s760
      %p764 = scmp.eq.s32.totalorder %s94, 0
      %p765 = por %p763, %p764
      %p766 = scmp.ne.s32.totalorder %s758, %s760
      %p767 = scmp.eq.s32.totalorder %s99, 1
      %p768 = por %p766, %p767
      %p769 = scmp.ne.s32.totalorder %s760, %s761
      %p770 = scmp.eq.s32.totalorder %s99, 0
      %p771 = por %p769, %p770
      %p772 = scmp.ne.s32.totalorder %s760, %s761
      %p773 = scmp.eq.s32.totalorder %s100, 1
      %p774 = por %p772, %p773
      %p776 = scmp.ne.s32.totalorder %s761, %s775
      %p777 = scmp.eq.s32.totalorder %s100, 0
      %p778 = por %p776, %p777
      %s780 = sadd.s32 %s779, 1
      %p783 = scmp.eq.s32.totalorder %s94, 1
      %p784 = scmp.ne.s32.totalorder %s779, %s781
      %p785 = scmp.eq.s32.totalorder %s94, 0
      %p786 = por %p784, %p785
      %p787 = scmp.ne.s32.totalorder %s779, %s781
      %p788 = scmp.eq.s32.totalorder %s99, 1
      %p789 = por %p787, %p788
      %p790 = scmp.ne.s32.totalorder %s781, %s782
      %p791 = scmp.eq.s32.totalorder %s99, 0
      %p792 = por %p790, %p791
      %p793 = scmp.ne.s32.totalorder %s781, %s782
      %p794 = scmp.eq.s32.totalorder %s100, 1
      %p795 = por %p793, %p794
      %p797 = scmp.ne.s32.totalorder %s782, %s796
      %p798 = scmp.eq.s32.totalorder %s100, 0
      %p799 = por %p797, %p798
      %s801 = sadd.s32 %s800, 1
      %p804 = scmp.eq.s32.totalorder %s94, 1
      %p805 = scmp.ne.s32.totalorder %s800, %s802
      %p806 = scmp.eq.s32.totalorder %s94, 0
      %p807 = por %p805, %p806
      %p808 = scmp.ne.s32.totalorder %s800, %s802
      %p809 = scmp.eq.s32.totalorder %s99, 1
      %p810 = por %p808, %p809
      %p811 = scmp.ne.s32.totalorder %s802, %s803
      %p812 = scmp.eq.s32.totalorder %s99, 0
      %p813 = por %p811, %p812
      %p814 = scmp.ne.s32.totalorder %s802, %s803
      %p815 = scmp.eq.s32.totalorder %s100, 1
      %p816 = por %p814, %p815
      %p818 = scmp.ne.s32.totalorder %s803, %s817
      %p819 = scmp.eq.s32.totalorder %s100, 0
      %p820 = por %p818, %p819
      %s822 = sadd.s32 %s821, 1
      %p825 = scmp.eq.s32.totalorder %s94, 1
      %p826 = scmp.ne.s32.totalorder %s821, %s823
      %p827 = scmp.eq.s32.totalorder %s94, 0
      %p828 = por %p826, %p827
      %p829 = scmp.ne.s32.totalorder %s821, %s823
      %p830 = scmp.eq.s32.totalorder %s99, 1
      %p831 = por %p829, %p830
      %p832 = scmp.ne.s32.totalorder %s823, %s824
      %p833 = scmp.eq.s32.totalorder %s99, 0
      %p834 = por %p832, %p833
      %p835 = scmp.ne.s32.totalorder %s823, %s824
      %p836 = scmp.eq.s32.totalorder %s100, 1
      %p837 = por %p835, %p836
      %p839 = scmp.ne.s32.totalorder %s824, %s838
      %p840 = scmp.eq.s32.totalorder %s100, 0
      %p841 = por %p839, %p840
      %s843 = sadd.s32 %s842, 1
      %p846 = scmp.eq.s32.totalorder %s94, 1
      %p847 = scmp.ne.s32.totalorder %s842, %s844
      %p848 = scmp.eq.s32.totalorder %s94, 0
      %p849 = por %p847, %p848
      %p850 = scmp.ne.s32.totalorder %s842, %s844
      %p851 = scmp.eq.s32.totalorder %s99, 1
      %p852 = por %p850, %p851
      %p853 = scmp.ne.s32.totalorder %s844, %s845
      %p854 = scmp.eq.s32.totalorder %s99, 0
      %p855 = por %p853, %p854
      %p856 = scmp.ne.s32.totalorder %s844, %s845
      %p857 = scmp.eq.s32.totalorder %s100, 1
      %p858 = por %p856, %p857
      %p860 = scmp.ne.s32.totalorder %s845, %s859
      %p861 = scmp.eq.s32.totalorder %s100, 0
      %p862 = por %p860, %p861
      %s864 = sadd.s32 %s863, 1
      %p867 = scmp.eq.s32.totalorder %s94, 1
      %p868 = scmp.ne.s32.totalorder %s863, %s865
      %p869 = scmp.eq.s32.totalorder %s94, 0
      %p870 = por %p868, %p869
      %p871 = scmp.ne.s32.totalorder %s863, %s865
      %p872 = scmp.eq.s32.totalorder %s99, 1
      %p873 = por %p871, %p872
      %p874 = scmp.ne.s32.totalorder %s865, %s866
      %p875 = scmp.eq.s32.totalorder %s99, 0
      %p876 = por %p874, %p875
      %p877 = scmp.ne.s32.totalorder %s865, %s866
      %p878 = scmp.eq.s32.totalorder %s100, 1
      %p879 = por %p877, %p878
      %p881 = scmp.ne.s32.totalorder %s866, %s880
      %p882 = scmp.eq.s32.totalorder %s100, 0
      %p883 = por %p881, %p882
      %s885 = sadd.s32 %s884, 1
      %p888 = scmp.eq.s32.totalorder %s94, 1
      %p889 = scmp.ne.s32.totalorder %s884, %s886
      %p890 = scmp.eq.s32.totalorder %s94, 0
      %p891 = por %p889, %p890
      %p892 = scmp.ne.s32.totalorder %s884, %s886
      %p893 = scmp.eq.s32.totalorder %s99, 1
      %p894 = por %p892, %p893
      %p895 = scmp.ne.s32.totalorder %s886, %s887
      %p896 = scmp.eq.s32.totalorder %s99, 0
      %p897 = por %p895, %p896
      %p898 = scmp.ne.s32.totalorder %s886, %s887
      %p899 = scmp.eq.s32.totalorder %s100, 1
      %p900 = por %p898, %p899
      %p902 = scmp.ne.s32.totalorder %s887, %s901
      %p903 = scmp.eq.s32.totalorder %s100, 0
      %p904 = por %p902, %p903
      %s905 = ssub.s32 %s94, %s101
      %p906 = scmp.eq.s32.totalorder %s905, 0
      %s908 = sadd.s32 %s907, 1
      %s909 = scalar_select %p906, %s907, %s908
      %p912 = pneg %p906
      %p913 = scmp.eq.s32.totalorder %s94, 1
      %p914 = por %p912, %p913
      %p915 = scmp.ne.s32.totalorder %s907, %s910
      %p916 = scmp.eq.s32.totalorder %s94, 0
      %p917 = por %p915, %p916
      %p918 = scmp.ne.s32.totalorder %s907, %s910
      %p919 = scmp.eq.s32.totalorder %s99, 1
      %p920 = por %p918, %p919
      %p921 = scmp.ne.s32.totalorder %s910, %s911
      %p922 = scmp.eq.s32.totalorder %s99, 0
      %p923 = por %p921, %p922
      %p924 = scmp.ne.s32.totalorder %s910, %s911
      %p925 = scmp.eq.s32.totalorder %s100, 1
      %p926 = por %p924, %p925
      %p928 = scmp.ne.s32.totalorder %s911, %s927
      %p929 = scmp.eq.s32.totalorder %s100, 0
      %p930 = por %p928, %p929
      %s931 = ssub.s32 %s94, %s101
      %p932 = scmp.eq.s32.totalorder %s931, 0
      %s934 = sadd.s32 %s933, 1
      %s935 = scalar_select %p932, %s933, %s934
      %p938 = pneg %p932
      %p939 = scmp.eq.s32.totalorder %s94, 1
      %p940 = por %p938, %p939
      %p941 = scmp.ne.s32.totalorder %s933, %s936
      %p942 = scmp.eq.s32.totalorder %s94, 0
      %p943 = por %p941, %p942
      %p944 = scmp.ne.s32.totalorder %s933, %s936
      %p945 = scmp.eq.s32.totalorder %s99, 1
      %p946 = por %p944, %p945
      %p947 = scmp.ne.s32.totalorder %s936, %s937
      %p948 = scmp.eq.s32.totalorder %s99, 0
      %p949 = por %p947, %p948
      %p950 = scmp.ne.s32.totalorder %s936, %s937
      %p951 = scmp.eq.s32.totalorder %s100, 1
      %p952 = por %p950, %p951
      %p954 = scmp.ne.s32.totalorder %s937, %s953
      %p955 = scmp.eq.s32.totalorder %s100, 0
      %p956 = por %p954, %p955
      %s957 = ssub.s32 %s94, %s101
      %p958 = scmp.eq.s32.totalorder %s957, 0
      %s960 = sadd.s32 %s959, 1
      %s961 = scalar_select %p958, %s959, %s960
      %p964 = pneg %p958
      %p965 = scmp.eq.s32.totalorder %s94, 1
      %p966 = por %p964, %p965
      %p967 = scmp.ne.s32.totalorder %s959, %s962
      %p968 = scmp.eq.s32.totalorder %s94, 0
      %p969 = por %p967, %p968
      %p970 = scmp.ne.s32.totalorder %s959, %s962
      %p971 = scmp.eq.s32.totalorder %s99, 1
      %p972 = por %p970, %p971
      %p973 = scmp.ne.s32.totalorder %s962, %s963
      %p974 = scmp.eq.s32.totalorder %s99, 0
      %p975 = por %p973, %p974
      %p976 = scmp.ne.s32.totalorder %s962, %s963
      %p977 = scmp.eq.s32.totalorder %s100, 1
      %p978 = por %p976, %p977
      %p980 = scmp.ne.s32.totalorder %s963, %s979
      %p981 = scmp.eq.s32.totalorder %s100, 0
      %p982 = por %p980, %p981
      %p983 = scmp.le.s32.totalorder 1, %s94
      %p984 = scmp.lt.s32.totalorder %s94, 3
      %p985 = pnand %p983, %p984
      %p986 = pneg %p985
      // Predicated region
      $region9: #{focalnet_forward.1} parent=5 // pred_check
        _
      $region10: #{focalnet_forward.1} parent=5 // pred_check_branch
        %988 = sbr.rel (%p985) target = $region12
      $region11: #{focalnet_forward.1} parent=5 // pred_region
        %s989 = ssub.s32 %s94, 1
        // Predicated region
        $region13: #{focalnet_forward.1} parent=11 // pred_check
          %p990 = pneg %p141
        $region14: #{focalnet_forward.1} parent=11 // pred_check_branch
          %992 = sbr.rel (%p990) target = $region16
        $region15: #{focalnet_forward.1} parent=11 // pred_region
          _
        $region16: #{focalnet_forward.1} parent=11 // pred_fallthru
          _
        // Predicated region
        $region17: #{focalnet_forward.1} parent=11 // pred_check
          %p993 = pneg %p162
        $region18: #{focalnet_forward.1} parent=11 // pred_check_branch
          %995 = sbr.rel (%p993) target = $region20
        $region19: #{focalnet_forward.1} parent=11 // pred_region
          _
        $region20: #{focalnet_forward.1} parent=11 // pred_fallthru
          _
        // Predicated region
        $region21: #{focalnet_forward.1} parent=11 // pred_check
          %p996 = pneg %p183
        $region22: #{focalnet_forward.1} parent=11 // pred_check_branch
          %998 = sbr.rel (%p996) target = $region24
        $region23: #{focalnet_forward.1} parent=11 // pred_region
          _
        $region24: #{focalnet_forward.1} parent=11 // pred_fallthru
          _
        // Predicated region
        $region25: #{focalnet_forward.1} parent=11 // pred_check
          %p999 = pneg %p204
        $region26: #{focalnet_forward.1} parent=11 // pred_check_branch
          %1001 = sbr.rel (%p999) target = $region28
        $region27: #{focalnet_forward.1} parent=11 // pred_region
          _
        $region28: #{focalnet_forward.1} parent=11 // pred_fallthru
          _
        // Predicated region
        $region29: #{focalnet_forward.1} parent=11 // pred_check
          %p1002 = pneg %p225
        $region30: #{focalnet_forward.1} parent=11 // pred_check_branch
          %1004 = sbr.rel (%p1002) target = $region32
        $region31: #{focalnet_forward.1} parent=11 // pred_region
          _
        $region32: #{focalnet_forward.1} parent=11 // pred_fallthru
          _
        // Predicated region
        $region33: #{focalnet_forward.1} parent=11 // pred_check
          %p1005 = pneg %p246
        $region34: #{focalnet_forward.1} parent=11 // pred_check_branch
          %1007 = sbr.rel (%p1005) target = $region36
        $region35: #{focalnet_forward.1} parent=11 // pred_region
          _
        $region36: #{focalnet_forward.1} parent=11 // pred_fallthru
          _
        // Predicated region
        $region37: #{focalnet_forward.1} parent=11 // pred_check
          %p1008 = pneg %p267
        $region38: #{focalnet_forward.1} parent=11 // pred_check_branch
          %1010 = sbr.rel (%p1008) target = $region40
        $region39: #{focalnet_forward.1} parent=11 // pred_region
          _
        $region40: #{focalnet_forward.1} parent=11 // pred_fallthru
          _
        // Predicated region
        $region41: #{focalnet_forward.1} parent=11 // pred_check
          %p1011 = pneg %p288
        $region42: #{focalnet_forward.1} parent=11 // pred_check_branch
          %1013 = sbr.rel (%p1011) target = $region44
        $region43: #{focalnet_forward.1} parent=11 // pred_region
          _
        $region44: #{focalnet_forward.1} parent=11 // pred_fallthru
          _
        // Predicated region
        $region45: #{focalnet_forward.1} parent=11 // pred_check
          %p1014 = pneg %p309
        $region46: #{focalnet_forward.1} parent=11 // pred_check_branch
          %1016 = sbr.rel (%p1014) target = $region48
        $region47: #{focalnet_forward.1} parent=11 // pred_region
          _
        $region48: #{focalnet_forward.1} parent=11 // pred_fallthru
          _
        // Predicated region
        $region49: #{focalnet_forward.1} parent=11 // pred_check
          %p1017 = pneg %p330
        $region50: #{focalnet_forward.1} parent=11 // pred_check_branch
          %1019 = sbr.rel (%p1017) target = $region52
        $region51: #{focalnet_forward.1} parent=11 // pred_region
          _
        $region52: #{focalnet_forward.1} parent=11 // pred_fallthru
          _
        // Predicated region
        $region53: #{focalnet_forward.1} parent=11 // pred_check
          %p1020 = pneg %p351
        $region54: #{focalnet_forward.1} parent=11 // pred_check_branch
          %1022 = sbr.rel (%p1020) target = $region56
        $region55: #{focalnet_forward.1} parent=11 // pred_region
          _
        $region56: #{focalnet_forward.1} parent=11 // pred_fallthru
          _
        // Predicated region
        $region57: #{focalnet_forward.1} parent=11 // pred_check
          %p1023 = pneg %p372
        $region58: #{focalnet_forward.1} parent=11 // pred_check_branch
          %1025 = sbr.rel (%p1023) target = $region60
        $region59: #{focalnet_forward.1} parent=11 // pred_region
          _
        $region60: #{focalnet_forward.1} parent=11 // pred_fallthru
          _
        // Predicated region
        $region61: #{focalnet_forward.1} parent=11 // pred_check
          %p1026 = pneg %p393
        $region62: #{focalnet_forward.1} parent=11 // pred_check_branch
          %1028 = sbr.rel (%p1026) target = $region64
        $region63: #{focalnet_forward.1} parent=11 // pred_region
          _
        $region64: #{focalnet_forward.1} parent=11 // pred_fallthru
          _
        // Predicated region
        $region65: #{focalnet_forward.1} parent=11 // pred_check
          %p1029 = pneg %p414
        $region66: #{focalnet_forward.1} parent=11 // pred_check_branch
          %1031 = sbr.rel (%p1029) target = $region68
        $region67: #{focalnet_forward.1} parent=11 // pred_region
          _
        $region68: #{focalnet_forward.1} parent=11 // pred_fallthru
          _
        // Predicated region
        $region69: #{focalnet_forward.1} parent=11 // pred_check
          %p1032 = pneg %p435
        $region70: #{focalnet_forward.1} parent=11 // pred_check_branch
          %1034 = sbr.rel (%p1032) target = $region72
        $region71: #{focalnet_forward.1} parent=11 // pred_region
          _
        $region72: #{focalnet_forward.1} parent=11 // pred_fallthru
          _
        // Predicated region
        $region73: #{focalnet_forward.1} parent=11 // pred_check
          %p1035 = pneg %p456
        $region74: #{focalnet_forward.1} parent=11 // pred_check_branch
          %1037 = sbr.rel (%p1035) target = $region76
        $region75: #{focalnet_forward.1} parent=11 // pred_region
          _
        $region76: #{focalnet_forward.1} parent=11 // pred_fallthru
          _
        // Predicated region
        $region77: #{focalnet_forward.1} parent=11 // pred_check
          %p1038 = pneg %p477
        $region78: #{focalnet_forward.1} parent=11 // pred_check_branch
          %1040 = sbr.rel (%p1038) target = $region80
        $region79: #{focalnet_forward.1} parent=11 // pred_region
          _
        $region80: #{focalnet_forward.1} parent=11 // pred_fallthru
          _
        // Predicated region
        $region81: #{focalnet_forward.1} parent=11 // pred_check
          %p1041 = pneg %p498
        $region82: #{focalnet_forward.1} parent=11 // pred_check_branch
          %1043 = sbr.rel (%p1041) target = $region84
        $region83: #{focalnet_forward.1} parent=11 // pred_region
          _
        $region84: #{focalnet_forward.1} parent=11 // pred_fallthru
          _
        // Predicated region
        $region85: #{focalnet_forward.1} parent=11 // pred_check
          %p1044 = pneg %p519
        $region86: #{focalnet_forward.1} parent=11 // pred_check_branch
          %1046 = sbr.rel (%p1044) target = $region88
        $region87: #{focalnet_forward.1} parent=11 // pred_region
          _
        $region88: #{focalnet_forward.1} parent=11 // pred_fallthru
          _
        // Predicated region
        $region89: #{focalnet_forward.1} parent=11 // pred_check
          %p1047 = pneg %p540
        $region90: #{focalnet_forward.1} parent=11 // pred_check_branch
          %1049 = sbr.rel (%p1047) target = $region92
        $region91: #{focalnet_forward.1} parent=11 // pred_region
          _
        $region92: #{focalnet_forward.1} parent=11 // pred_fallthru
          _
        // Predicated region
        $region93: #{focalnet_forward.1} parent=11 // pred_check
          %p1050 = pneg %p561
        $region94: #{focalnet_forward.1} parent=11 // pred_check_branch
          %1052 = sbr.rel (%p1050) target = $region96
        $region95: #{focalnet_forward.1} parent=11 // pred_region
          _
        $region96: #{focalnet_forward.1} parent=11 // pred_fallthru
          _
        // Predicated region
        $region97: #{focalnet_forward.1} parent=11 // pred_check
          %p1053 = pneg %p582
        $region98: #{focalnet_forward.1} parent=11 // pred_check_branch
          %1055 = sbr.rel (%p1053) target = $region100
        $region99: #{focalnet_forward.1} parent=11 // pred_region
          _
        $region100: #{focalnet_forward.1} parent=11 // pred_fallthru
          _
        // Predicated region
        $region101: #{focalnet_forward.1} parent=11 // pred_check
          %p1056 = pneg %p603
        $region102: #{focalnet_forward.1} parent=11 // pred_check_branch
          %1058 = sbr.rel (%p1056) target = $region104
        $region103: #{focalnet_forward.1} parent=11 // pred_region
          _
        $region104: #{focalnet_forward.1} parent=11 // pred_fallthru
          _
        // Predicated region
        $region105: #{focalnet_forward.1} parent=11 // pred_check
          %p1059 = pneg %p624
        $region106: #{focalnet_forward.1} parent=11 // pred_check_branch
          %1061 = sbr.rel (%p1059) target = $region108
        $region107: #{focalnet_forward.1} parent=11 // pred_region
          _
        $region108: #{focalnet_forward.1} parent=11 // pred_fallthru
          _
        // Predicated region
        $region109: #{focalnet_forward.1} parent=11 // pred_check
          %p1062 = pneg %p645
        $region110: #{focalnet_forward.1} parent=11 // pred_check_branch
          %1064 = sbr.rel (%p1062) target = $region112
        $region111: #{focalnet_forward.1} parent=11 // pred_region
          _
        $region112: #{focalnet_forward.1} parent=11 // pred_fallthru
          _
        // Predicated region
        $region113: #{focalnet_forward.1} parent=11 // pred_check
          %p1065 = pneg %p666
        $region114: #{focalnet_forward.1} parent=11 // pred_check_branch
          %1067 = sbr.rel (%p1065) target = $region116
        $region115: #{focalnet_forward.1} parent=11 // pred_region
          _
        $region116: #{focalnet_forward.1} parent=11 // pred_fallthru
          _
        // Predicated region
        $region117: #{focalnet_forward.1} parent=11 // pred_check
          %p1068 = pneg %p687
        $region118: #{focalnet_forward.1} parent=11 // pred_check_branch
          %1070 = sbr.rel (%p1068) target = $region120
        $region119: #{focalnet_forward.1} parent=11 // pred_region
          _
        $region120: #{focalnet_forward.1} parent=11 // pred_fallthru
          _
        // Predicated region
        $region121: #{focalnet_forward.1} parent=11 // pred_check
          %p1071 = pneg %p708
        $region122: #{focalnet_forward.1} parent=11 // pred_check_branch
          %1073 = sbr.rel (%p1071) target = $region124
        $region123: #{focalnet_forward.1} parent=11 // pred_region
          _
        $region124: #{focalnet_forward.1} parent=11 // pred_fallthru
          _
        // Predicated region
        $region125: #{focalnet_forward.1} parent=11 // pred_check
          %p1074 = pneg %p729
        $region126: #{focalnet_forward.1} parent=11 // pred_check_branch
          %1076 = sbr.rel (%p1074) target = $region128
        $region127: #{focalnet_forward.1} parent=11 // pred_region
          _
        $region128: #{focalnet_forward.1} parent=11 // pred_fallthru
          _
        // Predicated region
        $region129: #{focalnet_forward.1} parent=11 // pred_check
          %p1077 = pneg %p750
        $region130: #{focalnet_forward.1} parent=11 // pred_check_branch
          %1079 = sbr.rel (%p1077) target = $region132
        $region131: #{focalnet_forward.1} parent=11 // pred_region
          _
        $region132: #{focalnet_forward.1} parent=11 // pred_fallthru
          _
        // Predicated region
        $region133: #{focalnet_forward.1} parent=11 // pred_check
          %p1080 = pneg %p771
        $region134: #{focalnet_forward.1} parent=11 // pred_check_branch
          %1082 = sbr.rel (%p1080) target = $region136
        $region135: #{focalnet_forward.1} parent=11 // pred_region
          _
        $region136: #{focalnet_forward.1} parent=11 // pred_fallthru
          _
        // Predicated region
        $region137: #{focalnet_forward.1} parent=11 // pred_check
          %p1083 = pneg %p792
        $region138: #{focalnet_forward.1} parent=11 // pred_check_branch
          %1085 = sbr.rel (%p1083) target = $region140
        $region139: #{focalnet_forward.1} parent=11 // pred_region
          _
        $region140: #{focalnet_forward.1} parent=11 // pred_fallthru
          _
        // Predicated region
        $region141: #{focalnet_forward.1} parent=11 // pred_check
          %p1086 = pneg %p813
        $region142: #{focalnet_forward.1} parent=11 // pred_check_branch
          %1088 = sbr.rel (%p1086) target = $region144
        $region143: #{focalnet_forward.1} parent=11 // pred_region
          _
        $region144: #{focalnet_forward.1} parent=11 // pred_fallthru
          _
        // Predicated region
        $region145: #{focalnet_forward.1} parent=11 // pred_check
          %p1089 = pneg %p834
        $region146: #{focalnet_forward.1} parent=11 // pred_check_branch
          %1091 = sbr.rel (%p1089) target = $region148
        $region147: #{focalnet_forward.1} parent=11 // pred_region
          _
        $region148: #{focalnet_forward.1} parent=11 // pred_fallthru
          _
        // Predicated region
        $region149: #{focalnet_forward.1} parent=11 // pred_check
          %p1092 = pneg %p855
        $region150: #{focalnet_forward.1} parent=11 // pred_check_branch
          %1094 = sbr.rel (%p1092) target = $region152
        $region151: #{focalnet_forward.1} parent=11 // pred_region
          _
        $region152: #{focalnet_forward.1} parent=11 // pred_fallthru
          _
        // Predicated region
        $region153: #{focalnet_forward.1} parent=11 // pred_check
          %p1095 = pneg %p876
        $region154: #{focalnet_forward.1} parent=11 // pred_check_branch
          %1097 = sbr.rel (%p1095) target = $region156
        $region155: #{focalnet_forward.1} parent=11 // pred_region
          _
        $region156: #{focalnet_forward.1} parent=11 // pred_fallthru
          _
        // Predicated region
        $region157: #{focalnet_forward.1} parent=11 // pred_check
          %p1098 = pneg %p897
        $region158: #{focalnet_forward.1} parent=11 // pred_check_branch
          %1100 = sbr.rel (%p1098) target = $region160
        $region159: #{focalnet_forward.1} parent=11 // pred_region
          _
        $region160: #{focalnet_forward.1} parent=11 // pred_fallthru
          _
      $region12: #{focalnet_forward.1} parent=5 // pred_fallthru
        _
      %p1101 = scmp.lt.s32.totalorder %s94, 2
      // Predicated region
      $region161: #{focalnet_forward.1} parent=5 // pred_check
        %p1102 = pneg %p1101
      $region162: #{focalnet_forward.1} parent=5 // pred_check_branch
        %1104 = sbr.rel (%p1102) target = $region164
      $region163: #{focalnet_forward.1} parent=5 // pred_region
        // Predicated region
        $region165: #{focalnet_forward.1} parent=163 // pred_check
          %p1105 = pneg %p114
        $region166: #{focalnet_forward.1} parent=163 // pred_check_branch
          %1107 = sbr.rel (%p1105) target = $region168
        $region167: #{focalnet_forward.1} parent=163 // pred_region
          %p1108 = scmp.lt.s32.totalorder %s94, 1
          %s1109 = scalar_select %p1108, %s94, 1
          %s1110 = smul.addr %s1109, 12
          %s1111 = smul.addr %s1110, 8
          %s1112 = scalar_lea.vmem %s1, %s1111
        $region168: #{focalnet_forward.1} parent=163 // pred_fallthru
          _
      $region164: #{focalnet_forward.1} parent=5 // pred_fallthru
        _
      %p1113 = scmp.le.s32.totalorder 1, %s94
      %p1114 = scmp.lt.s32.totalorder %s94, 3
      %p1115 = pnand %p1113, %p1114
      %p1116 = pneg %p1115
      // Predicated region
      $region169: #{focalnet_forward.1} parent=5 // pred_check
        _
      $region170: #{focalnet_forward.1} parent=5 // pred_check_branch
        %1118 = sbr.rel (%p1115) target = $region172
      $region171: #{focalnet_forward.1} parent=5 // pred_region
        %s1119 = ssub.s32 %s94, 1
        %p1120 = scmp.lt.s32.totalorder %s99, 1
        %s1121 = scalar_select %p1120, %s99, 1
        %s1122 = smul.addr %s1121, 12
        %s1123 = smul.addr %s1122, 8
        %s1124 = scalar_lea.vmem %s1, %s1123
        %p1125 = pneg %p120
        %p1126 = pneg %p117
        %p1127 = pneg %p141
        %p1128 = pneg %p138
        %p1129 = pneg %p162
        %p1130 = pneg %p159
        %p1131 = pneg %p183
        %p1132 = pneg %p180
        %p1133 = pneg %p204
        %p1134 = pneg %p201
        %p1135 = pneg %p225
        %p1136 = pneg %p222
        %p1137 = pneg %p246
        %p1138 = pneg %p243
        %p1139 = pneg %p267
        %p1140 = pneg %p264
        %p1141 = pneg %p288
        %p1142 = pneg %p285
        %p1143 = pneg %p309
        %p1144 = pneg %p306
        %p1145 = pneg %p330
        %p1146 = pneg %p327
        %p1147 = pneg %p351
        %p1148 = pneg %p348
        %p1149 = pneg %p372
        %p1150 = pneg %p369
        %p1151 = pneg %p393
        %p1152 = pneg %p390
        %p1153 = pneg %p414
        %p1154 = pneg %p411
        %p1155 = pneg %p435
        %p1156 = pneg %p432
        %p1157 = pneg %p456
        %p1158 = pneg %p453
        %p1159 = pneg %p477
        %p1160 = pneg %p474
        %p1161 = pneg %p498
        %p1162 = pneg %p495
        %p1163 = pneg %p519
        %p1164 = pneg %p516
        %p1165 = pneg %p540
        %p1166 = pneg %p537
        %p1167 = pneg %p561
        %p1168 = pneg %p558
        %p1169 = pneg %p582
        %p1170 = pneg %p579
        %p1171 = pneg %p603
        %p1172 = pneg %p600
        %p1173 = pneg %p624
        %p1174 = pneg %p621
        %p1175 = pneg %p645
        %p1176 = pneg %p642
        %p1177 = pneg %p666
        %p1178 = pneg %p663
        %p1179 = pneg %p687
        %p1180 = pneg %p684
        %p1181 = pneg %p708
        %p1182 = pneg %p705
        %p1183 = pneg %p729
        %p1184 = pneg %p726
        %p1185 = pneg %p750
        %p1186 = pneg %p747
        %p1187 = pneg %p771
        %p1188 = pneg %p768
        %p1189 = pneg %p792
        %p1190 = pneg %p789
        %p1191 = pneg %p813
        %p1192 = pneg %p810
        %p1193 = pneg %p834
        %p1194 = pneg %p831
        %p1195 = pneg %p855
        %p1196 = pneg %p852
        %p1197 = pneg %p876
        %p1198 = pneg %p873
        %p1199 = pneg %p897
        %p1200 = pneg %p894
        %p1201 = pneg %p923
        %p1202 = pneg %p920
        %s1203 = sand.u32 %s910, 1
        %s1204 = scalar_lea.sflag [#allocation5], %s1203
        %s1205 = sand.u32 %s910, 1
        %s1206 = smul.addr %s1205, 32
        %s1207 = scalar_lea.vmem [#allocation4], %s1206
        %p1208 = pneg %p949
        %p1209 = pneg %p946
        %s1210 = sand.u32 %s936, 1
        %s1211 = scalar_lea.sflag [#allocation7], %s1210
        %s1212 = sand.u32 %s936, 1
        %s1213 = smul.addr %s1212, 32
        %s1214 = scalar_lea.vmem [#allocation6], %s1213
        %p1215 = pneg %p975
        %p1216 = pneg %p972
        %p1217 = scmp.lt.s32.totalorder %s99, 1
        %s1218 = scalar_select %p1217, %s99, 1
        %s1219 = smul.addr %s1218, 4
        %s1220 = smul.addr %s1219, 8
        %s1221 = scalar_lea.vmem %s81, %s1220
        %p1222 = scmp.lt.s32.totalorder %s99, 1
        %s1223 = scalar_select %p1222, %s99, 1
        %s1224 = smul.addr %s1223, 12
        %s1225 = smul.addr %s1224, 8
        %s1226 = scalar_lea.vmem %s1, %s1225
        %p1227 = scmp.lt.s32.totalorder %s99, 1
        %s1228 = scalar_select %p1227, %s99, 1
        %s1229 = smul.addr %s1228, 4
        %s1230 = smul.addr %s1229, 8
        %s1231 = scalar_lea.vmem %s81, %s1230
        %v1232 = vld [vmem:[%s3] sm:$0xff]
        %v1233 = vld [vmem:[%s3 + $0x8] sm:$0xff]
        %v1234 = vld [vmem:[%s1226] sm:$0xff]
        %v1235 = vld [vmem:[%s1226 + $0x8] sm:$0xff]
        %v1236 = vld [vmem:[%s1226 + $0x10] sm:$0xff]
        %v1237 = vld [vmem:[%s1226 + $0x18] sm:$0xff]
        %v1238 = vld [vmem:[%s1226 + $0x20] sm:$0xff]
        %v1239 = vld [vmem:[%s1226 + $0x28] sm:$0xff]
        %v1240 = vld [vmem:[%s1226 + $0x30] sm:$0xff]
        %v1241 = vld [vmem:[%s1226 + $0x38] sm:$0xff]
        %v1242 = vld [vmem:[%s1226 + $0x40] sm:$0xff]
        %v1243 = vld [vmem:[%s1226 + $0x48] sm:$0xff]
        %v1244 = vld [vmem:[%s1226 + $0x50] sm:$0xff]
        %v1245 = vld [vmem:[%s1226 + $0x58] sm:$0xff]
        %v1246 = vld [vmem:[%s5] sm:$0xff]
        %v1247 = vld [vmem:[%s5 + $0x8] sm:$0xff]
        %1249 = vset.pattern.permute.xlu0 0
        %1250 = vperm.xlu0 %1249, %v1246
        %v1251 = vpop.permute.xlu0 %1250
        %1254 = vset.pattern.permute.xlu0 0
        %1255 = vperm.xlu0 %1254, %v1247
        %v1256 = vpop.permute.xlu0 %1255
        %vm1258 = vcmask 392192
        %v1260 = vsel %vm1258, %v1232, 0
        %v1263 = vsel %vm1258, %v1233, 0
        %1265 = vmatprep.subr.mxu0 %v1235
        %1266 = vmatpush1.msra.mxu0 %v1234
        %1267 = vmatprep.subr.mxu0 %v1237
        %1268 = vmatpush1.msra.mxu0 %v1236
        %1269 = vmatprep.subr.mxu0 %v1239
        %1270 = vmatpush1.msra.mxu0 %v1238
        %1271 = vmatprep.subr.mxu0 %v1241
        %1272 = vmatpush1.msra.mxu0 %v1240
        %1273 = vmatprep.subr.mxu0 %v1243
        %1274 = vmatpush1.msra.mxu0 %v1242
        %1275 = vmatprep.subr.mxu0 %v1245
        %1276 = vmatpush1.msra.mxu0 %v1244
        %1277 = vmatprep.subr.mxu0 0.0
        %1278 = vmatpush1.msra.mxu0 0.0
        %1279 = vmatprep.subr.mxu0 0.0
        %1280 = vmatpush1.msra.mxu0 0.0
        %1281 = vmatprep.subr.mxu0 0.0
        %1282 = vmatpush1.msra.mxu0 0.0
        %1283 = vmatprep.subr.mxu0 0.0
        %1284 = vmatpush1.msra.mxu0 0.0
        %1285 = vmatprep.subr.mxu0 0.0
        %1286 = vmatpush1.msra.mxu0 0.0
        %1287 = vmatprep.subr.mxu0 0.0
        %1288 = vmatpush1.msra.mxu0 0.0
        %1289 = vmatprep.subr.mxu0 0.0
        %1290 = vmatpush1.msra.mxu0 0.0
        %1291 = vmatprep.subr.mxu0 0.0
        %1292 = vmatpush1.msra.mxu0 0.0
        %1293 = vmatprep.subr.mxu0 0.0
        %1294 = vmatpush1.msra.mxu0 0.0
        %1295 = vmatprep.subr.mxu0 0.0
        %1296 = vmatpush1.msra.mxu0 0.0
        %1297 = vmatprep.subr.mxu0 0.0
        %1298 = vmatpush1.msra.mxu0 0.0
        %1299 = vmatprep.subr.mxu0 0.0
        %1300 = vmatpush1.msra.mxu0 0.0
        %1301 = vmatprep.subr.mxu0 0.0
        %1302 = vmatpush1.msra.mxu0 0.0
        %1303 = vmatprep.subr.mxu0 0.0
        %1304 = vmatpush1.msra.mxu0 0.0
        %1305 = vmatprep.subr.mxu0 0.0
        %1306 = vmatpush1.msra.mxu0 0.0
        %1307 = vmatprep.subr.mxu0 0.0
        %1308 = vmatpush1.msra.mxu0 0.0
        %1309 = vmatprep.subr.mxu0 0.0
        %1310 = vmatpush1.msra.mxu0 0.0
        %1311 = vmatprep.subr.mxu0 0.0
        %1312 = vmatpush1.msra.mxu0 0.0
        %1313 = vmatprep.subr.mxu0 0.0
        %1314 = vmatpush1.msra.mxu0 0.0
        %1315 = vmatprep.subr.mxu0 0.0
        %1316 = vmatpush1.msra.mxu0 0.0
        %1317 = vmatprep.subr.mxu0 0.0
        %1318 = vmatpush1.msra.mxu0 0.0
        %1319 = vmatprep.subr.mxu0 0.0
        %1320 = vmatpush1.msra.mxu0 0.0
        %1321 = vmatprep.subr.mxu0 0.0
        %1322 = vmatpush1.msra.mxu0 0.0
        %1323 = vmatprep.subr.mxu0 0.0
        %1324 = vmatpush1.msra.mxu0 0.0
        %1325 = vmatprep.subr.mxu0 0.0
        %1326 = vmatpush1.msra.mxu0 0.0
        %1327 = vmatprep.subr.mxu0 0.0
        %1328 = vmatpush1.msra.mxu0 0.0
        %1329 = vmatprep.mubr.f32.mxu0 0.0
        %1330 = vmatmul.mubr.f32.gmra.mrb[0].mxu0 %v1260
        %v1331 = vpop.f32.mrb[0].mxu0
        %v1332 = vadd.f32 %v1251, %v1331
        %v1333 = vpop.f32.mrb[0].mxu0
        %v1334 = vadd.f32 %v1251, %v1333
        %1335 = vmatprep.mubr.f32.mxu0 0.0
        %1336 = vmatmul.mubr.f32.gmra.mrb[0].mxu0 %v1263
        %v1337 = vpop.f32.mrb[0].mxu0
        %v1338 = vadd.f32 %v1256, %v1337
        %v1339 = vpop.f32.mrb[0].mxu0
        %v1340 = vadd.f32 %v1256, %v1339
        %1341 = vdwg.mxu0
        %v1342 = vld [vmem:[%s7] sm:$0xff]
        %v1343 = vld [vmem:[%s7 + $0x8] sm:$0xff]
        %v1344 = vld [vmem:[%s9] sm:$0xff]
        %v1345 = vld [vmem:[%s9 + $0x8] sm:$0xff]
        %v1346 = vadd.f32 %v1332, %v1338
        %v1347 = vrot.slane %v1346, 4
        %v1348 = vadd.f32 %v1346, %v1347
        %v1349 = vrot.slane %v1348, 2
        %v1350 = vadd.f32 %v1348, %v1349
        %v1351 = vrot.slane %v1350, 1
        %v1352 = vadd.f32 %v1350, %v1351
        %vm1353 = vcmask 556032
        %v1354 = vsel %vm1353, %v1334, 0.0
        %v1355 = vsel %vm1353, %v1340, 0.0
        %v1356 = vadd.f32 %v1354, %v1355
        %v1357 = vrot.slane %v1356, 4
        %v1358 = vadd.f32 %v1356, %v1357
        %v1359 = vrot.slane %v1358, 2
        %v1360 = vadd.f32 %v1358, %v1359
        %v1361 = vrot.slane %v1360, 1
        %v1362 = vadd.f32 %v1360, %v1361
        %v1363 = vrcp.pop 16.0
        %v1364 = vmul.f32 %v1352, %v1363
        %v1365 = vmul.f32 %v1362, %v1363
        %v1366 = vsub.f32 %v1332, %v1364
        %v1367 = vsub.f32 %v1334, %v1365
        %v1368 = vsub.f32 %v1338, %v1364
        %v1369 = vsub.f32 %v1340, %v1365
        %v1370 = vmul.f32 %v1366, %v1366
        %v1371 = vmul.f32 %v1367, %v1367
        %v1372 = vmul.f32 %v1368, %v1368
        %v1373 = vmul.f32 %v1369, %v1369
        %v1374 = vadd.f32 %v1370, %v1372
        %v1375 = vrot.slane %v1374, 4
        %v1376 = vadd.f32 %v1374, %v1375
        %v1377 = vrot.slane %v1376, 2
        %v1378 = vadd.f32 %v1376, %v1377
        %v1379 = vrot.slane %v1378, 1
        %v1380 = vadd.f32 %v1378, %v1379
        %v1381 = vsel %vm1353, %v1371, 0.0
        %v1382 = vsel %vm1353, %v1373, 0.0
        %v1383 = vadd.f32 %v1381, %v1382
        %v1384 = vrot.slane %v1383, 4
        %v1385 = vadd.f32 %v1383, %v1384
        %v1386 = vrot.slane %v1385, 2
        %v1387 = vadd.f32 %v1385, %v1386
        %v1388 = vrot.slane %v1387, 1
        %v1389 = vadd.f32 %v1387, %v1388
        %v1390 = vmul.f32 %v1380, %v1363
        %v1391 = vmul.f32 %v1389, %v1363
        %v1392 = vadd.f32 %v1390, 1e-05
        %v1393 = vadd.f32 %v1391, 1e-05
        %v1394 = vrsqrt.pop %v1392
        %v1395 = vrsqrt.pop %v1393
        %v1396 = vmul.f32 %v1366, %v1394
        %v1397 = vmul.f32 %v1367, %v1395
        %v1398 = vmul.f32 %v1368, %v1394
        %v1399 = vmul.f32 %v1369, %v1395
        %1401 = vset.pattern.permute.xlu0 0
        %1402 = vperm.xlu0 %1401, %v1342
        %v1403 = vpop.permute.xlu0 %1402
        %1406 = vset.pattern.permute.xlu0 0
        %1407 = vperm.xlu0 %1406, %v1343
        %v1408 = vpop.permute.xlu0 %1407
        %v1410 = vmul.f32 %v1396, %v1403
        %v1411 = vmul.f32 %v1397, %v1403
        %v1412 = vmul.f32 %v1398, %v1408
        %v1413 = vmul.f32 %v1399, %v1408
        %1415 = vset.pattern.permute.xlu0 0
        %1416 = vperm.xlu0 %1415, %v1344
        %v1417 = vpop.permute.xlu0 %1416
        %1420 = vset.pattern.permute.xlu0 0
        %1421 = vperm.xlu0 %1420, %v1345
        %v1422 = vpop.permute.xlu0 %1421
        %v1424 = vadd.f32 %v1410, %v1417
        %v1425 = vadd.f32 %v1411, %v1417
        %v1426 = vadd.f32 %v1412, %v1422
        %v1427 = vadd.f32 %v1413, %v1422
        %v1428 = vadd.f32 %v1424, %v1426
        %v1429 = vrot.slane %v1428, 4
        %v1430 = vadd.f32 %v1428, %v1429
        %v1431 = vrot.slane %v1430, 2
        %v1432 = vadd.f32 %v1430, %v1431
        %v1433 = vrot.slane %v1432, 1
        %v1434 = vadd.f32 %v1432, %v1433
        %v1435 = vsel %vm1353, %v1425, 0.0
        %v1436 = vsel %vm1353, %v1427, 0.0
        %v1437 = vadd.f32 %v1435, %v1436
        %v1438 = vrot.slane %v1437, 4
        %v1439 = vadd.f32 %v1437, %v1438
        %v1440 = vrot.slane %v1439, 2
        %v1441 = vadd.f32 %v1439, %v1440
        %v1442 = vrot.slane %v1441, 1
        %v1443 = vadd.f32 %v1441, %v1442
        %v1444 = vmul.f32 %v1434, %v1363
        %v1445 = vmul.f32 %v1443, %v1363
        %v1446 = vsub.f32 %v1424, %v1444
        %v1447 = vsub.f32 %v1425, %v1445
        %v1448 = vsub.f32 %v1426, %v1444
        %v1449 = vsub.f32 %v1427, %v1445
        %v1450 = vmul.f32 %v1446, %v1446
        %v1451 = vmul.f32 %v1447, %v1447
        %v1452 = vmul.f32 %v1448, %v1448
        %v1453 = vmul.f32 %v1449, %v1449
        %v1454 = vadd.f32 %v1450, %v1452
        %v1455 = vrot.slane %v1454, 4
        %v1456 = vadd.f32 %v1454, %v1455
        %v1457 = vrot.slane %v1456, 2
        %v1458 = vadd.f32 %v1456, %v1457
        %v1459 = vrot.slane %v1458, 1
        %v1460 = vadd.f32 %v1458, %v1459
        %v1461 = vsel %vm1353, %v1451, 0.0
        %v1462 = vsel %vm1353, %v1453, 0.0
        %v1463 = vadd.f32 %v1461, %v1462
        %v1464 = vrot.slane %v1463, 4
        %v1465 = vadd.f32 %v1463, %v1464
        %v1466 = vrot.slane %v1465, 2
        %v1467 = vadd.f32 %v1465, %v1466
        %v1468 = vrot.slane %v1467, 1
        %v1469 = vadd.f32 %v1467, %v1468
        %v1470 = vmul.f32 %v1460, %v1363
        %v1471 = vmul.f32 %v1469, %v1363
        %v1472 = vadd.f32 %v1470, 1e-05
        %v1473 = vadd.f32 %v1471, 1e-05
        %v1474 = vrsqrt.pop %v1472
        %v1475 = vrsqrt.pop %v1473
        %v1476 = vmul.f32 %v1446, %v1474
        %v1477 = vmul.f32 %v1447, %v1475
        %v1478 = vmul.f32 %v1448, %v1474
        %v1479 = vmul.f32 %v1449, %v1475
        %v1480 = vld [vmem:[%s17] sm:$0xff]
        %v1481 = vld [vmem:[%s17 + $0x8] sm:$0xff]
        %v1482 = vld [vmem:[%s17 + $0x10] sm:$0xff]
        %v1483 = vld [vmem:[%s17 + $0x18] sm:$0xff]
        %v1484 = vld [vmem:[%s17 + $0x20] sm:$0x7]
        %v1485 = vld [vmem:[%s19] sm:$0xff]
        %v1486 = vld [vmem:[%s19 + $0x8] sm:$0xff]
        %v1487 = vld [vmem:[%s19 + $0x10] sm:$0xff]
        %v1488 = vld [vmem:[%s19 + $0x18] sm:$0xff]
        %v1489 = vld [vmem:[%s19 + $0x20] sm:$0x7]
        %1491 = vset.pattern.permute.xlu0 0
        %1492 = vperm.xlu0 %1491, %v1485
        %v1493 = vpop.permute.xlu0 %1492
        %1496 = vset.pattern.permute.xlu0 0
        %1497 = vperm.xlu0 %1496, %v1486
        %v1498 = vpop.permute.xlu0 %1497
        %1501 = vset.pattern.permute.xlu0 0
        %1502 = vperm.xlu0 %1501, %v1487
        %v1503 = vpop.permute.xlu0 %1502
        %1506 = vset.pattern.permute.xlu0 0
        %1507 = vperm.xlu0 %1506, %v1488
        %v1508 = vpop.permute.xlu0 %1507
        %1511 = vset.pattern.permute.xlu0 0
        %1512 = vperm.xlu0 %1511, %v1489
        %v1513 = vpop.permute.xlu0 %1512
        %vm1515 = vcmask 130048
        %v1517 = vsel %vm1515, %v1480, 0
        %v1520 = vsel %vm1515, %v1481, 0
        %v1523 = vsel %vm1515, %v1482, 0
        %v1526 = vsel %vm1515, %v1483, 0
        %v1529 = vsel %vm1515, %v1484, 0
        %1531 = vmatprep.subr.mxu0 %v1477
        %1532 = vmatpush1.msra.mxu0 %v1476
        %1533 = vmatprep.subr.mxu0 %v1479
        %1534 = vmatpush1.msra.mxu0 %v1478
        %1535 = vmatprep.subr.mxu0 0.0
        %1536 = vmatpush1.msra.mxu0 0.0
        %1537 = vmatprep.subr.mxu0 0.0
        %1538 = vmatpush1.msra.mxu0 0.0
        %1539 = vmatprep.subr.mxu0 0.0
        %1540 = vmatpush1.msra.mxu0 0.0
        %1541 = vmatprep.subr.mxu0 0.0
        %1542 = vmatpush1.msra.mxu0 0.0
        %1543 = vmatprep.subr.mxu0 0.0
        %1544 = vmatpush1.msra.mxu0 0.0
        %1545 = vmatprep.subr.mxu0 0.0
        %1546 = vmatpush1.msra.mxu0 0.0
        %1547 = vmatprep.subr.mxu0 0.0
        %1548 = vmatpush1.msra.mxu0 0.0
        %1549 = vmatprep.subr.mxu0 0.0
        %1550 = vmatpush1.msra.mxu0 0.0
        %1551 = vmatprep.subr.mxu0 0.0
        %1552 = vmatpush1.msra.mxu0 0.0
        %1553 = vmatprep.subr.mxu0 0.0
        %1554 = vmatpush1.msra.mxu0 0.0
        %1555 = vmatprep.subr.mxu0 0.0
        %1556 = vmatpush1.msra.mxu0 0.0
        %1557 = vmatprep.subr.mxu0 0.0
        %1558 = vmatpush1.msra.mxu0 0.0
        %1559 = vmatprep.subr.mxu0 0.0
        %1560 = vmatpush1.msra.mxu0 0.0
        %1561 = vmatprep.subr.mxu0 0.0
        %1562 = vmatpush1.msra.mxu0 0.0
        %1563 = vmatprep.subr.mxu0 0.0
        %1564 = vmatpush1.msra.mxu0 0.0
        %1565 = vmatprep.subr.mxu0 0.0
        %1566 = vmatpush1.msra.mxu0 0.0
        %1567 = vmatprep.subr.mxu0 0.0
        %1568 = vmatpush1.msra.mxu0 0.0
        %1569 = vmatprep.subr.mxu0 0.0
        %1570 = vmatpush1.msra.mxu0 0.0
        %1571 = vmatprep.subr.mxu0 0.0
        %1572 = vmatpush1.msra.mxu0 0.0
        %1573 = vmatprep.subr.mxu0 0.0
        %1574 = vmatpush1.msra.mxu0 0.0
        %1575 = vmatprep.subr.mxu0 0.0
        %1576 = vmatpush1.msra.mxu0 0.0
        %1577 = vmatprep.subr.mxu0 0.0
        %1578 = vmatpush1.msra.mxu0 0.0
        %1579 = vmatprep.subr.mxu0 0.0
        %1580 = vmatpush1.msra.mxu0 0.0
        %1581 = vmatprep.subr.mxu0 0.0
        %1582 = vmatpush1.msra.mxu0 0.0
        %1583 = vmatprep.subr.mxu0 0.0
        %1584 = vmatpush1.msra.mxu0 0.0
        %1585 = vmatprep.subr.mxu0 0.0
        %1586 = vmatpush1.msra.mxu0 0.0
        %1587 = vmatprep.subr.mxu0 0.0
        %1588 = vmatpush1.msra.mxu0 0.0
        %1589 = vmatprep.subr.mxu0 0.0
        %1590 = vmatpush1.msra.mxu0 0.0
        %1591 = vmatprep.subr.mxu0 0.0
        %1592 = vmatpush1.msra.mxu0 0.0
        %1593 = vmatprep.subr.mxu0 0.0
        %1594 = vmatpush1.msra.mxu0 0.0
        %1595 = vmatprep.mubr.f32.mxu0 0.0
        %1596 = vmatmul.mubr.f32.gmra.mrb[0].mxu0 %v1517
        %v1597 = vpop.f32.mrb[0].mxu0
        %v1598 = vadd.f32 %v1493, %v1597
        %v1599 = vpop.f32.mrb[0].mxu0
        %v1600 = vadd.f32 %v1493, %v1599
        %1601 = vmatprep.mubr.f32.mxu0 0.0
        %1602 = vmatmul.mubr.f32.gmra.mrb[0].mxu0 %v1520
        %v1603 = vpop.f32.mrb[0].mxu0
        %v1604 = vadd.f32 %v1498, %v1603
        %v1605 = vpop.f32.mrb[0].mxu0
        %v1606 = vadd.f32 %v1498, %v1605
        %1607 = vmatprep.mubr.f32.mxu0 0.0
        %1608 = vmatmul.mubr.f32.gmra.mrb[0].mxu0 %v1523
        %v1609 = vpop.f32.mrb[0].mxu0
        %v1610 = vadd.f32 %v1503, %v1609
        %v1611 = vpop.f32.mrb[0].mxu0
        %v1612 = vadd.f32 %v1503, %v1611
        %1613 = vmatprep.mubr.f32.mxu0 0.0
        %1614 = vmatmul.mubr.f32.gmra.mrb[0].mxu0 %v1526
        %v1615 = vpop.f32.mrb[0].mxu0
        %v1616 = vadd.f32 %v1508, %v1615
        %v1617 = vpop.f32.mrb[0].mxu0
        %v1618 = vadd.f32 %v1508, %v1617
        %1619 = vmatprep.mubr.f32.mxu0 0.0
        %1620 = vmatmul.mubr.f32.gmra.mrb[0].mxu0 %v1529
        %v1621 = vpop.f32.mrb[0].mxu0
        %v1622 = vadd.f32 %v1513, %v1621
        %v1623 = vpop.f32.mrb[0].mxu0
        %v1624 = vadd.f32 %v1513, %v1623
        %1625 = vdwg.mxu0
        %v1626 = vld [vmem:[%s11] sm:$0x1f]
        %v1627 = vld [vmem:[%s11 + $0x8] sm:$0x1f]
        %1628 = vst [vmem:[#allocation2] sm:$0xff] 0.0
        %1629 = vst [vmem:[#allocation2 + $0x8] sm:$0xff] 0.0
        %1630 = vst [vmem:[#allocation2 + $0x10] sm:$0xff] 0.0
        %1631 = vst.msk [vmem:[#allocation2 + $0x18] sm:$0xff] %vm1353, 0.0
        %1632 = vst [vmem:[#allocation2 + $0x20] sm:$0xff] 0.0
        %1633 = vst [vmem:[#allocation2 + $0x28] sm:$0xff] 0.0
        %1634 = vst [vmem:[#allocation2 + $0x30] sm:$0xff] 0.0
        %1635 = vst.msk [vmem:[#allocation2 + $0x38] sm:$0xff] %vm1353, 0.0
        %1636 = vst [vmem:[#allocation2 + $0x8] sm:$0xff] %v1610
        %1637 = vst.msk [vmem:[#allocation2 + $0x10] sm:$0xff] %vm1353, %v1612
        %1638 = vst [vmem:[#allocation2 + $0x28] sm:$0xff] %v1616
        %1639 = vst.msk [vmem:[#allocation2 + $0x30] sm:$0xff] %vm1353, %v1618
        %v1640 = vld [vmem:[%s13] sm:$0xff]
        %v1641 = vld [vmem:[%s13 + $0x8] sm:$0xff]
        %v1642 = vld [vmem:[#allocation2] sm:$0xff]
        %v1643 = vld [vmem:[#allocation2 + $0x8] sm:$0xff]
        %v1644 = vld [vmem:[#allocation2 + $0x10] sm:$0xff]
        %v1645 = vld [vmem:[#allocation2 + $0x20] sm:$0xff]
        %v1646 = vld [vmem:[#allocation2 + $0x28] sm:$0xff]
        %v1647 = vld [vmem:[#allocation2 + $0x30] sm:$0xff]
        %1649 = vset.pattern.permute.xlu0 0
        %1650 = vperm.xlu0 %1649, %v1640
        %v1651 = vpop.permute.xlu0 %1650
        %1654 = vset.pattern.permute.xlu0 0
        %1655 = vperm.xlu0 %1654, %v1641
        %v1656 = vpop.permute.xlu0 %1655
        %v1658 = vmul.f32 %v1642, %v1651
        %v1659 = vmul.f32 %v1643, %v1651
        %v1660 = vmul.f32 %v1644, %v1651
        %v1661 = vmul.f32 %v1645, %v1656
        %v1662 = vmul.f32 %v1646, %v1656
        %v1663 = vmul.f32 %v1647, %v1656
        %1664 = vset.pattern.permute.xlu0 3
        %1665 = vperm.xlu0 %1664, %v1640
        %v1666 = vpop.permute.xlu0 %1665
        %1668 = vset.pattern.permute.xlu0 3
        %1669 = vperm.xlu0 %1668, %v1641
        %v1670 = vpop.permute.xlu0 %1669
        %v1672 = vmul.f32 %v1642, %v1666
        %v1673 = vmul.f32 %v1643, %v1666
        %v1674 = vmul.f32 %v1644, %v1666
        %v1675 = vmul.f32 %v1645, %v1670
        %v1676 = vmul.f32 %v1646, %v1670
        %v1677 = vmul.f32 %v1647, %v1670
        %1684 = vrot.lane.b32.xlu0 %v1672, 114
        %v1685 = vpop.permute.xlu0 %1684
        %1686 = vrot.lane.b32.xlu0 %v1673, 114
        %v1687 = vpop.permute.xlu0 %1686
        %1688 = vrot.lane.b32.xlu0 %v1674, 114
        %v1689 = vpop.permute.xlu0 %1688
        %1690 = vrot.lane.b32.xlu0 %v1675, 114
        %v1691 = vpop.permute.xlu0 %1690
        %1692 = vrot.lane.b32.xlu0 %v1676, 114
        %v1693 = vpop.permute.xlu0 %1692
        %1694 = vrot.lane.b32.xlu0 %v1677, 114
        %v1695 = vpop.permute.xlu0 %1694
        %vm1696 = vcmask 932864
        %v1697 = vsel %vm1696, %v1685, %v1687
        %v1698 = vsel %vm1696, %v1687, %v1689
        %v1699 = vsel %vm1696, %v1691, %v1693
        %v1700 = vsel %vm1696, %v1693, %v1695
        %v1707 = vadd.f32 %v1658, %v1697
        %v1708 = vadd.f32 %v1659, %v1698
        %v1709 = vadd.f32 %v1660, %v1689
        %v1710 = vadd.f32 %v1661, %v1699
        %v1711 = vadd.f32 %v1662, %v1700
        %v1712 = vadd.f32 %v1663, %v1695
        %1713 = vset.pattern.permute.xlu0 6
        %1714 = vperm.xlu0 %1713, %v1640
        %v1715 = vpop.permute.xlu0 %1714
        %1717 = vset.pattern.permute.xlu0 6
        %1718 = vperm.xlu0 %1717, %v1641
        %v1719 = vpop.permute.xlu0 %1718
        %v1721 = vmul.f32 %v1643, %v1715
        %v1722 = vmul.f32 %v1644, %v1715
        %v1723 = vmul.f32 %v1646, %v1719
        %v1724 = vmul.f32 %v1647, %v1719
        %1729 = vrot.lane.b32.xlu0 %v1721, 100
        %v1730 = vpop.permute.xlu0 %1729
        %1731 = vrot.lane.b32.xlu0 %v1722, 100
        %v1732 = vpop.permute.xlu0 %1731
        %1733 = vrot.lane.b32.xlu0 %v1723, 100
        %v1734 = vpop.permute.xlu0 %1733
        %1735 = vrot.lane.b32.xlu0 %v1724, 100
        %v1736 = vpop.permute.xlu0 %1735
        %vm1737 = vcmask 818176
        %v1738 = vsel %vm1737, %v1730, %v1732
        %v1739 = vsel %vm1737, %v1734, %v1736
        %v1746 = vadd.f32 %v1707, %v1730
        %v1747 = vadd.f32 %v1708, %v1738
        %v1748 = vadd.f32 %v1709, %v1732
        %v1749 = vadd.f32 %v1710, %v1734
        %v1750 = vadd.f32 %v1711, %v1739
        %v1751 = vadd.f32 %v1712, %v1736
        %v1752 = vlaneseq
        %v1753 = vshrl.u32 %v1752, 7
        %v1754 = vsub.s32 1, %v1753
        %v1755 = vrot.slane %v1626, %v1754
        %v1756 = vlaneseq
        %v1757 = vshrl.u32 %v1756, 7
        %v1758 = vsub.s32 1, %v1757
        %v1759 = vrot.slane %v1627, %v1758
        %1762 = vrot.lane.b32.xlu0 %v1755, 113
        %v1763 = vpop.permute.xlu0 %1762
        %1764 = vrot.lane.b32.xlu0 %v1759, 113
        %v1765 = vpop.permute.xlu0 %1764
        %vm1766 = vcmask 924672
        %v1767 = vsel %vm1766, %v1763, %v1765
        %v1771 = vmul.f32 %v1746, %v1763
        %v1772 = vmul.f32 %v1747, %v1767
        %v1773 = vmul.f32 %v1748, %v1765
        %v1774 = vmul.f32 %v1749, %v1763
        %v1775 = vmul.f32 %v1750, %v1767
        %v1776 = vmul.f32 %v1751, %v1765
        %1777 = vset.pattern.permute.xlu0 1
        %1778 = vperm.xlu0 %1777, %v1640
        %v1779 = vpop.permute.xlu0 %1778
        %1781 = vset.pattern.permute.xlu0 1
        %1782 = vperm.xlu0 %1781, %v1641
        %v1783 = vpop.permute.xlu0 %1782
        %v1785 = vmul.f32 %v1642, %v1779
        %v1786 = vmul.f32 %v1643, %v1779
        %v1787 = vmul.f32 %v1644, %v1779
        %v1788 = vmul.f32 %v1645, %v1783
        %v1789 = vmul.f32 %v1646, %v1783
        %v1790 = vmul.f32 %v1647, %v1783
        %1791 = vset.pattern.permute.xlu0 4
        %1792 = vperm.xlu0 %1791, %v1640
        %v1793 = vpop.permute.xlu0 %1792
        %1795 = vset.pattern.permute.xlu0 4
        %1796 = vperm.xlu0 %1795, %v1641
        %v1797 = vpop.permute.xlu0 %1796
        %v1799 = vmul.f32 %v1643, %v1793
        %v1800 = vmul.f32 %v1644, %v1793
        %v1801 = vmul.f32 %v1646, %v1797
        %v1802 = vmul.f32 %v1647, %v1797
        %1807 = vrot.lane.b32.xlu0 %v1799, 114
        %v1808 = vpop.permute.xlu0 %1807
        %1809 = vrot.lane.b32.xlu0 %v1800, 114
        %v1810 = vpop.permute.xlu0 %1809
        %1811 = vrot.lane.b32.xlu0 %v1801, 114
        %v1812 = vpop.permute.xlu0 %1811
        %1813 = vrot.lane.b32.xlu0 %v1802, 114
        %v1814 = vpop.permute.xlu0 %1813
        %v1815 = vsel %vm1696, %v1808, %v1810
        %v1816 = vsel %vm1696, %v1812, %v1814
        %v1823 = vadd.f32 %v1785, %v1808
        %v1824 = vadd.f32 %v1786, %v1815
        %v1825 = vadd.f32 %v1787, %v1810
        %v1826 = vadd.f32 %v1788, %v1812
        %v1827 = vadd.f32 %v1789, %v1816
        %v1828 = vadd.f32 %v1790, %v1814
        %1829 = vset.pattern.permute.xlu0 7
        %1830 = vperm.xlu0 %1829, %v1640
        %v1831 = vpop.permute.xlu0 %1830
        %1833 = vset.pattern.permute.xlu0 7
        %1834 = vperm.xlu0 %1833, %v1641
        %v1835 = vpop.permute.xlu0 %1834
        %v1837 = vmul.f32 %v1643, %v1831
        %v1838 = vmul.f32 %v1644, %v1831
        %v1839 = vmul.f32 %v1646, %v1835
        %v1840 = vmul.f32 %v1647, %v1835
        %1845 = vrot.lane.b32.xlu0 %v1837, 100
        %v1846 = vpop.permute.xlu0 %1845
        %1847 = vrot.lane.b32.xlu0 %v1838, 100
        %v1848 = vpop.permute.xlu0 %1847
        %1849 = vrot.lane.b32.xlu0 %v1839, 100
        %v1850 = vpop.permute.xlu0 %1849
        %1851 = vrot.lane.b32.xlu0 %v1840, 100
        %v1852 = vpop.permute.xlu0 %1851
        %v1853 = vsel %vm1737, %v1846, %v1848
        %v1854 = vsel %vm1737, %v1850, %v1852
        %v1861 = vadd.f32 %v1823, %v1846
        %v1862 = vadd.f32 %v1824, %v1853
        %v1863 = vadd.f32 %v1825, %v1848
        %v1864 = vadd.f32 %v1826, %v1850
        %v1865 = vadd.f32 %v1827, %v1854
        %v1866 = vadd.f32 %v1828, %v1852
        %v1867 = vlaneseq
        %v1868 = vshrl.u32 %v1867, 7
        %v1869 = vsub.s32 2, %v1868
        %v1870 = vrot.slane %v1626, %v1869
        %v1871 = vlaneseq
        %v1872 = vshrl.u32 %v1871, 7
        %v1873 = vsub.s32 2, %v1872
        %v1874 = vrot.slane %v1627, %v1873
        %1877 = vrot.lane.b32.xlu0 %v1870, 114
        %v1878 = vpop.permute.xlu0 %1877
        %1879 = vrot.lane.b32.xlu0 %v1874, 114
        %v1880 = vpop.permute.xlu0 %1879
        %v1881 = vsel %vm1696, %v1878, %v1880
        %v1885 = vmul.f32 %v1861, %v1878
        %v1886 = vmul.f32 %v1862, %v1881
        %v1887 = vmul.f32 %v1863, %v1880
        %v1888 = vmul.f32 %v1864, %v1878
        %v1889 = vmul.f32 %v1865, %v1881
        %v1890 = vmul.f32 %v1866, %v1880
        %1897 = vrot.lane.b32.xlu0 %v1885, 127
        %v1898 = vpop.permute.xlu0 %1897
        %1899 = vrot.lane.b32.xlu0 %v1886, 127
        %v1900 = vpop.permute.xlu0 %1899
        %1901 = vrot.lane.b32.xlu0 %v1887, 127
        %v1902 = vpop.permute.xlu0 %1901
        %1903 = vrot.lane.b32.xlu0 %v1888, 127
        %v1904 = vpop.permute.xlu0 %1903
        %1905 = vrot.lane.b32.xlu0 %v1889, 127
        %v1906 = vpop.permute.xlu0 %1905
        %1907 = vrot.lane.b32.xlu0 %v1890, 127
        %v1908 = vpop.permute.xlu0 %1907
        %vm1909 = vcmask 1039360
        %v1910 = vsel %vm1909, %v1898, %v1900
        %v1911 = vsel %vm1909, %v1900, %v1902
        %v1912 = vsel %vm1909, %v1904, %v1906
        %v1913 = vsel %vm1909, %v1906, %v1908
        %v1920 = vadd.f32 %v1771, %v1910
        %v1921 = vadd.f32 %v1772, %v1911
        %v1922 = vadd.f32 %v1773, %v1902
        %v1923 = vadd.f32 %v1774, %v1912
        %v1924 = vadd.f32 %v1775, %v1913
        %v1925 = vadd.f32 %v1776, %v1908
        %1926 = vset.pattern.permute.xlu0 2
        %1927 = vperm.xlu0 %1926, %v1640
        %v1928 = vpop.permute.xlu0 %1927
        %1930 = vset.pattern.permute.xlu0 2
        %1931 = vperm.xlu0 %1930, %v1641
        %v1932 = vpop.permute.xlu0 %1931
        %v1934 = vmul.f32 %v1642, %v1928
        %v1935 = vmul.f32 %v1643, %v1928
        %v1936 = vmul.f32 %v1644, %v1928
        %v1937 = vmul.f32 %v1645, %v1932
        %v1938 = vmul.f32 %v1646, %v1932
        %v1939 = vmul.f32 %v1647, %v1932
        %1940 = vset.pattern.permute.xlu0 5
        %1941 = vperm.xlu0 %1940, %v1640
        %v1942 = vpop.permute.xlu0 %1941
        %1944 = vset.pattern.permute.xlu0 5
        %1945 = vperm.xlu0 %1944, %v1641
        %v1946 = vpop.permute.xlu0 %1945
        %v1948 = vmul.f32 %v1643, %v1942
        %v1949 = vmul.f32 %v1644, %v1942
        %v1950 = vmul.f32 %v1646, %v1946
        %v1951 = vmul.f32 %v1647, %v1946
        %1956 = vrot.lane.b32.xlu0 %v1948, 114
        %v1957 = vpop.permute.xlu0 %1956
        %1958 = vrot.lane.b32.xlu0 %v1949, 114
        %v1959 = vpop.permute.xlu0 %1958
        %1960 = vrot.lane.b32.xlu0 %v1950, 114
        %v1961 = vpop.permute.xlu0 %1960
        %1962 = vrot.lane.b32.xlu0 %v1951, 114
        %v1963 = vpop.permute.xlu0 %1962
        %v1964 = vsel %vm1696, %v1957, %v1959
        %v1965 = vsel %vm1696, %v1961, %v1963
        %v1972 = vadd.f32 %v1934, %v1957
        %v1973 = vadd.f32 %v1935, %v1964
        %v1974 = vadd.f32 %v1936, %v1959
        %v1975 = vadd.f32 %v1937, %v1961
        %v1976 = vadd.f32 %v1938, %v1965
        %v1977 = vadd.f32 %v1939, %v1963
        %1978 = vset.pattern.permute.xlu0 8
        %1979 = vperm.xlu0 %1978, %v1640
        %v1980 = vpop.permute.xlu0 %1979
        %1982 = vset.pattern.permute.xlu0 8
        %1983 = vperm.xlu0 %1982, %v1641
        %v1984 = vpop.permute.xlu0 %1983
        %v1986 = vmul.f32 %v1643, %v1980
        %v1987 = vmul.f32 %v1644, %v1980
        %v1988 = vmul.f32 %v1646, %v1984
        %v1989 = vmul.f32 %v1647, %v1984
        %1994 = vrot.lane.b32.xlu0 %v1986, 100
        %v1995 = vpop.permute.xlu0 %1994
        %1996 = vrot.lane.b32.xlu0 %v1987, 100
        %v1997 = vpop.permute.xlu0 %1996
        %1998 = vrot.lane.b32.xlu0 %v1988, 100
        %v1999 = vpop.permute.xlu0 %1998
        %2000 = vrot.lane.b32.xlu0 %v1989, 100
        %v2001 = vpop.permute.xlu0 %2000
        %v2002 = vsel %vm1737, %v1995, %v1997
        %v2003 = vsel %vm1737, %v1999, %v2001
        %v2010 = vadd.f32 %v1972, %v1995
        %v2011 = vadd.f32 %v1973, %v2002
        %v2012 = vadd.f32 %v1974, %v1997
        %v2013 = vadd.f32 %v1975, %v1999
        %v2014 = vadd.f32 %v1976, %v2003
        %v2015 = vadd.f32 %v1977, %v2001
        %v2016 = vlaneseq
        %v2017 = vshrl.u32 %v2016, 7
        %v2018 = vsub.s32 3, %v2017
        %v2019 = vrot.slane %v1626, %v2018
        %v2020 = vlaneseq
        %v2021 = vshrl.u32 %v2020, 7
        %v2022 = vsub.s32 3, %v2021
        %v2023 = vrot.slane %v1627, %v2022
        %2026 = vrot.lane.b32.xlu0 %v2019, 115
        %v2027 = vpop.permute.xlu0 %2026
        %2028 = vrot.lane.b32.xlu0 %v2023, 115
        %v2029 = vpop.permute.xlu0 %2028
        %vm2030 = vcmask 941056
        %v2031 = vsel %vm2030, %v2027, %v2029
        %v2035 = vmul.f32 %v2010, %v2027
        %v2036 = vmul.f32 %v2011, %v2031
        %v2037 = vmul.f32 %v2012, %v2029
        %v2038 = vmul.f32 %v2013, %v2027
        %v2039 = vmul.f32 %v2014, %v2031
        %v2040 = vmul.f32 %v2015, %v2029
        %2047 = vrot.lane.b32.xlu0 %v2035, 126
        %v2048 = vpop.permute.xlu0 %2047
        %2049 = vrot.lane.b32.xlu0 %v2036, 126
        %v2050 = vpop.permute.xlu0 %2049
        %2051 = vrot.lane.b32.xlu0 %v2037, 126
        %v2052 = vpop.permute.xlu0 %2051
        %2053 = vrot.lane.b32.xlu0 %v2038, 126
        %v2054 = vpop.permute.xlu0 %2053
        %2055 = vrot.lane.b32.xlu0 %v2039, 126
        %v2056 = vpop.permute.xlu0 %2055
        %2057 = vrot.lane.b32.xlu0 %v2040, 126
        %v2058 = vpop.permute.xlu0 %2057
        %vm2059 = vcmask 1031168
        %v2060 = vsel %vm2059, %v2048, %v2050
        %v2061 = vsel %vm2059, %v2050, %v2052
        %v2062 = vsel %vm2059, %v2054, %v2056
        %v2063 = vsel %vm2059, %v2056, %v2058
        %v2070 = vadd.f32 %v1920, %v2060
        %v2071 = vadd.f32 %v1921, %v2061
        %v2072 = vadd.f32 %v1922, %v2052
        %v2073 = vadd.f32 %v1923, %v2062
        %v2074 = vadd.f32 %v1924, %v2063
        %v2075 = vadd.f32 %v1925, %v2058
        %v2076 = vmul.f32 %v2070, %v2070
        %v2077 = vmul.f32 %v2071, %v2071
        %v2078 = vmul.f32 %v2072, %v2072
        %v2079 = vmul.f32 %v2073, %v2073
        %v2080 = vmul.f32 %v2074, %v2074
        %v2081 = vmul.f32 %v2075, %v2075
        %v2082 = vmul.f32 %v2070, %v2076
        %v2083 = vmul.f32 %v2071, %v2077
        %v2084 = vmul.f32 %v2072, %v2078
        %v2085 = vmul.f32 %v2073, %v2079
        %v2086 = vmul.f32 %v2074, %v2080
        %v2087 = vmul.f32 %v2075, %v2081
        %v2088 = vmul.f32 %v2082, 0.044715
        %v2089 = vmul.f32 %v2083, 0.044715
        %v2090 = vmul.f32 %v2084, 0.044715
        %v2091 = vmul.f32 %v2085, 0.044715
        %v2092 = vmul.f32 %v2086, 0.044715
        %v2093 = vmul.f32 %v2087, 0.044715
        %v2094 = vadd.f32 %v2070, %v2088
        %v2095 = vadd.f32 %v2071, %v2089
        %v2096 = vadd.f32 %v2072, %v2090
        %v2097 = vadd.f32 %v2073, %v2091
        %v2098 = vadd.f32 %v2074, %v2092
        %v2099 = vadd.f32 %v2075, %v2093
        %v2100 = vmul.f32 %v2094, 0.7978846
        %v2101 = vmul.f32 %v2095, 0.7978846
        %v2102 = vmul.f32 %v2096, 0.7978846
        %v2103 = vmul.f32 %v2097, 0.7978846
        %v2104 = vmul.f32 %v2098, 0.7978846
        %v2105 = vmul.f32 %v2099, 0.7978846
        %v2106 = vtanh.pop %v2100
        %v2107 = vtanh.pop %v2101
        %v2108 = vtanh.pop %v2102
        %v2109 = vtanh.pop %v2103
        %v2110 = vtanh.pop %v2104
        %v2111 = vtanh.pop %v2105
        %v2112 = vadd.f32 %v2106, 1.0
        %v2113 = vadd.f32 %v2107, 1.0
        %v2114 = vadd.f32 %v2108, 1.0
        %v2115 = vadd.f32 %v2109, 1.0
        %v2116 = vadd.f32 %v2110, 1.0
        %v2117 = vadd.f32 %v2111, 1.0
        %v2118 = vmul.f32 %v2112, 0.5
        %v2119 = vmul.f32 %v2113, 0.5
        %v2120 = vmul.f32 %v2114, 0.5
        %v2121 = vmul.f32 %v2115, 0.5
        %v2122 = vmul.f32 %v2116, 0.5
        %v2123 = vmul.f32 %v2117, 0.5
        %v2124 = vmul.f32 %v2070, %v2118
        %v2125 = vmul.f32 %v2071, %v2119
        %v2126 = vmul.f32 %v2072, %v2120
        %v2127 = vmul.f32 %v2073, %v2121
        %v2128 = vmul.f32 %v2074, %v2122
        %v2129 = vmul.f32 %v2075, %v2123
        %v2130 = vlaneseq
        %v2131 = vshrl.u32 %v2130, 7
        %v2132 = vsub.s32 0, %v2131
        %v2133 = vrot.slane %v1622, %v2132
        %v2134 = vlaneseq
        %v2135 = vshrl.u32 %v2134, 7
        %v2136 = vsub.s32 0, %v2135
        %v2137 = vrot.slane %v1624, %v2136
        %2140 = vrot.lane.b32.xlu0 %v2133, 113
        %v2141 = vpop.permute.xlu0 %2140
        %2142 = vrot.lane.b32.xlu0 %v2137, 113
        %v2143 = vpop.permute.xlu0 %2142
        %v2144 = vsel %vm1766, %v2141, %v2143
        %v2148 = vmul.f32 %v2124, %v2141
        %v2149 = vmul.f32 %v2125, %v2144
        %v2150 = vmul.f32 %v2126, %v2143
        %v2151 = vmul.f32 %v2127, %v2141
        %v2152 = vmul.f32 %v2128, %v2144
        %v2153 = vmul.f32 %v2129, %v2143
        %2160 = vrot.lane.b32.xlu0 %v2124, 15
        %v2161 = vpop.permute.xlu0 %2160
        %2162 = vrot.lane.b32.xlu0 %v2125, 15
        %v2163 = vpop.permute.xlu0 %2162
        %2164 = vrot.lane.b32.xlu0 %v2126, 15
        %v2165 = vpop.permute.xlu0 %2164
        %2166 = vrot.lane.b32.xlu0 %v2127, 15
        %v2167 = vpop.permute.xlu0 %2166
        %2168 = vrot.lane.b32.xlu0 %v2128, 15
        %v2169 = vpop.permute.xlu0 %2168
        %2170 = vrot.lane.b32.xlu0 %v2129, 15
        %v2171 = vpop.permute.xlu0 %2170
        %vm2172 = vcmask 121856
        %v2173 = vsel %vm2172, %v2161, %v2163
        %v2174 = vsel %vm2172, %v2163, %v2165
        %v2175 = vsel %vm2172, %v2167, %v2169
        %v2176 = vsel %vm2172, %v2169, %v2171
        %2181 = vst [vmem:[#allocation2 + $0x8] sm:$0xff] %v2173
        %2182 = vst.msk [vmem:[#allocation2 + $0x10] sm:$0xff] %vm1353, %v2174
        %2183 = vst [vmem:[#allocation2 + $0x28] sm:$0xff] %v2175
        %2184 = vst.msk [vmem:[#allocation2 + $0x30] sm:$0xff] %vm1353, %v2176
        %v2185 = vld [vmem:[%s15] sm:$0xff]
        %v2186 = vld [vmem:[%s15 + $0x8] sm:$0xff]
        %v2187 = vld [vmem:[#allocation2] sm:$0xff]
        %v2188 = vld [vmem:[#allocation2 + $0x8] sm:$0xff]
        %v2189 = vld [vmem:[#allocation2 + $0x10] sm:$0xff]
        %v2190 = vld [vmem:[#allocation2 + $0x20] sm:$0xff]
        %v2191 = vld [vmem:[#allocation2 + $0x28] sm:$0xff]
        %v2192 = vld [vmem:[#allocation2 + $0x30] sm:$0xff]
        %2194 = vset.pattern.permute.xlu0 0
        %2195 = vperm.xlu0 %2194, %v2185
        %v2196 = vpop.permute.xlu0 %2195
        %2199 = vset.pattern.permute.xlu0 0
        %2200 = vperm.xlu0 %2199, %v2186
        %v2201 = vpop.permute.xlu0 %2200
        %v2203 = vmul.f32 %v2187, %v2196
        %v2204 = vmul.f32 %v2188, %v2196
        %v2205 = vmul.f32 %v2189, %v2196
        %v2206 = vmul.f32 %v2190, %v2201
        %v2207 = vmul.f32 %v2191, %v2201
        %v2208 = vmul.f32 %v2192, %v2201
        %2209 = vset.pattern.permute.xlu0 5
        %2210 = vperm.xlu0 %2209, %v2185
        %v2211 = vpop.permute.xlu0 %2210
        %2213 = vset.pattern.permute.xlu0 5
        %2214 = vperm.xlu0 %2213, %v2186
        %v2215 = vpop.permute.xlu0 %2214
        %v2217 = vmul.f32 %v2187, %v2211
        %v2218 = vmul.f32 %v2188, %v2211
        %v2219 = vmul.f32 %v2189, %v2211
        %v2220 = vmul.f32 %v2190, %v2215
        %v2221 = vmul.f32 %v2191, %v2215
        %v2222 = vmul.f32 %v2192, %v2215
        %2229 = vrot.lane.b32.xlu0 %v2217, 114
        %v2230 = vpop.permute.xlu0 %2229
        %2231 = vrot.lane.b32.xlu0 %v2218, 114
        %v2232 = vpop.permute.xlu0 %2231
        %2233 = vrot.lane.b32.xlu0 %v2219, 114
        %v2234 = vpop.permute.xlu0 %2233
        %2235 = vrot.lane.b32.xlu0 %v2220, 114
        %v2236 = vpop.permute.xlu0 %2235
        %2237 = vrot.lane.b32.xlu0 %v2221, 114
        %v2238 = vpop.permute.xlu0 %2237
        %2239 = vrot.lane.b32.xlu0 %v2222, 114
        %v2240 = vpop.permute.xlu0 %2239
        %v2241 = vsel %vm1696, %v2230, %v2232
        %v2242 = vsel %vm1696, %v2232, %v2234
        %v2243 = vsel %vm1696, %v2236, %v2238
        %v2244 = vsel %vm1696, %v2238, %v2240
        %v2251 = vadd.f32 %v2203, %v2241
        %v2252 = vadd.f32 %v2204, %v2242
        %v2253 = vadd.f32 %v2205, %v2234
        %v2254 = vadd.f32 %v2206, %v2243
        %v2255 = vadd.f32 %v2207, %v2244
        %v2256 = vadd.f32 %v2208, %v2240
        %2257 = vset.pattern.permute.xlu0 10
        %2258 = vperm.xlu0 %2257, %v2185
        %v2259 = vpop.permute.xlu0 %2258
        %2261 = vset.pattern.permute.xlu0 10
        %2262 = vperm.xlu0 %2261, %v2186
        %v2263 = vpop.permute.xlu0 %2262
        %v2265 = vmul.f32 %v2187, %v2259
        %v2266 = vmul.f32 %v2188, %v2259
        %v2267 = vmul.f32 %v2189, %v2259
        %v2268 = vmul.f32 %v2190, %v2263
        %v2269 = vmul.f32 %v2191, %v2263
        %v2270 = vmul.f32 %v2192, %v2263
        %2277 = vrot.lane.b32.xlu0 %v2265, 100
        %v2278 = vpop.permute.xlu0 %2277
        %2279 = vrot.lane.b32.xlu0 %v2266, 100
        %v2280 = vpop.permute.xlu0 %2279
        %2281 = vrot.lane.b32.xlu0 %v2267, 100
        %v2282 = vpop.permute.xlu0 %2281
        %2283 = vrot.lane.b32.xlu0 %v2268, 100
        %v2284 = vpop.permute.xlu0 %2283
        %2285 = vrot.lane.b32.xlu0 %v2269, 100
        %v2286 = vpop.permute.xlu0 %2285
        %2287 = vrot.lane.b32.xlu0 %v2270, 100
        %v2288 = vpop.permute.xlu0 %2287
        %v2289 = vsel %vm1737, %v2278, %v2280
        %v2290 = vsel %vm1737, %v2280, %v2282
        %v2291 = vsel %vm1737, %v2284, %v2286
        %v2292 = vsel %vm1737, %v2286, %v2288
        %v2299 = vadd.f32 %v2251, %v2289
        %v2300 = vadd.f32 %v2252, %v2290
        %v2301 = vadd.f32 %v2253, %v2282
        %v2302 = vadd.f32 %v2254, %v2291
        %v2303 = vadd.f32 %v2255, %v2292
        %v2304 = vadd.f32 %v2256, %v2288
        %2305 = vset.pattern.permute.xlu0 15
        %2306 = vperm.xlu0 %2305, %v2185
        %v2307 = vpop.permute.xlu0 %2306
        %2309 = vset.pattern.permute.xlu0 15
        %2310 = vperm.xlu0 %2309, %v2186
        %v2311 = vpop.permute.xlu0 %2310
        %v2313 = vmul.f32 %v2188, %v2307
        %v2314 = vmul.f32 %v2189, %v2307
        %v2315 = vmul.f32 %v2191, %v2311
        %v2316 = vmul.f32 %v2192, %v2311
        %2321 = vrot.lane.b32.xlu0 %v2313, 86
        %v2322 = vpop.permute.xlu0 %2321
        %2323 = vrot.lane.b32.xlu0 %v2314, 86
        %v2324 = vpop.permute.xlu0 %2323
        %2325 = vrot.lane.b32.xlu0 %v2315, 86
        %v2326 = vpop.permute.xlu0 %2325
        %2327 = vrot.lane.b32.xlu0 %v2316, 86
        %v2328 = vpop.permute.xlu0 %2327
        %vm2329 = vcmask 703488
        %v2330 = vsel %vm2329, %v2322, %v2324
        %v2331 = vsel %vm2329, %v2326, %v2328
        %v2338 = vadd.f32 %v2299, %v2322
        %v2339 = vadd.f32 %v2300, %v2330
        %v2340 = vadd.f32 %v2301, %v2324
        %v2341 = vadd.f32 %v2302, %v2326
        %v2342 = vadd.f32 %v2303, %v2331
        %v2343 = vadd.f32 %v2304, %v2328
        %2344 = vset.pattern.permute.xlu0 20
        %2345 = vperm.xlu0 %2344, %v2185
        %v2346 = vpop.permute.xlu0 %2345
        %2348 = vset.pattern.permute.xlu0 20
        %2349 = vperm.xlu0 %2348, %v2186
        %v2350 = vpop.permute.xlu0 %2349
        %v2352 = vmul.f32 %v2188, %v2346
        %v2353 = vmul.f32 %v2189, %v2346
        %v2354 = vmul.f32 %v2191, %v2350
        %v2355 = vmul.f32 %v2192, %v2350
        %2360 = vrot.lane.b32.xlu0 %v2352, 72
        %v2361 = vpop.permute.xlu0 %2360
        %2362 = vrot.lane.b32.xlu0 %v2353, 72
        %v2363 = vpop.permute.xlu0 %2362
        %2364 = vrot.lane.b32.xlu0 %v2354, 72
        %v2365 = vpop.permute.xlu0 %2364
        %2366 = vrot.lane.b32.xlu0 %v2355, 72
        %v2367 = vpop.permute.xlu0 %2366
        %vm2368 = vcmask 588800
        %v2369 = vsel %vm2368, %v2361, %v2363
        %v2370 = vsel %vm2368, %v2365, %v2367
        %v2377 = vadd.f32 %v2338, %v2361
        %v2378 = vadd.f32 %v2339, %v2369
        %v2379 = vadd.f32 %v2340, %v2363
        %v2380 = vadd.f32 %v2341, %v2365
        %v2381 = vadd.f32 %v2342, %v2370
        %v2382 = vadd.f32 %v2343, %v2367
        %v2383 = vlaneseq
        %v2384 = vshrl.u32 %v2383, 7
        %v2385 = vsub.s32 0, %v2384
        %v2386 = vrot.slane %v1626, %v2385
        %v2387 = vlaneseq
        %v2388 = vshrl.u32 %v2387, 7
        %v2389 = vsub.s32 0, %v2388
        %v2390 = vrot.slane %v1627, %v2389
        %2393 = vrot.lane.b32.xlu0 %v2386, 98
        %v2394 = vpop.permute.xlu0 %2393
        %2395 = vrot.lane.b32.xlu0 %v2390, 98
        %v2396 = vpop.permute.xlu0 %2395
        %vm2397 = vcmask 801792
        %v2398 = vsel %vm2397, %v2394, %v2396
        %v2402 = vmul.f32 %v2377, %v2394
        %v2403 = vmul.f32 %v2378, %v2398
        %v2404 = vmul.f32 %v2379, %v2396
        %v2405 = vmul.f32 %v2380, %v2394
        %v2406 = vmul.f32 %v2381, %v2398
        %v2407 = vmul.f32 %v2382, %v2396
        %2408 = vset.pattern.permute.xlu0 1
        %2409 = vperm.xlu0 %2408, %v2185
        %v2410 = vpop.permute.xlu0 %2409
        %2412 = vset.pattern.permute.xlu0 1
        %2413 = vperm.xlu0 %2412, %v2186
        %v2414 = vpop.permute.xlu0 %2413
        %v2416 = vmul.f32 %v2187, %v2410
        %v2417 = vmul.f32 %v2188, %v2410
        %v2418 = vmul.f32 %v2189, %v2410
        %v2419 = vmul.f32 %v2190, %v2414
        %v2420 = vmul.f32 %v2191, %v2414
        %v2421 = vmul.f32 %v2192, %v2414
        %2422 = vset.pattern.permute.xlu0 6
        %2423 = vperm.xlu0 %2422, %v2185
        %v2424 = vpop.permute.xlu0 %2423
        %2426 = vset.pattern.permute.xlu0 6
        %2427 = vperm.xlu0 %2426, %v2186
        %v2428 = vpop.permute.xlu0 %2427
        %v2430 = vmul.f32 %v2187, %v2424
        %v2431 = vmul.f32 %v2188, %v2424
        %v2432 = vmul.f32 %v2189, %v2424
        %v2433 = vmul.f32 %v2190, %v2428
        %v2434 = vmul.f32 %v2191, %v2428
        %v2435 = vmul.f32 %v2192, %v2428
        %2442 = vrot.lane.b32.xlu0 %v2430, 114
        %v2443 = vpop.permute.xlu0 %2442
        %2444 = vrot.lane.b32.xlu0 %v2431, 114
        %v2445 = vpop.permute.xlu0 %2444
        %2446 = vrot.lane.b32.xlu0 %v2432, 114
        %v2447 = vpop.permute.xlu0 %2446
        %2448 = vrot.lane.b32.xlu0 %v2433, 114
        %v2449 = vpop.permute.xlu0 %2448
        %2450 = vrot.lane.b32.xlu0 %v2434, 114
        %v2451 = vpop.permute.xlu0 %2450
        %2452 = vrot.lane.b32.xlu0 %v2435, 114
        %v2453 = vpop.permute.xlu0 %2452
        %v2454 = vsel %vm1696, %v2443, %v2445
        %v2455 = vsel %vm1696, %v2445, %v2447
        %v2456 = vsel %vm1696, %v2449, %v2451
        %v2457 = vsel %vm1696, %v2451, %v2453
        %v2464 = vadd.f32 %v2416, %v2454
        %v2465 = vadd.f32 %v2417, %v2455
        %v2466 = vadd.f32 %v2418, %v2447
        %v2467 = vadd.f32 %v2419, %v2456
        %v2468 = vadd.f32 %v2420, %v2457
        %v2469 = vadd.f32 %v2421, %v2453
        %2470 = vset.pattern.permute.xlu0 11
        %2471 = vperm.xlu0 %2470, %v2185
        %v2472 = vpop.permute.xlu0 %2471
        %2474 = vset.pattern.permute.xlu0 11
        %2475 = vperm.xlu0 %2474, %v2186
        %v2476 = vpop.permute.xlu0 %2475
        %v2478 = vmul.f32 %v2187, %v2472
        %v2479 = vmul.f32 %v2188, %v2472
        %v2480 = vmul.f32 %v2189, %v2472
        %v2481 = vmul.f32 %v2190, %v2476
        %v2482 = vmul.f32 %v2191, %v2476
        %v2483 = vmul.f32 %v2192, %v2476
        %2490 = vrot.lane.b32.xlu0 %v2478, 100
        %v2491 = vpop.permute.xlu0 %2490
        %2492 = vrot.lane.b32.xlu0 %v2479, 100
        %v2493 = vpop.permute.xlu0 %2492
        %2494 = vrot.lane.b32.xlu0 %v2480, 100
        %v2495 = vpop.permute.xlu0 %2494
        %2496 = vrot.lane.b32.xlu0 %v2481, 100
        %v2497 = vpop.permute.xlu0 %2496
        %2498 = vrot.lane.b32.xlu0 %v2482, 100
        %v2499 = vpop.permute.xlu0 %2498
        %2500 = vrot.lane.b32.xlu0 %v2483, 100
        %v2501 = vpop.permute.xlu0 %2500
        %v2502 = vsel %vm1737, %v2491, %v2493
        %v2503 = vsel %vm1737, %v2493, %v2495
        %v2504 = vsel %vm1737, %v2497, %v2499
        %v2505 = vsel %vm1737, %v2499, %v2501
        %v2512 = vadd.f32 %v2464, %v2502
        %v2513 = vadd.f32 %v2465, %v2503
        %v2514 = vadd.f32 %v2466, %v2495
        %v2515 = vadd.f32 %v2467, %v2504
        %v2516 = vadd.f32 %v2468, %v2505
        %v2517 = vadd.f32 %v2469, %v2501
        %2518 = vset.pattern.permute.xlu0 16
        %2519 = vperm.xlu0 %2518, %v2185
        %v2520 = vpop.permute.xlu0 %2519
        %2522 = vset.pattern.permute.xlu0 16
        %2523 = vperm.xlu0 %2522, %v2186
        %v2524 = vpop.permute.xlu0 %2523
        %v2526 = vmul.f32 %v2188, %v2520
        %v2527 = vmul.f32 %v2189, %v2520
        %v2528 = vmul.f32 %v2191, %v2524
        %v2529 = vmul.f32 %v2192, %v2524
        %2534 = vrot.lane.b32.xlu0 %v2526, 86
        %v2535 = vpop.permute.xlu0 %2534
        %2536 = vrot.lane.b32.xlu0 %v2527, 86
        %v2537 = vpop.permute.xlu0 %2536
        %2538 = vrot.lane.b32.xlu0 %v2528, 86
        %v2539 = vpop.permute.xlu0 %2538
        %2540 = vrot.lane.b32.xlu0 %v2529, 86
        %v2541 = vpop.permute.xlu0 %2540
        %v2542 = vsel %vm2329, %v2535, %v2537
        %v2543 = vsel %vm2329, %v2539, %v2541
        %v2550 = vadd.f32 %v2512, %v2535
        %v2551 = vadd.f32 %v2513, %v2542
        %v2552 = vadd.f32 %v2514, %v2537
        %v2553 = vadd.f32 %v2515, %v2539
        %v2554 = vadd.f32 %v2516, %v2543
        %v2555 = vadd.f32 %v2517, %v2541
        %2556 = vset.pattern.permute.xlu0 21
        %2557 = vperm.xlu0 %2556, %v2185
        %v2558 = vpop.permute.xlu0 %2557
        %2560 = vset.pattern.permute.xlu0 21
        %2561 = vperm.xlu0 %2560, %v2186
        %v2562 = vpop.permute.xlu0 %2561
        %v2564 = vmul.f32 %v2188, %v2558
        %v2565 = vmul.f32 %v2189, %v2558
        %v2566 = vmul.f32 %v2191, %v2562
        %v2567 = vmul.f32 %v2192, %v2562
        %2572 = vrot.lane.b32.xlu0 %v2564, 72
        %v2573 = vpop.permute.xlu0 %2572
        %2574 = vrot.lane.b32.xlu0 %v2565, 72
        %v2575 = vpop.permute.xlu0 %2574
        %2576 = vrot.lane.b32.xlu0 %v2566, 72
        %v2577 = vpop.permute.xlu0 %2576
        %2578 = vrot.lane.b32.xlu0 %v2567, 72
        %v2579 = vpop.permute.xlu0 %2578
        %v2580 = vsel %vm2368, %v2573, %v2575
        %v2581 = vsel %vm2368, %v2577, %v2579
        %v2588 = vadd.f32 %v2550, %v2573
        %v2589 = vadd.f32 %v2551, %v2580
        %v2590 = vadd.f32 %v2552, %v2575
        %v2591 = vadd.f32 %v2553, %v2577
        %v2592 = vadd.f32 %v2554, %v2581
        %v2593 = vadd.f32 %v2555, %v2579
        %2594 = vrot.lane.b32.xlu0 %v1755, 99
        %v2595 = vpop.permute.xlu0 %2594
        %2596 = vrot.lane.b32.xlu0 %v1759, 99
        %v2597 = vpop.permute.xlu0 %2596
        %vm2598 = vcmask 809984
        %v2599 = vsel %vm2598, %v2595, %v2597
        %v2603 = vmul.f32 %v2588, %v2595
        %v2604 = vmul.f32 %v2589, %v2599
        %v2605 = vmul.f32 %v2590, %v2597
        %v2606 = vmul.f32 %v2591, %v2595
        %v2607 = vmul.f32 %v2592, %v2599
        %v2608 = vmul.f32 %v2593, %v2597
        %2615 = vrot.lane.b32.xlu0 %v2603, 127
        %v2616 = vpop.permute.xlu0 %2615
        %2617 = vrot.lane.b32.xlu0 %v2604, 127
        %v2618 = vpop.permute.xlu0 %2617
        %2619 = vrot.lane.b32.xlu0 %v2605, 127
        %v2620 = vpop.permute.xlu0 %2619
        %2621 = vrot.lane.b32.xlu0 %v2606, 127
        %v2622 = vpop.permute.xlu0 %2621
        %2623 = vrot.lane.b32.xlu0 %v2607, 127
        %v2624 = vpop.permute.xlu0 %2623
        %2625 = vrot.lane.b32.xlu0 %v2608, 127
        %v2626 = vpop.permute.xlu0 %2625
        %v2627 = vsel %vm1909, %v2616, %v2618
        %v2628 = vsel %vm1909, %v2618, %v2620
        %v2629 = vsel %vm1909, %v2622, %v2624
        %v2630 = vsel %vm1909, %v2624, %v2626
        %v2637 = vadd.f32 %v2402, %v2627
        %v2638 = vadd.f32 %v2403, %v2628
        %v2639 = vadd.f32 %v2404, %v2620
        %v2640 = vadd.f32 %v2405, %v2629
        %v2641 = vadd.f32 %v2406, %v2630
        %v2642 = vadd.f32 %v2407, %v2626
        %2643 = vset.pattern.permute.xlu0 2
        %2644 = vperm.xlu0 %2643, %v2185
        %v2645 = vpop.permute.xlu0 %2644
        %2647 = vset.pattern.permute.xlu0 2
        %2648 = vperm.xlu0 %2647, %v2186
        %v2649 = vpop.permute.xlu0 %2648
        %v2651 = vmul.f32 %v2187, %v2645
        %v2652 = vmul.f32 %v2188, %v2645
        %v2653 = vmul.f32 %v2189, %v2645
        %v2654 = vmul.f32 %v2190, %v2649
        %v2655 = vmul.f32 %v2191, %v2649
        %v2656 = vmul.f32 %v2192, %v2649
        %2657 = vset.pattern.permute.xlu0 7
        %2658 = vperm.xlu0 %2657, %v2185
        %v2659 = vpop.permute.xlu0 %2658
        %2661 = vset.pattern.permute.xlu0 7
        %2662 = vperm.xlu0 %2661, %v2186
        %v2663 = vpop.permute.xlu0 %2662
        %v2665 = vmul.f32 %v2187, %v2659
        %v2666 = vmul.f32 %v2188, %v2659
        %v2667 = vmul.f32 %v2189, %v2659
        %v2668 = vmul.f32 %v2190, %v2663
        %v2669 = vmul.f32 %v2191, %v2663
        %v2670 = vmul.f32 %v2192, %v2663
        %2677 = vrot.lane.b32.xlu0 %v2665, 114
        %v2678 = vpop.permute.xlu0 %2677
        %2679 = vrot.lane.b32.xlu0 %v2666, 114
        %v2680 = vpop.permute.xlu0 %2679
        %2681 = vrot.lane.b32.xlu0 %v2667, 114
        %v2682 = vpop.permute.xlu0 %2681
        %2683 = vrot.lane.b32.xlu0 %v2668, 114
        %v2684 = vpop.permute.xlu0 %2683
        %2685 = vrot.lane.b32.xlu0 %v2669, 114
        %v2686 = vpop.permute.xlu0 %2685
        %2687 = vrot.lane.b32.xlu0 %v2670, 114
        %v2688 = vpop.permute.xlu0 %2687
        %v2689 = vsel %vm1696, %v2678, %v2680
        %v2690 = vsel %vm1696, %v2680, %v2682
        %v2691 = vsel %vm1696, %v2684, %v2686
        %v2692 = vsel %vm1696, %v2686, %v2688
        %v2699 = vadd.f32 %v2651, %v2689
        %v2700 = vadd.f32 %v2652, %v2690
        %v2701 = vadd.f32 %v2653, %v2682
        %v2702 = vadd.f32 %v2654, %v2691
        %v2703 = vadd.f32 %v2655, %v2692
        %v2704 = vadd.f32 %v2656, %v2688
        %2705 = vset.pattern.permute.xlu0 12
        %2706 = vperm.xlu0 %2705, %v2185
        %v2707 = vpop.permute.xlu0 %2706
        %2709 = vset.pattern.permute.xlu0 12
        %2710 = vperm.xlu0 %2709, %v2186
        %v2711 = vpop.permute.xlu0 %2710
        %v2713 = vmul.f32 %v2188, %v2707
        %v2714 = vmul.f32 %v2189, %v2707
        %v2715 = vmul.f32 %v2191, %v2711
        %v2716 = vmul.f32 %v2192, %v2711
        %2721 = vrot.lane.b32.xlu0 %v2713, 100
        %v2722 = vpop.permute.xlu0 %2721
        %2723 = vrot.lane.b32.xlu0 %v2714, 100
        %v2724 = vpop.permute.xlu0 %2723
        %2725 = vrot.lane.b32.xlu0 %v2715, 100
        %v2726 = vpop.permute.xlu0 %2725
        %2727 = vrot.lane.b32.xlu0 %v2716, 100
        %v2728 = vpop.permute.xlu0 %2727
        %v2729 = vsel %vm1737, %v2722, %v2724
        %v2730 = vsel %vm1737, %v2726, %v2728
        %v2737 = vadd.f32 %v2699, %v2722
        %v2738 = vadd.f32 %v2700, %v2729
        %v2739 = vadd.f32 %v2701, %v2724
        %v2740 = vadd.f32 %v2702, %v2726
        %v2741 = vadd.f32 %v2703, %v2730
        %v2742 = vadd.f32 %v2704, %v2728
        %2743 = vset.pattern.permute.xlu0 17
        %2744 = vperm.xlu0 %2743, %v2185
        %v2745 = vpop.permute.xlu0 %2744
        %2747 = vset.pattern.permute.xlu0 17
        %2748 = vperm.xlu0 %2747, %v2186
        %v2749 = vpop.permute.xlu0 %2748
        %v2751 = vmul.f32 %v2188, %v2745
        %v2752 = vmul.f32 %v2189, %v2745
        %v2753 = vmul.f32 %v2191, %v2749
        %v2754 = vmul.f32 %v2192, %v2749
        %2759 = vrot.lane.b32.xlu0 %v2751, 86
        %v2760 = vpop.permute.xlu0 %2759
        %2761 = vrot.lane.b32.xlu0 %v2752, 86
        %v2762 = vpop.permute.xlu0 %2761
        %2763 = vrot.lane.b32.xlu0 %v2753, 86
        %v2764 = vpop.permute.xlu0 %2763
        %2765 = vrot.lane.b32.xlu0 %v2754, 86
        %v2766 = vpop.permute.xlu0 %2765
        %v2767 = vsel %vm2329, %v2760, %v2762
        %v2768 = vsel %vm2329, %v2764, %v2766
        %v2775 = vadd.f32 %v2737, %v2760
        %v2776 = vadd.f32 %v2738, %v2767
        %v2777 = vadd.f32 %v2739, %v2762
        %v2778 = vadd.f32 %v2740, %v2764
        %v2779 = vadd.f32 %v2741, %v2768
        %v2780 = vadd.f32 %v2742, %v2766
        %2781 = vset.pattern.permute.xlu0 22
        %2782 = vperm.xlu0 %2781, %v2185
        %v2783 = vpop.permute.xlu0 %2782
        %2785 = vset.pattern.permute.xlu0 22
        %2786 = vperm.xlu0 %2785, %v2186
        %v2787 = vpop.permute.xlu0 %2786
        %v2789 = vmul.f32 %v2188, %v2783
        %v2790 = vmul.f32 %v2189, %v2783
        %v2791 = vmul.f32 %v2191, %v2787
        %v2792 = vmul.f32 %v2192, %v2787
        %2797 = vrot.lane.b32.xlu0 %v2789, 72
        %v2798 = vpop.permute.xlu0 %2797
        %2799 = vrot.lane.b32.xlu0 %v2790, 72
        %v2800 = vpop.permute.xlu0 %2799
        %2801 = vrot.lane.b32.xlu0 %v2791, 72
        %v2802 = vpop.permute.xlu0 %2801
        %2803 = vrot.lane.b32.xlu0 %v2792, 72
        %v2804 = vpop.permute.xlu0 %2803
        %v2805 = vsel %vm2368, %v2798, %v2800
        %v2806 = vsel %vm2368, %v2802, %v2804
        %v2813 = vadd.f32 %v2775, %v2798
        %v2814 = vadd.f32 %v2776, %v2805
        %v2815 = vadd.f32 %v2777, %v2800
        %v2816 = vadd.f32 %v2778, %v2802
        %v2817 = vadd.f32 %v2779, %v2806
        %v2818 = vadd.f32 %v2780, %v2804
        %2819 = vrot.lane.b32.xlu0 %v1870, 100
        %v2820 = vpop.permute.xlu0 %2819
        %2821 = vrot.lane.b32.xlu0 %v1874, 100
        %v2822 = vpop.permute.xlu0 %2821
        %v2823 = vsel %vm1737, %v2820, %v2822
        %v2827 = vmul.f32 %v2813, %v2820
        %v2828 = vmul.f32 %v2814, %v2823
        %v2829 = vmul.f32 %v2815, %v2822
        %v2830 = vmul.f32 %v2816, %v2820
        %v2831 = vmul.f32 %v2817, %v2823
        %v2832 = vmul.f32 %v2818, %v2822
        %2839 = vrot.lane.b32.xlu0 %v2827, 126
        %v2840 = vpop.permute.xlu0 %2839
        %2841 = vrot.lane.b32.xlu0 %v2828, 126
        %v2842 = vpop.permute.xlu0 %2841
        %2843 = vrot.lane.b32.xlu0 %v2829, 126
        %v2844 = vpop.permute.xlu0 %2843
        %2845 = vrot.lane.b32.xlu0 %v2830, 126
        %v2846 = vpop.permute.xlu0 %2845
        %2847 = vrot.lane.b32.xlu0 %v2831, 126
        %v2848 = vpop.permute.xlu0 %2847
        %2849 = vrot.lane.b32.xlu0 %v2832, 126
        %v2850 = vpop.permute.xlu0 %2849
        %v2851 = vsel %vm2059, %v2840, %v2842
        %v2852 = vsel %vm2059, %v2842, %v2844
        %v2853 = vsel %vm2059, %v2846, %v2848
        %v2854 = vsel %vm2059, %v2848, %v2850
        %v2861 = vadd.f32 %v2637, %v2851
        %v2862 = vadd.f32 %v2638, %v2852
        %v2863 = vadd.f32 %v2639, %v2844
        %v2864 = vadd.f32 %v2640, %v2853
        %v2865 = vadd.f32 %v2641, %v2854
        %v2866 = vadd.f32 %v2642, %v2850
        %2867 = vset.pattern.permute.xlu0 3
        %2868 = vperm.xlu0 %2867, %v2185
        %v2869 = vpop.permute.xlu0 %2868
        %2871 = vset.pattern.permute.xlu0 3
        %2872 = vperm.xlu0 %2871, %v2186
        %v2873 = vpop.permute.xlu0 %2872
        %v2875 = vmul.f32 %v2187, %v2869
        %v2876 = vmul.f32 %v2188, %v2869
        %v2877 = vmul.f32 %v2189, %v2869
        %v2878 = vmul.f32 %v2190, %v2873
        %v2879 = vmul.f32 %v2191, %v2873
        %v2880 = vmul.f32 %v2192, %v2873
        %2881 = vset.pattern.permute.xlu0 8
        %2882 = vperm.xlu0 %2881, %v2185
        %v2883 = vpop.permute.xlu0 %2882
        %2885 = vset.pattern.permute.xlu0 8
        %2886 = vperm.xlu0 %2885, %v2186
        %v2887 = vpop.permute.xlu0 %2886
        %v2889 = vmul.f32 %v2187, %v2883
        %v2890 = vmul.f32 %v2188, %v2883
        %v2891 = vmul.f32 %v2189, %v2883
        %v2892 = vmul.f32 %v2190, %v2887
        %v2893 = vmul.f32 %v2191, %v2887
        %v2894 = vmul.f32 %v2192, %v2887
        %2901 = vrot.lane.b32.xlu0 %v2889, 114
        %v2902 = vpop.permute.xlu0 %2901
        %2903 = vrot.lane.b32.xlu0 %v2890, 114
        %v2904 = vpop.permute.xlu0 %2903
        %2905 = vrot.lane.b32.xlu0 %v2891, 114
        %v2906 = vpop.permute.xlu0 %2905
        %2907 = vrot.lane.b32.xlu0 %v2892, 114
        %v2908 = vpop.permute.xlu0 %2907
        %2909 = vrot.lane.b32.xlu0 %v2893, 114
        %v2910 = vpop.permute.xlu0 %2909
        %2911 = vrot.lane.b32.xlu0 %v2894, 114
        %v2912 = vpop.permute.xlu0 %2911
        %v2913 = vsel %vm1696, %v2902, %v2904
        %v2914 = vsel %vm1696, %v2904, %v2906
        %v2915 = vsel %vm1696, %v2908, %v2910
        %v2916 = vsel %vm1696, %v2910, %v2912
        %v2923 = vadd.f32 %v2875, %v2913
        %v2924 = vadd.f32 %v2876, %v2914
        %v2925 = vadd.f32 %v2877, %v2906
        %v2926 = vadd.f32 %v2878, %v2915
        %v2927 = vadd.f32 %v2879, %v2916
        %v2928 = vadd.f32 %v2880, %v2912
        %2929 = vset.pattern.permute.xlu0 13
        %2930 = vperm.xlu0 %2929, %v2185
        %v2931 = vpop.permute.xlu0 %2930
        %2933 = vset.pattern.permute.xlu0 13
        %2934 = vperm.xlu0 %2933, %v2186
        %v2935 = vpop.permute.xlu0 %2934
        %v2937 = vmul.f32 %v2188, %v2931
        %v2938 = vmul.f32 %v2189, %v2931
        %v2939 = vmul.f32 %v2191, %v2935
        %v2940 = vmul.f32 %v2192, %v2935
        %2945 = vrot.lane.b32.xlu0 %v2937, 100
        %v2946 = vpop.permute.xlu0 %2945
        %2947 = vrot.lane.b32.xlu0 %v2938, 100
        %v2948 = vpop.permute.xlu0 %2947
        %2949 = vrot.lane.b32.xlu0 %v2939, 100
        %v2950 = vpop.permute.xlu0 %2949
        %2951 = vrot.lane.b32.xlu0 %v2940, 100
        %v2952 = vpop.permute.xlu0 %2951
        %v2953 = vsel %vm1737, %v2946, %v2948
        %v2954 = vsel %vm1737, %v2950, %v2952
        %v2961 = vadd.f32 %v2923, %v2946
        %v2962 = vadd.f32 %v2924, %v2953
        %v2963 = vadd.f32 %v2925, %v2948
        %v2964 = vadd.f32 %v2926, %v2950
        %v2965 = vadd.f32 %v2927, %v2954
        %v2966 = vadd.f32 %v2928, %v2952
        %2967 = vset.pattern.permute.xlu0 18
        %2968 = vperm.xlu0 %2967, %v2185
        %v2969 = vpop.permute.xlu0 %2968
        %2971 = vset.pattern.permute.xlu0 18
        %2972 = vperm.xlu0 %2971, %v2186
        %v2973 = vpop.permute.xlu0 %2972
        %v2975 = vmul.f32 %v2188, %v2969
        %v2976 = vmul.f32 %v2189, %v2969
        %v2977 = vmul.f32 %v2191, %v2973
        %v2978 = vmul.f32 %v2192, %v2973
        %2983 = vrot.lane.b32.xlu0 %v2975, 86
        %v2984 = vpop.permute.xlu0 %2983
        %2985 = vrot.lane.b32.xlu0 %v2976, 86
        %v2986 = vpop.permute.xlu0 %2985
        %2987 = vrot.lane.b32.xlu0 %v2977, 86
        %v2988 = vpop.permute.xlu0 %2987
        %2989 = vrot.lane.b32.xlu0 %v2978, 86
        %v2990 = vpop.permute.xlu0 %2989
        %v2991 = vsel %vm2329, %v2984, %v2986
        %v2992 = vsel %vm2329, %v2988, %v2990
        %v2999 = vadd.f32 %v2961, %v2984
        %v3000 = vadd.f32 %v2962, %v2991
        %v3001 = vadd.f32 %v2963, %v2986
        %v3002 = vadd.f32 %v2964, %v2988
        %v3003 = vadd.f32 %v2965, %v2992
        %v3004 = vadd.f32 %v2966, %v2990
        %3005 = vset.pattern.permute.xlu0 23
        %3006 = vperm.xlu0 %3005, %v2185
        %v3007 = vpop.permute.xlu0 %3006
        %3009 = vset.pattern.permute.xlu0 23
        %3010 = vperm.xlu0 %3009, %v2186
        %v3011 = vpop.permute.xlu0 %3010
        %v3013 = vmul.f32 %v2188, %v3007
        %v3014 = vmul.f32 %v2189, %v3007
        %v3015 = vmul.f32 %v2191, %v3011
        %v3016 = vmul.f32 %v2192, %v3011
        %3021 = vrot.lane.b32.xlu0 %v3013, 72
        %v3022 = vpop.permute.xlu0 %3021
        %3023 = vrot.lane.b32.xlu0 %v3014, 72
        %v3024 = vpop.permute.xlu0 %3023
        %3025 = vrot.lane.b32.xlu0 %v3015, 72
        %v3026 = vpop.permute.xlu0 %3025
        %3027 = vrot.lane.b32.xlu0 %v3016, 72
        %v3028 = vpop.permute.xlu0 %3027
        %v3029 = vsel %vm2368, %v3022, %v3024
        %v3030 = vsel %vm2368, %v3026, %v3028
        %v3037 = vadd.f32 %v2999, %v3022
        %v3038 = vadd.f32 %v3000, %v3029
        %v3039 = vadd.f32 %v3001, %v3024
        %v3040 = vadd.f32 %v3002, %v3026
        %v3041 = vadd.f32 %v3003, %v3030
        %v3042 = vadd.f32 %v3004, %v3028
        %3043 = vrot.lane.b32.xlu0 %v2019, 101
        %v3044 = vpop.permute.xlu0 %3043
        %3045 = vrot.lane.b32.xlu0 %v2023, 101
        %v3046 = vpop.permute.xlu0 %3045
        %vm3047 = vcmask 826368
        %v3048 = vsel %vm3047, %v3044, %v3046
        %v3052 = vmul.f32 %v3037, %v3044
        %v3053 = vmul.f32 %v3038, %v3048
        %v3054 = vmul.f32 %v3039, %v3046
        %v3055 = vmul.f32 %v3040, %v3044
        %v3056 = vmul.f32 %v3041, %v3048
        %v3057 = vmul.f32 %v3042, %v3046
        %3064 = vrot.lane.b32.xlu0 %v3052, 125
        %v3065 = vpop.permute.xlu0 %3064
        %3066 = vrot.lane.b32.xlu0 %v3053, 125
        %v3067 = vpop.permute.xlu0 %3066
        %3068 = vrot.lane.b32.xlu0 %v3054, 125
        %v3069 = vpop.permute.xlu0 %3068
        %3070 = vrot.lane.b32.xlu0 %v3055, 125
        %v3071 = vpop.permute.xlu0 %3070
        %3072 = vrot.lane.b32.xlu0 %v3056, 125
        %v3073 = vpop.permute.xlu0 %3072
        %3074 = vrot.lane.b32.xlu0 %v3057, 125
        %v3075 = vpop.permute.xlu0 %3074
        %vm3076 = vcmask 1022976
        %v3077 = vsel %vm3076, %v3065, %v3067
        %v3078 = vsel %vm3076, %v3067, %v3069
        %v3079 = vsel %vm3076, %v3071, %v3073
        %v3080 = vsel %vm3076, %v3073, %v3075
        %v3087 = vadd.f32 %v2861, %v3077
        %v3088 = vadd.f32 %v2862, %v3078
        %v3089 = vadd.f32 %v2863, %v3069
        %v3090 = vadd.f32 %v2864, %v3079
        %v3091 = vadd.f32 %v2865, %v3080
        %v3092 = vadd.f32 %v2866, %v3075
        %3093 = vset.pattern.permute.xlu0 4
        %3094 = vperm.xlu0 %3093, %v2185
        %v3095 = vpop.permute.xlu0 %3094
        %3097 = vset.pattern.permute.xlu0 4
        %3098 = vperm.xlu0 %3097, %v2186
        %v3099 = vpop.permute.xlu0 %3098
        %v3101 = vmul.f32 %v2187, %v3095
        %v3102 = vmul.f32 %v2188, %v3095
        %v3103 = vmul.f32 %v2189, %v3095
        %v3104 = vmul.f32 %v2190, %v3099
        %v3105 = vmul.f32 %v2191, %v3099
        %v3106 = vmul.f32 %v2192, %v3099
        %3107 = vset.pattern.permute.xlu0 9
        %3108 = vperm.xlu0 %3107, %v2185
        %v3109 = vpop.permute.xlu0 %3108
        %3111 = vset.pattern.permute.xlu0 9
        %3112 = vperm.xlu0 %3111, %v2186
        %v3113 = vpop.permute.xlu0 %3112
        %v3115 = vmul.f32 %v2187, %v3109
        %v3116 = vmul.f32 %v2188, %v3109
        %v3117 = vmul.f32 %v2189, %v3109
        %v3118 = vmul.f32 %v2190, %v3113
        %v3119 = vmul.f32 %v2191, %v3113
        %v3120 = vmul.f32 %v2192, %v3113
        %3127 = vrot.lane.b32.xlu0 %v3115, 114
        %v3128 = vpop.permute.xlu0 %3127
        %3129 = vrot.lane.b32.xlu0 %v3116, 114
        %v3130 = vpop.permute.xlu0 %3129
        %3131 = vrot.lane.b32.xlu0 %v3117, 114
        %v3132 = vpop.permute.xlu0 %3131
        %3133 = vrot.lane.b32.xlu0 %v3118, 114
        %v3134 = vpop.permute.xlu0 %3133
        %3135 = vrot.lane.b32.xlu0 %v3119, 114
        %v3136 = vpop.permute.xlu0 %3135
        %3137 = vrot.lane.b32.xlu0 %v3120, 114
        %v3138 = vpop.permute.xlu0 %3137
        %v3139 = vsel %vm1696, %v3128, %v3130
        %v3140 = vsel %vm1696, %v3130, %v3132
        %v3141 = vsel %vm1696, %v3134, %v3136
        %v3142 = vsel %vm1696, %v3136, %v3138
        %v3149 = vadd.f32 %v3101, %v3139
        %v3150 = vadd.f32 %v3102, %v3140
        %v3151 = vadd.f32 %v3103, %v3132
        %v3152 = vadd.f32 %v3104, %v3141
        %v3153 = vadd.f32 %v3105, %v3142
        %v3154 = vadd.f32 %v3106, %v3138
        %3155 = vset.pattern.permute.xlu0 14
        %3156 = vperm.xlu0 %3155, %v2185
        %v3157 = vpop.permute.xlu0 %3156
        %3159 = vset.pattern.permute.xlu0 14
        %3160 = vperm.xlu0 %3159, %v2186
        %v3161 = vpop.permute.xlu0 %3160
        %v3163 = vmul.f32 %v2188, %v3157
        %v3164 = vmul.f32 %v2189, %v3157
        %v3165 = vmul.f32 %v2191, %v3161
        %v3166 = vmul.f32 %v2192, %v3161
        %3171 = vrot.lane.b32.xlu0 %v3163, 100
        %v3172 = vpop.permute.xlu0 %3171
        %3173 = vrot.lane.b32.xlu0 %v3164, 100
        %v3174 = vpop.permute.xlu0 %3173
        %3175 = vrot.lane.b32.xlu0 %v3165, 100
        %v3176 = vpop.permute.xlu0 %3175
        %3177 = vrot.lane.b32.xlu0 %v3166, 100
        %v3178 = vpop.permute.xlu0 %3177
        %v3179 = vsel %vm1737, %v3172, %v3174
        %v3180 = vsel %vm1737, %v3176, %v3178
        %v3187 = vadd.f32 %v3149, %v3172
        %v3188 = vadd.f32 %v3150, %v3179
        %v3189 = vadd.f32 %v3151, %v3174
        %v3190 = vadd.f32 %v3152, %v3176
        %v3191 = vadd.f32 %v3153, %v3180
        %v3192 = vadd.f32 %v3154, %v3178
        %3193 = vset.pattern.permute.xlu0 19
        %3194 = vperm.xlu0 %3193, %v2185
        %v3195 = vpop.permute.xlu0 %3194
        %3197 = vset.pattern.permute.xlu0 19
        %3198 = vperm.xlu0 %3197, %v2186
        %v3199 = vpop.permute.xlu0 %3198
        %v3201 = vmul.f32 %v2188, %v3195
        %v3202 = vmul.f32 %v2189, %v3195
        %v3203 = vmul.f32 %v2191, %v3199
        %v3204 = vmul.f32 %v2192, %v3199
        %3209 = vrot.lane.b32.xlu0 %v3201, 86
        %v3210 = vpop.permute.xlu0 %3209
        %3211 = vrot.lane.b32.xlu0 %v3202, 86
        %v3212 = vpop.permute.xlu0 %3211
        %3213 = vrot.lane.b32.xlu0 %v3203, 86
        %v3214 = vpop.permute.xlu0 %3213
        %3215 = vrot.lane.b32.xlu0 %v3204, 86
        %v3216 = vpop.permute.xlu0 %3215
        %v3217 = vsel %vm2329, %v3210, %v3212
        %v3218 = vsel %vm2329, %v3214, %v3216
        %v3225 = vadd.f32 %v3187, %v3210
        %v3226 = vadd.f32 %v3188, %v3217
        %v3227 = vadd.f32 %v3189, %v3212
        %v3228 = vadd.f32 %v3190, %v3214
        %v3229 = vadd.f32 %v3191, %v3218
        %v3230 = vadd.f32 %v3192, %v3216
        %3231 = vset.pattern.permute.xlu0 24
        %3232 = vperm.xlu0 %3231, %v2185
        %v3233 = vpop.permute.xlu0 %3232
        %3235 = vset.pattern.permute.xlu0 24
        %3236 = vperm.xlu0 %3235, %v2186
        %v3237 = vpop.permute.xlu0 %3236
        %v3239 = vmul.f32 %v2188, %v3233
        %v3240 = vmul.f32 %v2189, %v3233
        %v3241 = vmul.f32 %v2191, %v3237
        %v3242 = vmul.f32 %v2192, %v3237
        %3247 = vrot.lane.b32.xlu0 %v3239, 72
        %v3248 = vpop.permute.xlu0 %3247
        %3249 = vrot.lane.b32.xlu0 %v3240, 72
        %v3250 = vpop.permute.xlu0 %3249
        %3251 = vrot.lane.b32.xlu0 %v3241, 72
        %v3252 = vpop.permute.xlu0 %3251
        %3253 = vrot.lane.b32.xlu0 %v3242, 72
        %v3254 = vpop.permute.xlu0 %3253
        %v3255 = vsel %vm2368, %v3248, %v3250
        %v3256 = vsel %vm2368, %v3252, %v3254
        %v3263 = vadd.f32 %v3225, %v3248
        %v3264 = vadd.f32 %v3226, %v3255
        %v3265 = vadd.f32 %v3227, %v3250
        %v3266 = vadd.f32 %v3228, %v3252
        %v3267 = vadd.f32 %v3229, %v3256
        %v3268 = vadd.f32 %v3230, %v3254
        %v3269 = vlaneseq
        %v3270 = vshrl.u32 %v3269, 7
        %v3271 = vsub.s32 4, %v3270
        %v3272 = vrot.slane %v1626, %v3271
        %v3273 = vlaneseq
        %v3274 = vshrl.u32 %v3273, 7
        %v3275 = vsub.s32 4, %v3274
        %v3276 = vrot.slane %v1627, %v3275
        %3279 = vrot.lane.b32.xlu0 %v3272, 102
        %v3280 = vpop.permute.xlu0 %3279
        %3281 = vrot.lane.b32.xlu0 %v3276, 102
        %v3282 = vpop.permute.xlu0 %3281
        %vm3283 = vcmask 834560
        %v3284 = vsel %vm3283, %v3280, %v3282
        %v3288 = vmul.f32 %v3263, %v3280
        %v3289 = vmul.f32 %v3264, %v3284
        %v3290 = vmul.f32 %v3265, %v3282
        %v3291 = vmul.f32 %v3266, %v3280
        %v3292 = vmul.f32 %v3267, %v3284
        %v3293 = vmul.f32 %v3268, %v3282
        %3300 = vrot.lane.b32.xlu0 %v3288, 124
        %v3301 = vpop.permute.xlu0 %3300
        %3302 = vrot.lane.b32.xlu0 %v3289, 124
        %v3303 = vpop.permute.xlu0 %3302
        %3304 = vrot.lane.b32.xlu0 %v3290, 124
        %v3305 = vpop.permute.xlu0 %3304
        %3306 = vrot.lane.b32.xlu0 %v3291, 124
        %v3307 = vpop.permute.xlu0 %3306
        %3308 = vrot.lane.b32.xlu0 %v3292, 124
        %v3309 = vpop.permute.xlu0 %3308
        %3310 = vrot.lane.b32.xlu0 %v3293, 124
        %v3311 = vpop.permute.xlu0 %3310
        %vm3312 = vcmask 1014784
        %v3313 = vsel %vm3312, %v3301, %v3303
        %v3314 = vsel %vm3312, %v3303, %v3305
        %v3315 = vsel %vm3312, %v3307, %v3309
        %v3316 = vsel %vm3312, %v3309, %v3311
        %v3323 = vadd.f32 %v3087, %v3313
        %v3324 = vadd.f32 %v3088, %v3314
        %v3325 = vadd.f32 %v3089, %v3305
        %v3326 = vadd.f32 %v3090, %v3315
        %v3327 = vadd.f32 %v3091, %v3316
        %v3328 = vadd.f32 %v3092, %v3311
        %v3329 = vmul.f32 %v3323, %v3323
        %v3330 = vmul.f32 %v3324, %v3324
        %v3331 = vmul.f32 %v3325, %v3325
        %v3332 = vmul.f32 %v3326, %v3326
        %v3333 = vmul.f32 %v3327, %v3327
        %v3334 = vmul.f32 %v3328, %v3328
        %v3335 = vmul.f32 %v3323, %v3329
        %v3336 = vmul.f32 %v3324, %v3330
        %v3337 = vmul.f32 %v3325, %v3331
        %v3338 = vmul.f32 %v3326, %v3332
        %v3339 = vmul.f32 %v3327, %v3333
        %v3340 = vmul.f32 %v3328, %v3334
        %v3341 = vmul.f32 %v3335, 0.044715
        %v3342 = vmul.f32 %v3336, 0.044715
        %v3343 = vmul.f32 %v3337, 0.044715
        %v3344 = vmul.f32 %v3338, 0.044715
        %v3345 = vmul.f32 %v3339, 0.044715
        %v3346 = vmul.f32 %v3340, 0.044715
        %v3347 = vadd.f32 %v3323, %v3341
        %v3348 = vadd.f32 %v3324, %v3342
        %v3349 = vadd.f32 %v3325, %v3343
        %v3350 = vadd.f32 %v3326, %v3344
        %v3351 = vadd.f32 %v3327, %v3345
        %v3352 = vadd.f32 %v3328, %v3346
        %v3353 = vmul.f32 %v3347, 0.7978846
        %v3354 = vmul.f32 %v3348, 0.7978846
        %v3355 = vmul.f32 %v3349, 0.7978846
        %v3356 = vmul.f32 %v3350, 0.7978846
        %v3357 = vmul.f32 %v3351, 0.7978846
        %v3358 = vmul.f32 %v3352, 0.7978846
        %v3359 = vtanh.pop %v3353
        %v3360 = vtanh.pop %v3354
        %v3361 = vtanh.pop %v3355
        %v3362 = vtanh.pop %v3356
        %v3363 = vtanh.pop %v3357
        %v3364 = vtanh.pop %v3358
        %v3365 = vadd.f32 %v3359, 1.0
        %v3366 = vadd.f32 %v3360, 1.0
        %v3367 = vadd.f32 %v3361, 1.0
        %v3368 = vadd.f32 %v3362, 1.0
        %v3369 = vadd.f32 %v3363, 1.0
        %v3370 = vadd.f32 %v3364, 1.0
        %v3371 = vmul.f32 %v3365, 0.5
        %v3372 = vmul.f32 %v3366, 0.5
        %v3373 = vmul.f32 %v3367, 0.5
        %v3374 = vmul.f32 %v3368, 0.5
        %v3375 = vmul.f32 %v3369, 0.5
        %v3376 = vmul.f32 %v3370, 0.5
        %v3377 = vmul.f32 %v3323, %v3371
        %v3378 = vmul.f32 %v3324, %v3372
        %v3379 = vmul.f32 %v3325, %v3373
        %v3380 = vmul.f32 %v3326, %v3374
        %v3381 = vmul.f32 %v3327, %v3375
        %v3382 = vmul.f32 %v3328, %v3376
        %v3383 = vlaneseq
        %v3384 = vshrl.u32 %v3383, 7
        %v3385 = vsub.s32 1, %v3384
        %v3386 = vrot.slane %v1622, %v3385
        %v3387 = vlaneseq
        %v3388 = vshrl.u32 %v3387, 7
        %v3389 = vsub.s32 1, %v3388
        %v3390 = vrot.slane %v1624, %v3389
        %3393 = vrot.lane.b32.xlu0 %v3386, 98
        %v3394 = vpop.permute.xlu0 %3393
        %3395 = vrot.lane.b32.xlu0 %v3390, 98
        %v3396 = vpop.permute.xlu0 %3395
        %v3397 = vsel %vm2397, %v3394, %v3396
        %v3401 = vmul.f32 %v3377, %v3394
        %v3402 = vmul.f32 %v3378, %v3397
        %v3403 = vmul.f32 %v3379, %v3396
        %v3404 = vmul.f32 %v3380, %v3394
        %v3405 = vmul.f32 %v3381, %v3397
        %v3406 = vmul.f32 %v3382, %v3396
        %3413 = vrot.lane.b32.xlu0 %v3401, 15
        %v3414 = vpop.permute.xlu0 %3413
        %3415 = vrot.lane.b32.xlu0 %v3402, 15
        %v3416 = vpop.permute.xlu0 %3415
        %3417 = vrot.lane.b32.xlu0 %v3403, 15
        %v3418 = vpop.permute.xlu0 %3417
        %3419 = vrot.lane.b32.xlu0 %v3404, 15
        %v3420 = vpop.permute.xlu0 %3419
        %3421 = vrot.lane.b32.xlu0 %v3405, 15
        %v3422 = vpop.permute.xlu0 %3421
        %3423 = vrot.lane.b32.xlu0 %v3406, 15
        %v3424 = vpop.permute.xlu0 %3423
        %v3425 = vsel %vm2172, %v3414, %v3416
        %v3426 = vsel %vm2172, %v3416, %v3418
        %v3427 = vsel %vm2172, %v3420, %v3422
        %v3428 = vsel %vm2172, %v3422, %v3424
        %v3435 = vadd.f32 %v2148, %v3414
        %v3436 = vadd.f32 %v2149, %v3425
        %v3437 = vadd.f32 %v2150, %v3426
        %v3438 = vadd.f32 %v2151, %v3420
        %v3439 = vadd.f32 %v2152, %v3427
        %v3440 = vadd.f32 %v2153, %v3428
        %3447 = vrot.lane.b32.xlu0 %v3377, 30
        %v3448 = vpop.permute.xlu0 %3447
        %3449 = vrot.lane.b32.xlu0 %v3378, 30
        %v3450 = vpop.permute.xlu0 %3449
        %3451 = vrot.lane.b32.xlu0 %v3379, 30
        %v3452 = vpop.permute.xlu0 %3451
        %3453 = vrot.lane.b32.xlu0 %v3380, 30
        %v3454 = vpop.permute.xlu0 %3453
        %3455 = vrot.lane.b32.xlu0 %v3381, 30
        %v3456 = vpop.permute.xlu0 %3455
        %3457 = vrot.lane.b32.xlu0 %v3382, 30
        %v3458 = vpop.permute.xlu0 %3457
        %vm3459 = vcmask 244736
        %v3460 = vsel %vm3459, %v3448, %v3450
        %v3461 = vsel %vm3459, %v3450, %v3452
        %v3462 = vsel %vm3459, %v3454, %v3456
        %v3463 = vsel %vm3459, %v3456, %v3458
        %v3468 = vsel %vm1353, %v3461, 0.0
        %v3469 = vadd.f32 %v3460, %v3468
        %3470 = vadd.xlane.f32.xlu0 %v3469
        %v3471 = vpop.xlane.xlu0 %3470
        %v3472 = vsel %vm1353, %v3463, 0.0
        %v3473 = vadd.f32 %v3462, %v3472
        %3474 = vadd.xlane.f32.xlu0 %v3473
        %v3475 = vpop.xlane.xlu0 %3474
        %v3476 = vrcp.pop 196.0
        %v3477 = vmul.f32 %v3471, %v3476
        %v3478 = vmul.f32 %v3475, %v3476
        %v3479 = vmul.f32 %v3477, %v3477
        %v3480 = vmul.f32 %v3478, %v3478
        %v3481 = vmul.f32 %v3477, %v3479
        %v3482 = vmul.f32 %v3478, %v3480
        %v3483 = vmul.f32 %v3481, 0.044715
        %v3484 = vmul.f32 %v3482, 0.044715
        %v3485 = vadd.f32 %v3477, %v3483
        %v3486 = vadd.f32 %v3478, %v3484
        %v3487 = vmul.f32 %v3485, 0.7978846
        %v3488 = vmul.f32 %v3486, 0.7978846
        %v3489 = vtanh.pop %v3487
        %v3490 = vtanh.pop %v3488
        %v3491 = vadd.f32 %v3489, 1.0
        %v3492 = vadd.f32 %v3490, 1.0
        %v3493 = vmul.f32 %v3491, 0.5
        %v3494 = vmul.f32 %v3492, 0.5
        %v3495 = vmul.f32 %v3477, %v3493
        %v3496 = vmul.f32 %v3478, %v3494
        %v3497 = vlaneseq
        %v3498 = vshrl.u32 %v3497, 7
        %v3499 = vsub.s32 2, %v3498
        %v3500 = vrot.slane %v1622, %v3499
        %v3501 = vlaneseq
        %v3502 = vshrl.u32 %v3501, 7
        %v3503 = vsub.s32 2, %v3502
        %v3504 = vrot.slane %v1624, %v3503
        %v3505 = vmul.f32 %v3495, %v3500
        %v3506 = vmul.f32 %v3495, %v3504
        %v3507 = vmul.f32 %v3496, %v3500
        %v3508 = vmul.f32 %v3496, %v3504
        %3513 = vrot.lane.b32.xlu0 %v3505, 113
        %v3514 = vpop.permute.xlu0 %3513
        %3515 = vrot.lane.b32.xlu0 %v3506, 113
        %v3516 = vpop.permute.xlu0 %3515
        %3517 = vrot.lane.b32.xlu0 %v3507, 113
        %v3518 = vpop.permute.xlu0 %3517
        %3519 = vrot.lane.b32.xlu0 %v3508, 113
        %v3520 = vpop.permute.xlu0 %3519
        %v3521 = vsel %vm1766, %v3514, %v3516
        %v3522 = vsel %vm1766, %v3518, %v3520
        %v3529 = vadd.f32 %v3435, %v3514
        %v3530 = vadd.f32 %v3436, %v3521
        %v3531 = vadd.f32 %v3437, %v3516
        %v3532 = vadd.f32 %v3438, %v3518
        %v3533 = vadd.f32 %v3439, %v3522
        %v3534 = vadd.f32 %v3440, %v3520
        %v3535 = vld [vmem:[%s21] sm:$0xff]
        %v3536 = vld [vmem:[%s21 + $0x8] sm:$0xff]
        %v3537 = vld [vmem:[%s23] sm:$0xff]
        %v3538 = vld [vmem:[%s23 + $0x8] sm:$0xff]
        %3540 = vset.pattern.permute.xlu0 0
        %3541 = vperm.xlu0 %3540, %v3537
        %v3542 = vpop.permute.xlu0 %3541
        %3545 = vset.pattern.permute.xlu0 0
        %3546 = vperm.xlu0 %3545, %v3538
        %v3547 = vpop.permute.xlu0 %3546
        %3555 = vrot.lane.b32.xlu0 %v3529, 15
        %v3556 = vpop.permute.xlu0 %3555
        %3557 = vrot.lane.b32.xlu0 %v3530, 15
        %v3558 = vpop.permute.xlu0 %3557
        %3559 = vrot.lane.b32.xlu0 %v3531, 15
        %v3560 = vpop.permute.xlu0 %3559
        %3561 = vrot.lane.b32.xlu0 %v3532, 15
        %v3562 = vpop.permute.xlu0 %3561
        %3563 = vrot.lane.b32.xlu0 %v3533, 15
        %v3564 = vpop.permute.xlu0 %3563
        %3565 = vrot.lane.b32.xlu0 %v3534, 15
        %v3566 = vpop.permute.xlu0 %3565
        %v3567 = vsel %vm2172, %v3556, %v3558
        %v3568 = vsel %vm2172, %v3558, %v3560
        %v3569 = vsel %vm2172, %v3562, %v3564
        %v3570 = vsel %vm2172, %v3564, %v3566
        %v3576 = vsel %vm1515, %v3535, 0
        %v3579 = vsel %vm1515, %v3536, 0
        %3581 = vmatprep.subr.mxu0 %v3568
        %3582 = vmatpush1.msra.mxu0 %v3567
        %3583 = vmatprep.subr.mxu0 %v3570
        %3584 = vmatpush1.msra.mxu0 %v3569
        %3585 = vmatprep.subr.mxu0 0.0
        %3586 = vmatpush1.msra.mxu0 0.0
        %3587 = vmatprep.subr.mxu0 0.0
        %3588 = vmatpush1.msra.mxu0 0.0
        %3589 = vmatprep.subr.mxu0 0.0
        %3590 = vmatpush1.msra.mxu0 0.0
        %3591 = vmatprep.subr.mxu0 0.0
        %3592 = vmatpush1.msra.mxu0 0.0
        %3593 = vmatprep.subr.mxu0 0.0
        %3594 = vmatpush1.msra.mxu0 0.0
        %3595 = vmatprep.subr.mxu0 0.0
        %3596 = vmatpush1.msra.mxu0 0.0
        %3597 = vmatprep.subr.mxu0 0.0
        %3598 = vmatpush1.msra.mxu0 0.0
        %3599 = vmatprep.subr.mxu0 0.0
        %3600 = vmatpush1.msra.mxu0 0.0
        %3601 = vmatprep.subr.mxu0 0.0
        %3602 = vmatpush1.msra.mxu0 0.0
        %3603 = vmatprep.subr.mxu0 0.0
        %3604 = vmatpush1.msra.mxu0 0.0
        %3605 = vmatprep.subr.mxu0 0.0
        %3606 = vmatpush1.msra.mxu0 0.0
        %3607 = vmatprep.subr.mxu0 0.0
        %3608 = vmatpush1.msra.mxu0 0.0
        %3609 = vmatprep.subr.mxu0 0.0
        %3610 = vmatpush1.msra.mxu0 0.0
        %3611 = vmatprep.subr.mxu0 0.0
        %3612 = vmatpush1.msra.mxu0 0.0
        %3613 = vmatprep.subr.mxu0 0.0
        %3614 = vmatpush1.msra.mxu0 0.0
        %3615 = vmatprep.subr.mxu0 0.0
        %3616 = vmatpush1.msra.mxu0 0.0
        %3617 = vmatprep.subr.mxu0 0.0
        %3618 = vmatpush1.msra.mxu0 0.0
        %3619 = vmatprep.subr.mxu0 0.0
        %3620 = vmatpush1.msra.mxu0 0.0
        %3621 = vmatprep.subr.mxu0 0.0
        %3622 = vmatpush1.msra.mxu0 0.0
        %3623 = vmatprep.subr.mxu0 0.0
        %3624 = vmatpush1.msra.mxu0 0.0
        %3625 = vmatprep.subr.mxu0 0.0
        %3626 = vmatpush1.msra.mxu0 0.0
        %3627 = vmatprep.subr.mxu0 0.0
        %3628 = vmatpush1.msra.mxu0 0.0
        %3629 = vmatprep.subr.mxu0 0.0
        %3630 = vmatpush1.msra.mxu0 0.0
        %3631 = vmatprep.subr.mxu0 0.0
        %3632 = vmatpush1.msra.mxu0 0.0
        %3633 = vmatprep.subr.mxu0 0.0
        %3634 = vmatpush1.msra.mxu0 0.0
        %3635 = vmatprep.subr.mxu0 0.0
        %3636 = vmatpush1.msra.mxu0 0.0
        %3637 = vmatprep.subr.mxu0 0.0
        %3638 = vmatpush1.msra.mxu0 0.0
        %3639 = vmatprep.subr.mxu0 0.0
        %3640 = vmatpush1.msra.mxu0 0.0
        %3641 = vmatprep.subr.mxu0 0.0
        %3642 = vmatpush1.msra.mxu0 0.0
        %3643 = vmatprep.subr.mxu0 0.0
        %3644 = vmatpush1.msra.mxu0 0.0
        %3645 = vmatprep.mubr.f32.mxu0 0.0
        %3646 = vmatmul.mubr.f32.gmra.mrb[0].mxu0 %v3576
        %v3647 = vpop.f32.mrb[0].mxu0
        %v3648 = vadd.f32 %v3542, %v3647
        %v3649 = vpop.f32.mrb[0].mxu0
        %v3650 = vadd.f32 %v3542, %v3649
        %3651 = vmatprep.mubr.f32.mxu0 0.0
        %3652 = vmatmul.mubr.f32.gmra.mrb[0].mxu0 %v3579
        %v3653 = vpop.f32.mrb[0].mxu0
        %v3654 = vadd.f32 %v3547, %v3653
        %v3655 = vpop.f32.mrb[0].mxu0
        %v3656 = vadd.f32 %v3547, %v3655
        %3657 = vdwg.mxu0
        %v3658 = vmul.f32 %v1598, %v3648
        %v3659 = vmul.f32 %v1600, %v3650
        %v3660 = vmul.f32 %v1604, %v3654
        %v3661 = vmul.f32 %v1606, %v3656
        %v3662 = vld [vmem:[%s25] sm:$0xff]
        %v3663 = vld [vmem:[%s25 + $0x8] sm:$0xff]
        %v3664 = vld [vmem:[%s27] sm:$0xff]
        %v3665 = vld [vmem:[%s27 + $0x8] sm:$0xff]
        %3667 = vset.pattern.permute.xlu0 0
        %3668 = vperm.xlu0 %3667, %v3664
        %v3669 = vpop.permute.xlu0 %3668
        %3672 = vset.pattern.permute.xlu0 0
        %3673 = vperm.xlu0 %3672, %v3665
        %v3674 = vpop.permute.xlu0 %3673
        %v3677 = vsel %vm1515, %v3662, 0
        %v3680 = vsel %vm1515, %v3663, 0
        %3682 = vmatprep.subr.mxu0 %v3659
        %3683 = vmatpush1.msra.mxu0 %v3658
        %3684 = vmatprep.subr.mxu0 %v3661
        %3685 = vmatpush1.msra.mxu0 %v3660
        %3686 = vmatprep.subr.mxu0 0.0
        %3687 = vmatpush1.msra.mxu0 0.0
        %3688 = vmatprep.subr.mxu0 0.0
        %3689 = vmatpush1.msra.mxu0 0.0
        %3690 = vmatprep.subr.mxu0 0.0
        %3691 = vmatpush1.msra.mxu0 0.0
        %3692 = vmatprep.subr.mxu0 0.0
        %3693 = vmatpush1.msra.mxu0 0.0
        %3694 = vmatprep.subr.mxu0 0.0
        %3695 = vmatpush1.msra.mxu0 0.0
        %3696 = vmatprep.subr.mxu0 0.0
        %3697 = vmatpush1.msra.mxu0 0.0
        %3698 = vmatprep.subr.mxu0 0.0
        %3699 = vmatpush1.msra.mxu0 0.0
        %3700 = vmatprep.subr.mxu0 0.0
        %3701 = vmatpush1.msra.mxu0 0.0
        %3702 = vmatprep.subr.mxu0 0.0
        %3703 = vmatpush1.msra.mxu0 0.0
        %3704 = vmatprep.subr.mxu0 0.0
        %3705 = vmatpush1.msra.mxu0 0.0
        %3706 = vmatprep.subr.mxu0 0.0
        %3707 = vmatpush1.msra.mxu0 0.0
        %3708 = vmatprep.subr.mxu0 0.0
        %3709 = vmatpush1.msra.mxu0 0.0
        %3710 = vmatprep.subr.mxu0 0.0
        %3711 = vmatpush1.msra.mxu0 0.0
        %3712 = vmatprep.subr.mxu0 0.0
        %3713 = vmatpush1.msra.mxu0 0.0
        %3714 = vmatprep.subr.mxu0 0.0
        %3715 = vmatpush1.msra.mxu0 0.0
        %3716 = vmatprep.subr.mxu0 0.0
        %3717 = vmatpush1.msra.mxu0 0.0
        %3718 = vmatprep.subr.mxu0 0.0
        %3719 = vmatpush1.msra.mxu0 0.0
        %3720 = vmatprep.subr.mxu0 0.0
        %3721 = vmatpush1.msra.mxu0 0.0
        %3722 = vmatprep.subr.mxu0 0.0
        %3723 = vmatpush1.msra.mxu0 0.0
        %3724 = vmatprep.subr.mxu0 0.0
        %3725 = vmatpush1.msra.mxu0 0.0
        %3726 = vmatprep.subr.mxu0 0.0
        %3727 = vmatpush1.msra.mxu0 0.0
        %3728 = vmatprep.subr.mxu0 0.0
        %3729 = vmatpush1.msra.mxu0 0.0
        %3730 = vmatprep.subr.mxu0 0.0
        %3731 = vmatpush1.msra.mxu0 0.0
        %3732 = vmatprep.subr.mxu0 0.0
        %3733 = vmatpush1.msra.mxu0 0.0
        %3734 = vmatprep.subr.mxu0 0.0
        %3735 = vmatpush1.msra.mxu0 0.0
        %3736 = vmatprep.subr.mxu0 0.0
        %3737 = vmatpush1.msra.mxu0 0.0
        %3738 = vmatprep.subr.mxu0 0.0
        %3739 = vmatpush1.msra.mxu0 0.0
        %3740 = vmatprep.subr.mxu0 0.0
        %3741 = vmatpush1.msra.mxu0 0.0
        %3742 = vmatprep.subr.mxu0 0.0
        %3743 = vmatpush1.msra.mxu0 0.0
        %3744 = vmatprep.subr.mxu0 0.0
        %3745 = vmatpush1.msra.mxu0 0.0
        %3746 = vmatprep.mubr.f32.mxu0 0.0
        %3747 = vmatmul.mubr.f32.gmra.mrb[0].mxu0 %v3677
        %v3748 = vpop.f32.mrb[0].mxu0
        %v3749 = vadd.f32 %v3669, %v3748
        %v3750 = vpop.f32.mrb[0].mxu0
        %v3751 = vadd.f32 %v3669, %v3750
        %3752 = vmatprep.mubr.f32.mxu0 0.0
        %3753 = vmatmul.mubr.f32.gmra.mrb[0].mxu0 %v3680
        %v3754 = vpop.f32.mrb[0].mxu0
        %v3755 = vadd.f32 %v3674, %v3754
        %v3756 = vpop.f32.mrb[0].mxu0
        %v3757 = vadd.f32 %v3674, %v3756
        %3758 = vdwg.mxu0
        %v3759 = vadd.f32 %v1424, %v3749
        %v3760 = vadd.f32 %v1425, %v3751
        %v3761 = vadd.f32 %v1426, %v3755
        %v3762 = vadd.f32 %v1427, %v3757
        %v3763 = vadd.f32 %v3759, %v3761
        %v3764 = vrot.slane %v3763, 4
        %v3765 = vadd.f32 %v3763, %v3764
        %v3766 = vrot.slane %v3765, 2
        %v3767 = vadd.f32 %v3765, %v3766
        %v3768 = vrot.slane %v3767, 1
        %v3769 = vadd.f32 %v3767, %v3768
        %v3770 = vsel %vm1353, %v3760, 0.0
        %v3771 = vsel %vm1353, %v3762, 0.0
        %v3772 = vadd.f32 %v3770, %v3771
        %v3773 = vrot.slane %v3772, 4
        %v3774 = vadd.f32 %v3772, %v3773
        %v3775 = vrot.slane %v3774, 2
        %v3776 = vadd.f32 %v3774, %v3775
        %v3777 = vrot.slane %v3776, 1
        %v3778 = vadd.f32 %v3776, %v3777
        %v3779 = vmul.f32 %v3769, %v1363
        %v3780 = vmul.f32 %v3778, %v1363
        %v3781 = vsub.f32 %v3759, %v3779
        %v3782 = vsub.f32 %v3760, %v3780
        %v3783 = vsub.f32 %v3761, %v3779
        %v3784 = vsub.f32 %v3762, %v3780
        %v3785 = vmul.f32 %v3781, %v3781
        %v3786 = vmul.f32 %v3782, %v3782
        %v3787 = vmul.f32 %v3783, %v3783
        %v3788 = vmul.f32 %v3784, %v3784
        %v3789 = vadd.f32 %v3785, %v3787
        %v3790 = vrot.slane %v3789, 4
        %v3791 = vadd.f32 %v3789, %v3790
        %v3792 = vrot.slane %v3791, 2
        %v3793 = vadd.f32 %v3791, %v3792
        %v3794 = vrot.slane %v3793, 1
        %v3795 = vadd.f32 %v3793, %v3794
        %v3796 = vsel %vm1353, %v3786, 0.0
        %v3797 = vsel %vm1353, %v3788, 0.0
        %v3798 = vadd.f32 %v3796, %v3797
        %v3799 = vrot.slane %v3798, 4
        %v3800 = vadd.f32 %v3798, %v3799
        %v3801 = vrot.slane %v3800, 2
        %v3802 = vadd.f32 %v3800, %v3801
        %v3803 = vrot.slane %v3802, 1
        %v3804 = vadd.f32 %v3802, %v3803
        %v3805 = vmul.f32 %v3795, %v1363
        %v3806 = vmul.f32 %v3804, %v1363
        %v3807 = vadd.f32 %v3805, 1e-05
        %v3808 = vadd.f32 %v3806, 1e-05
        %v3809 = vrsqrt.pop %v3807
        %v3810 = vrsqrt.pop %v3808
        %v3811 = vmul.f32 %v3781, %v3809
        %v3812 = vmul.f32 %v3782, %v3810
        %v3813 = vmul.f32 %v3783, %v3809
        %v3814 = vmul.f32 %v3784, %v3810
        %v3815 = vld [vmem:[%s29] sm:$0xff]
        %v3816 = vld [vmem:[%s29 + $0x8] sm:$0xff]
        %v3817 = vld [vmem:[%s29 + $0x10] sm:$0xff]
        %v3818 = vld [vmem:[%s29 + $0x18] sm:$0xff]
        %v3819 = vld [vmem:[%s29 + $0x20] sm:$0xff]
        %v3820 = vld [vmem:[%s29 + $0x28] sm:$0xff]
        %v3821 = vld [vmem:[%s29 + $0x30] sm:$0xff]
        %v3822 = vld [vmem:[%s29 + $0x38] sm:$0xff]
        %v3823 = vld [vmem:[%s31] sm:$0xff]
        %v3824 = vld [vmem:[%s31 + $0x8] sm:$0xff]
        %v3825 = vld [vmem:[%s31 + $0x10] sm:$0xff]
        %v3826 = vld [vmem:[%s31 + $0x18] sm:$0xff]
        %v3827 = vld [vmem:[%s31 + $0x20] sm:$0xff]
        %v3828 = vld [vmem:[%s31 + $0x28] sm:$0xff]
        %v3829 = vld [vmem:[%s31 + $0x30] sm:$0xff]
        %v3830 = vld [vmem:[%s31 + $0x38] sm:$0xff]
        %3832 = vset.pattern.permute.xlu0 0
        %3833 = vperm.xlu0 %3832, %v3823
        %v3834 = vpop.permute.xlu0 %3833
        %3837 = vset.pattern.permute.xlu0 0
        %3838 = vperm.xlu0 %3837, %v3824
        %v3839 = vpop.permute.xlu0 %3838
        %3842 = vset.pattern.permute.xlu0 0
        %3843 = vperm.xlu0 %3842, %v3825
        %v3844 = vpop.permute.xlu0 %3843
        %3847 = vset.pattern.permute.xlu0 0
        %3848 = vperm.xlu0 %3847, %v3826
        %v3849 = vpop.permute.xlu0 %3848
        %3852 = vset.pattern.permute.xlu0 0
        %3853 = vperm.xlu0 %3852, %v3827
        %v3854 = vpop.permute.xlu0 %3853
        %3857 = vset.pattern.permute.xlu0 0
        %3858 = vperm.xlu0 %3857, %v3828
        %v3859 = vpop.permute.xlu0 %3858
        %3862 = vset.pattern.permute.xlu0 0
        %3863 = vperm.xlu0 %3862, %v3829
        %v3864 = vpop.permute.xlu0 %3863
        %3867 = vset.pattern.permute.xlu0 0
        %3868 = vperm.xlu0 %3867, %v3830
        %v3869 = vpop.permute.xlu0 %3868
        %v3872 = vsel %vm1515, %v3815, 0
        %v3875 = vsel %vm1515, %v3816, 0
        %v3878 = vsel %vm1515, %v3817, 0
        %v3881 = vsel %vm1515, %v3818, 0
        %v3884 = vsel %vm1515, %v3819, 0
        %v3887 = vsel %vm1515, %v3820, 0
        %v3890 = vsel %vm1515, %v3821, 0
        %v3893 = vsel %vm1515, %v3822, 0
        %3895 = vmatprep.subr.mxu0 %v3812
        %3896 = vmatpush1.msra.mxu0 %v3811
        %3897 = vmatprep.subr.mxu0 %v3814
        %3898 = vmatpush1.msra.mxu0 %v3813
        %3899 = vmatprep.subr.mxu0 0.0
        %3900 = vmatpush1.msra.mxu0 0.0
        %3901 = vmatprep.subr.mxu0 0.0
        %3902 = vmatpush1.msra.mxu0 0.0
        %3903 = vmatprep.subr.mxu0 0.0
        %3904 = vmatpush1.msra.mxu0 0.0
        %3905 = vmatprep.subr.mxu0 0.0
        %3906 = vmatpush1.msra.mxu0 0.0
        %3907 = vmatprep.subr.mxu0 0.0
        %3908 = vmatpush1.msra.mxu0 0.0
        %3909 = vmatprep.subr.mxu0 0.0
        %3910 = vmatpush1.msra.mxu0 0.0
        %3911 = vmatprep.subr.mxu0 0.0
        %3912 = vmatpush1.msra.mxu0 0.0
        %3913 = vmatprep.subr.mxu0 0.0
        %3914 = vmatpush1.msra.mxu0 0.0
        %3915 = vmatprep.subr.mxu0 0.0
        %3916 = vmatpush1.msra.mxu0 0.0
        %3917 = vmatprep.subr.mxu0 0.0
        %3918 = vmatpush1.msra.mxu0 0.0
        %3919 = vmatprep.subr.mxu0 0.0
        %3920 = vmatpush1.msra.mxu0 0.0
        %3921 = vmatprep.subr.mxu0 0.0
        %3922 = vmatpush1.msra.mxu0 0.0
        %3923 = vmatprep.subr.mxu0 0.0
        %3924 = vmatpush1.msra.mxu0 0.0
        %3925 = vmatprep.subr.mxu0 0.0
        %3926 = vmatpush1.msra.mxu0 0.0
        %3927 = vmatprep.subr.mxu0 0.0
        %3928 = vmatpush1.msra.mxu0 0.0
        %3929 = vmatprep.subr.mxu0 0.0
        %3930 = vmatpush1.msra.mxu0 0.0
        %3931 = vmatprep.subr.mxu0 0.0
        %3932 = vmatpush1.msra.mxu0 0.0
        %3933 = vmatprep.subr.mxu0 0.0
        %3934 = vmatpush1.msra.mxu0 0.0
        %3935 = vmatprep.subr.mxu0 0.0
        %3936 = vmatpush1.msra.mxu0 0.0
        %3937 = vmatprep.subr.mxu0 0.0
        %3938 = vmatpush1.msra.mxu0 0.0
        %3939 = vmatprep.subr.mxu0 0.0
        %3940 = vmatpush1.msra.mxu0 0.0
        %3941 = vmatprep.subr.mxu0 0.0
        %3942 = vmatpush1.msra.mxu0 0.0
        %3943 = vmatprep.subr.mxu0 0.0
        %3944 = vmatpush1.msra.mxu0 0.0
        %3945 = vmatprep.subr.mxu0 0.0
        %3946 = vmatpush1.msra.mxu0 0.0
        %3947 = vmatprep.subr.mxu0 0.0
        %3948 = vmatpush1.msra.mxu0 0.0
        %3949 = vmatprep.subr.mxu0 0.0
        %3950 = vmatpush1.msra.mxu0 0.0
        %3951 = vmatprep.subr.mxu0 0.0
        %3952 = vmatpush1.msra.mxu0 0.0
        %3953 = vmatprep.subr.mxu0 0.0
        %3954 = vmatpush1.msra.mxu0 0.0
        %3955 = vmatprep.subr.mxu0 0.0
        %3956 = vmatpush1.msra.mxu0 0.0
        %3957 = vmatprep.subr.mxu0 0.0
        %3958 = vmatpush1.msra.mxu0 0.0
        %3959 = vmatprep.mubr.f32.mxu0 0.0
        %3960 = vmatmul.mubr.f32.gmra.mrb[0].mxu0 %v3872
        %v3961 = vpop.f32.mrb[0].mxu0
        %v3962 = vadd.f32 %v3834, %v3961
        %v3963 = vpop.f32.mrb[0].mxu0
        %v3964 = vadd.f32 %v3834, %v3963
        %3965 = vmatprep.mubr.f32.mxu0 0.0
        %3966 = vmatmul.mubr.f32.gmra.mrb[0].mxu0 %v3875
        %v3967 = vpop.f32.mrb[0].mxu0
        %v3968 = vadd.f32 %v3839, %v3967
        %v3969 = vpop.f32.mrb[0].mxu0
        %v3970 = vadd.f32 %v3839, %v3969
        %3971 = vmatprep.mubr.f32.mxu0 0.0
        %3972 = vmatmul.mubr.f32.gmra.mrb[0].mxu0 %v3878
        %v3973 = vpop.f32.mrb[0].mxu0
        %v3974 = vadd.f32 %v3844, %v3973
        %v3975 = vpop.f32.mrb[0].mxu0
        %v3976 = vadd.f32 %v3844, %v3975
        %3977 = vmatprep.mubr.f32.mxu0 0.0
        %3978 = vmatmul.mubr.f32.gmra.mrb[0].mxu0 %v3881
        %v3979 = vpop.f32.mrb[0].mxu0
        %v3980 = vadd.f32 %v3849, %v3979
        %v3981 = vpop.f32.mrb[0].mxu0
        %v3982 = vadd.f32 %v3849, %v3981
        %3983 = vmatprep.mubr.f32.mxu0 0.0
        %3984 = vmatmul.mubr.f32.gmra.mrb[0].mxu0 %v3884
        %v3985 = vpop.f32.mrb[0].mxu0
        %v3986 = vadd.f32 %v3854, %v3985
        %v3987 = vpop.f32.mrb[0].mxu0
        %v3988 = vadd.f32 %v3854, %v3987
        %3989 = vmatprep.mubr.f32.mxu0 0.0
        %3990 = vmatmul.mubr.f32.gmra.mrb[0].mxu0 %v3887
        %v3991 = vpop.f32.mrb[0].mxu0
        %v3992 = vadd.f32 %v3859, %v3991
        %v3993 = vpop.f32.mrb[0].mxu0
        %v3994 = vadd.f32 %v3859, %v3993
        %3995 = vmatprep.mubr.f32.mxu0 0.0
        %3996 = vmatmul.mubr.f32.gmra.mrb[0].mxu0 %v3890
        %v3997 = vpop.f32.mrb[0].mxu0
        %v3998 = vadd.f32 %v3864, %v3997
        %v3999 = vpop.f32.mrb[0].mxu0
        %v4000 = vadd.f32 %v3864, %v3999
        %4001 = vmatprep.mubr.f32.mxu0 0.0
        %4002 = vmatmul.mubr.f32.gmra.mrb[0].mxu0 %v3893
        %v4003 = vpop.f32.mrb[0].mxu0
        %v4004 = vadd.f32 %v3869, %v4003
        %v4005 = vpop.f32.mrb[0].mxu0
        %v4006 = vadd.f32 %v3869, %v4005
        %4007 = vdwg.mxu0
        %v4008 = vmul.f32 %v3962, %v3962
        %v4009 = vmul.f32 %v3964, %v3964
        %v4010 = vmul.f32 %v3968, %v3968
        %v4011 = vmul.f32 %v3970, %v3970
        %v4012 = vmul.f32 %v3974, %v3974
        %v4013 = vmul.f32 %v3976, %v3976
        %v4014 = vmul.f32 %v3980, %v3980
        %v4015 = vmul.f32 %v3982, %v3982
        %v4016 = vmul.f32 %v3986, %v3986
        %v4017 = vmul.f32 %v3988, %v3988
        %v4018 = vmul.f32 %v3992, %v3992
        %v4019 = vmul.f32 %v3994, %v3994
        %v4020 = vmul.f32 %v3998, %v3998
        %v4021 = vmul.f32 %v4000, %v4000
        %v4022 = vmul.f32 %v4004, %v4004
        %v4023 = vmul.f32 %v4006, %v4006
        %v4024 = vmul.f32 %v3962, %v4008
        %v4025 = vmul.f32 %v3964, %v4009
        %v4026 = vmul.f32 %v3968, %v4010
        %v4027 = vmul.f32 %v3970, %v4011
        %v4028 = vmul.f32 %v3974, %v4012
        %v4029 = vmul.f32 %v3976, %v4013
        %v4030 = vmul.f32 %v3980, %v4014
        %v4031 = vmul.f32 %v3982, %v4015
        %v4032 = vmul.f32 %v3986, %v4016
        %v4033 = vmul.f32 %v3988, %v4017
        %v4034 = vmul.f32 %v3992, %v4018
        %v4035 = vmul.f32 %v3994, %v4019
        %v4036 = vmul.f32 %v3998, %v4020
        %v4037 = vmul.f32 %v4000, %v4021
        %v4038 = vmul.f32 %v4004, %v4022
        %v4039 = vmul.f32 %v4006, %v4023
        %v4040 = vmul.f32 %v4024, 0.044715
        %v4041 = vmul.f32 %v4025, 0.044715
        %v4042 = vmul.f32 %v4026, 0.044715
        %v4043 = vmul.f32 %v4027, 0.044715
        %v4044 = vmul.f32 %v4028, 0.044715
        %v4045 = vmul.f32 %v4029, 0.044715
        %v4046 = vmul.f32 %v4030, 0.044715
        %v4047 = vmul.f32 %v4031, 0.044715
        %v4048 = vmul.f32 %v4032, 0.044715
        %v4049 = vmul.f32 %v4033, 0.044715
        %v4050 = vmul.f32 %v4034, 0.044715
        %v4051 = vmul.f32 %v4035, 0.044715
        %v4052 = vmul.f32 %v4036, 0.044715
        %v4053 = vmul.f32 %v4037, 0.044715
        %v4054 = vmul.f32 %v4038, 0.044715
        %v4055 = vmul.f32 %v4039, 0.044715
        %v4056 = vadd.f32 %v3962, %v4040
        %v4057 = vadd.f32 %v3964, %v4041
        %v4058 = vadd.f32 %v3968, %v4042
        %v4059 = vadd.f32 %v3970, %v4043
        %v4060 = vadd.f32 %v3974, %v4044
        %v4061 = vadd.f32 %v3976, %v4045
        %v4062 = vadd.f32 %v3980, %v4046
        %v4063 = vadd.f32 %v3982, %v4047
        %v4064 = vadd.f32 %v3986, %v4048
        %v4065 = vadd.f32 %v3988, %v4049
        %v4066 = vadd.f32 %v3992, %v4050
        %v4067 = vadd.f32 %v3994, %v4051
        %v4068 = vadd.f32 %v3998, %v4052
        %v4069 = vadd.f32 %v4000, %v4053
        %v4070 = vadd.f32 %v4004, %v4054
        %v4071 = vadd.f32 %v4006, %v4055
        %v4072 = vmul.f32 %v4056, 0.7978846
        %v4073 = vmul.f32 %v4057, 0.7978846
        %v4074 = vmul.f32 %v4058, 0.7978846
        %v4075 = vmul.f32 %v4059, 0.7978846
        %v4076 = vmul.f32 %v4060, 0.7978846
        %v4077 = vmul.f32 %v4061, 0.7978846
        %v4078 = vmul.f32 %v4062, 0.7978846
        %v4079 = vmul.f32 %v4063, 0.7978846
        %v4080 = vmul.f32 %v4064, 0.7978846
        %v4081 = vmul.f32 %v4065, 0.7978846
        %v4082 = vmul.f32 %v4066, 0.7978846
        %v4083 = vmul.f32 %v4067, 0.7978846
        %v4084 = vmul.f32 %v4068, 0.7978846
        %v4085 = vmul.f32 %v4069, 0.7978846
        %v4086 = vmul.f32 %v4070, 0.7978846
        %v4087 = vmul.f32 %v4071, 0.7978846
        %v4088 = vtanh.pop %v4072
        %v4089 = vtanh.pop %v4073
        %v4090 = vtanh.pop %v4074
        %v4091 = vtanh.pop %v4075
        %v4092 = vtanh.pop %v4076
        %v4093 = vtanh.pop %v4077
        %v4094 = vtanh.pop %v4078
        %v4095 = vtanh.pop %v4079
        %v4096 = vtanh.pop %v4080
        %v4097 = vtanh.pop %v4081
        %v4098 = vtanh.pop %v4082
        %v4099 = vtanh.pop %v4083
        %v4100 = vtanh.pop %v4084
        %v4101 = vtanh.pop %v4085
        %v4102 = vtanh.pop %v4086
        %v4103 = vtanh.pop %v4087
        %v4104 = vadd.f32 %v4088, 1.0
        %v4105 = vadd.f32 %v4089, 1.0
        %v4106 = vadd.f32 %v4090, 1.0
        %v4107 = vadd.f32 %v4091, 1.0
        %v4108 = vadd.f32 %v4092, 1.0
        %v4109 = vadd.f32 %v4093, 1.0
        %v4110 = vadd.f32 %v4094, 1.0
        %v4111 = vadd.f32 %v4095, 1.0
        %v4112 = vadd.f32 %v4096, 1.0
        %v4113 = vadd.f32 %v4097, 1.0
        %v4114 = vadd.f32 %v4098, 1.0
        %v4115 = vadd.f32 %v4099, 1.0
        %v4116 = vadd.f32 %v4100, 1.0
        %v4117 = vadd.f32 %v4101, 1.0
        %v4118 = vadd.f32 %v4102, 1.0
        %v4119 = vadd.f32 %v4103, 1.0
        %v4120 = vmul.f32 %v4104, 0.5
        %v4121 = vmul.f32 %v4105, 0.5
        %v4122 = vmul.f32 %v4106, 0.5
        %v4123 = vmul.f32 %v4107, 0.5
        %v4124 = vmul.f32 %v4108, 0.5
        %v4125 = vmul.f32 %v4109, 0.5
        %v4126 = vmul.f32 %v4110, 0.5
        %v4127 = vmul.f32 %v4111, 0.5
        %v4128 = vmul.f32 %v4112, 0.5
        %v4129 = vmul.f32 %v4113, 0.5
        %v4130 = vmul.f32 %v4114, 0.5
        %v4131 = vmul.f32 %v4115, 0.5
        %v4132 = vmul.f32 %v4116, 0.5
        %v4133 = vmul.f32 %v4117, 0.5
        %v4134 = vmul.f32 %v4118, 0.5
        %v4135 = vmul.f32 %v4119, 0.5
        %v4136 = vmul.f32 %v3962, %v4120
        %v4137 = vmul.f32 %v3964, %v4121
        %v4138 = vmul.f32 %v3968, %v4122
        %v4139 = vmul.f32 %v3970, %v4123
        %v4140 = vmul.f32 %v3974, %v4124
        %v4141 = vmul.f32 %v3976, %v4125
        %v4142 = vmul.f32 %v3980, %v4126
        %v4143 = vmul.f32 %v3982, %v4127
        %v4144 = vmul.f32 %v3986, %v4128
        %v4145 = vmul.f32 %v3988, %v4129
        %v4146 = vmul.f32 %v3992, %v4130
        %v4147 = vmul.f32 %v3994, %v4131
        %v4148 = vmul.f32 %v3998, %v4132
        %v4149 = vmul.f32 %v4000, %v4133
        %v4150 = vmul.f32 %v4004, %v4134
        %v4151 = vmul.f32 %v4006, %v4135
        %v4152 = vld [vmem:[%s33] sm:$0xff]
        %v4153 = vld [vmem:[%s33 + $0x8] sm:$0xff]
        %v4154 = vld [vmem:[%s35] sm:$0xff]
        %v4155 = vld [vmem:[%s35 + $0x8] sm:$0xff]
        %4157 = vset.pattern.permute.xlu0 0
        %4158 = vperm.xlu0 %4157, %v4154
        %v4159 = vpop.permute.xlu0 %4158
        %4162 = vset.pattern.permute.xlu0 0
        %4163 = vperm.xlu0 %4162, %v4155
        %v4164 = vpop.permute.xlu0 %4163
        %vm4166 = vcmask 523264
        %v4168 = vsel %vm4166, %v4152, 0
        %v4171 = vsel %vm4166, %v4153, 0
        %4173 = vmatprep.subr.mxu0 %v4137
        %4174 = vmatpush1.msra.mxu0 %v4136
        %4175 = vmatprep.subr.mxu0 %v4139
        %4176 = vmatpush1.msra.mxu0 %v4138
        %4177 = vmatprep.subr.mxu0 %v4141
        %4178 = vmatpush1.msra.mxu0 %v4140
        %4179 = vmatprep.subr.mxu0 %v4143
        %4180 = vmatpush1.msra.mxu0 %v4142
        %4181 = vmatprep.subr.mxu0 %v4145
        %4182 = vmatpush1.msra.mxu0 %v4144
        %4183 = vmatprep.subr.mxu0 %v4147
        %4184 = vmatpush1.msra.mxu0 %v4146
        %4185 = vmatprep.subr.mxu0 %v4149
        %4186 = vmatpush1.msra.mxu0 %v4148
        %4187 = vmatprep.subr.mxu0 %v4151
        %4188 = vmatpush1.msra.mxu0 %v4150
        %4189 = vmatprep.subr.mxu0 0.0
        %4190 = vmatpush1.msra.mxu0 0.0
        %4191 = vmatprep.subr.mxu0 0.0
        %4192 = vmatpush1.msra.mxu0 0.0
        %4193 = vmatprep.subr.mxu0 0.0
        %4194 = vmatpush1.msra.mxu0 0.0
        %4195 = vmatprep.subr.mxu0 0.0
        %4196 = vmatpush1.msra.mxu0 0.0
        %4197 = vmatprep.subr.mxu0 0.0
        %4198 = vmatpush1.msra.mxu0 0.0
        %4199 = vmatprep.subr.mxu0 0.0
        %4200 = vmatpush1.msra.mxu0 0.0
        %4201 = vmatprep.subr.mxu0 0.0
        %4202 = vmatpush1.msra.mxu0 0.0
        %4203 = vmatprep.subr.mxu0 0.0
        %4204 = vmatpush1.msra.mxu0 0.0
        %4205 = vmatprep.subr.mxu0 0.0
        %4206 = vmatpush1.msra.mxu0 0.0
        %4207 = vmatprep.subr.mxu0 0.0
        %4208 = vmatpush1.msra.mxu0 0.0
        %4209 = vmatprep.subr.mxu0 0.0
        %4210 = vmatpush1.msra.mxu0 0.0
        %4211 = vmatprep.subr.mxu0 0.0
        %4212 = vmatpush1.msra.mxu0 0.0
        %4213 = vmatprep.subr.mxu0 0.0
        %4214 = vmatpush1.msra.mxu0 0.0
        %4215 = vmatprep.subr.mxu0 0.0
        %4216 = vmatpush1.msra.mxu0 0.0
        %4217 = vmatprep.subr.mxu0 0.0
        %4218 = vmatpush1.msra.mxu0 0.0
        %4219 = vmatprep.subr.mxu0 0.0
        %4220 = vmatpush1.msra.mxu0 0.0
        %4221 = vmatprep.subr.mxu0 0.0
        %4222 = vmatpush1.msra.mxu0 0.0
        %4223 = vmatprep.subr.mxu0 0.0
        %4224 = vmatpush1.msra.mxu0 0.0
        %4225 = vmatprep.subr.mxu0 0.0
        %4226 = vmatpush1.msra.mxu0 0.0
        %4227 = vmatprep.subr.mxu0 0.0
        %4228 = vmatpush1.msra.mxu0 0.0
        %4229 = vmatprep.subr.mxu0 0.0
        %4230 = vmatpush1.msra.mxu0 0.0
        %4231 = vmatprep.subr.mxu0 0.0
        %4232 = vmatpush1.msra.mxu0 0.0
        %4233 = vmatprep.subr.mxu0 0.0
        %4234 = vmatpush1.msra.mxu0 0.0
        %4235 = vmatprep.subr.mxu0 0.0
        %4236 = vmatpush1.msra.mxu0 0.0
        %4237 = vmatprep.mubr.f32.mxu0 0.0
        %4238 = vmatmul.mubr.f32.gmra.mrb[0].mxu0 %v4168
        %v4239 = vpop.f32.mrb[0].mxu0
        %v4240 = vadd.f32 %v4159, %v4239
        %v4241 = vpop.f32.mrb[0].mxu0
        %v4242 = vadd.f32 %v4159, %v4241
        %4243 = vmatprep.mubr.f32.mxu0 0.0
        %4244 = vmatmul.mubr.f32.gmra.mrb[0].mxu0 %v4171
        %v4245 = vpop.f32.mrb[0].mxu0
        %v4246 = vadd.f32 %v4164, %v4245
        %v4247 = vpop.f32.mrb[0].mxu0
        %v4248 = vadd.f32 %v4164, %v4247
        %4249 = vdwg.mxu0
        %v4250 = vadd.f32 %v3759, %v4240
        %v4251 = vadd.f32 %v3760, %v4242
        %v4252 = vadd.f32 %v3761, %v4246
        %v4253 = vadd.f32 %v3762, %v4248
        %v4254 = vld [vmem:[%s37] sm:$0xff]
        %v4255 = vld [vmem:[%s37 + $0x8] sm:$0xff]
        %v4256 = vld [vmem:[%s37 + $0x10] sm:$0xff]
        %v4257 = vld [vmem:[%s37 + $0x18] sm:$0xff]
        %v4258 = vld [vmem:[%s37 + $0x20] sm:$0xff]
        %v4259 = vld [vmem:[%s37 + $0x28] sm:$0xff]
        %v4260 = vld [vmem:[%s37 + $0x30] sm:$0xff]
        %v4261 = vld [vmem:[%s37 + $0x38] sm:$0xff]
        %v4262 = vld [vmem:[%s37 + $0x40] sm:$0xff]
        %v4263 = vld [vmem:[%s37 + $0x48] sm:$0xff]
        %v4264 = vld [vmem:[%s37 + $0x50] sm:$0xff]
        %v4265 = vld [vmem:[%s37 + $0x58] sm:$0xff]
        %v4266 = vld [vmem:[%s37 + $0x60] sm:$0xff]
        %v4267 = vld [vmem:[%s37 + $0x68] sm:$0xff]
        %v4268 = vld [vmem:[%s37 + $0x70] sm:$0xff]
        %v4269 = vld [vmem:[%s37 + $0x78] sm:$0xff]
        %v4270 = vld [vmem:[%s37 + $0x80] sm:$0xff]
        %v4271 = vld [vmem:[%s37 + $0x88] sm:$0xff]
        %v4272 = vld [vmem:[%s37 + $0x90] sm:$0xff]
        %v4273 = vld [vmem:[%s37 + $0x98] sm:$0xff]
        %v4274 = vld [vmem:[%s37 + $0xa0] sm:$0xff]
        %v4275 = vld [vmem:[%s37 + $0xa8] sm:$0xff]
        %v4276 = vld [vmem:[%s37 + $0xb0] sm:$0xff]
        %v4277 = vld [vmem:[%s37 + $0xb8] sm:$0xff]
        %v4278 = vld [vmem:[%s37 + $0xc0] sm:$0xf]
        %v4280 = vsel %vm1353, %v4251, 0
        %v4283 = vsel %vm1353, %v4253, 0
        %vm4285 = vcmask 1043456
        %v4287 = vsel %vm4285, %v4278, 0
        %4289 = vmatprep.subr.mxu0 0.0
        %4290 = vmatpush1.msra.mxu0 %v4254
        %4291 = vmatprep.subr.mxu0 0.0
        %4292 = vmatpush1.msra.mxu0 %v4255
        %4293 = vmatprep.subr.mxu0 0.0
        %4294 = vmatpush1.msra.mxu0 %v4256
        %4295 = vmatprep.subr.mxu0 0.0
        %4296 = vmatpush1.msra.mxu0 %v4257
        %4297 = vmatprep.subr.mxu0 0.0
        %4298 = vmatpush1.msra.mxu0 %v4258
        %4299 = vmatprep.subr.mxu0 0.0
        %4300 = vmatpush1.msra.mxu0 %v4259
        %4301 = vmatprep.subr.mxu0 0.0
        %4302 = vmatpush1.msra.mxu0 %v4260
        %4303 = vmatprep.subr.mxu0 0.0
        %4304 = vmatpush1.msra.mxu0 %v4261
        %4305 = vmatprep.subr.mxu0 0.0
        %4306 = vmatpush1.msra.mxu0 %v4262
        %4307 = vmatprep.subr.mxu0 0.0
        %4308 = vmatpush1.msra.mxu0 %v4263
        %4309 = vmatprep.subr.mxu0 0.0
        %4310 = vmatpush1.msra.mxu0 %v4264
        %4311 = vmatprep.subr.mxu0 0.0
        %4312 = vmatpush1.msra.mxu0 %v4265
        %4313 = vmatprep.subr.mxu0 0.0
        %4314 = vmatpush1.msra.mxu0 %v4266
        %4315 = vmatprep.subr.mxu0 0.0
        %4316 = vmatpush1.msra.mxu0 %v4267
        %4317 = vmatprep.subr.mxu0 0.0
        %4318 = vmatpush1.msra.mxu0 %v4268
        %4319 = vmatprep.subr.mxu0 0.0
        %4320 = vmatpush1.msra.mxu0 %v4269
        %4321 = vmatprep.subr.mxu0 0.0
        %4322 = vmatpush1.msra.mxu0 %v4270
        %4323 = vmatprep.subr.mxu0 0.0
        %4324 = vmatpush1.msra.mxu0 %v4271
        %4325 = vmatprep.subr.mxu0 0.0
        %4326 = vmatpush1.msra.mxu0 %v4272
        %4327 = vmatprep.subr.mxu0 0.0
        %4328 = vmatpush1.msra.mxu0 %v4273
        %4329 = vmatprep.subr.mxu0 0.0
        %4330 = vmatpush1.msra.mxu0 %v4274
        %4331 = vmatprep.subr.mxu0 0.0
        %4332 = vmatpush1.msra.mxu0 %v4275
        %4333 = vmatprep.subr.mxu0 0.0
        %4334 = vmatpush1.msra.mxu0 %v4276
        %4335 = vmatprep.subr.mxu0 0.0
        %4336 = vmatpush1.msra.mxu0 %v4277
        %4337 = vmatprep.subr.mxu0 0.0
        %4338 = vmatpush1.msra.mxu0 %v4287
        %4339 = vmatprep.subr.mxu0 0.0
        %4340 = vmatpush1.msra.mxu0 0.0
        %4341 = vmatprep.subr.mxu0 0.0
        %4342 = vmatpush1.msra.mxu0 0.0
        %4343 = vmatprep.subr.mxu0 0.0
        %4344 = vmatpush1.msra.mxu0 0.0
        %4345 = vmatprep.subr.mxu0 0.0
        %4346 = vmatpush1.msra.mxu0 0.0
        %4347 = vmatprep.subr.mxu0 0.0
        %4348 = vmatpush1.msra.mxu0 0.0
        %4349 = vmatprep.subr.mxu0 0.0
        %4350 = vmatpush1.msra.mxu0 0.0
        %4351 = vmatprep.subr.mxu0 0.0
        %4352 = vmatpush1.msra.mxu0 0.0
        %4353 = vmatprep.mubr.f32.mxu0 %v4280
        %4354 = vmatmul.mubr.f32.gmra.mrb[0].mxu0 %v4250
        %v4355 = vpop.f32.mrb[0].mxu0
        %v4356 = vadd.f32 0.0, %v4355
        %v4357 = vpop.f32.mrb[0].mxu0
        %4358 = vmatprep.mubr.f32.mxu0 %v4283
        %4359 = vmatmul.mubr.f32.gmra.mrb[0].mxu0 %v4252
        %v4360 = vpop.f32.mrb[0].mxu0
        %v4361 = vadd.f32 0.0, %v4360
        %v4362 = vpop.f32.mrb[0].mxu0
        %4363 = vdwg.mxu0
        %v4364 = vld [vmem:[%s39] sm:$0xff]
        %v4365 = vld [vmem:[%s39 + $0x8] sm:$0xff]
        %v4366 = vld [vmem:[%s39 + $0x10] sm:$0xff]
        %v4367 = vld [vmem:[%s39 + $0x18] sm:$0xff]
        %s4368 = scalar_lea.vmem %s37, 200
        %v4369 = vld [vmem:[%s4368] sm:$0xff]
        %v4370 = vld [vmem:[%s4368 + $0x8] sm:$0xff]
        %v4371 = vld [vmem:[%s4368 + $0x10] sm:$0xff]
        %v4372 = vld [vmem:[%s4368 + $0x18] sm:$0xff]
        %v4373 = vld [vmem:[%s4368 + $0x20] sm:$0xff]
        %v4374 = vld [vmem:[%s4368 + $0x28] sm:$0xff]
        %v4375 = vld [vmem:[%s4368 + $0x30] sm:$0xff]
        %v4376 = vld [vmem:[%s4368 + $0x38] sm:$0xff]
        %v4377 = vld [vmem:[%s4368 + $0x40] sm:$0xff]
        %v4378 = vld [vmem:[%s4368 + $0x48] sm:$0xff]
        %v4379 = vld [vmem:[%s4368 + $0x50] sm:$0xff]
        %v4380 = vld [vmem:[%s4368 + $0x58] sm:$0xff]
        %v4381 = vld [vmem:[%s4368 + $0x60] sm:$0xff]
        %v4382 = vld [vmem:[%s4368 + $0x68] sm:$0xff]
        %v4383 = vld [vmem:[%s4368 + $0x70] sm:$0xff]
        %v4384 = vld [vmem:[%s4368 + $0x78] sm:$0xff]
        %v4385 = vld [vmem:[%s4368 + $0x80] sm:$0xff]
        %v4386 = vld [vmem:[%s4368 + $0x88] sm:$0xff]
        %v4387 = vld [vmem:[%s4368 + $0x90] sm:$0xff]
        %v4388 = vld [vmem:[%s4368 + $0x98] sm:$0xff]
        %v4389 = vld [vmem:[%s4368 + $0xa0] sm:$0xff]
        %v4390 = vld [vmem:[%s4368 + $0xa8] sm:$0xff]
        %v4391 = vld [vmem:[%s4368 + $0xb0] sm:$0xff]
        %v4392 = vld [vmem:[%s4368 + $0xb8] sm:$0xff]
        %v4393 = vld [vmem:[%s4368 + $0xc0] sm:$0xf]
        %v4395 = vsel %vm4285, %v4393, 0
        %4397 = vmatprep.subr.mxu0 0.0
        %4398 = vmatpush1.msra.mxu0 %v4369
        %4399 = vmatprep.subr.mxu0 0.0
        %4400 = vmatpush1.msra.mxu0 %v4370
        %4401 = vmatprep.subr.mxu0 0.0
        %4402 = vmatpush1.msra.mxu0 %v4371
        %4403 = vmatprep.subr.mxu0 0.0
        %4404 = vmatpush1.msra.mxu0 %v4372
        %4405 = vmatprep.subr.mxu0 0.0
        %4406 = vmatpush1.msra.mxu0 %v4373
        %4407 = vmatprep.subr.mxu0 0.0
        %4408 = vmatpush1.msra.mxu0 %v4374
        %4409 = vmatprep.subr.mxu0 0.0
        %4410 = vmatpush1.msra.mxu0 %v4375
        %4411 = vmatprep.subr.mxu0 0.0
        %4412 = vmatpush1.msra.mxu0 %v4376
        %4413 = vmatprep.subr.mxu0 0.0
        %4414 = vmatpush1.msra.mxu0 %v4377
        %4415 = vmatprep.subr.mxu0 0.0
        %4416 = vmatpush1.msra.mxu0 %v4378
        %4417 = vmatprep.subr.mxu0 0.0
        %4418 = vmatpush1.msra.mxu0 %v4379
        %4419 = vmatprep.subr.mxu0 0.0
        %4420 = vmatpush1.msra.mxu0 %v4380
        %4421 = vmatprep.subr.mxu0 0.0
        %4422 = vmatpush1.msra.mxu0 %v4381
        %4423 = vmatprep.subr.mxu0 0.0
        %4424 = vmatpush1.msra.mxu0 %v4382
        %4425 = vmatprep.subr.mxu0 0.0
        %4426 = vmatpush1.msra.mxu0 %v4383
        %4427 = vmatprep.subr.mxu0 0.0
        %4428 = vmatpush1.msra.mxu0 %v4384
        %4429 = vmatprep.subr.mxu0 0.0
        %4430 = vmatpush1.msra.mxu0 %v4385
        %4431 = vmatprep.subr.mxu0 0.0
        %4432 = vmatpush1.msra.mxu0 %v4386
        %4433 = vmatprep.subr.mxu0 0.0
        %4434 = vmatpush1.msra.mxu0 %v4387
        %4435 = vmatprep.subr.mxu0 0.0
        %4436 = vmatpush1.msra.mxu0 %v4388
        %4437 = vmatprep.subr.mxu0 0.0
        %4438 = vmatpush1.msra.mxu0 %v4389
        %4439 = vmatprep.subr.mxu0 0.0
        %4440 = vmatpush1.msra.mxu0 %v4390
        %4441 = vmatprep.subr.mxu0 0.0
        %4442 = vmatpush1.msra.mxu0 %v4391
        %4443 = vmatprep.subr.mxu0 0.0
        %4444 = vmatpush1.msra.mxu0 %v4392
        %4445 = vmatprep.subr.mxu0 0.0
        %4446 = vmatpush1.msra.mxu0 %v4395
        %4447 = vmatprep.subr.mxu0 0.0
        %4448 = vmatpush1.msra.mxu0 0.0
        %4449 = vmatprep.subr.mxu0 0.0
        %4450 = vmatpush1.msra.mxu0 0.0
        %4451 = vmatprep.subr.mxu0 0.0
        %4452 = vmatpush1.msra.mxu0 0.0
        %4453 = vmatprep.subr.mxu0 0.0
        %4454 = vmatpush1.msra.mxu0 0.0
        %4455 = vmatprep.subr.mxu0 0.0
        %4456 = vmatpush1.msra.mxu0 0.0
        %4457 = vmatprep.subr.mxu0 0.0
        %4458 = vmatpush1.msra.mxu0 0.0
        %4459 = vmatprep.subr.mxu0 0.0
        %4460 = vmatpush1.msra.mxu0 0.0
        %4461 = vmatprep.mubr.f32.mxu0 %v4280
        %4462 = vmatmul.mubr.f32.gmra.mrb[0].mxu0 %v4250
        %v4463 = vpop.f32.mrb[0].mxu0
        %v4464 = vadd.f32 0.0, %v4463
        %v4465 = vpop.f32.mrb[0].mxu0
        %4466 = vmatprep.mubr.f32.mxu0 %v4283
        %4467 = vmatmul.mubr.f32.gmra.mrb[0].mxu0 %v4252
        %v4468 = vpop.f32.mrb[0].mxu0
        %v4469 = vadd.f32 0.0, %v4468
        %v4470 = vpop.f32.mrb[0].mxu0
        %4471 = vdwg.mxu0
        %s4472 = scalar_lea.vmem %s39, 32
        %v4473 = vld [vmem:[%s4472] sm:$0xff]
        %v4474 = vld [vmem:[%s4472 + $0x8] sm:$0xff]
        %v4475 = vld [vmem:[%s4472 + $0x10] sm:$0xff]
        %v4476 = vld [vmem:[%s4472 + $0x18] sm:$0xff]
        %v4478 = vsel %vm1515, %v4473, 0
        %v4481 = vsel %vm1515, %v4474, 0
        %v4484 = vsel %vm1515, %v4475, 0
        %v4487 = vsel %vm1515, %v4476, 0
        %4489 = vmatprep.subr.mxu0 0.0
        %4490 = vmatpush1.msra.mxu0 %v4464
        %4491 = vmatprep.subr.mxu0 0.0
        %4492 = vmatpush1.msra.mxu0 %v4469
        %4493 = vmatprep.subr.mxu0 0.0
        %4494 = vmatpush1.msra.mxu0 0.0
        %4495 = vmatprep.subr.mxu0 0.0
        %4496 = vmatpush1.msra.mxu0 0.0
        %4497 = vmatprep.subr.mxu0 0.0
        %4498 = vmatpush1.msra.mxu0 0.0
        %4499 = vmatprep.subr.mxu0 0.0
        %4500 = vmatpush1.msra.mxu0 0.0
        %4501 = vmatprep.subr.mxu0 0.0
        %4502 = vmatpush1.msra.mxu0 0.0
        %4503 = vmatprep.subr.mxu0 0.0
        %4504 = vmatpush1.msra.mxu0 0.0
        %4505 = vmatprep.subr.mxu0 0.0
        %4506 = vmatpush1.msra.mxu0 0.0
        %4507 = vmatprep.subr.mxu0 0.0
        %4508 = vmatpush1.msra.mxu0 0.0
        %4509 = vmatprep.subr.mxu0 0.0
        %4510 = vmatpush1.msra.mxu0 0.0
        %4511 = vmatprep.subr.mxu0 0.0
        %4512 = vmatpush1.msra.mxu0 0.0
        %4513 = vmatprep.subr.mxu0 0.0
        %4514 = vmatpush1.msra.mxu0 0.0
        %4515 = vmatprep.subr.mxu0 0.0
        %4516 = vmatpush1.msra.mxu0 0.0
        %4517 = vmatprep.subr.mxu0 0.0
        %4518 = vmatpush1.msra.mxu0 0.0
        %4519 = vmatprep.subr.mxu0 0.0
        %4520 = vmatpush1.msra.mxu0 0.0
        %4521 = vmatprep.subr.mxu0 0.0
        %4522 = vmatpush1.msra.mxu0 0.0
        %4523 = vmatprep.subr.mxu0 0.0
        %4524 = vmatpush1.msra.mxu0 0.0
        %4525 = vmatprep.subr.mxu0 0.0
        %4526 = vmatpush1.msra.mxu0 0.0
        %4527 = vmatprep.subr.mxu0 0.0
        %4528 = vmatpush1.msra.mxu0 0.0
        %4529 = vmatprep.subr.mxu0 0.0
        %4530 = vmatpush1.msra.mxu0 0.0
        %4531 = vmatprep.subr.mxu0 0.0
        %4532 = vmatpush1.msra.mxu0 0.0
        %4533 = vmatprep.subr.mxu0 0.0
        %4534 = vmatpush1.msra.mxu0 0.0
        %4535 = vmatprep.subr.mxu0 0.0
        %4536 = vmatpush1.msra.mxu0 0.0
        %4537 = vmatprep.subr.mxu0 0.0
        %4538 = vmatpush1.msra.mxu0 0.0
        %4539 = vmatprep.subr.mxu0 0.0
        %4540 = vmatpush1.msra.mxu0 0.0
        %4541 = vmatprep.subr.mxu0 0.0
        %4542 = vmatpush1.msra.mxu0 0.0
        %4543 = vmatprep.subr.mxu0 0.0
        %4544 = vmatpush1.msra.mxu0 0.0
        %4545 = vmatprep.subr.mxu0 0.0
        %4546 = vmatpush1.msra.mxu0 0.0
        %4547 = vmatprep.subr.mxu0 0.0
        %4548 = vmatpush1.msra.mxu0 0.0
        %4549 = vmatprep.subr.mxu0 0.0
        %4550 = vmatpush1.msra.mxu0 0.0
        %4551 = vmatprep.subr.mxu0 0.0
        %4552 = vmatpush1.msra.mxu0 0.0
        %4553 = vmatprep.mubr.f32.mxu0 0.0
        %4554 = vmatmul.mubr.f32.gmra.mrb[0].mxu0 %v4478
        %v4555 = vpop.f32.mrb[0].mxu0
        %v4556 = vadd.f32 0.0, %v4555
        %v4557 = vpop.f32.mrb[0].mxu0
        %4558 = vmatprep.mubr.f32.mxu0 0.0
        %4559 = vmatmul.mubr.f32.gmra.mrb[0].mxu0 %v4481
        %v4560 = vpop.f32.mrb[0].mxu0
        %v4561 = vadd.f32 0.0, %v4560
        %v4562 = vpop.f32.mrb[0].mxu0
        %4563 = vmatprep.mubr.f32.mxu0 0.0
        %4564 = vmatmul.mubr.f32.gmra.mrb[0].mxu0 %v4484
        %v4565 = vpop.f32.mrb[0].mxu0
        %v4566 = vadd.f32 0.0, %v4565
        %v4567 = vpop.f32.mrb[0].mxu0
        %4568 = vmatprep.mubr.f32.mxu0 0.0
        %4569 = vmatmul.mubr.f32.gmra.mrb[0].mxu0 %v4487
        %v4570 = vpop.f32.mrb[0].mxu0
        %v4571 = vadd.f32 0.0, %v4570
        %v4572 = vpop.f32.mrb[0].mxu0
        %4573 = vdwg.mxu0
        %v4575 = vsel %vm1515, %v4364, 0
        %v4578 = vsel %vm1515, %v4365, 0
        %v4581 = vsel %vm1515, %v4366, 0
        %v4584 = vsel %vm1515, %v4367, 0
        %4586 = vmatprep.subr.mxu0 0.0
        %4587 = vmatpush1.msra.mxu0 %v4356
        %4588 = vmatprep.subr.mxu0 0.0
        %4589 = vmatpush1.msra.mxu0 %v4361
        %4590 = vmatprep.subr.mxu0 0.0
        %4591 = vmatpush1.msra.mxu0 0.0
        %4592 = vmatprep.subr.mxu0 0.0
        %4593 = vmatpush1.msra.mxu0 0.0
        %4594 = vmatprep.subr.mxu0 0.0
        %4595 = vmatpush1.msra.mxu0 0.0
        %4596 = vmatprep.subr.mxu0 0.0
        %4597 = vmatpush1.msra.mxu0 0.0
        %4598 = vmatprep.subr.mxu0 0.0
        %4599 = vmatpush1.msra.mxu0 0.0
        %4600 = vmatprep.subr.mxu0 0.0
        %4601 = vmatpush1.msra.mxu0 0.0
        %4602 = vmatprep.subr.mxu0 0.0
        %4603 = vmatpush1.msra.mxu0 0.0
        %4604 = vmatprep.subr.mxu0 0.0
        %4605 = vmatpush1.msra.mxu0 0.0
        %4606 = vmatprep.subr.mxu0 0.0
        %4607 = vmatpush1.msra.mxu0 0.0
        %4608 = vmatprep.subr.mxu0 0.0
        %4609 = vmatpush1.msra.mxu0 0.0
        %4610 = vmatprep.subr.mxu0 0.0
        %4611 = vmatpush1.msra.mxu0 0.0
        %4612 = vmatprep.subr.mxu0 0.0
        %4613 = vmatpush1.msra.mxu0 0.0
        %4614 = vmatprep.subr.mxu0 0.0
        %4615 = vmatpush1.msra.mxu0 0.0
        %4616 = vmatprep.subr.mxu0 0.0
        %4617 = vmatpush1.msra.mxu0 0.0
        %4618 = vmatprep.subr.mxu0 0.0
        %4619 = vmatpush1.msra.mxu0 0.0
        %4620 = vmatprep.subr.mxu0 0.0
        %4621 = vmatpush1.msra.mxu0 0.0
        %4622 = vmatprep.subr.mxu0 0.0
        %4623 = vmatpush1.msra.mxu0 0.0
        %4624 = vmatprep.subr.mxu0 0.0
        %4625 = vmatpush1.msra.mxu0 0.0
        %4626 = vmatprep.subr.mxu0 0.0
        %4627 = vmatpush1.msra.mxu0 0.0
        %4628 = vmatprep.subr.mxu0 0.0
        %4629 = vmatpush1.msra.mxu0 0.0
        %4630 = vmatprep.subr.mxu0 0.0
        %4631 = vmatpush1.msra.mxu0 0.0
        %4632 = vmatprep.subr.mxu0 0.0
        %4633 = vmatpush1.msra.mxu0 0.0
        %4634 = vmatprep.subr.mxu0 0.0
        %4635 = vmatpush1.msra.mxu0 0.0
        %4636 = vmatprep.subr.mxu0 0.0
        %4637 = vmatpush1.msra.mxu0 0.0
        %4638 = vmatprep.subr.mxu0 0.0
        %4639 = vmatpush1.msra.mxu0 0.0
        %4640 = vmatprep.subr.mxu0 0.0
        %4641 = vmatpush1.msra.mxu0 0.0
        %4642 = vmatprep.subr.mxu0 0.0
        %4643 = vmatpush1.msra.mxu0 0.0
        %4644 = vmatprep.subr.mxu0 0.0
        %4645 = vmatpush1.msra.mxu0 0.0
        %4646 = vmatprep.subr.mxu0 0.0
        %4647 = vmatpush1.msra.mxu0 0.0
        %4648 = vmatprep.subr.mxu0 0.0
        %4649 = vmatpush1.msra.mxu0 0.0
        %4650 = vmatprep.mubr.f32.mxu0 0.0
        %4651 = vmatmul.mubr.f32.gmra.mrb[0].mxu0 %v4575
        %v4652 = vpop.f32.mrb[0].mxu0
        %v4653 = vadd.f32 %v4556, %v4652
        %v4654 = vpop.f32.mrb[0].mxu0
        %4655 = vmatprep.mubr.f32.mxu0 0.0
        %4656 = vmatmul.mubr.f32.gmra.mrb[0].mxu0 %v4578
        %v4657 = vpop.f32.mrb[0].mxu0
        %v4658 = vadd.f32 %v4561, %v4657
        %v4659 = vpop.f32.mrb[0].mxu0
        %4660 = vmatprep.mubr.f32.mxu0 0.0
        %4661 = vmatmul.mubr.f32.gmra.mrb[0].mxu0 %v4581
        %v4662 = vpop.f32.mrb[0].mxu0
        %v4663 = vadd.f32 %v4566, %v4662
        %v4664 = vpop.f32.mrb[0].mxu0
        %4665 = vmatprep.mubr.f32.mxu0 0.0
        %4666 = vmatmul.mubr.f32.gmra.mrb[0].mxu0 %v4584
        %v4667 = vpop.f32.mrb[0].mxu0
        %v4668 = vadd.f32 %v4571, %v4667
        %v4669 = vpop.f32.mrb[0].mxu0
        %4670 = vdwg.mxu0
        %s4671 = scalar_lea.vmem %s37, 400
        %v4672 = vld [vmem:[%s4671] sm:$0xff]
        %v4673 = vld [vmem:[%s4671 + $0x8] sm:$0xff]
        %v4674 = vld [vmem:[%s4671 + $0x10] sm:$0xff]
        %v4675 = vld [vmem:[%s4671 + $0x18] sm:$0xff]
        %v4676 = vld [vmem:[%s4671 + $0x20] sm:$0xff]
        %v4677 = vld [vmem:[%s4671 + $0x28] sm:$0xff]
        %v4678 = vld [vmem:[%s4671 + $0x30] sm:$0xff]
        %v4679 = vld [vmem:[%s4671 + $0x38] sm:$0xff]
        %v4680 = vld [vmem:[%s4671 + $0x40] sm:$0xff]
        %v4681 = vld [vmem:[%s4671 + $0x48] sm:$0xff]
        %v4682 = vld [vmem:[%s4671 + $0x50] sm:$0xff]
        %v4683 = vld [vmem:[%s4671 + $0x58] sm:$0xff]
        %v4684 = vld [vmem:[%s4671 + $0x60] sm:$0xff]
        %v4685 = vld [vmem:[%s4671 + $0x68] sm:$0xff]
        %v4686 = vld [vmem:[%s4671 + $0x70] sm:$0xff]
        %v4687 = vld [vmem:[%s4671 + $0x78] sm:$0xff]
        %v4688 = vld [vmem:[%s4671 + $0x80] sm:$0xff]
        %v4689 = vld [vmem:[%s4671 + $0x88] sm:$0xff]
        %v4690 = vld [vmem:[%s4671 + $0x90] sm:$0xff]
        %v4691 = vld [vmem:[%s4671 + $0x98] sm:$0xff]
        %v4692 = vld [vmem:[%s4671 + $0xa0] sm:$0xff]
        %v4693 = vld [vmem:[%s4671 + $0xa8] sm:$0xff]
        %v4694 = vld [vmem:[%s4671 + $0xb0] sm:$0xff]
        %v4695 = vld [vmem:[%s4671 + $0xb8] sm:$0xff]
        %v4696 = vld [vmem:[%s4671 + $0xc0] sm:$0xf]
        %v4698 = vsel %vm4285, %v4696, 0
        %4700 = vmatprep.subr.mxu0 0.0
        %4701 = vmatpush1.msra.mxu0 %v4672
        %4702 = vmatprep.subr.mxu0 0.0
        %4703 = vmatpush1.msra.mxu0 %v4673
        %4704 = vmatprep.subr.mxu0 0.0
        %4705 = vmatpush1.msra.mxu0 %v4674
        %4706 = vmatprep.subr.mxu0 0.0
        %4707 = vmatpush1.msra.mxu0 %v4675
        %4708 = vmatprep.subr.mxu0 0.0
        %4709 = vmatpush1.msra.mxu0 %v4676
        %4710 = vmatprep.subr.mxu0 0.0
        %4711 = vmatpush1.msra.mxu0 %v4677
        %4712 = vmatprep.subr.mxu0 0.0
        %4713 = vmatpush1.msra.mxu0 %v4678
        %4714 = vmatprep.subr.mxu0 0.0
        %4715 = vmatpush1.msra.mxu0 %v4679
        %4716 = vmatprep.subr.mxu0 0.0
        %4717 = vmatpush1.msra.mxu0 %v4680
        %4718 = vmatprep.subr.mxu0 0.0
        %4719 = vmatpush1.msra.mxu0 %v4681
        %4720 = vmatprep.subr.mxu0 0.0
        %4721 = vmatpush1.msra.mxu0 %v4682
        %4722 = vmatprep.subr.mxu0 0.0
        %4723 = vmatpush1.msra.mxu0 %v4683
        %4724 = vmatprep.subr.mxu0 0.0
        %4725 = vmatpush1.msra.mxu0 %v4684
        %4726 = vmatprep.subr.mxu0 0.0
        %4727 = vmatpush1.msra.mxu0 %v4685
        %4728 = vmatprep.subr.mxu0 0.0
        %4729 = vmatpush1.msra.mxu0 %v4686
        %4730 = vmatprep.subr.mxu0 0.0
        %4731 = vmatpush1.msra.mxu0 %v4687
        %4732 = vmatprep.subr.mxu0 0.0
        %4733 = vmatpush1.msra.mxu0 %v4688
        %4734 = vmatprep.subr.mxu0 0.0
        %4735 = vmatpush1.msra.mxu0 %v4689
        %4736 = vmatprep.subr.mxu0 0.0
        %4737 = vmatpush1.msra.mxu0 %v4690
        %4738 = vmatprep.subr.mxu0 0.0
        %4739 = vmatpush1.msra.mxu0 %v4691
        %4740 = vmatprep.subr.mxu0 0.0
        %4741 = vmatpush1.msra.mxu0 %v4692
        %4742 = vmatprep.subr.mxu0 0.0
        %4743 = vmatpush1.msra.mxu0 %v4693
        %4744 = vmatprep.subr.mxu0 0.0
        %4745 = vmatpush1.msra.mxu0 %v4694
        %4746 = vmatprep.subr.mxu0 0.0
        %4747 = vmatpush1.msra.mxu0 %v4695
        %4748 = vmatprep.subr.mxu0 0.0
        %4749 = vmatpush1.msra.mxu0 %v4698
        %4750 = vmatprep.subr.mxu0 0.0
        %4751 = vmatpush1.msra.mxu0 0.0
        %4752 = vmatprep.subr.mxu0 0.0
        %4753 = vmatpush1.msra.mxu0 0.0
        %4754 = vmatprep.subr.mxu0 0.0
        %4755 = vmatpush1.msra.mxu0 0.0
        %4756 = vmatprep.subr.mxu0 0.0
        %4757 = vmatpush1.msra.mxu0 0.0
        %4758 = vmatprep.subr.mxu0 0.0
        %4759 = vmatpush1.msra.mxu0 0.0
        %4760 = vmatprep.subr.mxu0 0.0
        %4761 = vmatpush1.msra.mxu0 0.0
        %4762 = vmatprep.subr.mxu0 0.0
        %4763 = vmatpush1.msra.mxu0 0.0
        %4764 = vmatprep.mubr.f32.mxu0 %v4280
        %4765 = vmatmul.mubr.f32.gmra.mrb[0].mxu0 %v4250
        %v4766 = vpop.f32.mrb[0].mxu0
        %v4767 = vadd.f32 0.0, %v4766
        %v4768 = vpop.f32.mrb[0].mxu0
        %4769 = vmatprep.mubr.f32.mxu0 %v4283
        %4770 = vmatmul.mubr.f32.gmra.mrb[0].mxu0 %v4252
        %v4771 = vpop.f32.mrb[0].mxu0
        %v4772 = vadd.f32 0.0, %v4771
        %v4773 = vpop.f32.mrb[0].mxu0
        %4774 = vdwg.mxu0
        %s4775 = scalar_lea.vmem %s39, 64
        %v4776 = vld [vmem:[%s4775] sm:$0xff]
        %v4777 = vld [vmem:[%s4775 + $0x8] sm:$0xff]
        %v4778 = vld [vmem:[%s4775 + $0x10] sm:$0xff]
        %v4779 = vld [vmem:[%s4775 + $0x18] sm:$0xff]
        %v4781 = vsel %vm1515, %v4776, 0
        %v4784 = vsel %vm1515, %v4777, 0
        %v4787 = vsel %vm1515, %v4778, 0
        %v4790 = vsel %vm1515, %v4779, 0
        %4792 = vmatprep.subr.mxu0 0.0
        %4793 = vmatpush1.msra.mxu0 %v4767
        %4794 = vmatprep.subr.mxu0 0.0
        %4795 = vmatpush1.msra.mxu0 %v4772
        %4796 = vmatprep.subr.mxu0 0.0
        %4797 = vmatpush1.msra.mxu0 0.0
        %4798 = vmatprep.subr.mxu0 0.0
        %4799 = vmatpush1.msra.mxu0 0.0
        %4800 = vmatprep.subr.mxu0 0.0
        %4801 = vmatpush1.msra.mxu0 0.0
        %4802 = vmatprep.subr.mxu0 0.0
        %4803 = vmatpush1.msra.mxu0 0.0
        %4804 = vmatprep.subr.mxu0 0.0
        %4805 = vmatpush1.msra.mxu0 0.0
        %4806 = vmatprep.subr.mxu0 0.0
        %4807 = vmatpush1.msra.mxu0 0.0
        %4808 = vmatprep.subr.mxu0 0.0
        %4809 = vmatpush1.msra.mxu0 0.0
        %4810 = vmatprep.subr.mxu0 0.0
        %4811 = vmatpush1.msra.mxu0 0.0
        %4812 = vmatprep.subr.mxu0 0.0
        %4813 = vmatpush1.msra.mxu0 0.0
        %4814 = vmatprep.subr.mxu0 0.0
        %4815 = vmatpush1.msra.mxu0 0.0
        %4816 = vmatprep.subr.mxu0 0.0
        %4817 = vmatpush1.msra.mxu0 0.0
        %4818 = vmatprep.subr.mxu0 0.0
        %4819 = vmatpush1.msra.mxu0 0.0
        %4820 = vmatprep.subr.mxu0 0.0
        %4821 = vmatpush1.msra.mxu0 0.0
        %4822 = vmatprep.subr.mxu0 0.0
        %4823 = vmatpush1.msra.mxu0 0.0
        %4824 = vmatprep.subr.mxu0 0.0
        %4825 = vmatpush1.msra.mxu0 0.0
        %4826 = vmatprep.subr.mxu0 0.0
        %4827 = vmatpush1.msra.mxu0 0.0
        %4828 = vmatprep.subr.mxu0 0.0
        %4829 = vmatpush1.msra.mxu0 0.0
        %4830 = vmatprep.subr.mxu0 0.0
        %4831 = vmatpush1.msra.mxu0 0.0
        %4832 = vmatprep.subr.mxu0 0.0
        %4833 = vmatpush1.msra.mxu0 0.0
        %4834 = vmatprep.subr.mxu0 0.0
        %4835 = vmatpush1.msra.mxu0 0.0
        %4836 = vmatprep.subr.mxu0 0.0
        %4837 = vmatpush1.msra.mxu0 0.0
        %4838 = vmatprep.subr.mxu0 0.0
        %4839 = vmatpush1.msra.mxu0 0.0
        %4840 = vmatprep.subr.mxu0 0.0
        %4841 = vmatpush1.msra.mxu0 0.0
        %4842 = vmatprep.subr.mxu0 0.0
        %4843 = vmatpush1.msra.mxu0 0.0
        %4844 = vmatprep.subr.mxu0 0.0
        %4845 = vmatpush1.msra.mxu0 0.0
        %4846 = vmatprep.subr.mxu0 0.0
        %4847 = vmatpush1.msra.mxu0 0.0
        %4848 = vmatprep.subr.mxu0 0.0
        %4849 = vmatpush1.msra.mxu0 0.0
        %4850 = vmatprep.subr.mxu0 0.0
        %4851 = vmatpush1.msra.mxu0 0.0
        %4852 = vmatprep.subr.mxu0 0.0
        %4853 = vmatpush1.msra.mxu0 0.0
        %4854 = vmatprep.subr.mxu0 0.0
        %4855 = vmatpush1.msra.mxu0 0.0
        %4856 = vmatprep.mubr.f32.mxu0 0.0
        %4857 = vmatmul.mubr.f32.gmra.mrb[0].mxu0 %v4781
        %v4858 = vpop.f32.mrb[0].mxu0
        %v4859 = vadd.f32 0.0, %v4858
        %v4860 = vpop.f32.mrb[0].mxu0
        %4861 = vmatprep.mubr.f32.mxu0 0.0
        %4862 = vmatmul.mubr.f32.gmra.mrb[0].mxu0 %v4784
        %v4863 = vpop.f32.mrb[0].mxu0
        %v4864 = vadd.f32 0.0, %v4863
        %v4865 = vpop.f32.mrb[0].mxu0
        %4866 = vmatprep.mubr.f32.mxu0 0.0
        %4867 = vmatmul.mubr.f32.gmra.mrb[0].mxu0 %v4787
        %v4868 = vpop.f32.mrb[0].mxu0
        %v4869 = vadd.f32 0.0, %v4868
        %v4870 = vpop.f32.mrb[0].mxu0
        %4871 = vmatprep.mubr.f32.mxu0 0.0
        %4872 = vmatmul.mubr.f32.gmra.mrb[0].mxu0 %v4790
        %v4873 = vpop.f32.mrb[0].mxu0
        %v4874 = vadd.f32 0.0, %v4873
        %v4875 = vpop.f32.mrb[0].mxu0
        %4876 = vdwg.mxu0
        %v4877 = vadd.f32 %v4653, %v4859
        %v4878 = vadd.f32 %v4658, %v4864
        %v4879 = vadd.f32 %v4663, %v4869
        %v4880 = vadd.f32 %v4668, %v4874
        %s4881 = scalar_lea.vmem %s37, 600
        %v4882 = vld [vmem:[%s4881] sm:$0xff]
        %v4883 = vld [vmem:[%s4881 + $0x8] sm:$0xff]
        %v4884 = vld [vmem:[%s4881 + $0x10] sm:$0xff]
        %v4885 = vld [vmem:[%s4881 + $0x18] sm:$0xff]
        %v4886 = vld [vmem:[%s4881 + $0x20] sm:$0xff]
        %v4887 = vld [vmem:[%s4881 + $0x28] sm:$0xff]
        %v4888 = vld [vmem:[%s4881 + $0x30] sm:$0xff]
        %v4889 = vld [vmem:[%s4881 + $0x38] sm:$0xff]
        %v4890 = vld [vmem:[%s4881 + $0x40] sm:$0xff]
        %v4891 = vld [vmem:[%s4881 + $0x48] sm:$0xff]
        %v4892 = vld [vmem:[%s4881 + $0x50] sm:$0xff]
        %v4893 = vld [vmem:[%s4881 + $0x58] sm:$0xff]
        %v4894 = vld [vmem:[%s4881 + $0x60] sm:$0xff]
        %v4895 = vld [vmem:[%s4881 + $0x68] sm:$0xff]
        %v4896 = vld [vmem:[%s4881 + $0x70] sm:$0xff]
        %v4897 = vld [vmem:[%s4881 + $0x78] sm:$0xff]
        %v4898 = vld [vmem:[%s4881 + $0x80] sm:$0xff]
        %v4899 = vld [vmem:[%s4881 + $0x88] sm:$0xff]
        %v4900 = vld [vmem:[%s4881 + $0x90] sm:$0xff]
        %v4901 = vld [vmem:[%s4881 + $0x98] sm:$0xff]
        %v4902 = vld [vmem:[%s4881 + $0xa0] sm:$0xff]
        %v4903 = vld [vmem:[%s4881 + $0xa8] sm:$0xff]
        %v4904 = vld [vmem:[%s4881 + $0xb0] sm:$0xff]
        %v4905 = vld [vmem:[%s4881 + $0xb8] sm:$0xff]
        %v4906 = vld [vmem:[%s4881 + $0xc0] sm:$0xf]
        %v4908 = vsel %vm4285, %v4906, 0
        %4910 = vmatprep.subr.mxu0 0.0
        %4911 = vmatpush1.msra.mxu0 %v4882
        %4912 = vmatprep.subr.mxu0 0.0
        %4913 = vmatpush1.msra.mxu0 %v4883
        %4914 = vmatprep.subr.mxu0 0.0
        %4915 = vmatpush1.msra.mxu0 %v4884
        %4916 = vmatprep.subr.mxu0 0.0
        %4917 = vmatpush1.msra.mxu0 %v4885
        %4918 = vmatprep.subr.mxu0 0.0
        %4919 = vmatpush1.msra.mxu0 %v4886
        %4920 = vmatprep.subr.mxu0 0.0
        %4921 = vmatpush1.msra.mxu0 %v4887
        %4922 = vmatprep.subr.mxu0 0.0
        %4923 = vmatpush1.msra.mxu0 %v4888
        %4924 = vmatprep.subr.mxu0 0.0
        %4925 = vmatpush1.msra.mxu0 %v4889
        %4926 = vmatprep.subr.mxu0 0.0
        %4927 = vmatpush1.msra.mxu0 %v4890
        %4928 = vmatprep.subr.mxu0 0.0
        %4929 = vmatpush1.msra.mxu0 %v4891
        %4930 = vmatprep.subr.mxu0 0.0
        %4931 = vmatpush1.msra.mxu0 %v4892
        %4932 = vmatprep.subr.mxu0 0.0
        %4933 = vmatpush1.msra.mxu0 %v4893
        %4934 = vmatprep.subr.mxu0 0.0
        %4935 = vmatpush1.msra.mxu0 %v4894
        %4936 = vmatprep.subr.mxu0 0.0
        %4937 = vmatpush1.msra.mxu0 %v4895
        %4938 = vmatprep.subr.mxu0 0.0
        %4939 = vmatpush1.msra.mxu0 %v4896
        %4940 = vmatprep.subr.mxu0 0.0
        %4941 = vmatpush1.msra.mxu0 %v4897
        %4942 = vmatprep.subr.mxu0 0.0
        %4943 = vmatpush1.msra.mxu0 %v4898
        %4944 = vmatprep.subr.mxu0 0.0
        %4945 = vmatpush1.msra.mxu0 %v4899
        %4946 = vmatprep.subr.mxu0 0.0
        %4947 = vmatpush1.msra.mxu0 %v4900
        %4948 = vmatprep.subr.mxu0 0.0
        %4949 = vmatpush1.msra.mxu0 %v4901
        %4950 = vmatprep.subr.mxu0 0.0
        %4951 = vmatpush1.msra.mxu0 %v4902
        %4952 = vmatprep.subr.mxu0 0.0
        %4953 = vmatpush1.msra.mxu0 %v4903
        %4954 = vmatprep.subr.mxu0 0.0
        %4955 = vmatpush1.msra.mxu0 %v4904
        %4956 = vmatprep.subr.mxu0 0.0
        %4957 = vmatpush1.msra.mxu0 %v4905
        %4958 = vmatprep.subr.mxu0 0.0
        %4959 = vmatpush1.msra.mxu0 %v4908
        %4960 = vmatprep.subr.mxu0 0.0
        %4961 = vmatpush1.msra.mxu0 0.0
        %4962 = vmatprep.subr.mxu0 0.0
        %4963 = vmatpush1.msra.mxu0 0.0
        %4964 = vmatprep.subr.mxu0 0.0
        %4965 = vmatpush1.msra.mxu0 0.0
        %4966 = vmatprep.subr.mxu0 0.0
        %4967 = vmatpush1.msra.mxu0 0.0
        %4968 = vmatprep.subr.mxu0 0.0
        %4969 = vmatpush1.msra.mxu0 0.0
        %4970 = vmatprep.subr.mxu0 0.0
        %4971 = vmatpush1.msra.mxu0 0.0
        %4972 = vmatprep.subr.mxu0 0.0
        %4973 = vmatpush1.msra.mxu0 0.0
        %4974 = vmatprep.mubr.f32.mxu0 %v4280
        %4975 = vmatmul.mubr.f32.gmra.mrb[0].mxu0 %v4250
        %v4976 = vpop.f32.mrb[0].mxu0
        %v4977 = vadd.f32 0.0, %v4976
        %v4978 = vpop.f32.mrb[0].mxu0
        %4979 = vmatprep.mubr.f32.mxu0 %v4283
        %4980 = vmatmul.mubr.f32.gmra.mrb[0].mxu0 %v4252
        %v4981 = vpop.f32.mrb[0].mxu0
        %v4982 = vadd.f32 0.0, %v4981
        %v4983 = vpop.f32.mrb[0].mxu0
        %4984 = vdwg.mxu0
        %s4985 = scalar_lea.vmem %s39, 96
        %v4986 = vld [vmem:[%s4985] sm:$0xff]
        %v4987 = vld [vmem:[%s4985 + $0x8] sm:$0xff]
        %v4988 = vld [vmem:[%s4985 + $0x10] sm:$0xff]
        %v4989 = vld [vmem:[%s4985 + $0x18] sm:$0xff]
        %v4991 = vsel %vm1515, %v4986, 0
        %v4994 = vsel %vm1515, %v4987, 0
        %v4997 = vsel %vm1515, %v4988, 0
        %v5000 = vsel %vm1515, %v4989, 0
        %5002 = vmatprep.subr.mxu0 0.0
        %5003 = vmatpush1.msra.mxu0 %v4977
        %5004 = vmatprep.subr.mxu0 0.0
        %5005 = vmatpush1.msra.mxu0 %v4982
        %5006 = vmatprep.subr.mxu0 0.0
        %5007 = vmatpush1.msra.mxu0 0.0
        %5008 = vmatprep.subr.mxu0 0.0
        %5009 = vmatpush1.msra.mxu0 0.0
        %5010 = vmatprep.subr.mxu0 0.0
        %5011 = vmatpush1.msra.mxu0 0.0
        %5012 = vmatprep.subr.mxu0 0.0
        %5013 = vmatpush1.msra.mxu0 0.0
        %5014 = vmatprep.subr.mxu0 0.0
        %5015 = vmatpush1.msra.mxu0 0.0
        %5016 = vmatprep.subr.mxu0 0.0
        %5017 = vmatpush1.msra.mxu0 0.0
        %5018 = vmatprep.subr.mxu0 0.0
        %5019 = vmatpush1.msra.mxu0 0.0
        %5020 = vmatprep.subr.mxu0 0.0
        %5021 = vmatpush1.msra.mxu0 0.0
        %5022 = vmatprep.subr.mxu0 0.0
        %5023 = vmatpush1.msra.mxu0 0.0
        %5024 = vmatprep.subr.mxu0 0.0
        %5025 = vmatpush1.msra.mxu0 0.0
        %5026 = vmatprep.subr.mxu0 0.0
        %5027 = vmatpush1.msra.mxu0 0.0
        %5028 = vmatprep.subr.mxu0 0.0
        %5029 = vmatpush1.msra.mxu0 0.0
        %5030 = vmatprep.subr.mxu0 0.0
        %5031 = vmatpush1.msra.mxu0 0.0
        %5032 = vmatprep.subr.mxu0 0.0
        %5033 = vmatpush1.msra.mxu0 0.0
        %5034 = vmatprep.subr.mxu0 0.0
        %5035 = vmatpush1.msra.mxu0 0.0
        %5036 = vmatprep.subr.mxu0 0.0
        %5037 = vmatpush1.msra.mxu0 0.0
        %5038 = vmatprep.subr.mxu0 0.0
        %5039 = vmatpush1.msra.mxu0 0.0
        %5040 = vmatprep.subr.mxu0 0.0
        %5041 = vmatpush1.msra.mxu0 0.0
        %5042 = vmatprep.subr.mxu0 0.0
        %5043 = vmatpush1.msra.mxu0 0.0
        %5044 = vmatprep.subr.mxu0 0.0
        %5045 = vmatpush1.msra.mxu0 0.0
        %5046 = vmatprep.subr.mxu0 0.0
        %5047 = vmatpush1.msra.mxu0 0.0
        %5048 = vmatprep.subr.mxu0 0.0
        %5049 = vmatpush1.msra.mxu0 0.0
        %5050 = vmatprep.subr.mxu0 0.0
        %5051 = vmatpush1.msra.mxu0 0.0
        %5052 = vmatprep.subr.mxu0 0.0
        %5053 = vmatpush1.msra.mxu0 0.0
        %5054 = vmatprep.subr.mxu0 0.0
        %5055 = vmatpush1.msra.mxu0 0.0
        %5056 = vmatprep.subr.mxu0 0.0
        %5057 = vmatpush1.msra.mxu0 0.0
        %5058 = vmatprep.subr.mxu0 0.0
        %5059 = vmatpush1.msra.mxu0 0.0
        %5060 = vmatprep.subr.mxu0 0.0
        %5061 = vmatpush1.msra.mxu0 0.0
        %5062 = vmatprep.subr.mxu0 0.0
        %5063 = vmatpush1.msra.mxu0 0.0
        %5064 = vmatprep.subr.mxu0 0.0
        %5065 = vmatpush1.msra.mxu0 0.0
        %5066 = vmatprep.mubr.f32.mxu0 0.0
        %5067 = vmatmul.mubr.f32.gmra.mrb[0].mxu0 %v4991
        %v5068 = vpop.f32.mrb[0].mxu0
        %v5069 = vadd.f32 0.0, %v5068
        %v5070 = vpop.f32.mrb[0].mxu0
        %5071 = vmatprep.mubr.f32.mxu0 0.0
        %5072 = vmatmul.mubr.f32.gmra.mrb[0].mxu0 %v4994
        %v5073 = vpop.f32.mrb[0].mxu0
        %v5074 = vadd.f32 0.0, %v5073
        %v5075 = vpop.f32.mrb[0].mxu0
        %5076 = vmatprep.mubr.f32.mxu0 0.0
        %5077 = vmatmul.mubr.f32.gmra.mrb[0].mxu0 %v4997
        %v5078 = vpop.f32.mrb[0].mxu0
        %v5079 = vadd.f32 0.0, %v5078
        %v5080 = vpop.f32.mrb[0].mxu0
        %5081 = vmatprep.mubr.f32.mxu0 0.0
        %5082 = vmatmul.mubr.f32.gmra.mrb[0].mxu0 %v5000
        %v5083 = vpop.f32.mrb[0].mxu0
        %v5084 = vadd.f32 0.0, %v5083
        %v5085 = vpop.f32.mrb[0].mxu0
        %5086 = vdwg.mxu0
        %v5087 = vadd.f32 %v4877, %v5069
        %v5088 = vadd.f32 %v4878, %v5074
        %v5089 = vadd.f32 %v4879, %v5079
        %v5090 = vadd.f32 %v4880, %v5084
        %v5091 = vld [vmem:[%s41] sm:$0xff]
        %v5092 = vld [vmem:[%s41 + $0x8] sm:$0xff]
        %v5093 = vld [vmem:[%s41 + $0x10] sm:$0xff]
        %v5094 = vld [vmem:[%s41 + $0x18] sm:$0xff]
        %5096 = vset.pattern.permute.xlu0 0
        %5097 = vperm.xlu0 %5096, %v5091
        %v5098 = vpop.permute.xlu0 %5097
        %5101 = vset.pattern.permute.xlu0 0
        %5102 = vperm.xlu0 %5101, %v5092
        %v5103 = vpop.permute.xlu0 %5102
        %5106 = vset.pattern.permute.xlu0 0
        %5107 = vperm.xlu0 %5106, %v5093
        %v5108 = vpop.permute.xlu0 %5107
        %5111 = vset.pattern.permute.xlu0 0
        %5112 = vperm.xlu0 %5111, %v5094
        %v5113 = vpop.permute.xlu0 %5112
        %v5115 = vadd.f32 %v5087, %v5098
        %v5116 = vadd.f32 %v5088, %v5103
        %v5117 = vadd.f32 %v5089, %v5108
        %v5118 = vadd.f32 %v5090, %v5113
        %v5119 = vld [vmem:[%s43] sm:$0xff]
        %v5120 = vld [vmem:[%s43 + $0x8] sm:$0xff]
        %v5121 = vld [vmem:[%s43 + $0x10] sm:$0xff]
        %v5122 = vld [vmem:[%s43 + $0x18] sm:$0xff]
        %v5123 = vld [vmem:[%s45] sm:$0xff]
        %v5124 = vld [vmem:[%s45 + $0x8] sm:$0xff]
        %v5125 = vld [vmem:[%s45 + $0x10] sm:$0xff]
        %v5126 = vld [vmem:[%s45 + $0x18] sm:$0xff]
        %vm5127 = vcmask 400384
        %v5128 = vsel %vm5127, %v5115, 0.0
        %v5129 = vsel %vm5127, %v5116, 0.0
        %v5130 = vadd.f32 %v5128, %v5129
        %v5131 = vsel %vm5127, %v5117, 0.0
        %v5132 = vadd.f32 %v5130, %v5131
        %v5133 = vsel %vm5127, %v5118, 0.0
        %v5134 = vadd.f32 %v5132, %v5133
        %v5135 = vrot.slane %v5134, 4
        %v5136 = vadd.f32 %v5134, %v5135
        %v5137 = vrot.slane %v5136, 2
        %v5138 = vadd.f32 %v5136, %v5137
        %v5139 = vrot.slane %v5138, 1
        %v5140 = vadd.f32 %v5138, %v5139
        %v5141 = vrcp.pop 32.0
        %v5142 = vmul.f32 %v5140, %v5141
        %v5143 = vsub.f32 %v5115, %v5142
        %v5144 = vsub.f32 %v5116, %v5142
        %v5145 = vsub.f32 %v5117, %v5142
        %v5146 = vsub.f32 %v5118, %v5142
        %v5147 = vmul.f32 %v5143, %v5143
        %v5148 = vmul.f32 %v5144, %v5144
        %v5149 = vmul.f32 %v5145, %v5145
        %v5150 = vmul.f32 %v5146, %v5146
        %v5151 = vsel %vm5127, %v5147, 0.0
        %v5152 = vsel %vm5127, %v5148, 0.0
        %v5153 = vadd.f32 %v5151, %v5152
        %v5154 = vsel %vm5127, %v5149, 0.0
        %v5155 = vadd.f32 %v5153, %v5154
        %v5156 = vsel %vm5127, %v5150, 0.0
        %v5157 = vadd.f32 %v5155, %v5156
        %v5158 = vrot.slane %v5157, 4
        %v5159 = vadd.f32 %v5157, %v5158
        %v5160 = vrot.slane %v5159, 2
        %v5161 = vadd.f32 %v5159, %v5160
        %v5162 = vrot.slane %v5161, 1
        %v5163 = vadd.f32 %v5161, %v5162
        %v5164 = vmul.f32 %v5163, %v5141
        %v5165 = vadd.f32 %v5164, 1e-05
        %v5166 = vrsqrt.pop %v5165
        %v5167 = vmul.f32 %v5143, %v5166
        %v5168 = vmul.f32 %v5144, %v5166
        %v5169 = vmul.f32 %v5145, %v5166
        %v5170 = vmul.f32 %v5146, %v5166
        %5172 = vset.pattern.permute.xlu0 0
        %5173 = vperm.xlu0 %5172, %v5119
        %v5174 = vpop.permute.xlu0 %5173
        %5177 = vset.pattern.permute.xlu0 0
        %5178 = vperm.xlu0 %5177, %v5120
        %v5179 = vpop.permute.xlu0 %5178
        %5182 = vset.pattern.permute.xlu0 0
        %5183 = vperm.xlu0 %5182, %v5121
        %v5184 = vpop.permute.xlu0 %5183
        %5187 = vset.pattern.permute.xlu0 0
        %5188 = vperm.xlu0 %5187, %v5122
        %v5189 = vpop.permute.xlu0 %5188
        %v5191 = vmul.f32 %v5167, %v5174
        %v5192 = vmul.f32 %v5168, %v5179
        %v5193 = vmul.f32 %v5169, %v5184
        %v5194 = vmul.f32 %v5170, %v5189
        %5196 = vset.pattern.permute.xlu0 0
        %5197 = vperm.xlu0 %5196, %v5123
        %v5198 = vpop.permute.xlu0 %5197
        %5201 = vset.pattern.permute.xlu0 0
        %5202 = vperm.xlu0 %5201, %v5124
        %v5203 = vpop.permute.xlu0 %5202
        %5206 = vset.pattern.permute.xlu0 0
        %5207 = vperm.xlu0 %5206, %v5125
        %v5208 = vpop.permute.xlu0 %5207
        %5211 = vset.pattern.permute.xlu0 0
        %5212 = vperm.xlu0 %5211, %v5126
        %v5213 = vpop.permute.xlu0 %5212
        %v5215 = vadd.f32 %v5191, %v5198
        %v5216 = vadd.f32 %v5192, %v5203
        %v5217 = vadd.f32 %v5193, %v5208
        %v5218 = vadd.f32 %v5194, %v5213
        %5219 = vst.msk [vmem:[%s1207] sm:$0xff] %vm5127, %v5215
        %5220 = vst.msk [vmem:[%s1207 + $0x8] sm:$0xff] %vm5127, %v5216
        %5221 = vst.msk [vmem:[%s1207 + $0x10] sm:$0xff] %vm5127, %v5217
        %5222 = vst.msk [vmem:[%s1207 + $0x18] sm:$0xff] %vm5127, %v5218
        %v5223 = vsel %vm5127, %v5215, 0.0
        %v5224 = vsel %vm5127, %v5216, 0.0
        %v5225 = vadd.f32 %v5223, %v5224
        %v5226 = vsel %vm5127, %v5217, 0.0
        %v5227 = vadd.f32 %v5225, %v5226
        %v5228 = vsel %vm5127, %v5218, 0.0
        %v5229 = vadd.f32 %v5227, %v5228
        %v5230 = vrot.slane %v5229, 4
        %v5231 = vadd.f32 %v5229, %v5230
        %v5232 = vrot.slane %v5231, 2
        %v5233 = vadd.f32 %v5231, %v5232
        %v5234 = vrot.slane %v5233, 1
        %v5235 = vadd.f32 %v5233, %v5234
        %v5236 = vmul.f32 %v5235, %v5141
        %v5237 = vsub.f32 %v5215, %v5236
        %v5238 = vsub.f32 %v5216, %v5236
        %v5239 = vsub.f32 %v5217, %v5236
        %v5240 = vsub.f32 %v5218, %v5236
        %v5241 = vmul.f32 %v5237, %v5237
        %v5242 = vmul.f32 %v5238, %v5238
        %v5243 = vmul.f32 %v5239, %v5239
        %v5244 = vmul.f32 %v5240, %v5240
        %v5245 = vsel %vm5127, %v5241, 0.0
        %v5246 = vsel %vm5127, %v5242, 0.0
        %v5247 = vadd.f32 %v5245, %v5246
        %v5248 = vsel %vm5127, %v5243, 0.0
        %v5249 = vadd.f32 %v5247, %v5248
        %v5250 = vsel %vm5127, %v5244, 0.0
        %v5251 = vadd.f32 %v5249, %v5250
        %v5252 = vrot.slane %v5251, 4
        %v5253 = vadd.f32 %v5251, %v5252
        %v5254 = vrot.slane %v5253, 2
        %v5255 = vadd.f32 %v5253, %v5254
        %v5256 = vrot.slane %v5255, 1
        %v5257 = vadd.f32 %v5255, %v5256
        %v5258 = vmul.f32 %v5257, %v5141
        %v5259 = vadd.f32 %v5258, 1e-05
        %v5260 = vrsqrt.pop %v5259
        %v5261 = vmul.f32 %v5237, %v5260
        %v5262 = vmul.f32 %v5238, %v5260
        %v5263 = vmul.f32 %v5239, %v5260
        %v5264 = vmul.f32 %v5240, %v5260
        %v5265 = vld [vmem:[%s53] sm:$0xff]
        %v5266 = vld [vmem:[%s53 + $0x8] sm:$0xff]
        %v5267 = vld [vmem:[%s53 + $0x10] sm:$0xff]
        %v5268 = vld [vmem:[%s53 + $0x18] sm:$0xff]
        %v5269 = vld [vmem:[%s53 + $0x20] sm:$0xff]
        %v5270 = vld [vmem:[%s53 + $0x28] sm:$0xff]
        %v5271 = vld [vmem:[%s53 + $0x30] sm:$0xff]
        %v5272 = vld [vmem:[%s53 + $0x38] sm:$0xff]
        %v5273 = vld [vmem:[%s53 + $0x40] sm:$0x7]
        %v5274 = vld [vmem:[%s55] sm:$0xff]
        %v5275 = vld [vmem:[%s55 + $0x8] sm:$0xff]
        %v5276 = vld [vmem:[%s55 + $0x10] sm:$0xff]
        %v5277 = vld [vmem:[%s55 + $0x18] sm:$0xff]
        %v5278 = vld [vmem:[%s55 + $0x20] sm:$0xff]
        %v5279 = vld [vmem:[%s55 + $0x28] sm:$0xff]
        %v5280 = vld [vmem:[%s55 + $0x30] sm:$0xff]
        %v5281 = vld [vmem:[%s55 + $0x38] sm:$0xff]
        %v5282 = vld [vmem:[%s55 + $0x40] sm:$0x7]
        %5284 = vset.pattern.permute.xlu0 0
        %5285 = vperm.xlu0 %5284, %v5274
        %v5286 = vpop.permute.xlu0 %5285
        %5289 = vset.pattern.permute.xlu0 0
        %5290 = vperm.xlu0 %5289, %v5275
        %v5291 = vpop.permute.xlu0 %5290
        %5294 = vset.pattern.permute.xlu0 0
        %5295 = vperm.xlu0 %5294, %v5276
        %v5296 = vpop.permute.xlu0 %5295
        %5299 = vset.pattern.permute.xlu0 0
        %5300 = vperm.xlu0 %5299, %v5277
        %v5301 = vpop.permute.xlu0 %5300
        %5304 = vset.pattern.permute.xlu0 0
        %5305 = vperm.xlu0 %5304, %v5278
        %v5306 = vpop.permute.xlu0 %5305
        %5309 = vset.pattern.permute.xlu0 0
        %5310 = vperm.xlu0 %5309, %v5279
        %v5311 = vpop.permute.xlu0 %5310
        %5314 = vset.pattern.permute.xlu0 0
        %5315 = vperm.xlu0 %5314, %v5280
        %v5316 = vpop.permute.xlu0 %5315
        %5319 = vset.pattern.permute.xlu0 0
        %5320 = vperm.xlu0 %5319, %v5281
        %v5321 = vpop.permute.xlu0 %5320
        %5324 = vset.pattern.permute.xlu0 0
        %5325 = vperm.xlu0 %5324, %v5282
        %v5326 = vpop.permute.xlu0 %5325
        %vm5328 = vcmask 261120
        %v5330 = vsel %vm5328, %v5265, 0
        %v5333 = vsel %vm5328, %v5266, 0
        %v5336 = vsel %vm5328, %v5267, 0
        %v5339 = vsel %vm5328, %v5268, 0
        %v5342 = vsel %vm5328, %v5269, 0
        %v5345 = vsel %vm5328, %v5270, 0
        %v5348 = vsel %vm5328, %v5271, 0
        %v5351 = vsel %vm5328, %v5272, 0
        %v5354 = vsel %vm5328, %v5273, 0
        %5356 = vmatprep.subr.mxu0 0.0
        %5357 = vmatpush1.msra.mxu0 %v5261
        %5358 = vmatprep.subr.mxu0 0.0
        %5359 = vmatpush1.msra.mxu0 %v5262
        %5360 = vmatprep.subr.mxu0 0.0
        %5361 = vmatpush1.msra.mxu0 %v5263
        %5362 = vmatprep.subr.mxu0 0.0
        %5363 = vmatpush1.msra.mxu0 %v5264
        %5364 = vmatprep.subr.mxu0 0.0
        %5365 = vmatpush1.msra.mxu0 0.0
        %5366 = vmatprep.subr.mxu0 0.0
        %5367 = vmatpush1.msra.mxu0 0.0
        %5368 = vmatprep.subr.mxu0 0.0
        %5369 = vmatpush1.msra.mxu0 0.0
        %5370 = vmatprep.subr.mxu0 0.0
        %5371 = vmatpush1.msra.mxu0 0.0
        %5372 = vmatprep.subr.mxu0 0.0
        %5373 = vmatpush1.msra.mxu0 0.0
        %5374 = vmatprep.subr.mxu0 0.0
        %5375 = vmatpush1.msra.mxu0 0.0
        %5376 = vmatprep.subr.mxu0 0.0
        %5377 = vmatpush1.msra.mxu0 0.0
        %5378 = vmatprep.subr.mxu0 0.0
        %5379 = vmatpush1.msra.mxu0 0.0
        %5380 = vmatprep.subr.mxu0 0.0
        %5381 = vmatpush1.msra.mxu0 0.0
        %5382 = vmatprep.subr.mxu0 0.0
        %5383 = vmatpush1.msra.mxu0 0.0
        %5384 = vmatprep.subr.mxu0 0.0
        %5385 = vmatpush1.msra.mxu0 0.0
        %5386 = vmatprep.subr.mxu0 0.0
        %5387 = vmatpush1.msra.mxu0 0.0
        %5388 = vmatprep.subr.mxu0 0.0
        %5389 = vmatpush1.msra.mxu0 0.0
        %5390 = vmatprep.subr.mxu0 0.0
        %5391 = vmatpush1.msra.mxu0 0.0
        %5392 = vmatprep.subr.mxu0 0.0
        %5393 = vmatpush1.msra.mxu0 0.0
        %5394 = vmatprep.subr.mxu0 0.0
        %5395 = vmatpush1.msra.mxu0 0.0
        %5396 = vmatprep.subr.mxu0 0.0
        %5397 = vmatpush1.msra.mxu0 0.0
        %5398 = vmatprep.subr.mxu0 0.0
        %5399 = vmatpush1.msra.mxu0 0.0
        %5400 = vmatprep.subr.mxu0 0.0
        %5401 = vmatpush1.msra.mxu0 0.0
        %5402 = vmatprep.subr.mxu0 0.0
        %5403 = vmatpush1.msra.mxu0 0.0
        %5404 = vmatprep.subr.mxu0 0.0
        %5405 = vmatpush1.msra.mxu0 0.0
        %5406 = vmatprep.subr.mxu0 0.0
        %5407 = vmatpush1.msra.mxu0 0.0
        %5408 = vmatprep.subr.mxu0 0.0
        %5409 = vmatpush1.msra.mxu0 0.0
        %5410 = vmatprep.subr.mxu0 0.0
        %5411 = vmatpush1.msra.mxu0 0.0
        %5412 = vmatprep.subr.mxu0 0.0
        %5413 = vmatpush1.msra.mxu0 0.0
        %5414 = vmatprep.subr.mxu0 0.0
        %5415 = vmatpush1.msra.mxu0 0.0
        %5416 = vmatprep.subr.mxu0 0.0
        %5417 = vmatpush1.msra.mxu0 0.0
        %5418 = vmatprep.subr.mxu0 0.0
        %5419 = vmatpush1.msra.mxu0 0.0
        %5420 = vmatprep.mubr.f32.mxu0 0.0
        %5421 = vmatmul.mubr.f32.gmra.mrb[0].mxu0 %v5330
        %v5422 = vpop.f32.mrb[0].mxu0
        %v5423 = vadd.f32 %v5286, %v5422
        %v5424 = vpop.f32.mrb[0].mxu0
        %5425 = vmatprep.mubr.f32.mxu0 0.0
        %5426 = vmatmul.mubr.f32.gmra.mrb[0].mxu0 %v5333
        %v5427 = vpop.f32.mrb[0].mxu0
        %v5428 = vadd.f32 %v5291, %v5427
        %v5429 = vpop.f32.mrb[0].mxu0
        %5430 = vmatprep.mubr.f32.mxu0 0.0
        %5431 = vmatmul.mubr.f32.gmra.mrb[0].mxu0 %v5336
        %v5432 = vpop.f32.mrb[0].mxu0
        %v5433 = vadd.f32 %v5296, %v5432
        %v5434 = vpop.f32.mrb[0].mxu0
        %5435 = vmatprep.mubr.f32.mxu0 0.0
        %5436 = vmatmul.mubr.f32.gmra.mrb[0].mxu0 %v5339
        %v5437 = vpop.f32.mrb[0].mxu0
        %v5438 = vadd.f32 %v5301, %v5437
        %v5439 = vpop.f32.mrb[0].mxu0
        %5440 = vmatprep.mubr.f32.mxu0 0.0
        %5441 = vmatmul.mubr.f32.gmra.mrb[0].mxu0 %v5342
        %v5442 = vpop.f32.mrb[0].mxu0
        %v5443 = vadd.f32 %v5306, %v5442
        %v5444 = vpop.f32.mrb[0].mxu0
        %5445 = vmatprep.mubr.f32.mxu0 0.0
        %5446 = vmatmul.mubr.f32.gmra.mrb[0].mxu0 %v5345
        %v5447 = vpop.f32.mrb[0].mxu0
        %v5448 = vadd.f32 %v5311, %v5447
        %v5449 = vpop.f32.mrb[0].mxu0
        %5450 = vmatprep.mubr.f32.mxu0 0.0
        %5451 = vmatmul.mubr.f32.gmra.mrb[0].mxu0 %v5348
        %v5452 = vpop.f32.mrb[0].mxu0
        %v5453 = vadd.f32 %v5316, %v5452
        %v5454 = vpop.f32.mrb[0].mxu0
        %5455 = vmatprep.mubr.f32.mxu0 0.0
        %5456 = vmatmul.mubr.f32.gmra.mrb[0].mxu0 %v5351
        %v5457 = vpop.f32.mrb[0].mxu0
        %v5458 = vadd.f32 %v5321, %v5457
        %v5459 = vpop.f32.mrb[0].mxu0
        %5460 = vmatprep.mubr.f32.mxu0 0.0
        %5461 = vmatmul.mubr.f32.gmra.mrb[0].mxu0 %v5354
        %v5462 = vpop.f32.mrb[0].mxu0
        %v5463 = vadd.f32 %v5326, %v5462
        %v5464 = vpop.f32.mrb[0].mxu0
        %5465 = vdwg.mxu0
        %v5466 = vld [vmem:[%s47] sm:$0x1f]
        %5467 = vst [vmem:[#allocation3] sm:$0xff] 0.0
        %5468 = vst [vmem:[#allocation3 + $0x8] sm:$0xff] 0.0
        %5469 = vst.msk [vmem:[#allocation3 + $0x10] sm:$0xff] %vm5127, 0.0
        %5470 = vst [vmem:[#allocation3 + $0x18] sm:$0xff] 0.0
        %5471 = vst [vmem:[#allocation3 + $0x20] sm:$0xff] 0.0
        %5472 = vst.msk [vmem:[#allocation3 + $0x28] sm:$0xff] %vm5127, 0.0
        %5473 = vst [vmem:[#allocation3 + $0x30] sm:$0xff] 0.0
        %5474 = vst [vmem:[#allocation3 + $0x38] sm:$0xff] 0.0
        %5475 = vst.msk [vmem:[#allocation3 + $0x40] sm:$0xff] %vm5127, 0.0
        %5476 = vst [vmem:[#allocation3 + $0x48] sm:$0xff] 0.0
        %5477 = vst [vmem:[#allocation3 + $0x50] sm:$0xff] 0.0
        %5478 = vst.msk [vmem:[#allocation3 + $0x58] sm:$0xff] %vm5127, 0.0
        %5479 = vst.msk [vmem:[#allocation3 + $0x8] sm:$0xff] %vm5127, %v5443
        %5480 = vst.msk [vmem:[#allocation3 + $0x20] sm:$0xff] %vm5127, %v5448
        %5481 = vst.msk [vmem:[#allocation3 + $0x38] sm:$0xff] %vm5127, %v5453
        %5482 = vst.msk [vmem:[#allocation3 + $0x50] sm:$0xff] %vm5127, %v5458
        %v5483 = vld [vmem:[%s49] sm:$0xff]
        %v5484 = vld [vmem:[%s49 + $0x8] sm:$0xff]
        %v5485 = vld [vmem:[%s49 + $0x10] sm:$0xff]
        %v5486 = vld [vmem:[%s49 + $0x18] sm:$0xff]
        %v5487 = vld [vmem:[#allocation3] sm:$0xff]
        %v5488 = vld [vmem:[#allocation3 + $0x8] sm:$0xff]
        %v5489 = vld [vmem:[#allocation3 + $0x18] sm:$0xff]
        %v5490 = vld [vmem:[#allocation3 + $0x20] sm:$0xff]
        %v5491 = vld [vmem:[#allocation3 + $0x30] sm:$0xff]
        %v5492 = vld [vmem:[#allocation3 + $0x38] sm:$0xff]
        %v5493 = vld [vmem:[#allocation3 + $0x48] sm:$0xff]
        %v5494 = vld [vmem:[#allocation3 + $0x50] sm:$0xff]
        %5496 = vset.pattern.permute.xlu0 0
        %5497 = vperm.xlu0 %5496, %v5483
        %v5498 = vpop.permute.xlu0 %5497
        %5501 = vset.pattern.permute.xlu0 0
        %5502 = vperm.xlu0 %5501, %v5484
        %v5503 = vpop.permute.xlu0 %5502
        %5506 = vset.pattern.permute.xlu0 0
        %5507 = vperm.xlu0 %5506, %v5485
        %v5508 = vpop.permute.xlu0 %5507
        %5511 = vset.pattern.permute.xlu0 0
        %5512 = vperm.xlu0 %5511, %v5486
        %v5513 = vpop.permute.xlu0 %5512
        %v5515 = vmul.f32 %v5487, %v5498
        %v5516 = vmul.f32 %v5488, %v5498
        %v5517 = vmul.f32 %v5489, %v5503
        %v5518 = vmul.f32 %v5490, %v5503
        %v5519 = vmul.f32 %v5491, %v5508
        %v5520 = vmul.f32 %v5492, %v5508
        %v5521 = vmul.f32 %v5493, %v5513
        %v5522 = vmul.f32 %v5494, %v5513
        %5523 = vset.pattern.permute.xlu0 3
        %5524 = vperm.xlu0 %5523, %v5483
        %v5525 = vpop.permute.xlu0 %5524
        %5527 = vset.pattern.permute.xlu0 3
        %5528 = vperm.xlu0 %5527, %v5484
        %v5529 = vpop.permute.xlu0 %5528
        %5531 = vset.pattern.permute.xlu0 3
        %5532 = vperm.xlu0 %5531, %v5485
        %v5533 = vpop.permute.xlu0 %5532
        %5535 = vset.pattern.permute.xlu0 3
        %5536 = vperm.xlu0 %5535, %v5486
        %v5537 = vpop.permute.xlu0 %5536
        %v5539 = vmul.f32 %v5487, %v5525
        %v5540 = vmul.f32 %v5488, %v5525
        %v5541 = vmul.f32 %v5489, %v5529
        %v5542 = vmul.f32 %v5490, %v5529
        %v5543 = vmul.f32 %v5491, %v5533
        %v5544 = vmul.f32 %v5492, %v5533
        %v5545 = vmul.f32 %v5493, %v5537
        %v5546 = vmul.f32 %v5494, %v5537
        %5555 = vrot.lane.b32.xlu0 %v5539, 121
        %v5556 = vpop.permute.xlu0 %5555
        %5557 = vrot.lane.b32.xlu0 %v5540, 121
        %v5558 = vpop.permute.xlu0 %5557
        %5559 = vrot.lane.b32.xlu0 %v5541, 121
        %v5560 = vpop.permute.xlu0 %5559
        %5561 = vrot.lane.b32.xlu0 %v5542, 121
        %v5562 = vpop.permute.xlu0 %5561
        %5563 = vrot.lane.b32.xlu0 %v5543, 121
        %v5564 = vpop.permute.xlu0 %5563
        %5565 = vrot.lane.b32.xlu0 %v5544, 121
        %v5566 = vpop.permute.xlu0 %5565
        %5567 = vrot.lane.b32.xlu0 %v5545, 121
        %v5568 = vpop.permute.xlu0 %5567
        %5569 = vrot.lane.b32.xlu0 %v5546, 121
        %v5570 = vpop.permute.xlu0 %5569
        %vm5571 = vcmask 990208
        %v5572 = vsel %vm5571, %v5556, %v5558
        %v5573 = vsel %vm5571, %v5560, %v5562
        %v5574 = vsel %vm5571, %v5564, %v5566
        %v5575 = vsel %vm5571, %v5568, %v5570
        %v5584 = vadd.f32 %v5515, %v5572
        %v5585 = vadd.f32 %v5516, %v5558
        %v5586 = vadd.f32 %v5517, %v5573
        %v5587 = vadd.f32 %v5518, %v5562
        %v5588 = vadd.f32 %v5519, %v5574
        %v5589 = vadd.f32 %v5520, %v5566
        %v5590 = vadd.f32 %v5521, %v5575
        %v5591 = vadd.f32 %v5522, %v5570
        %5592 = vset.pattern.permute.xlu0 6
        %5593 = vperm.xlu0 %5592, %v5483
        %v5594 = vpop.permute.xlu0 %5593
        %5596 = vset.pattern.permute.xlu0 6
        %5597 = vperm.xlu0 %5596, %v5484
        %v5598 = vpop.permute.xlu0 %5597
        %5600 = vset.pattern.permute.xlu0 6
        %5601 = vperm.xlu0 %5600, %v5485
        %v5602 = vpop.permute.xlu0 %5601
        %5604 = vset.pattern.permute.xlu0 6
        %5605 = vperm.xlu0 %5604, %v5486
        %v5606 = vpop.permute.xlu0 %5605
        %v5608 = vmul.f32 %v5488, %v5594
        %v5609 = vmul.f32 %v5490, %v5598
        %v5610 = vmul.f32 %v5492, %v5602
        %v5611 = vmul.f32 %v5494, %v5606
        %5616 = vrot.lane.b32.xlu0 %v5608, 114
        %v5617 = vpop.permute.xlu0 %5616
        %5618 = vrot.lane.b32.xlu0 %v5609, 114
        %v5619 = vpop.permute.xlu0 %5618
        %5620 = vrot.lane.b32.xlu0 %v5610, 114
        %v5621 = vpop.permute.xlu0 %5620
        %5622 = vrot.lane.b32.xlu0 %v5611, 114
        %v5623 = vpop.permute.xlu0 %5622
        %v5628 = vadd.f32 %v5584, %v5617
        %v5629 = vadd.f32 %v5585, %v5617
        %v5630 = vadd.f32 %v5586, %v5619
        %v5631 = vadd.f32 %v5587, %v5619
        %v5632 = vadd.f32 %v5588, %v5621
        %v5633 = vadd.f32 %v5589, %v5621
        %v5634 = vadd.f32 %v5590, %v5623
        %v5635 = vadd.f32 %v5591, %v5623
        %v5636 = vlaneseq
        %v5637 = vshrl.u32 %v5636, 7
        %v5638 = vsub.s32 1, %v5637
        %v5639 = vrot.slane %v5466, %v5638
        %5641 = vrot.lane.b32.xlu0 %v5639, 120
        %v5642 = vpop.permute.xlu0 %5641
        %v5644 = vmul.f32 %v5628, %v5642
        %v5645 = vmul.f32 %v5629, %v5642
        %v5646 = vmul.f32 %v5630, %v5642
        %v5647 = vmul.f32 %v5631, %v5642
        %v5648 = vmul.f32 %v5632, %v5642
        %v5649 = vmul.f32 %v5633, %v5642
        %v5650 = vmul.f32 %v5634, %v5642
        %v5651 = vmul.f32 %v5635, %v5642
        %5652 = vset.pattern.permute.xlu0 1
        %5653 = vperm.xlu0 %5652, %v5483
        %v5654 = vpop.permute.xlu0 %5653
        %5656 = vset.pattern.permute.xlu0 1
        %5657 = vperm.xlu0 %5656, %v5484
        %v5658 = vpop.permute.xlu0 %5657
        %5660 = vset.pattern.permute.xlu0 1
        %5661 = vperm.xlu0 %5660, %v5485
        %v5662 = vpop.permute.xlu0 %5661
        %5664 = vset.pattern.permute.xlu0 1
        %5665 = vperm.xlu0 %5664, %v5486
        %v5666 = vpop.permute.xlu0 %5665
        %v5668 = vmul.f32 %v5487, %v5654
        %v5669 = vmul.f32 %v5488, %v5654
        %v5670 = vmul.f32 %v5489, %v5658
        %v5671 = vmul.f32 %v5490, %v5658
        %v5672 = vmul.f32 %v5491, %v5662
        %v5673 = vmul.f32 %v5492, %v5662
        %v5674 = vmul.f32 %v5493, %v5666
        %v5675 = vmul.f32 %v5494, %v5666
        %5676 = vset.pattern.permute.xlu0 4
        %5677 = vperm.xlu0 %5676, %v5483
        %v5678 = vpop.permute.xlu0 %5677
        %5680 = vset.pattern.permute.xlu0 4
        %5681 = vperm.xlu0 %5680, %v5484
        %v5682 = vpop.permute.xlu0 %5681
        %5684 = vset.pattern.permute.xlu0 4
        %5685 = vperm.xlu0 %5684, %v5485
        %v5686 = vpop.permute.xlu0 %5685
        %5688 = vset.pattern.permute.xlu0 4
        %5689 = vperm.xlu0 %5688, %v5486
        %v5690 = vpop.permute.xlu0 %5689
        %v5692 = vmul.f32 %v5488, %v5678
        %v5693 = vmul.f32 %v5490, %v5682
        %v5694 = vmul.f32 %v5492, %v5686
        %v5695 = vmul.f32 %v5494, %v5690
        %5700 = vrot.lane.b32.xlu0 %v5692, 121
        %v5701 = vpop.permute.xlu0 %5700
        %5702 = vrot.lane.b32.xlu0 %v5693, 121
        %v5703 = vpop.permute.xlu0 %5702
        %5704 = vrot.lane.b32.xlu0 %v5694, 121
        %v5705 = vpop.permute.xlu0 %5704
        %5706 = vrot.lane.b32.xlu0 %v5695, 121
        %v5707 = vpop.permute.xlu0 %5706
        %v5712 = vadd.f32 %v5668, %v5701
        %v5713 = vadd.f32 %v5669, %v5701
        %v5714 = vadd.f32 %v5670, %v5703
        %v5715 = vadd.f32 %v5671, %v5703
        %v5716 = vadd.f32 %v5672, %v5705
        %v5717 = vadd.f32 %v5673, %v5705
        %v5718 = vadd.f32 %v5674, %v5707
        %v5719 = vadd.f32 %v5675, %v5707
        %5720 = vset.pattern.permute.xlu0 7
        %5721 = vperm.xlu0 %5720, %v5483
        %v5722 = vpop.permute.xlu0 %5721
        %5724 = vset.pattern.permute.xlu0 7
        %5725 = vperm.xlu0 %5724, %v5484
        %v5726 = vpop.permute.xlu0 %5725
        %5728 = vset.pattern.permute.xlu0 7
        %5729 = vperm.xlu0 %5728, %v5485
        %v5730 = vpop.permute.xlu0 %5729
        %5732 = vset.pattern.permute.xlu0 7
        %5733 = vperm.xlu0 %5732, %v5486
        %v5734 = vpop.permute.xlu0 %5733
        %v5736 = vmul.f32 %v5488, %v5722
        %v5737 = vmul.f32 %v5490, %v5726
        %v5738 = vmul.f32 %v5492, %v5730
        %v5739 = vmul.f32 %v5494, %v5734
        %5744 = vrot.lane.b32.xlu0 %v5736, 114
        %v5745 = vpop.permute.xlu0 %5744
        %5746 = vrot.lane.b32.xlu0 %v5737, 114
        %v5747 = vpop.permute.xlu0 %5746
        %5748 = vrot.lane.b32.xlu0 %v5738, 114
        %v5749 = vpop.permute.xlu0 %5748
        %5750 = vrot.lane.b32.xlu0 %v5739, 114
        %v5751 = vpop.permute.xlu0 %5750
        %v5756 = vadd.f32 %v5712, %v5745
        %v5757 = vadd.f32 %v5713, %v5745
        %v5758 = vadd.f32 %v5714, %v5747
        %v5759 = vadd.f32 %v5715, %v5747
        %v5760 = vadd.f32 %v5716, %v5749
        %v5761 = vadd.f32 %v5717, %v5749
        %v5762 = vadd.f32 %v5718, %v5751
        %v5763 = vadd.f32 %v5719, %v5751
        %v5764 = vlaneseq
        %v5765 = vshrl.u32 %v5764, 7
        %v5766 = vsub.s32 2, %v5765
        %v5767 = vrot.slane %v5466, %v5766
        %5769 = vrot.lane.b32.xlu0 %v5767, 121
        %v5770 = vpop.permute.xlu0 %5769
        %v5772 = vmul.f32 %v5756, %v5770
        %v5773 = vmul.f32 %v5757, %v5770
        %v5774 = vmul.f32 %v5758, %v5770
        %v5775 = vmul.f32 %v5759, %v5770
        %v5776 = vmul.f32 %v5760, %v5770
        %v5777 = vmul.f32 %v5761, %v5770
        %v5778 = vmul.f32 %v5762, %v5770
        %v5779 = vmul.f32 %v5763, %v5770
        %5788 = vrot.lane.b32.xlu0 %v5772, 127
        %v5789 = vpop.permute.xlu0 %5788
        %5790 = vrot.lane.b32.xlu0 %v5773, 127
        %v5791 = vpop.permute.xlu0 %5790
        %5792 = vrot.lane.b32.xlu0 %v5774, 127
        %v5793 = vpop.permute.xlu0 %5792
        %5794 = vrot.lane.b32.xlu0 %v5775, 127
        %v5795 = vpop.permute.xlu0 %5794
        %5796 = vrot.lane.b32.xlu0 %v5776, 127
        %v5797 = vpop.permute.xlu0 %5796
        %5798 = vrot.lane.b32.xlu0 %v5777, 127
        %v5799 = vpop.permute.xlu0 %5798
        %5800 = vrot.lane.b32.xlu0 %v5778, 127
        %v5801 = vpop.permute.xlu0 %5800
        %5802 = vrot.lane.b32.xlu0 %v5779, 127
        %v5803 = vpop.permute.xlu0 %5802
        %v5804 = vsel %vm1909, %v5789, %v5791
        %v5805 = vsel %vm1909, %v5793, %v5795
        %v5806 = vsel %vm1909, %v5797, %v5799
        %v5807 = vsel %vm1909, %v5801, %v5803
        %v5816 = vadd.f32 %v5644, %v5804
        %v5817 = vadd.f32 %v5645, %v5791
        %v5818 = vadd.f32 %v5646, %v5805
        %v5819 = vadd.f32 %v5647, %v5795
        %v5820 = vadd.f32 %v5648, %v5806
        %v5821 = vadd.f32 %v5649, %v5799
        %v5822 = vadd.f32 %v5650, %v5807
        %v5823 = vadd.f32 %v5651, %v5803
        %5824 = vset.pattern.permute.xlu0 2
        %5825 = vperm.xlu0 %5824, %v5483
        %v5826 = vpop.permute.xlu0 %5825
        %5828 = vset.pattern.permute.xlu0 2
        %5829 = vperm.xlu0 %5828, %v5484
        %v5830 = vpop.permute.xlu0 %5829
        %5832 = vset.pattern.permute.xlu0 2
        %5833 = vperm.xlu0 %5832, %v5485
        %v5834 = vpop.permute.xlu0 %5833
        %5836 = vset.pattern.permute.xlu0 2
        %5837 = vperm.xlu0 %5836, %v5486
        %v5838 = vpop.permute.xlu0 %5837
        %v5840 = vmul.f32 %v5487, %v5826
        %v5841 = vmul.f32 %v5488, %v5826
        %v5842 = vmul.f32 %v5489, %v5830
        %v5843 = vmul.f32 %v5490, %v5830
        %v5844 = vmul.f32 %v5491, %v5834
        %v5845 = vmul.f32 %v5492, %v5834
        %v5846 = vmul.f32 %v5493, %v5838
        %v5847 = vmul.f32 %v5494, %v5838
        %5848 = vset.pattern.permute.xlu0 5
        %5849 = vperm.xlu0 %5848, %v5483
        %v5850 = vpop.permute.xlu0 %5849
        %5852 = vset.pattern.permute.xlu0 5
        %5853 = vperm.xlu0 %5852, %v5484
        %v5854 = vpop.permute.xlu0 %5853
        %5856 = vset.pattern.permute.xlu0 5
        %5857 = vperm.xlu0 %5856, %v5485
        %v5858 = vpop.permute.xlu0 %5857
        %5860 = vset.pattern.permute.xlu0 5
        %5861 = vperm.xlu0 %5860, %v5486
        %v5862 = vpop.permute.xlu0 %5861
        %v5864 = vmul.f32 %v5488, %v5850
        %v5865 = vmul.f32 %v5490, %v5854
        %v5866 = vmul.f32 %v5492, %v5858
        %v5867 = vmul.f32 %v5494, %v5862
        %5872 = vrot.lane.b32.xlu0 %v5864, 121
        %v5873 = vpop.permute.xlu0 %5872
        %5874 = vrot.lane.b32.xlu0 %v5865, 121
        %v5875 = vpop.permute.xlu0 %5874
        %5876 = vrot.lane.b32.xlu0 %v5866, 121
        %v5877 = vpop.permute.xlu0 %5876
        %5878 = vrot.lane.b32.xlu0 %v5867, 121
        %v5879 = vpop.permute.xlu0 %5878
        %v5884 = vadd.f32 %v5840, %v5873
        %v5885 = vadd.f32 %v5841, %v5873
        %v5886 = vadd.f32 %v5842, %v5875
        %v5887 = vadd.f32 %v5843, %v5875
        %v5888 = vadd.f32 %v5844, %v5877
        %v5889 = vadd.f32 %v5845, %v5877
        %v5890 = vadd.f32 %v5846, %v5879
        %v5891 = vadd.f32 %v5847, %v5879
        %5892 = vset.pattern.permute.xlu0 8
        %5893 = vperm.xlu0 %5892, %v5483
        %v5894 = vpop.permute.xlu0 %5893
        %5896 = vset.pattern.permute.xlu0 8
        %5897 = vperm.xlu0 %5896, %v5484
        %v5898 = vpop.permute.xlu0 %5897
        %5900 = vset.pattern.permute.xlu0 8
        %5901 = vperm.xlu0 %5900, %v5485
        %v5902 = vpop.permute.xlu0 %5901
        %5904 = vset.pattern.permute.xlu0 8
        %5905 = vperm.xlu0 %5904, %v5486
        %v5906 = vpop.permute.xlu0 %5905
        %v5908 = vmul.f32 %v5488, %v5894
        %v5909 = vmul.f32 %v5490, %v5898
        %v5910 = vmul.f32 %v5492, %v5902
        %v5911 = vmul.f32 %v5494, %v5906
        %5916 = vrot.lane.b32.xlu0 %v5908, 114
        %v5917 = vpop.permute.xlu0 %5916
        %5918 = vrot.lane.b32.xlu0 %v5909, 114
        %v5919 = vpop.permute.xlu0 %5918
        %5920 = vrot.lane.b32.xlu0 %v5910, 114
        %v5921 = vpop.permute.xlu0 %5920
        %5922 = vrot.lane.b32.xlu0 %v5911, 114
        %v5923 = vpop.permute.xlu0 %5922
        %v5928 = vadd.f32 %v5884, %v5917
        %v5929 = vadd.f32 %v5885, %v5917
        %v5930 = vadd.f32 %v5886, %v5919
        %v5931 = vadd.f32 %v5887, %v5919
        %v5932 = vadd.f32 %v5888, %v5921
        %v5933 = vadd.f32 %v5889, %v5921
        %v5934 = vadd.f32 %v5890, %v5923
        %v5935 = vadd.f32 %v5891, %v5923
        %v5936 = vlaneseq
        %v5937 = vshrl.u32 %v5936, 7
        %v5938 = vsub.s32 3, %v5937
        %v5939 = vrot.slane %v5466, %v5938
        %5941 = vrot.lane.b32.xlu0 %v5939, 122
        %v5942 = vpop.permute.xlu0 %5941
        %v5944 = vmul.f32 %v5928, %v5942
        %v5945 = vmul.f32 %v5929, %v5942
        %v5946 = vmul.f32 %v5930, %v5942
        %v5947 = vmul.f32 %v5931, %v5942
        %v5948 = vmul.f32 %v5932, %v5942
        %v5949 = vmul.f32 %v5933, %v5942
        %v5950 = vmul.f32 %v5934, %v5942
        %v5951 = vmul.f32 %v5935, %v5942
        %5960 = vrot.lane.b32.xlu0 %v5944, 126
        %v5961 = vpop.permute.xlu0 %5960
        %5962 = vrot.lane.b32.xlu0 %v5945, 126
        %v5963 = vpop.permute.xlu0 %5962
        %5964 = vrot.lane.b32.xlu0 %v5946, 126
        %v5965 = vpop.permute.xlu0 %5964
        %5966 = vrot.lane.b32.xlu0 %v5947, 126
        %v5967 = vpop.permute.xlu0 %5966
        %5968 = vrot.lane.b32.xlu0 %v5948, 126
        %v5969 = vpop.permute.xlu0 %5968
        %5970 = vrot.lane.b32.xlu0 %v5949, 126
        %v5971 = vpop.permute.xlu0 %5970
        %5972 = vrot.lane.b32.xlu0 %v5950, 126
        %v5973 = vpop.permute.xlu0 %5972
        %5974 = vrot.lane.b32.xlu0 %v5951, 126
        %v5975 = vpop.permute.xlu0 %5974
        %v5976 = vsel %vm2059, %v5961, %v5963
        %v5977 = vsel %vm2059, %v5965, %v5967
        %v5978 = vsel %vm2059, %v5969, %v5971
        %v5979 = vsel %vm2059, %v5973, %v5975
        %v5988 = vadd.f32 %v5816, %v5976
        %v5989 = vadd.f32 %v5817, %v5963
        %v5990 = vadd.f32 %v5818, %v5977
        %v5991 = vadd.f32 %v5819, %v5967
        %v5992 = vadd.f32 %v5820, %v5978
        %v5993 = vadd.f32 %v5821, %v5971
        %v5994 = vadd.f32 %v5822, %v5979
        %v5995 = vadd.f32 %v5823, %v5975
        %v5996 = vmul.f32 %v5988, %v5988
        %v5997 = vmul.f32 %v5989, %v5989
        %v5998 = vmul.f32 %v5990, %v5990
        %v5999 = vmul.f32 %v5991, %v5991
        %v6000 = vmul.f32 %v5992, %v5992
        %v6001 = vmul.f32 %v5993, %v5993
        %v6002 = vmul.f32 %v5994, %v5994
        %v6003 = vmul.f32 %v5995, %v5995
        %v6004 = vmul.f32 %v5988, %v5996
        %v6005 = vmul.f32 %v5989, %v5997
        %v6006 = vmul.f32 %v5990, %v5998
        %v6007 = vmul.f32 %v5991, %v5999
        %v6008 = vmul.f32 %v5992, %v6000
        %v6009 = vmul.f32 %v5993, %v6001
        %v6010 = vmul.f32 %v5994, %v6002
        %v6011 = vmul.f32 %v5995, %v6003
        %v6012 = vmul.f32 %v6004, 0.044715
        %v6013 = vmul.f32 %v6005, 0.044715
        %v6014 = vmul.f32 %v6006, 0.044715
        %v6015 = vmul.f32 %v6007, 0.044715
        %v6016 = vmul.f32 %v6008, 0.044715
        %v6017 = vmul.f32 %v6009, 0.044715
        %v6018 = vmul.f32 %v6010, 0.044715
        %v6019 = vmul.f32 %v6011, 0.044715
        %v6020 = vadd.f32 %v5988, %v6012
        %v6021 = vadd.f32 %v5989, %v6013
        %v6022 = vadd.f32 %v5990, %v6014
        %v6023 = vadd.f32 %v5991, %v6015
        %v6024 = vadd.f32 %v5992, %v6016
        %v6025 = vadd.f32 %v5993, %v6017
        %v6026 = vadd.f32 %v5994, %v6018
        %v6027 = vadd.f32 %v5995, %v6019
        %v6028 = vmul.f32 %v6020, 0.7978846
        %v6029 = vmul.f32 %v6021, 0.7978846
        %v6030 = vmul.f32 %v6022, 0.7978846
        %v6031 = vmul.f32 %v6023, 0.7978846
        %v6032 = vmul.f32 %v6024, 0.7978846
        %v6033 = vmul.f32 %v6025, 0.7978846
        %v6034 = vmul.f32 %v6026, 0.7978846
        %v6035 = vmul.f32 %v6027, 0.7978846
        %v6036 = vtanh.pop %v6028
        %v6037 = vtanh.pop %v6029
        %v6038 = vtanh.pop %v6030
        %v6039 = vtanh.pop %v6031
        %v6040 = vtanh.pop %v6032
        %v6041 = vtanh.pop %v6033
        %v6042 = vtanh.pop %v6034
        %v6043 = vtanh.pop %v6035
        %v6044 = vadd.f32 %v6036, 1.0
        %v6045 = vadd.f32 %v6037, 1.0
        %v6046 = vadd.f32 %v6038, 1.0
        %v6047 = vadd.f32 %v6039, 1.0
        %v6048 = vadd.f32 %v6040, 1.0
        %v6049 = vadd.f32 %v6041, 1.0
        %v6050 = vadd.f32 %v6042, 1.0
        %v6051 = vadd.f32 %v6043, 1.0
        %v6052 = vmul.f32 %v6044, 0.5
        %v6053 = vmul.f32 %v6045, 0.5
        %v6054 = vmul.f32 %v6046, 0.5
        %v6055 = vmul.f32 %v6047, 0.5
        %v6056 = vmul.f32 %v6048, 0.5
        %v6057 = vmul.f32 %v6049, 0.5
        %v6058 = vmul.f32 %v6050, 0.5
        %v6059 = vmul.f32 %v6051, 0.5
        %v6060 = vmul.f32 %v5988, %v6052
        %v6061 = vmul.f32 %v5989, %v6053
        %v6062 = vmul.f32 %v5990, %v6054
        %v6063 = vmul.f32 %v5991, %v6055
        %v6064 = vmul.f32 %v5992, %v6056
        %v6065 = vmul.f32 %v5993, %v6057
        %v6066 = vmul.f32 %v5994, %v6058
        %v6067 = vmul.f32 %v5995, %v6059
        %v6068 = vlaneseq
        %v6069 = vshrl.u32 %v6068, 7
        %v6070 = vsub.s32 0, %v6069
        %v6071 = vrot.slane %v5463, %v6070
        %6073 = vrot.lane.b32.xlu0 %v6071, 120
        %v6074 = vpop.permute.xlu0 %6073
        %v6076 = vmul.f32 %v6060, %v6074
        %v6077 = vmul.f32 %v6061, %v6074
        %v6078 = vmul.f32 %v6062, %v6074
        %v6079 = vmul.f32 %v6063, %v6074
        %v6080 = vmul.f32 %v6064, %v6074
        %v6081 = vmul.f32 %v6065, %v6074
        %v6082 = vmul.f32 %v6066, %v6074
        %v6083 = vmul.f32 %v6067, %v6074
        %6092 = vrot.lane.b32.xlu0 %v6060, 8
        %v6093 = vpop.permute.xlu0 %6092
        %6094 = vrot.lane.b32.xlu0 %v6061, 8
        %v6095 = vpop.permute.xlu0 %6094
        %6096 = vrot.lane.b32.xlu0 %v6062, 8
        %v6097 = vpop.permute.xlu0 %6096
        %6098 = vrot.lane.b32.xlu0 %v6063, 8
        %v6099 = vpop.permute.xlu0 %6098
        %6100 = vrot.lane.b32.xlu0 %v6064, 8
        %v6101 = vpop.permute.xlu0 %6100
        %6102 = vrot.lane.b32.xlu0 %v6065, 8
        %v6103 = vpop.permute.xlu0 %6102
        %6104 = vrot.lane.b32.xlu0 %v6066, 8
        %v6105 = vpop.permute.xlu0 %6104
        %6106 = vrot.lane.b32.xlu0 %v6067, 8
        %v6107 = vpop.permute.xlu0 %6106
        %vm6108 = vcmask 64512
        %v6109 = vsel %vm6108, %v6093, %v6095
        %v6110 = vsel %vm6108, %v6097, %v6099
        %v6111 = vsel %vm6108, %v6101, %v6103
        %v6112 = vsel %vm6108, %v6105, %v6107
        %6117 = vst.msk [vmem:[#allocation3 + $0x8] sm:$0xff] %vm5127, %v6109
        %6118 = vst.msk [vmem:[#allocation3 + $0x20] sm:$0xff] %vm5127, %v6110
        %6119 = vst.msk [vmem:[#allocation3 + $0x38] sm:$0xff] %vm5127, %v6111
        %6120 = vst.msk [vmem:[#allocation3 + $0x50] sm:$0xff] %vm5127, %v6112
        %v6121 = vld [vmem:[%s51] sm:$0xff]
        %v6122 = vld [vmem:[%s51 + $0x8] sm:$0xff]
        %v6123 = vld [vmem:[%s51 + $0x10] sm:$0xff]
        %v6124 = vld [vmem:[%s51 + $0x18] sm:$0xff]
        %v6125 = vld [vmem:[#allocation3] sm:$0xff]
        %v6126 = vld [vmem:[#allocation3 + $0x8] sm:$0xff]
        %v6127 = vld [vmem:[#allocation3 + $0x18] sm:$0xff]
        %v6128 = vld [vmem:[#allocation3 + $0x20] sm:$0xff]
        %v6129 = vld [vmem:[#allocation3 + $0x30] sm:$0xff]
        %v6130 = vld [vmem:[#allocation3 + $0x38] sm:$0xff]
        %v6131 = vld [vmem:[#allocation3 + $0x48] sm:$0xff]
        %v6132 = vld [vmem:[#allocation3 + $0x50] sm:$0xff]
        %6134 = vset.pattern.permute.xlu0 0
        %6135 = vperm.xlu0 %6134, %v6121
        %v6136 = vpop.permute.xlu0 %6135
        %6139 = vset.pattern.permute.xlu0 0
        %6140 = vperm.xlu0 %6139, %v6122
        %v6141 = vpop.permute.xlu0 %6140
        %6144 = vset.pattern.permute.xlu0 0
        %6145 = vperm.xlu0 %6144, %v6123
        %v6146 = vpop.permute.xlu0 %6145
        %6149 = vset.pattern.permute.xlu0 0
        %6150 = vperm.xlu0 %6149, %v6124
        %v6151 = vpop.permute.xlu0 %6150
        %v6153 = vmul.f32 %v6125, %v6136
        %v6154 = vmul.f32 %v6126, %v6136
        %v6155 = vmul.f32 %v6127, %v6141
        %v6156 = vmul.f32 %v6128, %v6141
        %v6157 = vmul.f32 %v6129, %v6146
        %v6158 = vmul.f32 %v6130, %v6146
        %v6159 = vmul.f32 %v6131, %v6151
        %v6160 = vmul.f32 %v6132, %v6151
        %6161 = vset.pattern.permute.xlu0 5
        %6162 = vperm.xlu0 %6161, %v6121
        %v6163 = vpop.permute.xlu0 %6162
        %6165 = vset.pattern.permute.xlu0 5
        %6166 = vperm.xlu0 %6165, %v6122
        %v6167 = vpop.permute.xlu0 %6166
        %6169 = vset.pattern.permute.xlu0 5
        %6170 = vperm.xlu0 %6169, %v6123
        %v6171 = vpop.permute.xlu0 %6170
        %6173 = vset.pattern.permute.xlu0 5
        %6174 = vperm.xlu0 %6173, %v6124
        %v6175 = vpop.permute.xlu0 %6174
        %v6177 = vmul.f32 %v6125, %v6163
        %v6178 = vmul.f32 %v6126, %v6163
        %v6179 = vmul.f32 %v6127, %v6167
        %v6180 = vmul.f32 %v6128, %v6167
        %v6181 = vmul.f32 %v6129, %v6171
        %v6182 = vmul.f32 %v6130, %v6171
        %v6183 = vmul.f32 %v6131, %v6175
        %v6184 = vmul.f32 %v6132, %v6175
        %6193 = vrot.lane.b32.xlu0 %v6177, 121
        %v6194 = vpop.permute.xlu0 %6193
        %6195 = vrot.lane.b32.xlu0 %v6178, 121
        %v6196 = vpop.permute.xlu0 %6195
        %6197 = vrot.lane.b32.xlu0 %v6179, 121
        %v6198 = vpop.permute.xlu0 %6197
        %6199 = vrot.lane.b32.xlu0 %v6180, 121
        %v6200 = vpop.permute.xlu0 %6199
        %6201 = vrot.lane.b32.xlu0 %v6181, 121
        %v6202 = vpop.permute.xlu0 %6201
        %6203 = vrot.lane.b32.xlu0 %v6182, 121
        %v6204 = vpop.permute.xlu0 %6203
        %6205 = vrot.lane.b32.xlu0 %v6183, 121
        %v6206 = vpop.permute.xlu0 %6205
        %6207 = vrot.lane.b32.xlu0 %v6184, 121
        %v6208 = vpop.permute.xlu0 %6207
        %v6209 = vsel %vm5571, %v6194, %v6196
        %v6210 = vsel %vm5571, %v6198, %v6200
        %v6211 = vsel %vm5571, %v6202, %v6204
        %v6212 = vsel %vm5571, %v6206, %v6208
        %v6221 = vadd.f32 %v6153, %v6209
        %v6222 = vadd.f32 %v6154, %v6196
        %v6223 = vadd.f32 %v6155, %v6210
        %v6224 = vadd.f32 %v6156, %v6200
        %v6225 = vadd.f32 %v6157, %v6211
        %v6226 = vadd.f32 %v6158, %v6204
        %v6227 = vadd.f32 %v6159, %v6212
        %v6228 = vadd.f32 %v6160, %v6208
        %6229 = vset.pattern.permute.xlu0 10
        %6230 = vperm.xlu0 %6229, %v6121
        %v6231 = vpop.permute.xlu0 %6230
        %6233 = vset.pattern.permute.xlu0 10
        %6234 = vperm.xlu0 %6233, %v6122
        %v6235 = vpop.permute.xlu0 %6234
        %6237 = vset.pattern.permute.xlu0 10
        %6238 = vperm.xlu0 %6237, %v6123
        %v6239 = vpop.permute.xlu0 %6238
        %6241 = vset.pattern.permute.xlu0 10
        %6242 = vperm.xlu0 %6241, %v6124
        %v6243 = vpop.permute.xlu0 %6242
        %v6245 = vmul.f32 %v6125, %v6231
        %v6246 = vmul.f32 %v6126, %v6231
        %v6247 = vmul.f32 %v6127, %v6235
        %v6248 = vmul.f32 %v6128, %v6235
        %v6249 = vmul.f32 %v6129, %v6239
        %v6250 = vmul.f32 %v6130, %v6239
        %v6251 = vmul.f32 %v6131, %v6243
        %v6252 = vmul.f32 %v6132, %v6243
        %6261 = vrot.lane.b32.xlu0 %v6245, 114
        %v6262 = vpop.permute.xlu0 %6261
        %6263 = vrot.lane.b32.xlu0 %v6246, 114
        %v6264 = vpop.permute.xlu0 %6263
        %6265 = vrot.lane.b32.xlu0 %v6247, 114
        %v6266 = vpop.permute.xlu0 %6265
        %6267 = vrot.lane.b32.xlu0 %v6248, 114
        %v6268 = vpop.permute.xlu0 %6267
        %6269 = vrot.lane.b32.xlu0 %v6249, 114
        %v6270 = vpop.permute.xlu0 %6269
        %6271 = vrot.lane.b32.xlu0 %v6250, 114
        %v6272 = vpop.permute.xlu0 %6271
        %6273 = vrot.lane.b32.xlu0 %v6251, 114
        %v6274 = vpop.permute.xlu0 %6273
        %6275 = vrot.lane.b32.xlu0 %v6252, 114
        %v6276 = vpop.permute.xlu0 %6275
        %v6277 = vsel %vm1696, %v6262, %v6264
        %v6278 = vsel %vm1696, %v6266, %v6268
        %v6279 = vsel %vm1696, %v6270, %v6272
        %v6280 = vsel %vm1696, %v6274, %v6276
        %v6289 = vadd.f32 %v6221, %v6277
        %v6290 = vadd.f32 %v6222, %v6264
        %v6291 = vadd.f32 %v6223, %v6278
        %v6292 = vadd.f32 %v6224, %v6268
        %v6293 = vadd.f32 %v6225, %v6279
        %v6294 = vadd.f32 %v6226, %v6272
        %v6295 = vadd.f32 %v6227, %v6280
        %v6296 = vadd.f32 %v6228, %v6276
        %6297 = vset.pattern.permute.xlu0 15
        %6298 = vperm.xlu0 %6297, %v6121
        %v6299 = vpop.permute.xlu0 %6298
        %6301 = vset.pattern.permute.xlu0 15
        %6302 = vperm.xlu0 %6301, %v6122
        %v6303 = vpop.permute.xlu0 %6302
        %6305 = vset.pattern.permute.xlu0 15
        %6306 = vperm.xlu0 %6305, %v6123
        %v6307 = vpop.permute.xlu0 %6306
        %6309 = vset.pattern.permute.xlu0 15
        %6310 = vperm.xlu0 %6309, %v6124
        %v6311 = vpop.permute.xlu0 %6310
        %v6313 = vmul.f32 %v6126, %v6299
        %v6314 = vmul.f32 %v6128, %v6303
        %v6315 = vmul.f32 %v6130, %v6307
        %v6316 = vmul.f32 %v6132, %v6311
        %6321 = vrot.lane.b32.xlu0 %v6313, 107
        %v6322 = vpop.permute.xlu0 %6321
        %6323 = vrot.lane.b32.xlu0 %v6314, 107
        %v6324 = vpop.permute.xlu0 %6323
        %6325 = vrot.lane.b32.xlu0 %v6315, 107
        %v6326 = vpop.permute.xlu0 %6325
        %6327 = vrot.lane.b32.xlu0 %v6316, 107
        %v6328 = vpop.permute.xlu0 %6327
        %v6333 = vadd.f32 %v6289, %v6322
        %v6334 = vadd.f32 %v6290, %v6322
        %v6335 = vadd.f32 %v6291, %v6324
        %v6336 = vadd.f32 %v6292, %v6324
        %v6337 = vadd.f32 %v6293, %v6326
        %v6338 = vadd.f32 %v6294, %v6326
        %v6339 = vadd.f32 %v6295, %v6328
        %v6340 = vadd.f32 %v6296, %v6328
        %6341 = vset.pattern.permute.xlu0 20
        %6342 = vperm.xlu0 %6341, %v6121
        %v6343 = vpop.permute.xlu0 %6342
        %6345 = vset.pattern.permute.xlu0 20
        %6346 = vperm.xlu0 %6345, %v6122
        %v6347 = vpop.permute.xlu0 %6346
        %6349 = vset.pattern.permute.xlu0 20
        %6350 = vperm.xlu0 %6349, %v6123
        %v6351 = vpop.permute.xlu0 %6350
        %6353 = vset.pattern.permute.xlu0 20
        %6354 = vperm.xlu0 %6353, %v6124
        %v6355 = vpop.permute.xlu0 %6354
        %v6357 = vmul.f32 %v6126, %v6343
        %v6358 = vmul.f32 %v6128, %v6347
        %v6359 = vmul.f32 %v6130, %v6351
        %v6360 = vmul.f32 %v6132, %v6355
        %6365 = vrot.lane.b32.xlu0 %v6357, 100
        %v6366 = vpop.permute.xlu0 %6365
        %6367 = vrot.lane.b32.xlu0 %v6358, 100
        %v6368 = vpop.permute.xlu0 %6367
        %6369 = vrot.lane.b32.xlu0 %v6359, 100
        %v6370 = vpop.permute.xlu0 %6369
        %6371 = vrot.lane.b32.xlu0 %v6360, 100
        %v6372 = vpop.permute.xlu0 %6371
        %v6377 = vadd.f32 %v6333, %v6366
        %v6378 = vadd.f32 %v6334, %v6366
        %v6379 = vadd.f32 %v6335, %v6368
        %v6380 = vadd.f32 %v6336, %v6368
        %v6381 = vadd.f32 %v6337, %v6370
        %v6382 = vadd.f32 %v6338, %v6370
        %v6383 = vadd.f32 %v6339, %v6372
        %v6384 = vadd.f32 %v6340, %v6372
        %v6385 = vlaneseq
        %v6386 = vshrl.u32 %v6385, 7
        %v6387 = vsub.s32 0, %v6386
        %v6388 = vrot.slane %v5466, %v6387
        %6390 = vrot.lane.b32.xlu0 %v6388, 112
        %v6391 = vpop.permute.xlu0 %6390
        %v6393 = vmul.f32 %v6377, %v6391
        %v6394 = vmul.f32 %v6378, %v6391
        %v6395 = vmul.f32 %v6379, %v6391
        %v6396 = vmul.f32 %v6380, %v6391
        %v6397 = vmul.f32 %v6381, %v6391
        %v6398 = vmul.f32 %v6382, %v6391
        %v6399 = vmul.f32 %v6383, %v6391
        %v6400 = vmul.f32 %v6384, %v6391
        %6401 = vset.pattern.permute.xlu0 1
        %6402 = vperm.xlu0 %6401, %v6121
        %v6403 = vpop.permute.xlu0 %6402
        %6405 = vset.pattern.permute.xlu0 1
        %6406 = vperm.xlu0 %6405, %v6122
        %v6407 = vpop.permute.xlu0 %6406
        %6409 = vset.pattern.permute.xlu0 1
        %6410 = vperm.xlu0 %6409, %v6123
        %v6411 = vpop.permute.xlu0 %6410
        %6413 = vset.pattern.permute.xlu0 1
        %6414 = vperm.xlu0 %6413, %v6124
        %v6415 = vpop.permute.xlu0 %6414
        %v6417 = vmul.f32 %v6125, %v6403
        %v6418 = vmul.f32 %v6126, %v6403
        %v6419 = vmul.f32 %v6127, %v6407
        %v6420 = vmul.f32 %v6128, %v6407
        %v6421 = vmul.f32 %v6129, %v6411
        %v6422 = vmul.f32 %v6130, %v6411
        %v6423 = vmul.f32 %v6131, %v6415
        %v6424 = vmul.f32 %v6132, %v6415
        %6425 = vset.pattern.permute.xlu0 6
        %6426 = vperm.xlu0 %6425, %v6121
        %v6427 = vpop.permute.xlu0 %6426
        %6429 = vset.pattern.permute.xlu0 6
        %6430 = vperm.xlu0 %6429, %v6122
        %v6431 = vpop.permute.xlu0 %6430
        %6433 = vset.pattern.permute.xlu0 6
        %6434 = vperm.xlu0 %6433, %v6123
        %v6435 = vpop.permute.xlu0 %6434
        %6437 = vset.pattern.permute.xlu0 6
        %6438 = vperm.xlu0 %6437, %v6124
        %v6439 = vpop.permute.xlu0 %6438
        %v6441 = vmul.f32 %v6125, %v6427
        %v6442 = vmul.f32 %v6126, %v6427
        %v6443 = vmul.f32 %v6127, %v6431
        %v6444 = vmul.f32 %v6128, %v6431
        %v6445 = vmul.f32 %v6129, %v6435
        %v6446 = vmul.f32 %v6130, %v6435
        %v6447 = vmul.f32 %v6131, %v6439
        %v6448 = vmul.f32 %v6132, %v6439
        %6457 = vrot.lane.b32.xlu0 %v6441, 121
        %v6458 = vpop.permute.xlu0 %6457
        %6459 = vrot.lane.b32.xlu0 %v6442, 121
        %v6460 = vpop.permute.xlu0 %6459
        %6461 = vrot.lane.b32.xlu0 %v6443, 121
        %v6462 = vpop.permute.xlu0 %6461
        %6463 = vrot.lane.b32.xlu0 %v6444, 121
        %v6464 = vpop.permute.xlu0 %6463
        %6465 = vrot.lane.b32.xlu0 %v6445, 121
        %v6466 = vpop.permute.xlu0 %6465
        %6467 = vrot.lane.b32.xlu0 %v6446, 121
        %v6468 = vpop.permute.xlu0 %6467
        %6469 = vrot.lane.b32.xlu0 %v6447, 121
        %v6470 = vpop.permute.xlu0 %6469
        %6471 = vrot.lane.b32.xlu0 %v6448, 121
        %v6472 = vpop.permute.xlu0 %6471
        %v6473 = vsel %vm5571, %v6458, %v6460
        %v6474 = vsel %vm5571, %v6462, %v6464
        %v6475 = vsel %vm5571, %v6466, %v6468
        %v6476 = vsel %vm5571, %v6470, %v6472
        %v6485 = vadd.f32 %v6417, %v6473
        %v6486 = vadd.f32 %v6418, %v6460
        %v6487 = vadd.f32 %v6419, %v6474
        %v6488 = vadd.f32 %v6420, %v6464
        %v6489 = vadd.f32 %v6421, %v6475
        %v6490 = vadd.f32 %v6422, %v6468
        %v6491 = vadd.f32 %v6423, %v6476
        %v6492 = vadd.f32 %v6424, %v6472
        %6493 = vset.pattern.permute.xlu0 11
        %6494 = vperm.xlu0 %6493, %v6121
        %v6495 = vpop.permute.xlu0 %6494
        %6497 = vset.pattern.permute.xlu0 11
        %6498 = vperm.xlu0 %6497, %v6122
        %v6499 = vpop.permute.xlu0 %6498
        %6501 = vset.pattern.permute.xlu0 11
        %6502 = vperm.xlu0 %6501, %v6123
        %v6503 = vpop.permute.xlu0 %6502
        %6505 = vset.pattern.permute.xlu0 11
        %6506 = vperm.xlu0 %6505, %v6124
        %v6507 = vpop.permute.xlu0 %6506
        %v6509 = vmul.f32 %v6125, %v6495
        %v6510 = vmul.f32 %v6126, %v6495
        %v6511 = vmul.f32 %v6127, %v6499
        %v6512 = vmul.f32 %v6128, %v6499
        %v6513 = vmul.f32 %v6129, %v6503
        %v6514 = vmul.f32 %v6130, %v6503
        %v6515 = vmul.f32 %v6131, %v6507
        %v6516 = vmul.f32 %v6132, %v6507
        %6525 = vrot.lane.b32.xlu0 %v6509, 114
        %v6526 = vpop.permute.xlu0 %6525
        %6527 = vrot.lane.b32.xlu0 %v6510, 114
        %v6528 = vpop.permute.xlu0 %6527
        %6529 = vrot.lane.b32.xlu0 %v6511, 114
        %v6530 = vpop.permute.xlu0 %6529
        %6531 = vrot.lane.b32.xlu0 %v6512, 114
        %v6532 = vpop.permute.xlu0 %6531
        %6533 = vrot.lane.b32.xlu0 %v6513, 114
        %v6534 = vpop.permute.xlu0 %6533
        %6535 = vrot.lane.b32.xlu0 %v6514, 114
        %v6536 = vpop.permute.xlu0 %6535
        %6537 = vrot.lane.b32.xlu0 %v6515, 114
        %v6538 = vpop.permute.xlu0 %6537
        %6539 = vrot.lane.b32.xlu0 %v6516, 114
        %v6540 = vpop.permute.xlu0 %6539
        %v6541 = vsel %vm1696, %v6526, %v6528
        %v6542 = vsel %vm1696, %v6530, %v6532
        %v6543 = vsel %vm1696, %v6534, %v6536
        %v6544 = vsel %vm1696, %v6538, %v6540
        %v6553 = vadd.f32 %v6485, %v6541
        %v6554 = vadd.f32 %v6486, %v6528
        %v6555 = vadd.f32 %v6487, %v6542
        %v6556 = vadd.f32 %v6488, %v6532
        %v6557 = vadd.f32 %v6489, %v6543
        %v6558 = vadd.f32 %v6490, %v6536
        %v6559 = vadd.f32 %v6491, %v6544
        %v6560 = vadd.f32 %v6492, %v6540
        %6561 = vset.pattern.permute.xlu0 16
        %6562 = vperm.xlu0 %6561, %v6121
        %v6563 = vpop.permute.xlu0 %6562
        %6565 = vset.pattern.permute.xlu0 16
        %6566 = vperm.xlu0 %6565, %v6122
        %v6567 = vpop.permute.xlu0 %6566
        %6569 = vset.pattern.permute.xlu0 16
        %6570 = vperm.xlu0 %6569, %v6123
        %v6571 = vpop.permute.xlu0 %6570
        %6573 = vset.pattern.permute.xlu0 16
        %6574 = vperm.xlu0 %6573, %v6124
        %v6575 = vpop.permute.xlu0 %6574
        %v6577 = vmul.f32 %v6126, %v6563
        %v6578 = vmul.f32 %v6128, %v6567
        %v6579 = vmul.f32 %v6130, %v6571
        %v6580 = vmul.f32 %v6132, %v6575
        %6585 = vrot.lane.b32.xlu0 %v6577, 107
        %v6586 = vpop.permute.xlu0 %6585
        %6587 = vrot.lane.b32.xlu0 %v6578, 107
        %v6588 = vpop.permute.xlu0 %6587
        %6589 = vrot.lane.b32.xlu0 %v6579, 107
        %v6590 = vpop.permute.xlu0 %6589
        %6591 = vrot.lane.b32.xlu0 %v6580, 107
        %v6592 = vpop.permute.xlu0 %6591
        %v6597 = vadd.f32 %v6553, %v6586
        %v6598 = vadd.f32 %v6554, %v6586
        %v6599 = vadd.f32 %v6555, %v6588
        %v6600 = vadd.f32 %v6556, %v6588
        %v6601 = vadd.f32 %v6557, %v6590
        %v6602 = vadd.f32 %v6558, %v6590
        %v6603 = vadd.f32 %v6559, %v6592
        %v6604 = vadd.f32 %v6560, %v6592
        %6605 = vset.pattern.permute.xlu0 21
        %6606 = vperm.xlu0 %6605, %v6121
        %v6607 = vpop.permute.xlu0 %6606
        %6609 = vset.pattern.permute.xlu0 21
        %6610 = vperm.xlu0 %6609, %v6122
        %v6611 = vpop.permute.xlu0 %6610
        %6613 = vset.pattern.permute.xlu0 21
        %6614 = vperm.xlu0 %6613, %v6123
        %v6615 = vpop.permute.xlu0 %6614
        %6617 = vset.pattern.permute.xlu0 21
        %6618 = vperm.xlu0 %6617, %v6124
        %v6619 = vpop.permute.xlu0 %6618
        %v6621 = vmul.f32 %v6126, %v6607
        %v6622 = vmul.f32 %v6128, %v6611
        %v6623 = vmul.f32 %v6130, %v6615
        %v6624 = vmul.f32 %v6132, %v6619
        %6629 = vrot.lane.b32.xlu0 %v6621, 100
        %v6630 = vpop.permute.xlu0 %6629
        %6631 = vrot.lane.b32.xlu0 %v6622, 100
        %v6632 = vpop.permute.xlu0 %6631
        %6633 = vrot.lane.b32.xlu0 %v6623, 100
        %v6634 = vpop.permute.xlu0 %6633
        %6635 = vrot.lane.b32.xlu0 %v6624, 100
        %v6636 = vpop.permute.xlu0 %6635
        %v6641 = vadd.f32 %v6597, %v6630
        %v6642 = vadd.f32 %v6598, %v6630
        %v6643 = vadd.f32 %v6599, %v6632
        %v6644 = vadd.f32 %v6600, %v6632
        %v6645 = vadd.f32 %v6601, %v6634
        %v6646 = vadd.f32 %v6602, %v6634
        %v6647 = vadd.f32 %v6603, %v6636
        %v6648 = vadd.f32 %v6604, %v6636
        %6649 = vrot.lane.b32.xlu0 %v5639, 113
        %v6650 = vpop.permute.xlu0 %6649
        %v6652 = vmul.f32 %v6641, %v6650
        %v6653 = vmul.f32 %v6642, %v6650
        %v6654 = vmul.f32 %v6643, %v6650
        %v6655 = vmul.f32 %v6644, %v6650
        %v6656 = vmul.f32 %v6645, %v6650
        %v6657 = vmul.f32 %v6646, %v6650
        %v6658 = vmul.f32 %v6647, %v6650
        %v6659 = vmul.f32 %v6648, %v6650
        %6668 = vrot.lane.b32.xlu0 %v6652, 127
        %v6669 = vpop.permute.xlu0 %6668
        %6670 = vrot.lane.b32.xlu0 %v6653, 127
        %v6671 = vpop.permute.xlu0 %6670
        %6672 = vrot.lane.b32.xlu0 %v6654, 127
        %v6673 = vpop.permute.xlu0 %6672
        %6674 = vrot.lane.b32.xlu0 %v6655, 127
        %v6675 = vpop.permute.xlu0 %6674
        %6676 = vrot.lane.b32.xlu0 %v6656, 127
        %v6677 = vpop.permute.xlu0 %6676
        %6678 = vrot.lane.b32.xlu0 %v6657, 127
        %v6679 = vpop.permute.xlu0 %6678
        %6680 = vrot.lane.b32.xlu0 %v6658, 127
        %v6681 = vpop.permute.xlu0 %6680
        %6682 = vrot.lane.b32.xlu0 %v6659, 127
        %v6683 = vpop.permute.xlu0 %6682
        %v6684 = vsel %vm1909, %v6669, %v6671
        %v6685 = vsel %vm1909, %v6673, %v6675
        %v6686 = vsel %vm1909, %v6677, %v6679
        %v6687 = vsel %vm1909, %v6681, %v6683
        %v6696 = vadd.f32 %v6393, %v6684
        %v6697 = vadd.f32 %v6394, %v6671
        %v6698 = vadd.f32 %v6395, %v6685
        %v6699 = vadd.f32 %v6396, %v6675
        %v6700 = vadd.f32 %v6397, %v6686
        %v6701 = vadd.f32 %v6398, %v6679
        %v6702 = vadd.f32 %v6399, %v6687
        %v6703 = vadd.f32 %v6400, %v6683
        %6704 = vset.pattern.permute.xlu0 2
        %6705 = vperm.xlu0 %6704, %v6121
        %v6706 = vpop.permute.xlu0 %6705
        %6708 = vset.pattern.permute.xlu0 2
        %6709 = vperm.xlu0 %6708, %v6122
        %v6710 = vpop.permute.xlu0 %6709
        %6712 = vset.pattern.permute.xlu0 2
        %6713 = vperm.xlu0 %6712, %v6123
        %v6714 = vpop.permute.xlu0 %6713
        %6716 = vset.pattern.permute.xlu0 2
        %6717 = vperm.xlu0 %6716, %v6124
        %v6718 = vpop.permute.xlu0 %6717
        %v6720 = vmul.f32 %v6125, %v6706
        %v6721 = vmul.f32 %v6126, %v6706
        %v6722 = vmul.f32 %v6127, %v6710
        %v6723 = vmul.f32 %v6128, %v6710
        %v6724 = vmul.f32 %v6129, %v6714
        %v6725 = vmul.f32 %v6130, %v6714
        %v6726 = vmul.f32 %v6131, %v6718
        %v6727 = vmul.f32 %v6132, %v6718
        %6728 = vset.pattern.permute.xlu0 7
        %6729 = vperm.xlu0 %6728, %v6121
        %v6730 = vpop.permute.xlu0 %6729
        %6732 = vset.pattern.permute.xlu0 7
        %6733 = vperm.xlu0 %6732, %v6122
        %v6734 = vpop.permute.xlu0 %6733
        %6736 = vset.pattern.permute.xlu0 7
        %6737 = vperm.xlu0 %6736, %v6123
        %v6738 = vpop.permute.xlu0 %6737
        %6740 = vset.pattern.permute.xlu0 7
        %6741 = vperm.xlu0 %6740, %v6124
        %v6742 = vpop.permute.xlu0 %6741
        %v6744 = vmul.f32 %v6125, %v6730
        %v6745 = vmul.f32 %v6126, %v6730
        %v6746 = vmul.f32 %v6127, %v6734
        %v6747 = vmul.f32 %v6128, %v6734
        %v6748 = vmul.f32 %v6129, %v6738
        %v6749 = vmul.f32 %v6130, %v6738
        %v6750 = vmul.f32 %v6131, %v6742
        %v6751 = vmul.f32 %v6132, %v6742
        %6760 = vrot.lane.b32.xlu0 %v6744, 121
        %v6761 = vpop.permute.xlu0 %6760
        %6762 = vrot.lane.b32.xlu0 %v6745, 121
        %v6763 = vpop.permute.xlu0 %6762
        %6764 = vrot.lane.b32.xlu0 %v6746, 121
        %v6765 = vpop.permute.xlu0 %6764
        %6766 = vrot.lane.b32.xlu0 %v6747, 121
        %v6767 = vpop.permute.xlu0 %6766
        %6768 = vrot.lane.b32.xlu0 %v6748, 121
        %v6769 = vpop.permute.xlu0 %6768
        %6770 = vrot.lane.b32.xlu0 %v6749, 121
        %v6771 = vpop.permute.xlu0 %6770
        %6772 = vrot.lane.b32.xlu0 %v6750, 121
        %v6773 = vpop.permute.xlu0 %6772
        %6774 = vrot.lane.b32.xlu0 %v6751, 121
        %v6775 = vpop.permute.xlu0 %6774
        %v6776 = vsel %vm5571, %v6761, %v6763
        %v6777 = vsel %vm5571, %v6765, %v6767
        %v6778 = vsel %vm5571, %v6769, %v6771
        %v6779 = vsel %vm5571, %v6773, %v6775
        %v6788 = vadd.f32 %v6720, %v6776
        %v6789 = vadd.f32 %v6721, %v6763
        %v6790 = vadd.f32 %v6722, %v6777
        %v6791 = vadd.f32 %v6723, %v6767
        %v6792 = vadd.f32 %v6724, %v6778
        %v6793 = vadd.f32 %v6725, %v6771
        %v6794 = vadd.f32 %v6726, %v6779
        %v6795 = vadd.f32 %v6727, %v6775
        %6796 = vset.pattern.permute.xlu0 12
        %6797 = vperm.xlu0 %6796, %v6121
        %v6798 = vpop.permute.xlu0 %6797
        %6800 = vset.pattern.permute.xlu0 12
        %6801 = vperm.xlu0 %6800, %v6122
        %v6802 = vpop.permute.xlu0 %6801
        %6804 = vset.pattern.permute.xlu0 12
        %6805 = vperm.xlu0 %6804, %v6123
        %v6806 = vpop.permute.xlu0 %6805
        %6808 = vset.pattern.permute.xlu0 12
        %6809 = vperm.xlu0 %6808, %v6124
        %v6810 = vpop.permute.xlu0 %6809
        %v6812 = vmul.f32 %v6126, %v6798
        %v6813 = vmul.f32 %v6128, %v6802
        %v6814 = vmul.f32 %v6130, %v6806
        %v6815 = vmul.f32 %v6132, %v6810
        %6820 = vrot.lane.b32.xlu0 %v6812, 114
        %v6821 = vpop.permute.xlu0 %6820
        %6822 = vrot.lane.b32.xlu0 %v6813, 114
        %v6823 = vpop.permute.xlu0 %6822
        %6824 = vrot.lane.b32.xlu0 %v6814, 114
        %v6825 = vpop.permute.xlu0 %6824
        %6826 = vrot.lane.b32.xlu0 %v6815, 114
        %v6827 = vpop.permute.xlu0 %6826
        %v6832 = vadd.f32 %v6788, %v6821
        %v6833 = vadd.f32 %v6789, %v6821
        %v6834 = vadd.f32 %v6790, %v6823
        %v6835 = vadd.f32 %v6791, %v6823
        %v6836 = vadd.f32 %v6792, %v6825
        %v6837 = vadd.f32 %v6793, %v6825
        %v6838 = vadd.f32 %v6794, %v6827
        %v6839 = vadd.f32 %v6795, %v6827
        %6840 = vset.pattern.permute.xlu0 17
        %6841 = vperm.xlu0 %6840, %v6121
        %v6842 = vpop.permute.xlu0 %6841
        %6844 = vset.pattern.permute.xlu0 17
        %6845 = vperm.xlu0 %6844, %v6122
        %v6846 = vpop.permute.xlu0 %6845
        %6848 = vset.pattern.permute.xlu0 17
        %6849 = vperm.xlu0 %6848, %v6123
        %v6850 = vpop.permute.xlu0 %6849
        %6852 = vset.pattern.permute.xlu0 17
        %6853 = vperm.xlu0 %6852, %v6124
        %v6854 = vpop.permute.xlu0 %6853
        %v6856 = vmul.f32 %v6126, %v6842
        %v6857 = vmul.f32 %v6128, %v6846
        %v6858 = vmul.f32 %v6130, %v6850
        %v6859 = vmul.f32 %v6132, %v6854
        %6864 = vrot.lane.b32.xlu0 %v6856, 107
        %v6865 = vpop.permute.xlu0 %6864
        %6866 = vrot.lane.b32.xlu0 %v6857, 107
        %v6867 = vpop.permute.xlu0 %6866
        %6868 = vrot.lane.b32.xlu0 %v6858, 107
        %v6869 = vpop.permute.xlu0 %6868
        %6870 = vrot.lane.b32.xlu0 %v6859, 107
        %v6871 = vpop.permute.xlu0 %6870
        %v6876 = vadd.f32 %v6832, %v6865
        %v6877 = vadd.f32 %v6833, %v6865
        %v6878 = vadd.f32 %v6834, %v6867
        %v6879 = vadd.f32 %v6835, %v6867
        %v6880 = vadd.f32 %v6836, %v6869
        %v6881 = vadd.f32 %v6837, %v6869
        %v6882 = vadd.f32 %v6838, %v6871
        %v6883 = vadd.f32 %v6839, %v6871
        %6884 = vset.pattern.permute.xlu0 22
        %6885 = vperm.xlu0 %6884, %v6121
        %v6886 = vpop.permute.xlu0 %6885
        %6888 = vset.pattern.permute.xlu0 22
        %6889 = vperm.xlu0 %6888, %v6122
        %v6890 = vpop.permute.xlu0 %6889
        %6892 = vset.pattern.permute.xlu0 22
        %6893 = vperm.xlu0 %6892, %v6123
        %v6894 = vpop.permute.xlu0 %6893
        %6896 = vset.pattern.permute.xlu0 22
        %6897 = vperm.xlu0 %6896, %v6124
        %v6898 = vpop.permute.xlu0 %6897
        %v6900 = vmul.f32 %v6126, %v6886
        %v6901 = vmul.f32 %v6128, %v6890
        %v6902 = vmul.f32 %v6130, %v6894
        %v6903 = vmul.f32 %v6132, %v6898
        %6908 = vrot.lane.b32.xlu0 %v6900, 100
        %v6909 = vpop.permute.xlu0 %6908
        %6910 = vrot.lane.b32.xlu0 %v6901, 100
        %v6911 = vpop.permute.xlu0 %6910
        %6912 = vrot.lane.b32.xlu0 %v6902, 100
        %v6913 = vpop.permute.xlu0 %6912
        %6914 = vrot.lane.b32.xlu0 %v6903, 100
        %v6915 = vpop.permute.xlu0 %6914
        %v6920 = vadd.f32 %v6876, %v6909
        %v6921 = vadd.f32 %v6877, %v6909
        %v6922 = vadd.f32 %v6878, %v6911
        %v6923 = vadd.f32 %v6879, %v6911
        %v6924 = vadd.f32 %v6880, %v6913
        %v6925 = vadd.f32 %v6881, %v6913
        %v6926 = vadd.f32 %v6882, %v6915
        %v6927 = vadd.f32 %v6883, %v6915
        %6928 = vrot.lane.b32.xlu0 %v5767, 114
        %v6929 = vpop.permute.xlu0 %6928
        %v6931 = vmul.f32 %v6920, %v6929
        %v6932 = vmul.f32 %v6921, %v6929
        %v6933 = vmul.f32 %v6922, %v6929
        %v6934 = vmul.f32 %v6923, %v6929
        %v6935 = vmul.f32 %v6924, %v6929
        %v6936 = vmul.f32 %v6925, %v6929
        %v6937 = vmul.f32 %v6926, %v6929
        %v6938 = vmul.f32 %v6927, %v6929
        %6947 = vrot.lane.b32.xlu0 %v6931, 126
        %v6948 = vpop.permute.xlu0 %6947
        %6949 = vrot.lane.b32.xlu0 %v6932, 126
        %v6950 = vpop.permute.xlu0 %6949
        %6951 = vrot.lane.b32.xlu0 %v6933, 126
        %v6952 = vpop.permute.xlu0 %6951
        %6953 = vrot.lane.b32.xlu0 %v6934, 126
        %v6954 = vpop.permute.xlu0 %6953
        %6955 = vrot.lane.b32.xlu0 %v6935, 126
        %v6956 = vpop.permute.xlu0 %6955
        %6957 = vrot.lane.b32.xlu0 %v6936, 126
        %v6958 = vpop.permute.xlu0 %6957
        %6959 = vrot.lane.b32.xlu0 %v6937, 126
        %v6960 = vpop.permute.xlu0 %6959
        %6961 = vrot.lane.b32.xlu0 %v6938, 126
        %v6962 = vpop.permute.xlu0 %6961
        %v6963 = vsel %vm2059, %v6948, %v6950
        %v6964 = vsel %vm2059, %v6952, %v6954
        %v6965 = vsel %vm2059, %v6956, %v6958
        %v6966 = vsel %vm2059, %v6960, %v6962
        %v6975 = vadd.f32 %v6696, %v6963
        %v6976 = vadd.f32 %v6697, %v6950
        %v6977 = vadd.f32 %v6698, %v6964
        %v6978 = vadd.f32 %v6699, %v6954
        %v6979 = vadd.f32 %v6700, %v6965
        %v6980 = vadd.f32 %v6701, %v6958
        %v6981 = vadd.f32 %v6702, %v6966
        %v6982 = vadd.f32 %v6703, %v6962
        %6983 = vset.pattern.permute.xlu0 3
        %6984 = vperm.xlu0 %6983, %v6121
        %v6985 = vpop.permute.xlu0 %6984
        %6987 = vset.pattern.permute.xlu0 3
        %6988 = vperm.xlu0 %6987, %v6122
        %v6989 = vpop.permute.xlu0 %6988
        %6991 = vset.pattern.permute.xlu0 3
        %6992 = vperm.xlu0 %6991, %v6123
        %v6993 = vpop.permute.xlu0 %6992
        %6995 = vset.pattern.permute.xlu0 3
        %6996 = vperm.xlu0 %6995, %v6124
        %v6997 = vpop.permute.xlu0 %6996
        %v6999 = vmul.f32 %v6125, %v6985
        %v7000 = vmul.f32 %v6126, %v6985
        %v7001 = vmul.f32 %v6127, %v6989
        %v7002 = vmul.f32 %v6128, %v6989
        %v7003 = vmul.f32 %v6129, %v6993
        %v7004 = vmul.f32 %v6130, %v6993
        %v7005 = vmul.f32 %v6131, %v6997
        %v7006 = vmul.f32 %v6132, %v6997
        %7007 = vset.pattern.permute.xlu0 8
        %7008 = vperm.xlu0 %7007, %v6121
        %v7009 = vpop.permute.xlu0 %7008
        %7011 = vset.pattern.permute.xlu0 8
        %7012 = vperm.xlu0 %7011, %v6122
        %v7013 = vpop.permute.xlu0 %7012
        %7015 = vset.pattern.permute.xlu0 8
        %7016 = vperm.xlu0 %7015, %v6123
        %v7017 = vpop.permute.xlu0 %7016
        %7019 = vset.pattern.permute.xlu0 8
        %7020 = vperm.xlu0 %7019, %v6124
        %v7021 = vpop.permute.xlu0 %7020
        %v7023 = vmul.f32 %v6125, %v7009
        %v7024 = vmul.f32 %v6126, %v7009
        %v7025 = vmul.f32 %v6127, %v7013
        %v7026 = vmul.f32 %v6128, %v7013
        %v7027 = vmul.f32 %v6129, %v7017
        %v7028 = vmul.f32 %v6130, %v7017
        %v7029 = vmul.f32 %v6131, %v7021
        %v7030 = vmul.f32 %v6132, %v7021
        %7039 = vrot.lane.b32.xlu0 %v7023, 121
        %v7040 = vpop.permute.xlu0 %7039
        %7041 = vrot.lane.b32.xlu0 %v7024, 121
        %v7042 = vpop.permute.xlu0 %7041
        %7043 = vrot.lane.b32.xlu0 %v7025, 121
        %v7044 = vpop.permute.xlu0 %7043
        %7045 = vrot.lane.b32.xlu0 %v7026, 121
        %v7046 = vpop.permute.xlu0 %7045
        %7047 = vrot.lane.b32.xlu0 %v7027, 121
        %v7048 = vpop.permute.xlu0 %7047
        %7049 = vrot.lane.b32.xlu0 %v7028, 121
        %v7050 = vpop.permute.xlu0 %7049
        %7051 = vrot.lane.b32.xlu0 %v7029, 121
        %v7052 = vpop.permute.xlu0 %7051
        %7053 = vrot.lane.b32.xlu0 %v7030, 121
        %v7054 = vpop.permute.xlu0 %7053
        %v7055 = vsel %vm5571, %v7040, %v7042
        %v7056 = vsel %vm5571, %v7044, %v7046
        %v7057 = vsel %vm5571, %v7048, %v7050
        %v7058 = vsel %vm5571, %v7052, %v7054
        %v7067 = vadd.f32 %v6999, %v7055
        %v7068 = vadd.f32 %v7000, %v7042
        %v7069 = vadd.f32 %v7001, %v7056
        %v7070 = vadd.f32 %v7002, %v7046
        %v7071 = vadd.f32 %v7003, %v7057
        %v7072 = vadd.f32 %v7004, %v7050
        %v7073 = vadd.f32 %v7005, %v7058
        %v7074 = vadd.f32 %v7006, %v7054
        %7075 = vset.pattern.permute.xlu0 13
        %7076 = vperm.xlu0 %7075, %v6121
        %v7077 = vpop.permute.xlu0 %7076
        %7079 = vset.pattern.permute.xlu0 13
        %7080 = vperm.xlu0 %7079, %v6122
        %v7081 = vpop.permute.xlu0 %7080
        %7083 = vset.pattern.permute.xlu0 13
        %7084 = vperm.xlu0 %7083, %v6123
        %v7085 = vpop.permute.xlu0 %7084
        %7087 = vset.pattern.permute.xlu0 13
        %7088 = vperm.xlu0 %7087, %v6124
        %v7089 = vpop.permute.xlu0 %7088
        %v7091 = vmul.f32 %v6126, %v7077
        %v7092 = vmul.f32 %v6128, %v7081
        %v7093 = vmul.f32 %v6130, %v7085
        %v7094 = vmul.f32 %v6132, %v7089
        %7099 = vrot.lane.b32.xlu0 %v7091, 114
        %v7100 = vpop.permute.xlu0 %7099
        %7101 = vrot.lane.b32.xlu0 %v7092, 114
        %v7102 = vpop.permute.xlu0 %7101
        %7103 = vrot.lane.b32.xlu0 %v7093, 114
        %v7104 = vpop.permute.xlu0 %7103
        %7105 = vrot.lane.b32.xlu0 %v7094, 114
        %v7106 = vpop.permute.xlu0 %7105
        %v7111 = vadd.f32 %v7067, %v7100
        %v7112 = vadd.f32 %v7068, %v7100
        %v7113 = vadd.f32 %v7069, %v7102
        %v7114 = vadd.f32 %v7070, %v7102
        %v7115 = vadd.f32 %v7071, %v7104
        %v7116 = vadd.f32 %v7072, %v7104
        %v7117 = vadd.f32 %v7073, %v7106
        %v7118 = vadd.f32 %v7074, %v7106
        %7119 = vset.pattern.permute.xlu0 18
        %7120 = vperm.xlu0 %7119, %v6121
        %v7121 = vpop.permute.xlu0 %7120
        %7123 = vset.pattern.permute.xlu0 18
        %7124 = vperm.xlu0 %7123, %v6122
        %v7125 = vpop.permute.xlu0 %7124
        %7127 = vset.pattern.permute.xlu0 18
        %7128 = vperm.xlu0 %7127, %v6123
        %v7129 = vpop.permute.xlu0 %7128
        %7131 = vset.pattern.permute.xlu0 18
        %7132 = vperm.xlu0 %7131, %v6124
        %v7133 = vpop.permute.xlu0 %7132
        %v7135 = vmul.f32 %v6126, %v7121
        %v7136 = vmul.f32 %v6128, %v7125
        %v7137 = vmul.f32 %v6130, %v7129
        %v7138 = vmul.f32 %v6132, %v7133
        %7143 = vrot.lane.b32.xlu0 %v7135, 107
        %v7144 = vpop.permute.xlu0 %7143
        %7145 = vrot.lane.b32.xlu0 %v7136, 107
        %v7146 = vpop.permute.xlu0 %7145
        %7147 = vrot.lane.b32.xlu0 %v7137, 107
        %v7148 = vpop.permute.xlu0 %7147
        %7149 = vrot.lane.b32.xlu0 %v7138, 107
        %v7150 = vpop.permute.xlu0 %7149
        %v7155 = vadd.f32 %v7111, %v7144
        %v7156 = vadd.f32 %v7112, %v7144
        %v7157 = vadd.f32 %v7113, %v7146
        %v7158 = vadd.f32 %v7114, %v7146
        %v7159 = vadd.f32 %v7115, %v7148
        %v7160 = vadd.f32 %v7116, %v7148
        %v7161 = vadd.f32 %v7117, %v7150
        %v7162 = vadd.f32 %v7118, %v7150
        %7163 = vset.pattern.permute.xlu0 23
        %7164 = vperm.xlu0 %7163, %v6121
        %v7165 = vpop.permute.xlu0 %7164
        %7167 = vset.pattern.permute.xlu0 23
        %7168 = vperm.xlu0 %7167, %v6122
        %v7169 = vpop.permute.xlu0 %7168
        %7171 = vset.pattern.permute.xlu0 23
        %7172 = vperm.xlu0 %7171, %v6123
        %v7173 = vpop.permute.xlu0 %7172
        %7175 = vset.pattern.permute.xlu0 23
        %7176 = vperm.xlu0 %7175, %v6124
        %v7177 = vpop.permute.xlu0 %7176
        %v7179 = vmul.f32 %v6126, %v7165
        %v7180 = vmul.f32 %v6128, %v7169
        %v7181 = vmul.f32 %v6130, %v7173
        %v7182 = vmul.f32 %v6132, %v7177
        %7187 = vrot.lane.b32.xlu0 %v7179, 100
        %v7188 = vpop.permute.xlu0 %7187
        %7189 = vrot.lane.b32.xlu0 %v7180, 100
        %v7190 = vpop.permute.xlu0 %7189
        %7191 = vrot.lane.b32.xlu0 %v7181, 100
        %v7192 = vpop.permute.xlu0 %7191
        %7193 = vrot.lane.b32.xlu0 %v7182, 100
        %v7194 = vpop.permute.xlu0 %7193
        %v7199 = vadd.f32 %v7155, %v7188
        %v7200 = vadd.f32 %v7156, %v7188
        %v7201 = vadd.f32 %v7157, %v7190
        %v7202 = vadd.f32 %v7158, %v7190
        %v7203 = vadd.f32 %v7159, %v7192
        %v7204 = vadd.f32 %v7160, %v7192
        %v7205 = vadd.f32 %v7161, %v7194
        %v7206 = vadd.f32 %v7162, %v7194
        %7207 = vrot.lane.b32.xlu0 %v5939, 115
        %v7208 = vpop.permute.xlu0 %7207
        %v7210 = vmul.f32 %v7199, %v7208
        %v7211 = vmul.f32 %v7200, %v7208
        %v7212 = vmul.f32 %v7201, %v7208
        %v7213 = vmul.f32 %v7202, %v7208
        %v7214 = vmul.f32 %v7203, %v7208
        %v7215 = vmul.f32 %v7204, %v7208
        %v7216 = vmul.f32 %v7205, %v7208
        %v7217 = vmul.f32 %v7206, %v7208
        %7226 = vrot.lane.b32.xlu0 %v7210, 125
        %v7227 = vpop.permute.xlu0 %7226
        %7228 = vrot.lane.b32.xlu0 %v7211, 125
        %v7229 = vpop.permute.xlu0 %7228
        %7230 = vrot.lane.b32.xlu0 %v7212, 125
        %v7231 = vpop.permute.xlu0 %7230
        %7232 = vrot.lane.b32.xlu0 %v7213, 125
        %v7233 = vpop.permute.xlu0 %7232
        %7234 = vrot.lane.b32.xlu0 %v7214, 125
        %v7235 = vpop.permute.xlu0 %7234
        %7236 = vrot.lane.b32.xlu0 %v7215, 125
        %v7237 = vpop.permute.xlu0 %7236
        %7238 = vrot.lane.b32.xlu0 %v7216, 125
        %v7239 = vpop.permute.xlu0 %7238
        %7240 = vrot.lane.b32.xlu0 %v7217, 125
        %v7241 = vpop.permute.xlu0 %7240
        %v7242 = vsel %vm3076, %v7227, %v7229
        %v7243 = vsel %vm3076, %v7231, %v7233
        %v7244 = vsel %vm3076, %v7235, %v7237
        %v7245 = vsel %vm3076, %v7239, %v7241
        %v7254 = vadd.f32 %v6975, %v7242
        %v7255 = vadd.f32 %v6976, %v7229
        %v7256 = vadd.f32 %v6977, %v7243
        %v7257 = vadd.f32 %v6978, %v7233
        %v7258 = vadd.f32 %v6979, %v7244
        %v7259 = vadd.f32 %v6980, %v7237
        %v7260 = vadd.f32 %v6981, %v7245
        %v7261 = vadd.f32 %v6982, %v7241
        %7262 = vset.pattern.permute.xlu0 4
        %7263 = vperm.xlu0 %7262, %v6121
        %v7264 = vpop.permute.xlu0 %7263
        %7266 = vset.pattern.permute.xlu0 4
        %7267 = vperm.xlu0 %7266, %v6122
        %v7268 = vpop.permute.xlu0 %7267
        %7270 = vset.pattern.permute.xlu0 4
        %7271 = vperm.xlu0 %7270, %v6123
        %v7272 = vpop.permute.xlu0 %7271
        %7274 = vset.pattern.permute.xlu0 4
        %7275 = vperm.xlu0 %7274, %v6124
        %v7276 = vpop.permute.xlu0 %7275
        %v7278 = vmul.f32 %v6125, %v7264
        %v7279 = vmul.f32 %v6126, %v7264
        %v7280 = vmul.f32 %v6127, %v7268
        %v7281 = vmul.f32 %v6128, %v7268
        %v7282 = vmul.f32 %v6129, %v7272
        %v7283 = vmul.f32 %v6130, %v7272
        %v7284 = vmul.f32 %v6131, %v7276
        %v7285 = vmul.f32 %v6132, %v7276
        %7286 = vset.pattern.permute.xlu0 9
        %7287 = vperm.xlu0 %7286, %v6121
        %v7288 = vpop.permute.xlu0 %7287
        %7290 = vset.pattern.permute.xlu0 9
        %7291 = vperm.xlu0 %7290, %v6122
        %v7292 = vpop.permute.xlu0 %7291
        %7294 = vset.pattern.permute.xlu0 9
        %7295 = vperm.xlu0 %7294, %v6123
        %v7296 = vpop.permute.xlu0 %7295
        %7298 = vset.pattern.permute.xlu0 9
        %7299 = vperm.xlu0 %7298, %v6124
        %v7300 = vpop.permute.xlu0 %7299
        %v7302 = vmul.f32 %v6125, %v7288
        %v7303 = vmul.f32 %v6126, %v7288
        %v7304 = vmul.f32 %v6127, %v7292
        %v7305 = vmul.f32 %v6128, %v7292
        %v7306 = vmul.f32 %v6129, %v7296
        %v7307 = vmul.f32 %v6130, %v7296
        %v7308 = vmul.f32 %v6131, %v7300
        %v7309 = vmul.f32 %v6132, %v7300
        %7318 = vrot.lane.b32.xlu0 %v7302, 121
        %v7319 = vpop.permute.xlu0 %7318
        %7320 = vrot.lane.b32.xlu0 %v7303, 121
        %v7321 = vpop.permute.xlu0 %7320
        %7322 = vrot.lane.b32.xlu0 %v7304, 121
        %v7323 = vpop.permute.xlu0 %7322
        %7324 = vrot.lane.b32.xlu0 %v7305, 121
        %v7325 = vpop.permute.xlu0 %7324
        %7326 = vrot.lane.b32.xlu0 %v7306, 121
        %v7327 = vpop.permute.xlu0 %7326
        %7328 = vrot.lane.b32.xlu0 %v7307, 121
        %v7329 = vpop.permute.xlu0 %7328
        %7330 = vrot.lane.b32.xlu0 %v7308, 121
        %v7331 = vpop.permute.xlu0 %7330
        %7332 = vrot.lane.b32.xlu0 %v7309, 121
        %v7333 = vpop.permute.xlu0 %7332
        %v7334 = vsel %vm5571, %v7319, %v7321
        %v7335 = vsel %vm5571, %v7323, %v7325
        %v7336 = vsel %vm5571, %v7327, %v7329
        %v7337 = vsel %vm5571, %v7331, %v7333
        %v7346 = vadd.f32 %v7278, %v7334
        %v7347 = vadd.f32 %v7279, %v7321
        %v7348 = vadd.f32 %v7280, %v7335
        %v7349 = vadd.f32 %v7281, %v7325
        %v7350 = vadd.f32 %v7282, %v7336
        %v7351 = vadd.f32 %v7283, %v7329
        %v7352 = vadd.f32 %v7284, %v7337
        %v7353 = vadd.f32 %v7285, %v7333
        %7354 = vset.pattern.permute.xlu0 14
        %7355 = vperm.xlu0 %7354, %v6121
        %v7356 = vpop.permute.xlu0 %7355
        %7358 = vset.pattern.permute.xlu0 14
        %7359 = vperm.xlu0 %7358, %v6122
        %v7360 = vpop.permute.xlu0 %7359
        %7362 = vset.pattern.permute.xlu0 14
        %7363 = vperm.xlu0 %7362, %v6123
        %v7364 = vpop.permute.xlu0 %7363
        %7366 = vset.pattern.permute.xlu0 14
        %7367 = vperm.xlu0 %7366, %v6124
        %v7368 = vpop.permute.xlu0 %7367
        %v7370 = vmul.f32 %v6126, %v7356
        %v7371 = vmul.f32 %v6128, %v7360
        %v7372 = vmul.f32 %v6130, %v7364
        %v7373 = vmul.f32 %v6132, %v7368
        %7378 = vrot.lane.b32.xlu0 %v7370, 114
        %v7379 = vpop.permute.xlu0 %7378
        %7380 = vrot.lane.b32.xlu0 %v7371, 114
        %v7381 = vpop.permute.xlu0 %7380
        %7382 = vrot.lane.b32.xlu0 %v7372, 114
        %v7383 = vpop.permute.xlu0 %7382
        %7384 = vrot.lane.b32.xlu0 %v7373, 114
        %v7385 = vpop.permute.xlu0 %7384
        %v7390 = vadd.f32 %v7346, %v7379
        %v7391 = vadd.f32 %v7347, %v7379
        %v7392 = vadd.f32 %v7348, %v7381
        %v7393 = vadd.f32 %v7349, %v7381
        %v7394 = vadd.f32 %v7350, %v7383
        %v7395 = vadd.f32 %v7351, %v7383
        %v7396 = vadd.f32 %v7352, %v7385
        %v7397 = vadd.f32 %v7353, %v7385
        %7398 = vset.pattern.permute.xlu0 19
        %7399 = vperm.xlu0 %7398, %v6121
        %v7400 = vpop.permute.xlu0 %7399
        %7402 = vset.pattern.permute.xlu0 19
        %7403 = vperm.xlu0 %7402, %v6122
        %v7404 = vpop.permute.xlu0 %7403
        %7406 = vset.pattern.permute.xlu0 19
        %7407 = vperm.xlu0 %7406, %v6123
        %v7408 = vpop.permute.xlu0 %7407
        %7410 = vset.pattern.permute.xlu0 19
        %7411 = vperm.xlu0 %7410, %v6124
        %v7412 = vpop.permute.xlu0 %7411
        %v7414 = vmul.f32 %v6126, %v7400
        %v7415 = vmul.f32 %v6128, %v7404
        %v7416 = vmul.f32 %v6130, %v7408
        %v7417 = vmul.f32 %v6132, %v7412
        %7422 = vrot.lane.b32.xlu0 %v7414, 107
        %v7423 = vpop.permute.xlu0 %7422
        %7424 = vrot.lane.b32.xlu0 %v7415, 107
        %v7425 = vpop.permute.xlu0 %7424
        %7426 = vrot.lane.b32.xlu0 %v7416, 107
        %v7427 = vpop.permute.xlu0 %7426
        %7428 = vrot.lane.b32.xlu0 %v7417, 107
        %v7429 = vpop.permute.xlu0 %7428
        %v7434 = vadd.f32 %v7390, %v7423
        %v7435 = vadd.f32 %v7391, %v7423
        %v7436 = vadd.f32 %v7392, %v7425
        %v7437 = vadd.f32 %v7393, %v7425
        %v7438 = vadd.f32 %v7394, %v7427
        %v7439 = vadd.f32 %v7395, %v7427
        %v7440 = vadd.f32 %v7396, %v7429
        %v7441 = vadd.f32 %v7397, %v7429
        %7442 = vset.pattern.permute.xlu0 24
        %7443 = vperm.xlu0 %7442, %v6121
        %v7444 = vpop.permute.xlu0 %7443
        %7446 = vset.pattern.permute.xlu0 24
        %7447 = vperm.xlu0 %7446, %v6122
        %v7448 = vpop.permute.xlu0 %7447
        %7450 = vset.pattern.permute.xlu0 24
        %7451 = vperm.xlu0 %7450, %v6123
        %v7452 = vpop.permute.xlu0 %7451
        %7454 = vset.pattern.permute.xlu0 24
        %7455 = vperm.xlu0 %7454, %v6124
        %v7456 = vpop.permute.xlu0 %7455
        %v7458 = vmul.f32 %v6126, %v7444
        %v7459 = vmul.f32 %v6128, %v7448
        %v7460 = vmul.f32 %v6130, %v7452
        %v7461 = vmul.f32 %v6132, %v7456
        %7466 = vrot.lane.b32.xlu0 %v7458, 100
        %v7467 = vpop.permute.xlu0 %7466
        %7468 = vrot.lane.b32.xlu0 %v7459, 100
        %v7469 = vpop.permute.xlu0 %7468
        %7470 = vrot.lane.b32.xlu0 %v7460, 100
        %v7471 = vpop.permute.xlu0 %7470
        %7472 = vrot.lane.b32.xlu0 %v7461, 100
        %v7473 = vpop.permute.xlu0 %7472
        %v7478 = vadd.f32 %v7434, %v7467
        %v7479 = vadd.f32 %v7435, %v7467
        %v7480 = vadd.f32 %v7436, %v7469
        %v7481 = vadd.f32 %v7437, %v7469
        %v7482 = vadd.f32 %v7438, %v7471
        %v7483 = vadd.f32 %v7439, %v7471
        %v7484 = vadd.f32 %v7440, %v7473
        %v7485 = vadd.f32 %v7441, %v7473
        %v7486 = vlaneseq
        %v7487 = vshrl.u32 %v7486, 7
        %v7488 = vsub.s32 4, %v7487
        %v7489 = vrot.slane %v5466, %v7488
        %7491 = vrot.lane.b32.xlu0 %v7489, 116
        %v7492 = vpop.permute.xlu0 %7491
        %v7494 = vmul.f32 %v7478, %v7492
        %v7495 = vmul.f32 %v7479, %v7492
        %v7496 = vmul.f32 %v7480, %v7492
        %v7497 = vmul.f32 %v7481, %v7492
        %v7498 = vmul.f32 %v7482, %v7492
        %v7499 = vmul.f32 %v7483, %v7492
        %v7500 = vmul.f32 %v7484, %v7492
        %v7501 = vmul.f32 %v7485, %v7492
        %7510 = vrot.lane.b32.xlu0 %v7494, 124
        %v7511 = vpop.permute.xlu0 %7510
        %7512 = vrot.lane.b32.xlu0 %v7495, 124
        %v7513 = vpop.permute.xlu0 %7512
        %7514 = vrot.lane.b32.xlu0 %v7496, 124
        %v7515 = vpop.permute.xlu0 %7514
        %7516 = vrot.lane.b32.xlu0 %v7497, 124
        %v7517 = vpop.permute.xlu0 %7516
        %7518 = vrot.lane.b32.xlu0 %v7498, 124
        %v7519 = vpop.permute.xlu0 %7518
        %7520 = vrot.lane.b32.xlu0 %v7499, 124
        %v7521 = vpop.permute.xlu0 %7520
        %7522 = vrot.lane.b32.xlu0 %v7500, 124
        %v7523 = vpop.permute.xlu0 %7522
        %7524 = vrot.lane.b32.xlu0 %v7501, 124
        %v7525 = vpop.permute.xlu0 %7524
        %v7526 = vsel %vm3312, %v7511, %v7513
        %v7527 = vsel %vm3312, %v7515, %v7517
        %v7528 = vsel %vm3312, %v7519, %v7521
        %v7529 = vsel %vm3312, %v7523, %v7525
        %v7538 = vadd.f32 %v7254, %v7526
        %v7539 = vadd.f32 %v7255, %v7513
        %v7540 = vadd.f32 %v7256, %v7527
        %v7541 = vadd.f32 %v7257, %v7517
        %v7542 = vadd.f32 %v7258, %v7528
        %v7543 = vadd.f32 %v7259, %v7521
        %v7544 = vadd.f32 %v7260, %v7529
        %v7545 = vadd.f32 %v7261, %v7525
        %v7546 = vmul.f32 %v7538, %v7538
        %v7547 = vmul.f32 %v7539, %v7539
        %v7548 = vmul.f32 %v7540, %v7540
        %v7549 = vmul.f32 %v7541, %v7541
        %v7550 = vmul.f32 %v7542, %v7542
        %v7551 = vmul.f32 %v7543, %v7543
        %v7552 = vmul.f32 %v7544, %v7544
        %v7553 = vmul.f32 %v7545, %v7545
        %v7554 = vmul.f32 %v7538, %v7546
        %v7555 = vmul.f32 %v7539, %v7547
        %v7556 = vmul.f32 %v7540, %v7548
        %v7557 = vmul.f32 %v7541, %v7549
        %v7558 = vmul.f32 %v7542, %v7550
        %v7559 = vmul.f32 %v7543, %v7551
        %v7560 = vmul.f32 %v7544, %v7552
        %v7561 = vmul.f32 %v7545, %v7553
        %v7562 = vmul.f32 %v7554, 0.044715
        %v7563 = vmul.f32 %v7555, 0.044715
        %v7564 = vmul.f32 %v7556, 0.044715
        %v7565 = vmul.f32 %v7557, 0.044715
        %v7566 = vmul.f32 %v7558, 0.044715
        %v7567 = vmul.f32 %v7559, 0.044715
        %v7568 = vmul.f32 %v7560, 0.044715
        %v7569 = vmul.f32 %v7561, 0.044715
        %v7570 = vadd.f32 %v7538, %v7562
        %v7571 = vadd.f32 %v7539, %v7563
        %v7572 = vadd.f32 %v7540, %v7564
        %v7573 = vadd.f32 %v7541, %v7565
        %v7574 = vadd.f32 %v7542, %v7566
        %v7575 = vadd.f32 %v7543, %v7567
        %v7576 = vadd.f32 %v7544, %v7568
        %v7577 = vadd.f32 %v7545, %v7569
        %v7578 = vmul.f32 %v7570, 0.7978846
        %v7579 = vmul.f32 %v7571, 0.7978846
        %v7580 = vmul.f32 %v7572, 0.7978846
        %v7581 = vmul.f32 %v7573, 0.7978846
        %v7582 = vmul.f32 %v7574, 0.7978846
        %v7583 = vmul.f32 %v7575, 0.7978846
        %v7584 = vmul.f32 %v7576, 0.7978846
        %v7585 = vmul.f32 %v7577, 0.7978846
        %v7586 = vtanh.pop %v7578
        %v7587 = vtanh.pop %v7579
        %v7588 = vtanh.pop %v7580
        %v7589 = vtanh.pop %v7581
        %v7590 = vtanh.pop %v7582
        %v7591 = vtanh.pop %v7583
        %v7592 = vtanh.pop %v7584
        %v7593 = vtanh.pop %v7585
        %v7594 = vadd.f32 %v7586, 1.0
        %v7595 = vadd.f32 %v7587, 1.0
        %v7596 = vadd.f32 %v7588, 1.0
        %v7597 = vadd.f32 %v7589, 1.0
        %v7598 = vadd.f32 %v7590, 1.0
        %v7599 = vadd.f32 %v7591, 1.0
        %v7600 = vadd.f32 %v7592, 1.0
        %v7601 = vadd.f32 %v7593, 1.0
        %v7602 = vmul.f32 %v7594, 0.5
        %v7603 = vmul.f32 %v7595, 0.5
        %v7604 = vmul.f32 %v7596, 0.5
        %v7605 = vmul.f32 %v7597, 0.5
        %v7606 = vmul.f32 %v7598, 0.5
        %v7607 = vmul.f32 %v7599, 0.5
        %v7608 = vmul.f32 %v7600, 0.5
        %v7609 = vmul.f32 %v7601, 0.5
        %v7610 = vmul.f32 %v7538, %v7602
        %v7611 = vmul.f32 %v7539, %v7603
        %v7612 = vmul.f32 %v7540, %v7604
        %v7613 = vmul.f32 %v7541, %v7605
        %v7614 = vmul.f32 %v7542, %v7606
        %v7615 = vmul.f32 %v7543, %v7607
        %v7616 = vmul.f32 %v7544, %v7608
        %v7617 = vmul.f32 %v7545, %v7609
        %v7618 = vlaneseq
        %v7619 = vshrl.u32 %v7618, 7
        %v7620 = vsub.s32 1, %v7619
        %v7621 = vrot.slane %v5463, %v7620
        %7623 = vrot.lane.b32.xlu0 %v7621, 112
        %v7624 = vpop.permute.xlu0 %7623
        %v7626 = vmul.f32 %v7610, %v7624
        %v7627 = vmul.f32 %v7611, %v7624
        %v7628 = vmul.f32 %v7612, %v7624
        %v7629 = vmul.f32 %v7613, %v7624
        %v7630 = vmul.f32 %v7614, %v7624
        %v7631 = vmul.f32 %v7615, %v7624
        %v7632 = vmul.f32 %v7616, %v7624
        %v7633 = vmul.f32 %v7617, %v7624
        %7642 = vrot.lane.b32.xlu0 %v7626, 8
        %v7643 = vpop.permute.xlu0 %7642
        %7644 = vrot.lane.b32.xlu0 %v7627, 8
        %v7645 = vpop.permute.xlu0 %7644
        %7646 = vrot.lane.b32.xlu0 %v7628, 8
        %v7647 = vpop.permute.xlu0 %7646
        %7648 = vrot.lane.b32.xlu0 %v7629, 8
        %v7649 = vpop.permute.xlu0 %7648
        %7650 = vrot.lane.b32.xlu0 %v7630, 8
        %v7651 = vpop.permute.xlu0 %7650
        %7652 = vrot.lane.b32.xlu0 %v7631, 8
        %v7653 = vpop.permute.xlu0 %7652
        %7654 = vrot.lane.b32.xlu0 %v7632, 8
        %v7655 = vpop.permute.xlu0 %7654
        %7656 = vrot.lane.b32.xlu0 %v7633, 8
        %v7657 = vpop.permute.xlu0 %7656
        %v7658 = vsel %vm6108, %v7643, %v7645
        %v7659 = vsel %vm6108, %v7647, %v7649
        %v7660 = vsel %vm6108, %v7651, %v7653
        %v7661 = vsel %vm6108, %v7655, %v7657
        %v7670 = vadd.f32 %v6076, %v7643
        %v7671 = vadd.f32 %v6077, %v7658
        %v7672 = vadd.f32 %v6078, %v7647
        %v7673 = vadd.f32 %v6079, %v7659
        %v7674 = vadd.f32 %v6080, %v7651
        %v7675 = vadd.f32 %v6081, %v7660
        %v7676 = vadd.f32 %v6082, %v7655
        %v7677 = vadd.f32 %v6083, %v7661
        %7686 = vrot.lane.b32.xlu0 %v7610, 16
        %v7687 = vpop.permute.xlu0 %7686
        %7688 = vrot.lane.b32.xlu0 %v7611, 16
        %v7689 = vpop.permute.xlu0 %7688
        %7690 = vrot.lane.b32.xlu0 %v7612, 16
        %v7691 = vpop.permute.xlu0 %7690
        %7692 = vrot.lane.b32.xlu0 %v7613, 16
        %v7693 = vpop.permute.xlu0 %7692
        %7694 = vrot.lane.b32.xlu0 %v7614, 16
        %v7695 = vpop.permute.xlu0 %7694
        %7696 = vrot.lane.b32.xlu0 %v7615, 16
        %v7697 = vpop.permute.xlu0 %7696
        %7698 = vrot.lane.b32.xlu0 %v7616, 16
        %v7699 = vpop.permute.xlu0 %7698
        %7700 = vrot.lane.b32.xlu0 %v7617, 16
        %v7701 = vpop.permute.xlu0 %7700
        %v7702 = vsel %vm1515, %v7687, %v7689
        %v7703 = vsel %vm1515, %v7691, %v7693
        %v7704 = vsel %vm1515, %v7695, %v7697
        %v7705 = vsel %vm1515, %v7699, %v7701
        %v7710 = vsel %vm5127, %v7702, 0.0
        %7711 = vadd.xlane.f32.xlu0 %v7710
        %v7712 = vpop.xlane.xlu0 %7711
        %v7713 = vsel %vm5127, %v7703, 0.0
        %7714 = vadd.xlane.f32.xlu0 %v7713
        %v7715 = vpop.xlane.xlu0 %7714
        %v7716 = vsel %vm5127, %v7704, 0.0
        %7717 = vadd.xlane.f32.xlu0 %v7716
        %v7718 = vpop.xlane.xlu0 %7717
        %v7719 = vsel %vm5127, %v7705, 0.0
        %7720 = vadd.xlane.f32.xlu0 %v7719
        %v7721 = vpop.xlane.xlu0 %7720
        %v7722 = vrcp.pop 49.0
        %v7723 = vmul.f32 %v7712, %v7722
        %v7724 = vmul.f32 %v7715, %v7722
        %v7725 = vmul.f32 %v7718, %v7722
        %v7726 = vmul.f32 %v7721, %v7722
        %v7727 = vmul.f32 %v7723, %v7723
        %v7728 = vmul.f32 %v7724, %v7724
        %v7729 = vmul.f32 %v7725, %v7725
        %v7730 = vmul.f32 %v7726, %v7726
        %v7731 = vmul.f32 %v7723, %v7727
        %v7732 = vmul.f32 %v7724, %v7728
        %v7733 = vmul.f32 %v7725, %v7729
        %v7734 = vmul.f32 %v7726, %v7730
        %v7735 = vmul.f32 %v7731, 0.044715
        %v7736 = vmul.f32 %v7732, 0.044715
        %v7737 = vmul.f32 %v7733, 0.044715
        %v7738 = vmul.f32 %v7734, 0.044715
        %v7739 = vadd.f32 %v7723, %v7735
        %v7740 = vadd.f32 %v7724, %v7736
        %v7741 = vadd.f32 %v7725, %v7737
        %v7742 = vadd.f32 %v7726, %v7738
        %v7743 = vmul.f32 %v7739, 0.7978846
        %v7744 = vmul.f32 %v7740, 0.7978846
        %v7745 = vmul.f32 %v7741, 0.7978846
        %v7746 = vmul.f32 %v7742, 0.7978846
        %v7747 = vtanh.pop %v7743
        %v7748 = vtanh.pop %v7744
        %v7749 = vtanh.pop %v7745
        %v7750 = vtanh.pop %v7746
        %v7751 = vadd.f32 %v7747, 1.0
        %v7752 = vadd.f32 %v7748, 1.0
        %v7753 = vadd.f32 %v7749, 1.0
        %v7754 = vadd.f32 %v7750, 1.0
        %v7755 = vmul.f32 %v7751, 0.5
        %v7756 = vmul.f32 %v7752, 0.5
        %v7757 = vmul.f32 %v7753, 0.5
        %v7758 = vmul.f32 %v7754, 0.5
        %v7759 = vmul.f32 %v7723, %v7755
        %v7760 = vmul.f32 %v7724, %v7756
        %v7761 = vmul.f32 %v7725, %v7757
        %v7762 = vmul.f32 %v7726, %v7758
        %v7763 = vlaneseq
        %v7764 = vshrl.u32 %v7763, 7
        %v7765 = vsub.s32 2, %v7764
        %v7766 = vrot.slane %v5463, %v7765
        %v7767 = vmul.f32 %v7759, %v7766
        %v7768 = vmul.f32 %v7760, %v7766
        %v7769 = vmul.f32 %v7761, %v7766
        %v7770 = vmul.f32 %v7762, %v7766
        %7775 = vrot.lane.b32.xlu0 %v7767, 120
        %v7776 = vpop.permute.xlu0 %7775
        %7777 = vrot.lane.b32.xlu0 %v7768, 120
        %v7778 = vpop.permute.xlu0 %7777
        %7779 = vrot.lane.b32.xlu0 %v7769, 120
        %v7780 = vpop.permute.xlu0 %7779
        %7781 = vrot.lane.b32.xlu0 %v7770, 120
        %v7782 = vpop.permute.xlu0 %7781
        %v7787 = vadd.f32 %v7670, %v7776
        %v7788 = vadd.f32 %v7671, %v7776
        %v7789 = vadd.f32 %v7672, %v7778
        %v7790 = vadd.f32 %v7673, %v7778
        %v7791 = vadd.f32 %v7674, %v7780
        %v7792 = vadd.f32 %v7675, %v7780
        %v7793 = vadd.f32 %v7676, %v7782
        %v7794 = vadd.f32 %v7677, %v7782
        %v7795 = vld [vmem:[%s57] sm:$0xff]
        %v7796 = vld [vmem:[%s57 + $0x8] sm:$0xff]
        %v7797 = vld [vmem:[%s57 + $0x10] sm:$0xff]
        %v7798 = vld [vmem:[%s57 + $0x18] sm:$0xff]
        %v7799 = vld [vmem:[%s59] sm:$0xff]
        %v7800 = vld [vmem:[%s59 + $0x8] sm:$0xff]
        %v7801 = vld [vmem:[%s59 + $0x10] sm:$0xff]
        %v7802 = vld [vmem:[%s59 + $0x18] sm:$0xff]
        %7804 = vset.pattern.permute.xlu0 0
        %7805 = vperm.xlu0 %7804, %v7799
        %v7806 = vpop.permute.xlu0 %7805
        %7809 = vset.pattern.permute.xlu0 0
        %7810 = vperm.xlu0 %7809, %v7800
        %v7811 = vpop.permute.xlu0 %7810
        %7814 = vset.pattern.permute.xlu0 0
        %7815 = vperm.xlu0 %7814, %v7801
        %v7816 = vpop.permute.xlu0 %7815
        %7819 = vset.pattern.permute.xlu0 0
        %7820 = vperm.xlu0 %7819, %v7802
        %v7821 = vpop.permute.xlu0 %7820
        %7831 = vrot.lane.b32.xlu0 %v7787, 8
        %v7832 = vpop.permute.xlu0 %7831
        %7833 = vrot.lane.b32.xlu0 %v7788, 8
        %v7834 = vpop.permute.xlu0 %7833
        %7835 = vrot.lane.b32.xlu0 %v7789, 8
        %v7836 = vpop.permute.xlu0 %7835
        %7837 = vrot.lane.b32.xlu0 %v7790, 8
        %v7838 = vpop.permute.xlu0 %7837
        %7839 = vrot.lane.b32.xlu0 %v7791, 8
        %v7840 = vpop.permute.xlu0 %7839
        %7841 = vrot.lane.b32.xlu0 %v7792, 8
        %v7842 = vpop.permute.xlu0 %7841
        %7843 = vrot.lane.b32.xlu0 %v7793, 8
        %v7844 = vpop.permute.xlu0 %7843
        %7845 = vrot.lane.b32.xlu0 %v7794, 8
        %v7846 = vpop.permute.xlu0 %7845
        %v7847 = vsel %vm6108, %v7832, %v7834
        %v7848 = vsel %vm6108, %v7836, %v7838
        %v7849 = vsel %vm6108, %v7840, %v7842
        %v7850 = vsel %vm6108, %v7844, %v7846
        %v7856 = vsel %vm5328, %v7795, 0
        %v7859 = vsel %vm5328, %v7796, 0
        %v7862 = vsel %vm5328, %v7797, 0
        %v7865 = vsel %vm5328, %v7798, 0
        %7867 = vmatprep.subr.mxu0 0.0
        %7868 = vmatpush1.msra.mxu0 %v7847
        %7869 = vmatprep.subr.mxu0 0.0
        %7870 = vmatpush1.msra.mxu0 %v7848
        %7871 = vmatprep.subr.mxu0 0.0
        %7872 = vmatpush1.msra.mxu0 %v7849
        %7873 = vmatprep.subr.mxu0 0.0
        %7874 = vmatpush1.msra.mxu0 %v7850
        %7875 = vmatprep.subr.mxu0 0.0
        %7876 = vmatpush1.msra.mxu0 0.0
        %7877 = vmatprep.subr.mxu0 0.0
        %7878 = vmatpush1.msra.mxu0 0.0
        %7879 = vmatprep.subr.mxu0 0.0
        %7880 = vmatpush1.msra.mxu0 0.0
        %7881 = vmatprep.subr.mxu0 0.0
        %7882 = vmatpush1.msra.mxu0 0.0
        %7883 = vmatprep.subr.mxu0 0.0
        %7884 = vmatpush1.msra.mxu0 0.0
        %7885 = vmatprep.subr.mxu0 0.0
        %7886 = vmatpush1.msra.mxu0 0.0
        %7887 = vmatprep.subr.mxu0 0.0
        %7888 = vmatpush1.msra.mxu0 0.0
        %7889 = vmatprep.subr.mxu0 0.0
        %7890 = vmatpush1.msra.mxu0 0.0
        %7891 = vmatprep.subr.mxu0 0.0
        %7892 = vmatpush1.msra.mxu0 0.0
        %7893 = vmatprep.subr.mxu0 0.0
        %7894 = vmatpush1.msra.mxu0 0.0
        %7895 = vmatprep.subr.mxu0 0.0
        %7896 = vmatpush1.msra.mxu0 0.0
        %7897 = vmatprep.subr.mxu0 0.0
        %7898 = vmatpush1.msra.mxu0 0.0
        %7899 = vmatprep.subr.mxu0 0.0
        %7900 = vmatpush1.msra.mxu0 0.0
        %7901 = vmatprep.subr.mxu0 0.0
        %7902 = vmatpush1.msra.mxu0 0.0
        %7903 = vmatprep.subr.mxu0 0.0
        %7904 = vmatpush1.msra.mxu0 0.0
        %7905 = vmatprep.subr.mxu0 0.0
        %7906 = vmatpush1.msra.mxu0 0.0
        %7907 = vmatprep.subr.mxu0 0.0
        %7908 = vmatpush1.msra.mxu0 0.0
        %7909 = vmatprep.subr.mxu0 0.0
        %7910 = vmatpush1.msra.mxu0 0.0
        %7911 = vmatprep.subr.mxu0 0.0
        %7912 = vmatpush1.msra.mxu0 0.0
        %7913 = vmatprep.subr.mxu0 0.0
        %7914 = vmatpush1.msra.mxu0 0.0
        %7915 = vmatprep.subr.mxu0 0.0
        %7916 = vmatpush1.msra.mxu0 0.0
        %7917 = vmatprep.subr.mxu0 0.0
        %7918 = vmatpush1.msra.mxu0 0.0
        %7919 = vmatprep.subr.mxu0 0.0
        %7920 = vmatpush1.msra.mxu0 0.0
        %7921 = vmatprep.subr.mxu0 0.0
        %7922 = vmatpush1.msra.mxu0 0.0
        %7923 = vmatprep.subr.mxu0 0.0
        %7924 = vmatpush1.msra.mxu0 0.0
        %7925 = vmatprep.subr.mxu0 0.0
        %7926 = vmatpush1.msra.mxu0 0.0
        %7927 = vmatprep.subr.mxu0 0.0
        %7928 = vmatpush1.msra.mxu0 0.0
        %7929 = vmatprep.subr.mxu0 0.0
        %7930 = vmatpush1.msra.mxu0 0.0
        %7931 = vmatprep.mubr.f32.mxu0 0.0
        %7932 = vmatmul.mubr.f32.gmra.mrb[0].mxu0 %v7856
        %v7933 = vpop.f32.mrb[0].mxu0
        %v7934 = vadd.f32 %v7806, %v7933
        %v7935 = vpop.f32.mrb[0].mxu0
        %7936 = vmatprep.mubr.f32.mxu0 0.0
        %7937 = vmatmul.mubr.f32.gmra.mrb[0].mxu0 %v7859
        %v7938 = vpop.f32.mrb[0].mxu0
        %v7939 = vadd.f32 %v7811, %v7938
        %v7940 = vpop.f32.mrb[0].mxu0
        %7941 = vmatprep.mubr.f32.mxu0 0.0
        %7942 = vmatmul.mubr.f32.gmra.mrb[0].mxu0 %v7862
        %v7943 = vpop.f32.mrb[0].mxu0
        %v7944 = vadd.f32 %v7816, %v7943
        %v7945 = vpop.f32.mrb[0].mxu0
        %7946 = vmatprep.mubr.f32.mxu0 0.0
        %7947 = vmatmul.mubr.f32.gmra.mrb[0].mxu0 %v7865
        %v7948 = vpop.f32.mrb[0].mxu0
        %v7949 = vadd.f32 %v7821, %v7948
        %v7950 = vpop.f32.mrb[0].mxu0
        %7951 = vdwg.mxu0
        %v7952 = vmul.f32 %v5423, %v7934
        %v7953 = vmul.f32 %v5428, %v7939
        %v7954 = vmul.f32 %v5433, %v7944
        %v7955 = vmul.f32 %v5438, %v7949
        %v7956 = vld [vmem:[%s61] sm:$0xff]
        %v7957 = vld [vmem:[%s61 + $0x8] sm:$0xff]
        %v7958 = vld [vmem:[%s61 + $0x10] sm:$0xff]
        %v7959 = vld [vmem:[%s61 + $0x18] sm:$0xff]
        %v7960 = vld [vmem:[%s63] sm:$0xff]
        %v7961 = vld [vmem:[%s63 + $0x8] sm:$0xff]
        %v7962 = vld [vmem:[%s63 + $0x10] sm:$0xff]
        %v7963 = vld [vmem:[%s63 + $0x18] sm:$0xff]
        %7965 = vset.pattern.permute.xlu0 0
        %7966 = vperm.xlu0 %7965, %v7960
        %v7967 = vpop.permute.xlu0 %7966
        %7970 = vset.pattern.permute.xlu0 0
        %7971 = vperm.xlu0 %7970, %v7961
        %v7972 = vpop.permute.xlu0 %7971
        %7975 = vset.pattern.permute.xlu0 0
        %7976 = vperm.xlu0 %7975, %v7962
        %v7977 = vpop.permute.xlu0 %7976
        %7980 = vset.pattern.permute.xlu0 0
        %7981 = vperm.xlu0 %7980, %v7963
        %v7982 = vpop.permute.xlu0 %7981
        %v7985 = vsel %vm5328, %v7956, 0
        %v7988 = vsel %vm5328, %v7957, 0
        %v7991 = vsel %vm5328, %v7958, 0
        %v7994 = vsel %vm5328, %v7959, 0
        %7996 = vmatprep.subr.mxu0 0.0
        %7997 = vmatpush1.msra.mxu0 %v7952
        %7998 = vmatprep.subr.mxu0 0.0
        %7999 = vmatpush1.msra.mxu0 %v7953
        %8000 = vmatprep.subr.mxu0 0.0
        %8001 = vmatpush1.msra.mxu0 %v7954
        %8002 = vmatprep.subr.mxu0 0.0
        %8003 = vmatpush1.msra.mxu0 %v7955
        %8004 = vmatprep.subr.mxu0 0.0
        %8005 = vmatpush1.msra.mxu0 0.0
        %8006 = vmatprep.subr.mxu0 0.0
        %8007 = vmatpush1.msra.mxu0 0.0
        %8008 = vmatprep.subr.mxu0 0.0
        %8009 = vmatpush1.msra.mxu0 0.0
        %8010 = vmatprep.subr.mxu0 0.0
        %8011 = vmatpush1.msra.mxu0 0.0
        %8012 = vmatprep.subr.mxu0 0.0
        %8013 = vmatpush1.msra.mxu0 0.0
        %8014 = vmatprep.subr.mxu0 0.0
        %8015 = vmatpush1.msra.mxu0 0.0
        %8016 = vmatprep.subr.mxu0 0.0
        %8017 = vmatpush1.msra.mxu0 0.0
        %8018 = vmatprep.subr.mxu0 0.0
        %8019 = vmatpush1.msra.mxu0 0.0
        %8020 = vmatprep.subr.mxu0 0.0
        %8021 = vmatpush1.msra.mxu0 0.0
        %8022 = vmatprep.subr.mxu0 0.0
        %8023 = vmatpush1.msra.mxu0 0.0
        %8024 = vmatprep.subr.mxu0 0.0
        %8025 = vmatpush1.msra.mxu0 0.0
        %8026 = vmatprep.subr.mxu0 0.0
        %8027 = vmatpush1.msra.mxu0 0.0
        %8028 = vmatprep.subr.mxu0 0.0
        %8029 = vmatpush1.msra.mxu0 0.0
        %8030 = vmatprep.subr.mxu0 0.0
        %8031 = vmatpush1.msra.mxu0 0.0
        %8032 = vmatprep.subr.mxu0 0.0
        %8033 = vmatpush1.msra.mxu0 0.0
        %8034 = vmatprep.subr.mxu0 0.0
        %8035 = vmatpush1.msra.mxu0 0.0
        %8036 = vmatprep.subr.mxu0 0.0
        %8037 = vmatpush1.msra.mxu0 0.0
        %8038 = vmatprep.subr.mxu0 0.0
        %8039 = vmatpush1.msra.mxu0 0.0
        %8040 = vmatprep.subr.mxu0 0.0
        %8041 = vmatpush1.msra.mxu0 0.0
        %8042 = vmatprep.subr.mxu0 0.0
        %8043 = vmatpush1.msra.mxu0 0.0
        %8044 = vmatprep.subr.mxu0 0.0
        %8045 = vmatpush1.msra.mxu0 0.0
        %8046 = vmatprep.subr.mxu0 0.0
        %8047 = vmatpush1.msra.mxu0 0.0
        %8048 = vmatprep.subr.mxu0 0.0
        %8049 = vmatpush1.msra.mxu0 0.0
        %8050 = vmatprep.subr.mxu0 0.0
        %8051 = vmatpush1.msra.mxu0 0.0
        %8052 = vmatprep.subr.mxu0 0.0
        %8053 = vmatpush1.msra.mxu0 0.0
        %8054 = vmatprep.subr.mxu0 0.0
        %8055 = vmatpush1.msra.mxu0 0.0
        %8056 = vmatprep.subr.mxu0 0.0
        %8057 = vmatpush1.msra.mxu0 0.0
        %8058 = vmatprep.subr.mxu0 0.0
        %8059 = vmatpush1.msra.mxu0 0.0
        %8060 = vmatprep.mubr.f32.mxu0 0.0
        %8061 = vmatmul.mubr.f32.gmra.mrb[0].mxu0 %v7985
        %v8062 = vpop.f32.mrb[0].mxu0
        %v8063 = vadd.f32 %v7967, %v8062
        %v8064 = vpop.f32.mrb[0].mxu0
        %8065 = vmatprep.mubr.f32.mxu0 0.0
        %8066 = vmatmul.mubr.f32.gmra.mrb[0].mxu0 %v7988
        %v8067 = vpop.f32.mrb[0].mxu0
        %v8068 = vadd.f32 %v7972, %v8067
        %v8069 = vpop.f32.mrb[0].mxu0
        %8070 = vmatprep.mubr.f32.mxu0 0.0
        %8071 = vmatmul.mubr.f32.gmra.mrb[0].mxu0 %v7991
        %v8072 = vpop.f32.mrb[0].mxu0
        %v8073 = vadd.f32 %v7977, %v8072
        %v8074 = vpop.f32.mrb[0].mxu0
        %8075 = vmatprep.mubr.f32.mxu0 0.0
        %8076 = vmatmul.mubr.f32.gmra.mrb[0].mxu0 %v7994
        %v8077 = vpop.f32.mrb[0].mxu0
        %v8078 = vadd.f32 %v7982, %v8077
        %v8079 = vpop.f32.mrb[0].mxu0
        %8080 = vdwg.mxu0
        %v8081 = vadd.f32 %v5215, %v8063
        %v8082 = vadd.f32 %v5216, %v8068
        %v8083 = vadd.f32 %v5217, %v8073
        %v8084 = vadd.f32 %v5218, %v8078
        %v8085 = vsel %vm5127, %v8081, 0.0
        %v8086 = vsel %vm5127, %v8082, 0.0
        %v8087 = vadd.f32 %v8085, %v8086
        %v8088 = vsel %vm5127, %v8083, 0.0
        %v8089 = vadd.f32 %v8087, %v8088
        %v8090 = vsel %vm5127, %v8084, 0.0
        %v8091 = vadd.f32 %v8089, %v8090
        %v8092 = vrot.slane %v8091, 4
        %v8093 = vadd.f32 %v8091, %v8092
        %v8094 = vrot.slane %v8093, 2
        %v8095 = vadd.f32 %v8093, %v8094
        %v8096 = vrot.slane %v8095, 1
        %v8097 = vadd.f32 %v8095, %v8096
        %v8098 = vmul.f32 %v8097, %v5141
        %v8099 = vsub.f32 %v8081, %v8098
        %v8100 = vsub.f32 %v8082, %v8098
        %v8101 = vsub.f32 %v8083, %v8098
        %v8102 = vsub.f32 %v8084, %v8098
        %v8103 = vmul.f32 %v8099, %v8099
        %v8104 = vmul.f32 %v8100, %v8100
        %v8105 = vmul.f32 %v8101, %v8101
        %v8106 = vmul.f32 %v8102, %v8102
        %v8107 = vsel %vm5127, %v8103, 0.0
        %v8108 = vsel %vm5127, %v8104, 0.0
        %v8109 = vadd.f32 %v8107, %v8108
        %v8110 = vsel %vm5127, %v8105, 0.0
        %v8111 = vadd.f32 %v8109, %v8110
        %v8112 = vsel %vm5127, %v8106, 0.0
        %v8113 = vadd.f32 %v8111, %v8112
        %v8114 = vrot.slane %v8113, 4
        %v8115 = vadd.f32 %v8113, %v8114
        %v8116 = vrot.slane %v8115, 2
        %v8117 = vadd.f32 %v8115, %v8116
        %v8118 = vrot.slane %v8117, 1
        %v8119 = vadd.f32 %v8117, %v8118
        %v8120 = vmul.f32 %v8119, %v5141
        %v8121 = vadd.f32 %v8120, 1e-05
        %v8122 = vrsqrt.pop %v8121
        %v8123 = vmul.f32 %v8099, %v8122
        %v8124 = vmul.f32 %v8100, %v8122
        %v8125 = vmul.f32 %v8101, %v8122
        %v8126 = vmul.f32 %v8102, %v8122
        %v8127 = vld [vmem:[%s65] sm:$0xff]
        %v8128 = vld [vmem:[%s65 + $0x8] sm:$0xff]
        %v8129 = vld [vmem:[%s65 + $0x10] sm:$0xff]
        %v8130 = vld [vmem:[%s65 + $0x18] sm:$0xff]
        %v8131 = vld [vmem:[%s65 + $0x20] sm:$0xff]
        %v8132 = vld [vmem:[%s65 + $0x28] sm:$0xff]
        %v8133 = vld [vmem:[%s65 + $0x30] sm:$0xff]
        %v8134 = vld [vmem:[%s65 + $0x38] sm:$0xff]
        %v8135 = vld [vmem:[%s65 + $0x40] sm:$0xff]
        %v8136 = vld [vmem:[%s65 + $0x48] sm:$0xff]
        %v8137 = vld [vmem:[%s65 + $0x50] sm:$0xff]
        %v8138 = vld [vmem:[%s65 + $0x58] sm:$0xff]
        %v8139 = vld [vmem:[%s65 + $0x60] sm:$0xff]
        %v8140 = vld [vmem:[%s65 + $0x68] sm:$0xff]
        %v8141 = vld [vmem:[%s65 + $0x70] sm:$0xff]
        %v8142 = vld [vmem:[%s65 + $0x78] sm:$0xff]
        %v8143 = vld [vmem:[%s67] sm:$0xff]
        %v8144 = vld [vmem:[%s67 + $0x8] sm:$0xff]
        %v8145 = vld [vmem:[%s67 + $0x10] sm:$0xff]
        %v8146 = vld [vmem:[%s67 + $0x18] sm:$0xff]
        %v8147 = vld [vmem:[%s67 + $0x20] sm:$0xff]
        %v8148 = vld [vmem:[%s67 + $0x28] sm:$0xff]
        %v8149 = vld [vmem:[%s67 + $0x30] sm:$0xff]
        %v8150 = vld [vmem:[%s67 + $0x38] sm:$0xff]
        %v8151 = vld [vmem:[%s67 + $0x40] sm:$0xff]
        %v8152 = vld [vmem:[%s67 + $0x48] sm:$0xff]
        %v8153 = vld [vmem:[%s67 + $0x50] sm:$0xff]
        %v8154 = vld [vmem:[%s67 + $0x58] sm:$0xff]
        %v8155 = vld [vmem:[%s67 + $0x60] sm:$0xff]
        %v8156 = vld [vmem:[%s67 + $0x68] sm:$0xff]
        %v8157 = vld [vmem:[%s67 + $0x70] sm:$0xff]
        %v8158 = vld [vmem:[%s67 + $0x78] sm:$0xff]
        %8160 = vset.pattern.permute.xlu0 0
        %8161 = vperm.xlu0 %8160, %v8143
        %v8162 = vpop.permute.xlu0 %8161
        %8165 = vset.pattern.permute.xlu0 0
        %8166 = vperm.xlu0 %8165, %v8144
        %v8167 = vpop.permute.xlu0 %8166
        %8170 = vset.pattern.permute.xlu0 0
        %8171 = vperm.xlu0 %8170, %v8145
        %v8172 = vpop.permute.xlu0 %8171
        %8175 = vset.pattern.permute.xlu0 0
        %8176 = vperm.xlu0 %8175, %v8146
        %v8177 = vpop.permute.xlu0 %8176
        %8180 = vset.pattern.permute.xlu0 0
        %8181 = vperm.xlu0 %8180, %v8147
        %v8182 = vpop.permute.xlu0 %8181
        %8185 = vset.pattern.permute.xlu0 0
        %8186 = vperm.xlu0 %8185, %v8148
        %v8187 = vpop.permute.xlu0 %8186
        %8190 = vset.pattern.permute.xlu0 0
        %8191 = vperm.xlu0 %8190, %v8149
        %v8192 = vpop.permute.xlu0 %8191
        %8195 = vset.pattern.permute.xlu0 0
        %8196 = vperm.xlu0 %8195, %v8150
        %v8197 = vpop.permute.xlu0 %8196
        %8200 = vset.pattern.permute.xlu0 0
        %8201 = vperm.xlu0 %8200, %v8151
        %v8202 = vpop.permute.xlu0 %8201
        %8205 = vset.pattern.permute.xlu0 0
        %8206 = vperm.xlu0 %8205, %v8152
        %v8207 = vpop.permute.xlu0 %8206
        %8210 = vset.pattern.permute.xlu0 0
        %8211 = vperm.xlu0 %8210, %v8153
        %v8212 = vpop.permute.xlu0 %8211
        %8215 = vset.pattern.permute.xlu0 0
        %8216 = vperm.xlu0 %8215, %v8154
        %v8217 = vpop.permute.xlu0 %8216
        %8220 = vset.pattern.permute.xlu0 0
        %8221 = vperm.xlu0 %8220, %v8155
        %v8222 = vpop.permute.xlu0 %8221
        %8225 = vset.pattern.permute.xlu0 0
        %8226 = vperm.xlu0 %8225, %v8156
        %v8227 = vpop.permute.xlu0 %8226
        %8230 = vset.pattern.permute.xlu0 0
        %8231 = vperm.xlu0 %8230, %v8157
        %v8232 = vpop.permute.xlu0 %8231
        %8235 = vset.pattern.permute.xlu0 0
        %8236 = vperm.xlu0 %8235, %v8158
        %v8237 = vpop.permute.xlu0 %8236
        %v8240 = vsel %vm5328, %v8127, 0
        %v8243 = vsel %vm5328, %v8128, 0
        %v8246 = vsel %vm5328, %v8129, 0
        %v8249 = vsel %vm5328, %v8130, 0
        %v8252 = vsel %vm5328, %v8131, 0
        %v8255 = vsel %vm5328, %v8132, 0
        %v8258 = vsel %vm5328, %v8133, 0
        %v8261 = vsel %vm5328, %v8134, 0
        %v8264 = vsel %vm5328, %v8135, 0
        %v8267 = vsel %vm5328, %v8136, 0
        %v8270 = vsel %vm5328, %v8137, 0
        %v8273 = vsel %vm5328, %v8138, 0
        %v8276 = vsel %vm5328, %v8139, 0
        %v8279 = vsel %vm5328, %v8140, 0
        %v8282 = vsel %vm5328, %v8141, 0
        %v8285 = vsel %vm5328, %v8142, 0
        %8287 = vmatprep.subr.mxu0 0.0
        %8288 = vmatpush1.msra.mxu0 %v8123
        %8289 = vmatprep.subr.mxu0 0.0
        %8290 = vmatpush1.msra.mxu0 %v8124
        %8291 = vmatprep.subr.mxu0 0.0
        %8292 = vmatpush1.msra.mxu0 %v8125
        %8293 = vmatprep.subr.mxu0 0.0
        %8294 = vmatpush1.msra.mxu0 %v8126
        %8295 = vmatprep.subr.mxu0 0.0
        %8296 = vmatpush1.msra.mxu0 0.0
        %8297 = vmatprep.subr.mxu0 0.0
        %8298 = vmatpush1.msra.mxu0 0.0
        %8299 = vmatprep.subr.mxu0 0.0
        %8300 = vmatpush1.msra.mxu0 0.0
        %8301 = vmatprep.subr.mxu0 0.0
        %8302 = vmatpush1.msra.mxu0 0.0
        %8303 = vmatprep.subr.mxu0 0.0
        %8304 = vmatpush1.msra.mxu0 0.0
        %8305 = vmatprep.subr.mxu0 0.0
        %8306 = vmatpush1.msra.mxu0 0.0
        %8307 = vmatprep.subr.mxu0 0.0
        %8308 = vmatpush1.msra.mxu0 0.0
        %8309 = vmatprep.subr.mxu0 0.0
        %8310 = vmatpush1.msra.mxu0 0.0
        %8311 = vmatprep.subr.mxu0 0.0
        %8312 = vmatpush1.msra.mxu0 0.0
        %8313 = vmatprep.subr.mxu0 0.0
        %8314 = vmatpush1.msra.mxu0 0.0
        %8315 = vmatprep.subr.mxu0 0.0
        %8316 = vmatpush1.msra.mxu0 0.0
        %8317 = vmatprep.subr.mxu0 0.0
        %8318 = vmatpush1.msra.mxu0 0.0
        %8319 = vmatprep.subr.mxu0 0.0
        %8320 = vmatpush1.msra.mxu0 0.0
        %8321 = vmatprep.subr.mxu0 0.0
        %8322 = vmatpush1.msra.mxu0 0.0
        %8323 = vmatprep.subr.mxu0 0.0
        %8324 = vmatpush1.msra.mxu0 0.0
        %8325 = vmatprep.subr.mxu0 0.0
        %8326 = vmatpush1.msra.mxu0 0.0
        %8327 = vmatprep.subr.mxu0 0.0
        %8328 = vmatpush1.msra.mxu0 0.0
        %8329 = vmatprep.subr.mxu0 0.0
        %8330 = vmatpush1.msra.mxu0 0.0
        %8331 = vmatprep.subr.mxu0 0.0
        %8332 = vmatpush1.msra.mxu0 0.0
        %8333 = vmatprep.subr.mxu0 0.0
        %8334 = vmatpush1.msra.mxu0 0.0
        %8335 = vmatprep.subr.mxu0 0.0
        %8336 = vmatpush1.msra.mxu0 0.0
        %8337 = vmatprep.subr.mxu0 0.0
        %8338 = vmatpush1.msra.mxu0 0.0
        %8339 = vmatprep.subr.mxu0 0.0
        %8340 = vmatpush1.msra.mxu0 0.0
        %8341 = vmatprep.subr.mxu0 0.0
        %8342 = vmatpush1.msra.mxu0 0.0
        %8343 = vmatprep.subr.mxu0 0.0
        %8344 = vmatpush1.msra.mxu0 0.0
        %8345 = vmatprep.subr.mxu0 0.0
        %8346 = vmatpush1.msra.mxu0 0.0
        %8347 = vmatprep.subr.mxu0 0.0
        %8348 = vmatpush1.msra.mxu0 0.0
        %8349 = vmatprep.subr.mxu0 0.0
        %8350 = vmatpush1.msra.mxu0 0.0
        %8351 = vmatprep.mubr.f32.mxu0 0.0
        %8352 = vmatmul.mubr.f32.gmra.mrb[0].mxu0 %v8240
        %v8353 = vpop.f32.mrb[0].mxu0
        %v8354 = vadd.f32 %v8162, %v8353
        %v8355 = vpop.f32.mrb[0].mxu0
        %8356 = vmatprep.mubr.f32.mxu0 0.0
        %8357 = vmatmul.mubr.f32.gmra.mrb[0].mxu0 %v8243
        %v8358 = vpop.f32.mrb[0].mxu0
        %v8359 = vadd.f32 %v8167, %v8358
        %v8360 = vpop.f32.mrb[0].mxu0
        %8361 = vmatprep.mubr.f32.mxu0 0.0
        %8362 = vmatmul.mubr.f32.gmra.mrb[0].mxu0 %v8246
        %v8363 = vpop.f32.mrb[0].mxu0
        %v8364 = vadd.f32 %v8172, %v8363
        %v8365 = vpop.f32.mrb[0].mxu0
        %8366 = vmatprep.mubr.f32.mxu0 0.0
        %8367 = vmatmul.mubr.f32.gmra.mrb[0].mxu0 %v8249
        %v8368 = vpop.f32.mrb[0].mxu0
        %v8369 = vadd.f32 %v8177, %v8368
        %v8370 = vpop.f32.mrb[0].mxu0
        %8371 = vmatprep.mubr.f32.mxu0 0.0
        %8372 = vmatmul.mubr.f32.gmra.mrb[0].mxu0 %v8252
        %v8373 = vpop.f32.mrb[0].mxu0
        %v8374 = vadd.f32 %v8182, %v8373
        %v8375 = vpop.f32.mrb[0].mxu0
        %8376 = vmatprep.mubr.f32.mxu0 0.0
        %8377 = vmatmul.mubr.f32.gmra.mrb[0].mxu0 %v8255
        %v8378 = vpop.f32.mrb[0].mxu0
        %v8379 = vadd.f32 %v8187, %v8378
        %v8380 = vpop.f32.mrb[0].mxu0
        %8381 = vmatprep.mubr.f32.mxu0 0.0
        %8382 = vmatmul.mubr.f32.gmra.mrb[0].mxu0 %v8258
        %v8383 = vpop.f32.mrb[0].mxu0
        %v8384 = vadd.f32 %v8192, %v8383
        %v8385 = vpop.f32.mrb[0].mxu0
        %8386 = vmatprep.mubr.f32.mxu0 0.0
        %8387 = vmatmul.mubr.f32.gmra.mrb[0].mxu0 %v8261
        %v8388 = vpop.f32.mrb[0].mxu0
        %v8389 = vadd.f32 %v8197, %v8388
        %v8390 = vpop.f32.mrb[0].mxu0
        %8391 = vmatprep.mubr.f32.mxu0 0.0
        %8392 = vmatmul.mubr.f32.gmra.mrb[0].mxu0 %v8264
        %v8393 = vpop.f32.mrb[0].mxu0
        %v8394 = vadd.f32 %v8202, %v8393
        %v8395 = vpop.f32.mrb[0].mxu0
        %8396 = vmatprep.mubr.f32.mxu0 0.0
        %8397 = vmatmul.mubr.f32.gmra.mrb[0].mxu0 %v8267
        %v8398 = vpop.f32.mrb[0].mxu0
        %v8399 = vadd.f32 %v8207, %v8398
        %v8400 = vpop.f32.mrb[0].mxu0
        %8401 = vmatprep.mubr.f32.mxu0 0.0
        %8402 = vmatmul.mubr.f32.gmra.mrb[0].mxu0 %v8270
        %v8403 = vpop.f32.mrb[0].mxu0
        %v8404 = vadd.f32 %v8212, %v8403
        %v8405 = vpop.f32.mrb[0].mxu0
        %8406 = vmatprep.mubr.f32.mxu0 0.0
        %8407 = vmatmul.mubr.f32.gmra.mrb[0].mxu0 %v8273
        %v8408 = vpop.f32.mrb[0].mxu0
        %v8409 = vadd.f32 %v8217, %v8408
        %v8410 = vpop.f32.mrb[0].mxu0
        %8411 = vmatprep.mubr.f32.mxu0 0.0
        %8412 = vmatmul.mubr.f32.gmra.mrb[0].mxu0 %v8276
        %v8413 = vpop.f32.mrb[0].mxu0
        %v8414 = vadd.f32 %v8222, %v8413
        %v8415 = vpop.f32.mrb[0].mxu0
        %8416 = vmatprep.mubr.f32.mxu0 0.0
        %8417 = vmatmul.mubr.f32.gmra.mrb[0].mxu0 %v8279
        %v8418 = vpop.f32.mrb[0].mxu0
        %v8419 = vadd.f32 %v8227, %v8418
        %v8420 = vpop.f32.mrb[0].mxu0
        %8421 = vmatprep.mubr.f32.mxu0 0.0
        %8422 = vmatmul.mubr.f32.gmra.mrb[0].mxu0 %v8282
        %v8423 = vpop.f32.mrb[0].mxu0
        %v8424 = vadd.f32 %v8232, %v8423
        %v8425 = vpop.f32.mrb[0].mxu0
        %8426 = vmatprep.mubr.f32.mxu0 0.0
        %8427 = vmatmul.mubr.f32.gmra.mrb[0].mxu0 %v8285
        %v8428 = vpop.f32.mrb[0].mxu0
        %v8429 = vadd.f32 %v8237, %v8428
        %v8430 = vpop.f32.mrb[0].mxu0
        %8431 = vdwg.mxu0
        %v8432 = vmul.f32 %v8354, %v8354
        %v8433 = vmul.f32 %v8359, %v8359
        %v8434 = vmul.f32 %v8364, %v8364
        %v8435 = vmul.f32 %v8369, %v8369
        %v8436 = vmul.f32 %v8374, %v8374
        %v8437 = vmul.f32 %v8379, %v8379
        %v8438 = vmul.f32 %v8384, %v8384
        %v8439 = vmul.f32 %v8389, %v8389
        %v8440 = vmul.f32 %v8394, %v8394
        %v8441 = vmul.f32 %v8399, %v8399
        %v8442 = vmul.f32 %v8404, %v8404
        %v8443 = vmul.f32 %v8409, %v8409
        %v8444 = vmul.f32 %v8414, %v8414
        %v8445 = vmul.f32 %v8419, %v8419
        %v8446 = vmul.f32 %v8424, %v8424
        %v8447 = vmul.f32 %v8429, %v8429
        %v8448 = vmul.f32 %v8354, %v8432
        %v8449 = vmul.f32 %v8359, %v8433
        %v8450 = vmul.f32 %v8364, %v8434
        %v8451 = vmul.f32 %v8369, %v8435
        %v8452 = vmul.f32 %v8374, %v8436
        %v8453 = vmul.f32 %v8379, %v8437
        %v8454 = vmul.f32 %v8384, %v8438
        %v8455 = vmul.f32 %v8389, %v8439
        %v8456 = vmul.f32 %v8394, %v8440
        %v8457 = vmul.f32 %v8399, %v8441
        %v8458 = vmul.f32 %v8404, %v8442
        %v8459 = vmul.f32 %v8409, %v8443
        %v8460 = vmul.f32 %v8414, %v8444
        %v8461 = vmul.f32 %v8419, %v8445
        %v8462 = vmul.f32 %v8424, %v8446
        %v8463 = vmul.f32 %v8429, %v8447
        %v8464 = vmul.f32 %v8448, 0.044715
        %v8465 = vmul.f32 %v8449, 0.044715
        %v8466 = vmul.f32 %v8450, 0.044715
        %v8467 = vmul.f32 %v8451, 0.044715
        %v8468 = vmul.f32 %v8452, 0.044715
        %v8469 = vmul.f32 %v8453, 0.044715
        %v8470 = vmul.f32 %v8454, 0.044715
        %v8471 = vmul.f32 %v8455, 0.044715
        %v8472 = vmul.f32 %v8456, 0.044715
        %v8473 = vmul.f32 %v8457, 0.044715
        %v8474 = vmul.f32 %v8458, 0.044715
        %v8475 = vmul.f32 %v8459, 0.044715
        %v8476 = vmul.f32 %v8460, 0.044715
        %v8477 = vmul.f32 %v8461, 0.044715
        %v8478 = vmul.f32 %v8462, 0.044715
        %v8479 = vmul.f32 %v8463, 0.044715
        %v8480 = vadd.f32 %v8354, %v8464
        %v8481 = vadd.f32 %v8359, %v8465
        %v8482 = vadd.f32 %v8364, %v8466
        %v8483 = vadd.f32 %v8369, %v8467
        %v8484 = vadd.f32 %v8374, %v8468
        %v8485 = vadd.f32 %v8379, %v8469
        %v8486 = vadd.f32 %v8384, %v8470
        %v8487 = vadd.f32 %v8389, %v8471
        %v8488 = vadd.f32 %v8394, %v8472
        %v8489 = vadd.f32 %v8399, %v8473
        %v8490 = vadd.f32 %v8404, %v8474
        %v8491 = vadd.f32 %v8409, %v8475
        %v8492 = vadd.f32 %v8414, %v8476
        %v8493 = vadd.f32 %v8419, %v8477
        %v8494 = vadd.f32 %v8424, %v8478
        %v8495 = vadd.f32 %v8429, %v8479
        %v8496 = vmul.f32 %v8480, 0.7978846
        %v8497 = vmul.f32 %v8481, 0.7978846
        %v8498 = vmul.f32 %v8482, 0.7978846
        %v8499 = vmul.f32 %v8483, 0.7978846
        %v8500 = vmul.f32 %v8484, 0.7978846
        %v8501 = vmul.f32 %v8485, 0.7978846
        %v8502 = vmul.f32 %v8486, 0.7978846
        %v8503 = vmul.f32 %v8487, 0.7978846
        %v8504 = vmul.f32 %v8488, 0.7978846
        %v8505 = vmul.f32 %v8489, 0.7978846
        %v8506 = vmul.f32 %v8490, 0.7978846
        %v8507 = vmul.f32 %v8491, 0.7978846
        %v8508 = vmul.f32 %v8492, 0.7978846
        %v8509 = vmul.f32 %v8493, 0.7978846
        %v8510 = vmul.f32 %v8494, 0.7978846
        %v8511 = vmul.f32 %v8495, 0.7978846
        %v8512 = vtanh.pop %v8496
        %v8513 = vtanh.pop %v8497
        %v8514 = vtanh.pop %v8498
        %v8515 = vtanh.pop %v8499
        %v8516 = vtanh.pop %v8500
        %v8517 = vtanh.pop %v8501
        %v8518 = vtanh.pop %v8502
        %v8519 = vtanh.pop %v8503
        %v8520 = vtanh.pop %v8504
        %v8521 = vtanh.pop %v8505
        %v8522 = vtanh.pop %v8506
        %v8523 = vtanh.pop %v8507
        %v8524 = vtanh.pop %v8508
        %v8525 = vtanh.pop %v8509
        %v8526 = vtanh.pop %v8510
        %v8527 = vtanh.pop %v8511
        %v8528 = vadd.f32 %v8512, 1.0
        %v8529 = vadd.f32 %v8513, 1.0
        %v8530 = vadd.f32 %v8514, 1.0
        %v8531 = vadd.f32 %v8515, 1.0
        %v8532 = vadd.f32 %v8516, 1.0
        %v8533 = vadd.f32 %v8517, 1.0
        %v8534 = vadd.f32 %v8518, 1.0
        %v8535 = vadd.f32 %v8519, 1.0
        %v8536 = vadd.f32 %v8520, 1.0
        %v8537 = vadd.f32 %v8521, 1.0
        %v8538 = vadd.f32 %v8522, 1.0
        %v8539 = vadd.f32 %v8523, 1.0
        %v8540 = vadd.f32 %v8524, 1.0
        %v8541 = vadd.f32 %v8525, 1.0
        %v8542 = vadd.f32 %v8526, 1.0
        %v8543 = vadd.f32 %v8527, 1.0
        %v8544 = vmul.f32 %v8528, 0.5
        %v8545 = vmul.f32 %v8529, 0.5
        %v8546 = vmul.f32 %v8530, 0.5
        %v8547 = vmul.f32 %v8531, 0.5
        %v8548 = vmul.f32 %v8532, 0.5
        %v8549 = vmul.f32 %v8533, 0.5
        %v8550 = vmul.f32 %v8534, 0.5
        %v8551 = vmul.f32 %v8535, 0.5
        %v8552 = vmul.f32 %v8536, 0.5
        %v8553 = vmul.f32 %v8537, 0.5
        %v8554 = vmul.f32 %v8538, 0.5
        %v8555 = vmul.f32 %v8539, 0.5
        %v8556 = vmul.f32 %v8540, 0.5
        %v8557 = vmul.f32 %v8541, 0.5
        %v8558 = vmul.f32 %v8542, 0.5
        %v8559 = vmul.f32 %v8543, 0.5
        %v8560 = vmul.f32 %v8354, %v8544
        %v8561 = vmul.f32 %v8359, %v8545
        %v8562 = vmul.f32 %v8364, %v8546
        %v8563 = vmul.f32 %v8369, %v8547
        %v8564 = vmul.f32 %v8374, %v8548
        %v8565 = vmul.f32 %v8379, %v8549
        %v8566 = vmul.f32 %v8384, %v8550
        %v8567 = vmul.f32 %v8389, %v8551
        %v8568 = vmul.f32 %v8394, %v8552
        %v8569 = vmul.f32 %v8399, %v8553
        %v8570 = vmul.f32 %v8404, %v8554
        %v8571 = vmul.f32 %v8409, %v8555
        %v8572 = vmul.f32 %v8414, %v8556
        %v8573 = vmul.f32 %v8419, %v8557
        %v8574 = vmul.f32 %v8424, %v8558
        %v8575 = vmul.f32 %v8429, %v8559
        %v8576 = vld [vmem:[%s69] sm:$0xff]
        %v8577 = vld [vmem:[%s69 + $0x8] sm:$0xff]
        %v8578 = vld [vmem:[%s69 + $0x10] sm:$0xff]
        %v8579 = vld [vmem:[%s69 + $0x18] sm:$0xff]
        %v8580 = vld [vmem:[%s71] sm:$0xff]
        %v8581 = vld [vmem:[%s71 + $0x8] sm:$0xff]
        %v8582 = vld [vmem:[%s71 + $0x10] sm:$0xff]
        %v8583 = vld [vmem:[%s71 + $0x18] sm:$0xff]
        %8585 = vset.pattern.permute.xlu0 0
        %8586 = vperm.xlu0 %8585, %v8580
        %v8587 = vpop.permute.xlu0 %8586
        %8590 = vset.pattern.permute.xlu0 0
        %8591 = vperm.xlu0 %8590, %v8581
        %v8592 = vpop.permute.xlu0 %8591
        %8595 = vset.pattern.permute.xlu0 0
        %8596 = vperm.xlu0 %8595, %v8582
        %v8597 = vpop.permute.xlu0 %8596
        %8600 = vset.pattern.permute.xlu0 0
        %8601 = vperm.xlu0 %8600, %v8583
        %v8602 = vpop.permute.xlu0 %8601
        %8604 = vmatprep.subr.mxu0 0.0
        %8605 = vmatpush1.msra.mxu0 %v8560
        %8606 = vmatprep.subr.mxu0 0.0
        %8607 = vmatpush1.msra.mxu0 %v8561
        %8608 = vmatprep.subr.mxu0 0.0
        %8609 = vmatpush1.msra.mxu0 %v8562
        %8610 = vmatprep.subr.mxu0 0.0
        %8611 = vmatpush1.msra.mxu0 %v8563
        %8612 = vmatprep.subr.mxu0 0.0
        %8613 = vmatpush1.msra.mxu0 %v8564
        %8614 = vmatprep.subr.mxu0 0.0
        %8615 = vmatpush1.msra.mxu0 %v8565
        %8616 = vmatprep.subr.mxu0 0.0
        %8617 = vmatpush1.msra.mxu0 %v8566
        %8618 = vmatprep.subr.mxu0 0.0
        %8619 = vmatpush1.msra.mxu0 %v8567
        %8620 = vmatprep.subr.mxu0 0.0
        %8621 = vmatpush1.msra.mxu0 %v8568
        %8622 = vmatprep.subr.mxu0 0.0
        %8623 = vmatpush1.msra.mxu0 %v8569
        %8624 = vmatprep.subr.mxu0 0.0
        %8625 = vmatpush1.msra.mxu0 %v8570
        %8626 = vmatprep.subr.mxu0 0.0
        %8627 = vmatpush1.msra.mxu0 %v8571
        %8628 = vmatprep.subr.mxu0 0.0
        %8629 = vmatpush1.msra.mxu0 %v8572
        %8630 = vmatprep.subr.mxu0 0.0
        %8631 = vmatpush1.msra.mxu0 %v8573
        %8632 = vmatprep.subr.mxu0 0.0
        %8633 = vmatpush1.msra.mxu0 %v8574
        %8634 = vmatprep.subr.mxu0 0.0
        %8635 = vmatpush1.msra.mxu0 %v8575
        %8636 = vmatprep.subr.mxu0 0.0
        %8637 = vmatpush1.msra.mxu0 0.0
        %8638 = vmatprep.subr.mxu0 0.0
        %8639 = vmatpush1.msra.mxu0 0.0
        %8640 = vmatprep.subr.mxu0 0.0
        %8641 = vmatpush1.msra.mxu0 0.0
        %8642 = vmatprep.subr.mxu0 0.0
        %8643 = vmatpush1.msra.mxu0 0.0
        %8644 = vmatprep.subr.mxu0 0.0
        %8645 = vmatpush1.msra.mxu0 0.0
        %8646 = vmatprep.subr.mxu0 0.0
        %8647 = vmatpush1.msra.mxu0 0.0
        %8648 = vmatprep.subr.mxu0 0.0
        %8649 = vmatpush1.msra.mxu0 0.0
        %8650 = vmatprep.subr.mxu0 0.0
        %8651 = vmatpush1.msra.mxu0 0.0
        %8652 = vmatprep.subr.mxu0 0.0
        %8653 = vmatpush1.msra.mxu0 0.0
        %8654 = vmatprep.subr.mxu0 0.0
        %8655 = vmatpush1.msra.mxu0 0.0
        %8656 = vmatprep.subr.mxu0 0.0
        %8657 = vmatpush1.msra.mxu0 0.0
        %8658 = vmatprep.subr.mxu0 0.0
        %8659 = vmatpush1.msra.mxu0 0.0
        %8660 = vmatprep.subr.mxu0 0.0
        %8661 = vmatpush1.msra.mxu0 0.0
        %8662 = vmatprep.subr.mxu0 0.0
        %8663 = vmatpush1.msra.mxu0 0.0
        %8664 = vmatprep.subr.mxu0 0.0
        %8665 = vmatpush1.msra.mxu0 0.0
        %8666 = vmatprep.subr.mxu0 0.0
        %8667 = vmatpush1.msra.mxu0 0.0
        %8668 = vmatprep.mubr.f32.mxu0 0.0
        %8669 = vmatmul.mubr.f32.gmra.mrb[0].mxu0 %v8576
        %v8670 = vpop.f32.mrb[0].mxu0
        %v8671 = vadd.f32 %v8587, %v8670
        %v8672 = vpop.f32.mrb[0].mxu0
        %8673 = vmatprep.mubr.f32.mxu0 0.0
        %8674 = vmatmul.mubr.f32.gmra.mrb[0].mxu0 %v8577
        %v8675 = vpop.f32.mrb[0].mxu0
        %v8676 = vadd.f32 %v8592, %v8675
        %v8677 = vpop.f32.mrb[0].mxu0
        %8678 = vmatprep.mubr.f32.mxu0 0.0
        %8679 = vmatmul.mubr.f32.gmra.mrb[0].mxu0 %v8578
        %v8680 = vpop.f32.mrb[0].mxu0
        %v8681 = vadd.f32 %v8597, %v8680
        %v8682 = vpop.f32.mrb[0].mxu0
        %8683 = vmatprep.mubr.f32.mxu0 0.0
        %8684 = vmatmul.mubr.f32.gmra.mrb[0].mxu0 %v8579
        %v8685 = vpop.f32.mrb[0].mxu0
        %v8686 = vadd.f32 %v8602, %v8685
        %v8687 = vpop.f32.mrb[0].mxu0
        %8688 = vdwg.mxu0
        %v8689 = vadd.f32 %v8081, %v8671
        %v8690 = vadd.f32 %v8082, %v8676
        %v8691 = vadd.f32 %v8083, %v8681
        %v8692 = vadd.f32 %v8084, %v8686
        %8693 = vst.msk [vmem:[%s1214] sm:$0xff] %vm5127, %v8689
        %8694 = vst.msk [vmem:[%s1214 + $0x8] sm:$0xff] %vm5127, %v8690
        %8695 = vst.msk [vmem:[%s1214 + $0x10] sm:$0xff] %vm5127, %v8691
        %8696 = vst.msk [vmem:[%s1214 + $0x18] sm:$0xff] %vm5127, %v8692
        %v8697 = vld [vmem:[%s73] sm:$0xff]
        %v8698 = vld [vmem:[%s73 + $0x8] sm:$0xff]
        %v8699 = vld [vmem:[%s73 + $0x10] sm:$0xff]
        %v8700 = vld [vmem:[%s73 + $0x18] sm:$0xff]
        %v8701 = vld [vmem:[%s75] sm:$0xff]
        %v8702 = vld [vmem:[%s75 + $0x8] sm:$0xff]
        %v8703 = vld [vmem:[%s75 + $0x10] sm:$0xff]
        %v8704 = vld [vmem:[%s75 + $0x18] sm:$0xff]
        %v8705 = vsel %vm5127, %v8689, 0.0
        %v8706 = vsel %vm5127, %v8690, 0.0
        %v8707 = vadd.f32 %v8705, %v8706
        %v8708 = vsel %vm5127, %v8691, 0.0
        %v8709 = vadd.f32 %v8707, %v8708
        %v8710 = vsel %vm5127, %v8692, 0.0
        %v8711 = vadd.f32 %v8709, %v8710
        %v8712 = vrot.slane %v8711, 4
        %v8713 = vadd.f32 %v8711, %v8712
        %v8714 = vrot.slane %v8713, 2
        %v8715 = vadd.f32 %v8713, %v8714
        %v8716 = vrot.slane %v8715, 1
        %v8717 = vadd.f32 %v8715, %v8716
        %v8718 = vmul.f32 %v8717, %v5141
        %v8719 = vsub.f32 %v8689, %v8718
        %v8720 = vsub.f32 %v8690, %v8718
        %v8721 = vsub.f32 %v8691, %v8718
        %v8722 = vsub.f32 %v8692, %v8718
        %v8723 = vmul.f32 %v8719, %v8719
        %v8724 = vmul.f32 %v8720, %v8720
        %v8725 = vmul.f32 %v8721, %v8721
        %v8726 = vmul.f32 %v8722, %v8722
        %v8727 = vsel %vm5127, %v8723, 0.0
        %v8728 = vsel %vm5127, %v8724, 0.0
        %v8729 = vadd.f32 %v8727, %v8728
        %v8730 = vsel %vm5127, %v8725, 0.0
        %v8731 = vadd.f32 %v8729, %v8730
        %v8732 = vsel %vm5127, %v8726, 0.0
        %v8733 = vadd.f32 %v8731, %v8732
        %v8734 = vrot.slane %v8733, 4
        %v8735 = vadd.f32 %v8733, %v8734
        %v8736 = vrot.slane %v8735, 2
        %v8737 = vadd.f32 %v8735, %v8736
        %v8738 = vrot.slane %v8737, 1
        %v8739 = vadd.f32 %v8737, %v8738
        %v8740 = vmul.f32 %v8739, %v5141
        %v8741 = vadd.f32 %v8740, 1e-05
        %v8742 = vrsqrt.pop %v8741
        %v8743 = vmul.f32 %v8719, %v8742
        %v8744 = vmul.f32 %v8720, %v8742
        %v8745 = vmul.f32 %v8721, %v8742
        %v8746 = vmul.f32 %v8722, %v8742
        %8748 = vset.pattern.permute.xlu0 0
        %8749 = vperm.xlu0 %8748, %v8697
        %v8750 = vpop.permute.xlu0 %8749
        %8753 = vset.pattern.permute.xlu0 0
        %8754 = vperm.xlu0 %8753, %v8698
        %v8755 = vpop.permute.xlu0 %8754
        %8758 = vset.pattern.permute.xlu0 0
        %8759 = vperm.xlu0 %8758, %v8699
        %v8760 = vpop.permute.xlu0 %8759
        %8763 = vset.pattern.permute.xlu0 0
        %8764 = vperm.xlu0 %8763, %v8700
        %v8765 = vpop.permute.xlu0 %8764
        %v8767 = vmul.f32 %v8743, %v8750
        %v8768 = vmul.f32 %v8744, %v8755
        %v8769 = vmul.f32 %v8745, %v8760
        %v8770 = vmul.f32 %v8746, %v8765
        %8772 = vset.pattern.permute.xlu0 0
        %8773 = vperm.xlu0 %8772, %v8701
        %v8774 = vpop.permute.xlu0 %8773
        %8777 = vset.pattern.permute.xlu0 0
        %8778 = vperm.xlu0 %8777, %v8702
        %v8779 = vpop.permute.xlu0 %8778
        %8782 = vset.pattern.permute.xlu0 0
        %8783 = vperm.xlu0 %8782, %v8703
        %v8784 = vpop.permute.xlu0 %8783
        %8787 = vset.pattern.permute.xlu0 0
        %8788 = vperm.xlu0 %8787, %v8704
        %v8789 = vpop.permute.xlu0 %8788
        %v8791 = vadd.f32 %v8767, %v8774
        %v8792 = vadd.f32 %v8768, %v8779
        %v8793 = vadd.f32 %v8769, %v8784
        %v8794 = vadd.f32 %v8770, %v8789
        %8795 = vst.msk [vmem:[%s1231] sm:$0xff] %vm5127, %v8791
        %8796 = vst.msk [vmem:[%s1231 + $0x8] sm:$0xff] %vm5127, %v8792
        %8797 = vst.msk [vmem:[%s1231 + $0x10] sm:$0xff] %vm5127, %v8793
        %8798 = vst.msk [vmem:[%s1231 + $0x18] sm:$0xff] %vm5127, %v8794
        %s8799 = sand.u32 %s910, 1
        %s8800 = scalar_lea.sflag [#allocation5], %s8799
        %s8801 = sand.u32 %s910, 1
        %s8802 = smul.addr %s8801, 32
        %s8803 = scalar_lea.vmem [#allocation4], %s8802
        %s8804 = sand.u32 %s936, 1
        %s8805 = scalar_lea.sflag [#allocation7], %s8804
        %s8806 = sand.u32 %s936, 1
        %s8807 = smul.addr %s8806, 32
        %s8808 = scalar_lea.vmem [#allocation6], %s8807
        %p8809 = scmp.lt.s32.totalorder %s99, 1
        %s8810 = scalar_select %p8809, %s99, 1
        %s8811 = smul.addr %s8810, 4
        %s8812 = smul.addr %s8811, 8
        %s8813 = scalar_lea.vmem %s81, %s8812
        // Predicated region
        $region173: #{focalnet_forward.1} parent=171 // pred_check
          %p8814 = pneg %p920
        $region174: #{focalnet_forward.1} parent=171 // pred_check_branch
          %8816 = sbr.rel (%p8814) target = $region176
        $region175: #{focalnet_forward.1} parent=171 // pred_region
          %s8818 = ssub.s32 512, 512
          %8819 = vsyncadd %s8800, %s8818
          %s8820 = smul.addr %s99, 4
          %s8821 = smul.addr %s8820, 128
          %s8822 = scalar_lea.hbm %s77, %s8821
          %s8823 = sshll.u32 %s8803, 4
          %s8824 = int_to_ptr.vmem [resolvable:$true] %s8823
          %8829 = dma.vmem_to_hbm [thread:$0]  %s8824, 512, %s8822, %s8800, 128, 128, 8
        $region176: #{focalnet_forward.1} parent=171 // pred_fallthru
          _
        // Predicated region
        $region177: #{focalnet_forward.1} parent=171 // pred_check
          %p8830 = pneg %p946
        $region178: #{focalnet_forward.1} parent=171 // pred_check_branch
          %8832 = sbr.rel (%p8830) target = $region180
        $region179: #{focalnet_forward.1} parent=171 // pred_region
          %s8834 = ssub.s32 512, 512
          %8835 = vsyncadd %s8805, %s8834
          %s8836 = smul.addr %s99, 4
          %s8837 = smul.addr %s8836, 128
          %s8838 = scalar_lea.hbm %s79, %s8837
          %s8839 = sshll.u32 %s8808, 4
          %s8840 = int_to_ptr.vmem [resolvable:$true] %s8839
          %8845 = dma.vmem_to_hbm [thread:$0]  %s8840, 512, %s8838, %s8805, 128, 128, 8
        $region180: #{focalnet_forward.1} parent=171 // pred_fallthru
          _
        // Predicated region
        $region181: #{focalnet_forward.1} parent=171 // pred_check
          %p8846 = pneg %p972
        $region182: #{focalnet_forward.1} parent=171 // pred_check_branch
          %8848 = sbr.rel (%p8846) target = $region184
        $region183: #{focalnet_forward.1} parent=171 // pred_region
          _
        $region184: #{focalnet_forward.1} parent=171 // pred_fallthru
          _
      $region172: #{focalnet_forward.1} parent=5 // pred_fallthru
        _
      %p8849 = scmp.le.s32.totalorder 2, %s94
      // Predicated region
      $region185: #{focalnet_forward.1} parent=5 // pred_check
        %p8850 = pneg %p8849
      $region186: #{focalnet_forward.1} parent=5 // pred_check_branch
        %8852 = sbr.rel (%p8850) target = $region188
      $region187: #{focalnet_forward.1} parent=5 // pred_region
        %s8853 = ssub.s32 %s94, 2
        // Predicated region
        $region189: #{focalnet_forward.1} parent=187 // pred_check
          %p8854 = pneg %p926
        $region190: #{focalnet_forward.1} parent=187 // pred_check_branch
          %8856 = sbr.rel (%p8854) target = $region192
        $region191: #{focalnet_forward.1} parent=187 // pred_region
          %s8857 = sand.u32 %s911, 1
          %s8858 = scalar_lea.sflag [#allocation5], %s8857
          %s8859 = sand.u32 %s911, 1
          %s8860 = smul.addr %s8859, 32
          %s8861 = scalar_lea.vmem [#allocation4], %s8860
          %8862 = dma.done %s8858, 512
        $region192: #{focalnet_forward.1} parent=187 // pred_fallthru
          _
        // Predicated region
        $region193: #{focalnet_forward.1} parent=187 // pred_check
          %p8863 = pneg %p952
        $region194: #{focalnet_forward.1} parent=187 // pred_check_branch
          %8865 = sbr.rel (%p8863) target = $region196
        $region195: #{focalnet_forward.1} parent=187 // pred_region
          %s8866 = sand.u32 %s937, 1
          %s8867 = scalar_lea.sflag [#allocation7], %s8866
          %s8868 = sand.u32 %s937, 1
          %s8869 = smul.addr %s8868, 32
          %s8870 = scalar_lea.vmem [#allocation6], %s8869
          %8871 = dma.done %s8867, 512
        $region196: #{focalnet_forward.1} parent=187 // pred_fallthru
          _
        // Predicated region
        $region197: #{focalnet_forward.1} parent=187 // pred_check
          %p8872 = pneg %p978
        $region198: #{focalnet_forward.1} parent=187 // pred_check_branch
          %8874 = sbr.rel (%p8872) target = $region200
        $region199: #{focalnet_forward.1} parent=187 // pred_region
          %p8875 = scmp.lt.s32.totalorder %s100, 1
          %s8876 = scalar_select %p8875, %s100, 1
          %s8877 = smul.addr %s8876, 4
          %s8878 = smul.addr %s8877, 8
          %s8879 = scalar_lea.vmem %s81, %s8878
        $region200: #{focalnet_forward.1} parent=187 // pred_fallthru
          _
      $region188: #{focalnet_forward.1} parent=5 // pred_fallthru
        _
    $region6: #{focalnet_forward.1} parent=1 // loop_footer
      %s98 = sadd.s32 1, %s94
    $region7: #{focalnet_forward.1} parent=1 // loop_footer_branch
      %93 = sbr.rel target = $region3
    $region8: #{focalnet_forward.1} parent=1 // loop_exit
      _
    %8880 = vsyncpa [#allocation5], 1
    %s8881 = scalar_lea.sflag [#allocation5], 1
    %8882 = vsyncpa %s8881, 1
    %8883 = vsyncpa [#allocation7], 1
    %s8884 = scalar_lea.sflag [#allocation7], 1
    %8885 = vsyncpa %s8884, 1

</llo_original>
